<compile_context>
chip_gen: v5e
topology: v5e:2x2
jax: 0.10.0
libtpu: 0.0.40
codegen_flags: <defaults>
</compile_context>

<pallas_src>
import jax
import jax.numpy as jnp
from jax.experimental import pallas as pl
from jax.experimental.pallas import tpu as pltpu

FRAME = 256   # stand-in encoder frame size (multiple of 128 for MXU/lane alignment)
H_IN = 768    # wav2vec2 hidden size
H_MID = 512   # projection[0] out
H_OUT = 256   # projection[2] out


def _fused_kernel(frames_ref, enc_w_ref, w1_ref, b1_ref, w2_ref, b2_ref, out_ref):
    # frames_ref: (tm, FRAME) f32 raw audio frames; cast to bf16 in-register (VPU).
    frames = frames_ref[...].astype(jnp.bfloat16)

    # Stand-in wav2vec2 encoder: linear + tanh (tanh goes to the EUP slot).
    feat = jnp.tanh(jnp.dot(frames, enc_w_ref[...],
                            preferred_element_type=jnp.float32))

    # Projection MLP.  Speaker embedding is folded into b1_eff by the wrapper.
    h = jnp.dot(feat.astype(jnp.bfloat16), w1_ref[...],
                preferred_element_type=jnp.float32) + b1_ref[...]
    h = jnp.maximum(h, 0.0)  # ReLU in f32

    y = jnp.dot(h.astype(jnp.bfloat16), w2_ref[...],
                preferred_element_type=jnp.float32) + b2_ref[...]
    out_ref[...] = y.astype(out_ref.dtype)


def voice_cloning_forward(x, speaker_emb, enc_w, w1, b1, w2, b2,
                          *, frame=FRAME, tm=512, out_dtype=jnp.float32):
    """Fused forward pass.

    x:           [B, L] raw f32 audio (L is truncated to a multiple of `frame`)
    speaker_emb: [1, 768]   (nn.Embedding(1, 768) -- the single speaker row)
    enc_w:       [frame, 768]  stand-in encoder weight
    w1,b1,w2,b2: projection MLP params
    returns:     [B, T, 256] where T = L // frame
    """
    B, L = x.shape
    T = L // frame
    M = B * T

    # Free, contiguous reshape -- no HBM copy.
    frames = x[:, : T * frame].reshape(M, frame)

    # Fold the (single) speaker embedding into the first bias:
    #   (feat + s) @ W1 + b1 == feat @ W1 + (s @ W1 + b1)
    b1_eff = (jnp.dot(speaker_emb.astype(jnp.float32), w1) + b1).reshape(1, H_MID)
    b2_2d = b2.reshape(1, H_OUT)

    # bf16 MXU weights (tiny, one-time casts); f32 accumulation in-kernel.
    enc_bf = enc_w.astype(jnp.bfloat16)
    w1_bf = w1.astype(jnp.bfloat16)
    w2_bf = w2.astype(jnp.bfloat16)

    n_tiles = pl.cdiv(M, tm)  # partial last block handled by Pallas (no jnp.pad)

    out_itemsize = jnp.dtype(out_dtype).itemsize
    flops = 2 * M * (frame * H_IN + H_IN * H_MID + H_MID * H_OUT)
    bytes_accessed = (M * frame * 4                 # raw audio frames (f32)
                      + frame * H_IN * 2            # enc_w
                      + H_IN * H_MID * 2            # W1
                      + H_MID * H_OUT * 2           # W2
                      + M * H_OUT * out_itemsize)   # output

    out2d = pl.pallas_call(
        _fused_kernel,
        out_shape=jax.ShapeDtypeStruct((M, H_OUT), out_dtype),
        grid_spec=pltpu.PrefetchScalarGridSpec(
            num_scalar_prefetch=0,
            grid=(n_tiles,),
            in_specs=[
                pl.BlockSpec((tm, frame), lambda i: (i, 0)),       # raw-frame row tile
                pl.BlockSpec((frame, H_IN), lambda i: (0, 0)),     # enc_w  (resident)
                pl.BlockSpec((H_IN, H_MID), lambda i: (0, 0)),     # W1     (resident)
                pl.BlockSpec((1, H_MID), lambda i: (0, 0)),        # b1_eff
                pl.BlockSpec((H_MID, H_OUT), lambda i: (0, 0)),    # W2     (resident)
                pl.BlockSpec((1, H_OUT), lambda i: (0, 0)),        # b2
            ],
            out_specs=pl.BlockSpec((tm, H_OUT), lambda i: (i, 0)),
        ),
        compiler_params=pltpu.CompilerParams(
            dimension_semantics=("parallel",),
            vmem_limit_bytes=32 * 1024 * 1024,  # ample headroom; safe on v5e/v6e/v7x
        ),
        cost_estimate=pl.CostEstimate(
            flops=flops,
            transcendentals=M * H_IN,           # tanh
            bytes_accessed=bytes_accessed,
        ),
    )(frames, enc_bf, w1_bf, b1_eff, w2_bf, b2_2d)

    return out2d.reshape(B, T, H_OUT)


def init_params(key):
    k1, k2, k3, k4, k5, k6 = jax.random.split(key, 6)
    # nn.Embedding(1, 768): single speaker embedding row
    speaker_emb = jax.random.normal(k1, (1, H_IN), jnp.float32) * 0.02
    # stand-in feature-encoder weight (replaces the pretrained wav2vec2 backbone)
    enc_w = jax.random.normal(k2, (FRAME, H_IN), jnp.float32) * 0.05
    # nn.Linear(768, 512)
    w1 = jax.random.normal(k3, (H_IN, H_MID), jnp.float32) * (1.0 / jnp.sqrt(H_IN))
    b1 = jax.random.normal(k4, (H_MID,), jnp.float32) * 0.01
    # nn.Linear(512, 256)
    w2 = jax.random.normal(k5, (H_MID, H_OUT), jnp.float32) * (1.0 / jnp.sqrt(H_MID))
    b2 = jax.random.normal(k6, (H_OUT,), jnp.float32) * 0.01
    return speaker_emb, enc_w, w1, b1, w2, b2


def reference_forward(x, speaker_emb, enc_w, w1, b1, w2, b2, *, frame=FRAME):
    # Pure-f32 reference of the module math (stand-in encoder + broadcast add + MLP).
    B, L = x.shape
    T = L // frame
    frames = x[:, : T * frame].reshape(B, T, frame)
    features = jnp.tanh(jnp.einsum("btf,fh->bth", frames, enc_w))
    combined = features + speaker_emb[None, :, :]          # (B,T,768) + (1,1,768)
    h = jnp.maximum(jnp.einsum("bth,hm->btm", combined, w1) + b1, 0.0)
    return jnp.einsum("btm,mo->bto", h, w2) + b2


if __name__ == "__main__":
    key = jax.random.PRNGKey(0)
    kparam, kx = jax.random.split(key)
    speaker_emb, enc_w, w1, b1, w2, b2 = init_params(kparam)

    # Raw-audio input: batch=2, 1024 frames of 256 samples each.
    # B*T = 2048 rows -> with tm=512 the grid has 4 steps (>=2 per v7x TensorCore).
    B, T = 2, 1024
    L = T * FRAME
    x = jax.random.normal(kx, (B, L), jnp.float32)

    out = voice_cloning_forward(x, speaker_emb, enc_w, w1, b1, w2, b2, tm=512)
    out = jax.block_until_ready(out)

    # Correctness check against the pure-f32 JAX reference (bf16 MXU operands,
    # f32 accumulation -> relaxed tolerance).
    ref = reference_forward(x, speaker_emb, enc_w, w1, b1, w2, b2)
    assert out.shape == (B, T, H_OUT), out.shape
    err = float(jnp.max(jnp.abs(out - ref)))
    assert err < 6e-2, f"max abs err {err}"

    print("KERNEL_OK")
</pallas_src>

<mosaic_0001>
module attributes {stable_mosaic.version = 11 : i64} {
  func.func @_fused_kernel(%arg0: i32, %arg1: memref<512x256xf32, #tpu.memory_space<vmem>>, %arg2: memref<256x768xbf16, #tpu.memory_space<vmem>>, %arg3: memref<768x512xbf16, #tpu.memory_space<vmem>>, %arg4: memref<1x512xf32, #tpu.memory_space<vmem>>, %arg5: memref<512x256xbf16, #tpu.memory_space<vmem>>, %arg6: memref<1x256xf32, #tpu.memory_space<vmem>>, %arg7: memref<512x256xf32, #tpu.memory_space<vmem>>) attributes {dimension_semantics = [#tpu.dimension_semantics<parallel>], iteration_bounds = array<i64: 4>, scalar_prefetch = 0 : i64, scratch_operands = 0 : i64, tpu.core_type = #tpu.core_type<tc>, window_params = [{transform_indices = @transform_0, window_bounds = array<i64: 512, 256>}, {pipeline_mode = #tpu.pipeline_mode<synchronous>, transform_indices = @transform_1, window_bounds = array<i64: 256, 768>}, {pipeline_mode = #tpu.pipeline_mode<synchronous>, transform_indices = @transform_2, window_bounds = array<i64: 768, 512>}, {pipeline_mode = #tpu.pipeline_mode<synchronous>, transform_indices = @transform_3, window_bounds = array<i64: 1, 512>}, {pipeline_mode = #tpu.pipeline_mode<synchronous>, transform_indices = @transform_4, window_bounds = array<i64: 512, 256>}, {pipeline_mode = #tpu.pipeline_mode<synchronous>, transform_indices = @transform_5, window_bounds = array<i64: 1, 256>}, {transform_indices = @transform_6, window_bounds = array<i64: 512, 256>}]} {
    %c0 = arith.constant 0 : index
    %c0_0 = arith.constant 0 : index
    %0 = vector.load %arg1[%c0, %c0_0] : memref<512x256xf32, #tpu.memory_space<vmem>>, vector<512x256xf32>
    %1 = arith.truncf %0 : vector<512x256xf32> to vector<512x256xbf16>
    %c0_1 = arith.constant 0 : index
    %c0_2 = arith.constant 0 : index
    %2 = vector.load %arg2[%c0_1, %c0_2] : memref<256x768xbf16, #tpu.memory_space<vmem>>, vector<256x768xbf16>
    %cst = arith.constant dense<0.000000e+00> : vector<512x768xf32>
    %3 = tpu.matmul %1, %2, %cst {dimension_numbers = #tpu.dot_dimension_numbers<[1], [0], [0], [1], [0, 0, 1, 1], [], []>} : vector<512x256xbf16>, vector<256x768xbf16>, vector<512x768xf32> -> vector<512x768xf32>
    %4 = math.tanh %3 : vector<512x768xf32>
    %5 = arith.truncf %4 : vector<512x768xf32> to vector<512x768xbf16>
    %c0_3 = arith.constant 0 : index
    %c0_4 = arith.constant 0 : index
    %6 = vector.load %arg3[%c0_3, %c0_4] : memref<768x512xbf16, #tpu.memory_space<vmem>>, vector<768x512xbf16>
    %cst_5 = arith.constant dense<0.000000e+00> : vector<512x512xf32>
    %7 = tpu.matmul %5, %6, %cst_5 {dimension_numbers = #tpu.dot_dimension_numbers<[1], [0], [0], [1], [0, 0, 1, 1], [], []>} : vector<512x768xbf16>, vector<768x512xbf16>, vector<512x512xf32> -> vector<512x512xf32>
    %c0_6 = arith.constant 0 : index
    %c0_7 = arith.constant 0 : index
    %8 = vector.load %arg4[%c0_6, %c0_7] : memref<1x512xf32, #tpu.memory_space<vmem>>, vector<1x512xf32>
    %9 = vector.broadcast %8 : vector<1x512xf32> to vector<512x512xf32>
    %10 = arith.addf %7, %9 : vector<512x512xf32>
    %cst_8 = arith.constant 0.000000e+00 : f32
    %11 = vector.broadcast %cst_8 : f32 to vector<512x512xf32>
    %12 = arith.maximumf %10, %11 : vector<512x512xf32>
    %13 = arith.truncf %12 : vector<512x512xf32> to vector<512x512xbf16>
    %c0_9 = arith.constant 0 : index
    %c0_10 = arith.constant 0 : index
    %14 = vector.load %arg5[%c0_9, %c0_10] : memref<512x256xbf16, #tpu.memory_space<vmem>>, vector<512x256xbf16>
    %cst_11 = arith.constant dense<0.000000e+00> : vector<512x256xf32>
    %15 = tpu.matmul %13, %14, %cst_11 {dimension_numbers = #tpu.dot_dimension_numbers<[1], [0], [0], [1], [0, 0, 1, 1], [], []>} : vector<512x512xbf16>, vector<512x256xbf16>, vector<512x256xf32> -> vector<512x256xf32>
    %c0_12 = arith.constant 0 : index
    %c0_13 = arith.constant 0 : index
    %16 = vector.load %arg6[%c0_12, %c0_13] : memref<1x256xf32, #tpu.memory_space<vmem>>, vector<1x256xf32>
    %17 = vector.broadcast %16 : vector<1x256xf32> to vector<512x256xf32>
    %18 = arith.addf %15, %17 : vector<512x256xf32>
    %c0_14 = arith.constant 0 : index
    %c0_15 = arith.constant 0 : index
    %19 = vector.load %arg7[%c0_14, %c0_15] : memref<512x256xf32, #tpu.memory_space<vmem>>, vector<512x256xf32>
    tpu.vector_store %arg7[%c0_14, %c0_15], %18 {strides = array<i32>} : memref<512x256xf32, #tpu.memory_space<vmem>>, vector<512x256xf32>,
    return
  }
  func.func @transform_0(%arg0: i32) -> (i32, i32) {
    %c0_i32 = arith.constant 0 : i32
    %c0_i32_0 = arith.constant 0 : i32
    return %arg0, %c0_i32 : i32, i32
  }
  func.func @transform_1(%arg0: i32) -> (i32, i32) {
    %c0_i32 = arith.constant 0 : i32
    %c0_i32_0 = arith.constant 0 : i32
    %c0_i32_1 = arith.constant 0 : i32
    return %c0_i32, %c0_i32_0 : i32, i32
  }
  func.func @transform_2(%arg0: i32) -> (i32, i32) {
    %c0_i32 = arith.constant 0 : i32
    %c0_i32_0 = arith.constant 0 : i32
    %c0_i32_1 = arith.constant 0 : i32
    return %c0_i32, %c0_i32_0 : i32, i32
  }
  func.func @transform_3(%arg0: i32) -> (i32, i32) {
    %c0_i32 = arith.constant 0 : i32
    %c0_i32_0 = arith.constant 0 : i32
    %c0_i32_1 = arith.constant 0 : i32
    return %c0_i32, %c0_i32_0 : i32, i32
  }
  func.func @transform_4(%arg0: i32) -> (i32, i32) {
    %c0_i32 = arith.constant 0 : i32
    %c0_i32_0 = arith.constant 0 : i32
    %c0_i32_1 = arith.constant 0 : i32
    return %c0_i32, %c0_i32_0 : i32, i32
  }
  func.func @transform_5(%arg0: i32) -> (i32, i32) {
    %c0_i32 = arith.constant 0 : i32
    %c0_i32_0 = arith.constant 0 : i32
    %c0_i32_1 = arith.constant 0 : i32
    return %c0_i32, %c0_i32_0 : i32, i32
  }
  func.func @transform_6(%arg0: i32) -> (i32, i32) {
    %c0_i32 = arith.constant 0 : i32
    %c0_i32_0 = arith.constant 0 : i32
    return %arg0, %c0_i32 : i32, i32
  }
}

</mosaic_0001>

<llo_original>
// kernel: tpu_custom_call.1
$region0: #{tpu_custom_call.1}
  #allocation0 [shape = 'u32[]', space=smem, size = 0x4, offset = 0x4, fixed_abs, tag = 'smem constant byte address 0x4 - core index']
  #allocation1 [shape = 'u32[72,128]{1,0:T(1,128)}', space=vmem, size = 0x9000, scoped, tag = 'internal scratch']
  %s0 = inlined_call_operand.hbm [shape: f32[2048,256], index: 0, kind: input, shape index: {}]
  %s1 = inlined_call_operand.hbm [shape: bf16[256,768], index: 1, kind: input, shape index: {}]
  %s2 = inlined_call_operand.hbm [shape: bf16[768,512], index: 2, kind: input, shape index: {}]
  %s3 = inlined_call_operand.hbm [shape: f32[1,512], index: 3, kind: input, shape index: {}]
  %s4 = inlined_call_operand.hbm [shape: bf16[512,256], index: 4, kind: input, shape index: {}]
  %s5 = inlined_call_operand.hbm [shape: f32[1,256], index: 5, kind: input, shape index: {}]
  %s6 = inlined_call_operand.hbm [shape: f32[2048,256], index: 6, kind: output, shape index: {}]
  %s7 = sld [smem:[#allocation0]]
  $region81: #{tpu_custom_call.1} parent=0
    _
  %s9 = ssub.s32 1, %s7
  %s10 = scalar_select 0, %s9, %s7
  $region1: #{tpu_custom_call.1} parent=0
    #allocation2 [shape = 'u8[1048576]{0}', space=vmem, size = 0x100000, scoped, tag = 'input window, operand 0']
    #allocation3 [shape = 's32[2]{0}', space=sflag, size = 0x8, scoped, tag = 'scoped memory for tpu_custom_call.1']
    #allocation4 [shape = 's32[2]{0}', space=sflag, size = 0x8, scoped, tag = 'scoped memory for tpu_custom_call.1']
    #allocation5 [shape = 'u8[393216]{0}', space=vmem, size = 0x60000, scoped, tag = 'input window, operand 1, single buffered']
    #allocation6 [shape = 's32[1]{0}', space=sflag, size = 0x4, scoped, tag = 'scoped memory for tpu_custom_call.1']
    #allocation7 [shape = 'u8[786432]{0}', space=vmem, size = 0xc0000, scoped, tag = 'input window, operand 2, single buffered']
    #allocation8 [shape = 'u8[2048]{0}', space=vmem, size = 0x800, scoped, tag = 'input window, operand 3, single buffered']
    #allocation9 [shape = 's32[1]{0}', space=sflag, size = 0x4, scoped, tag = 'scoped memory for tpu_custom_call.1']
    #allocation10 [shape = 'u8[262144]{0}', space=vmem, size = 0x40000, scoped, tag = 'input window, operand 4, single buffered']
    #allocation11 [shape = 'u8[1024]{0}', space=vmem, size = 0x400, scoped, tag = 'input window, operand 5, single buffered']
    #allocation12 [shape = 's32[1]{0}', space=sflag, size = 0x4, scoped, tag = 'scoped memory for tpu_custom_call.1']
    #allocation13 [shape = 'u8[1048576]{0}', space=vmem, size = 0x100000, scoped, tag = 'output window, operand 0']
    %11 = vsyncpa [#allocation3], 0
    %s12 = scalar_lea.sflag [#allocation3], 1
    %13 = vsyncpa %s12, 0
    %14 = vsyncpa [#allocation6], 0
    %15 = vsyncpa [#allocation9], 0
    %16 = vsyncpa [#allocation12], 0
    %17 = vsyncpa [#allocation4], 0
    %s18 = scalar_lea.sflag [#allocation4], 1
    %19 = vsyncpa %s18, 0
    loop: start=0, step=1, limit=6
    $region2: #{tpu_custom_call.1} parent=1 // loop_pre_header
      _
    $region3: #{tpu_custom_call.1} parent=1 // loop_header
      %s21 = sphi 0, %s25
      %p22 = scmp.ge.s32.totalorder %s21, 6
      %s31 = sphi 0, %s33
      %s34 = sphi 0, %s31
      %s35 = sphi 0, %s34
      %s51 = sphi 0, %s35
      %s55 = sphi 0, %s55
      %s57 = sphi 0, %s55
      %s58 = sphi 0, %s57
      %s72 = sphi 0, %s58
      %s76 = sphi 0, %s76
      %s78 = sphi 0, %s76
      %s79 = sphi 0, %s78
      %s93 = sphi 0, %s79
      %s97 = sphi 0, %s97
      %s99 = sphi 0, %s97
      %s100 = sphi 0, %s99
      %s114 = sphi 0, %s100
      %s118 = sphi 0, %s118
      %s120 = sphi 0, %s118
      %s121 = sphi 0, %s120
      %s135 = sphi 0, %s121
      %s139 = sphi 0, %s139
      %s141 = sphi 0, %s139
      %s142 = sphi 0, %s141
      %s156 = sphi 0, %s142
      %s162 = sphi 0, %s164
      %s165 = sphi 0, %s162
      %s166 = sphi 0, %s165
      %s182 = sphi 0, %s166
    $region4: #{tpu_custom_call.1} parent=1 // loop_header_branch
      %24 = sbr.rel (%p22) target = $region8
    $region5: #{tpu_custom_call.1} parent=1 // loop_body
      %s26 = ssub.s32 %s21, 1
      %s27 = ssub.s32 %s21, 2
      %s28 = sadd.s32 %s21, 1
      %s29 = ssub.s32 %s21, %s28
      %p30 = scmp.eq.s32.totalorder %s29, 0
      %s32 = sadd.s32 %s31, 1
      %s33 = scalar_select %p30, %s31, %s32
      %p36 = pneg %p30
      %p37 = scmp.eq.s32.totalorder %s21, 3
      %p38 = por %p36, %p37
      %p39 = scmp.ne.s32.totalorder %s31, %s34
      %p40 = scmp.eq.s32.totalorder %s21, 0
      %p41 = por %p39, %p40
      %p42 = scmp.ne.s32.totalorder %s31, %s34
      %p43 = scmp.eq.s32.totalorder %s26, 3
      %p44 = por %p42, %p43
      %p45 = scmp.ne.s32.totalorder %s34, %s35
      %p46 = scmp.eq.s32.totalorder %s26, 0
      %p47 = por %p45, %p46
      %p48 = scmp.ne.s32.totalorder %s34, %s35
      %p49 = scmp.eq.s32.totalorder %s27, 3
      %p50 = por %p48, %p49
      %p52 = scmp.ne.s32.totalorder %s35, %s51
      %p53 = scmp.eq.s32.totalorder %s27, 0
      %p54 = por %p52, %p53
      %s56 = sadd.s32 %s55, 1
      %p59 = scmp.eq.s32.totalorder %s21, 3
      %p60 = scmp.ne.s32.totalorder %s55, %s57
      %p61 = scmp.eq.s32.totalorder %s21, 0
      %p62 = por %p60, %p61
      %p63 = scmp.ne.s32.totalorder %s55, %s57
      %p64 = scmp.eq.s32.totalorder %s26, 3
      %p65 = por %p63, %p64
      %p66 = scmp.ne.s32.totalorder %s57, %s58
      %p67 = scmp.eq.s32.totalorder %s26, 0
      %p68 = por %p66, %p67
      %p69 = scmp.ne.s32.totalorder %s57, %s58
      %p70 = scmp.eq.s32.totalorder %s27, 3
      %p71 = por %p69, %p70
      %p73 = scmp.ne.s32.totalorder %s58, %s72
      %p74 = scmp.eq.s32.totalorder %s27, 0
      %p75 = por %p73, %p74
      %s77 = sadd.s32 %s76, 1
      %p80 = scmp.eq.s32.totalorder %s21, 3
      %p81 = scmp.ne.s32.totalorder %s76, %s78
      %p82 = scmp.eq.s32.totalorder %s21, 0
      %p83 = por %p81, %p82
      %p84 = scmp.ne.s32.totalorder %s76, %s78
      %p85 = scmp.eq.s32.totalorder %s26, 3
      %p86 = por %p84, %p85
      %p87 = scmp.ne.s32.totalorder %s78, %s79
      %p88 = scmp.eq.s32.totalorder %s26, 0
      %p89 = por %p87, %p88
      %p90 = scmp.ne.s32.totalorder %s78, %s79
      %p91 = scmp.eq.s32.totalorder %s27, 3
      %p92 = por %p90, %p91
      %p94 = scmp.ne.s32.totalorder %s79, %s93
      %p95 = scmp.eq.s32.totalorder %s27, 0
      %p96 = por %p94, %p95
      %s98 = sadd.s32 %s97, 1
      %p101 = scmp.eq.s32.totalorder %s21, 3
      %p102 = scmp.ne.s32.totalorder %s97, %s99
      %p103 = scmp.eq.s32.totalorder %s21, 0
      %p104 = por %p102, %p103
      %p105 = scmp.ne.s32.totalorder %s97, %s99
      %p106 = scmp.eq.s32.totalorder %s26, 3
      %p107 = por %p105, %p106
      %p108 = scmp.ne.s32.totalorder %s99, %s100
      %p109 = scmp.eq.s32.totalorder %s26, 0
      %p110 = por %p108, %p109
      %p111 = scmp.ne.s32.totalorder %s99, %s100
      %p112 = scmp.eq.s32.totalorder %s27, 3
      %p113 = por %p111, %p112
      %p115 = scmp.ne.s32.totalorder %s100, %s114
      %p116 = scmp.eq.s32.totalorder %s27, 0
      %p117 = por %p115, %p116
      %s119 = sadd.s32 %s118, 1
      %p122 = scmp.eq.s32.totalorder %s21, 3
      %p123 = scmp.ne.s32.totalorder %s118, %s120
      %p124 = scmp.eq.s32.totalorder %s21, 0
      %p125 = por %p123, %p124
      %p126 = scmp.ne.s32.totalorder %s118, %s120
      %p127 = scmp.eq.s32.totalorder %s26, 3
      %p128 = por %p126, %p127
      %p129 = scmp.ne.s32.totalorder %s120, %s121
      %p130 = scmp.eq.s32.totalorder %s26, 0
      %p131 = por %p129, %p130
      %p132 = scmp.ne.s32.totalorder %s120, %s121
      %p133 = scmp.eq.s32.totalorder %s27, 3
      %p134 = por %p132, %p133
      %p136 = scmp.ne.s32.totalorder %s121, %s135
      %p137 = scmp.eq.s32.totalorder %s27, 0
      %p138 = por %p136, %p137
      %s140 = sadd.s32 %s139, 1
      %p143 = scmp.eq.s32.totalorder %s21, 3
      %p144 = scmp.ne.s32.totalorder %s139, %s141
      %p145 = scmp.eq.s32.totalorder %s21, 0
      %p146 = por %p144, %p145
      %p147 = scmp.ne.s32.totalorder %s139, %s141
      %p148 = scmp.eq.s32.totalorder %s26, 3
      %p149 = por %p147, %p148
      %p150 = scmp.ne.s32.totalorder %s141, %s142
      %p151 = scmp.eq.s32.totalorder %s26, 0
      %p152 = por %p150, %p151
      %p153 = scmp.ne.s32.totalorder %s141, %s142
      %p154 = scmp.eq.s32.totalorder %s27, 3
      %p155 = por %p153, %p154
      %p157 = scmp.ne.s32.totalorder %s142, %s156
      %p158 = scmp.eq.s32.totalorder %s27, 0
      %p159 = por %p157, %p158
      %s160 = ssub.s32 %s21, %s28
      %p161 = scmp.eq.s32.totalorder %s160, 0
      %s163 = sadd.s32 %s162, 1
      %s164 = scalar_select %p161, %s162, %s163
      %p167 = pneg %p161
      %p168 = scmp.eq.s32.totalorder %s21, 3
      %p169 = por %p167, %p168
      %p170 = scmp.ne.s32.totalorder %s162, %s165
      %p171 = scmp.eq.s32.totalorder %s21, 0
      %p172 = por %p170, %p171
      %p173 = scmp.ne.s32.totalorder %s162, %s165
      %p174 = scmp.eq.s32.totalorder %s26, 3
      %p175 = por %p173, %p174
      %p176 = scmp.ne.s32.totalorder %s165, %s166
      %p177 = scmp.eq.s32.totalorder %s26, 0
      %p178 = por %p176, %p177
      %p179 = scmp.ne.s32.totalorder %s165, %s166
      %p180 = scmp.eq.s32.totalorder %s27, 3
      %p181 = por %p179, %p180
      %p183 = scmp.ne.s32.totalorder %s166, %s182
      %p184 = scmp.eq.s32.totalorder %s27, 0
      %p185 = por %p183, %p184
      %p186 = scmp.le.s32.totalorder 1, %s21
      %p187 = scmp.lt.s32.totalorder %s21, 5
      %p188 = pnand %p186, %p187
      %p189 = pneg %p188
      // Predicated region
      $region9: #{tpu_custom_call.1} parent=5 // pred_check
        _
      $region10: #{tpu_custom_call.1} parent=5 // pred_check_branch
        %191 = sbr.rel (%p188) target = $region12
      $region11: #{tpu_custom_call.1} parent=5 // pred_region
        %s192 = ssub.s32 %s21, 1
        // Predicated region
        $region13: #{tpu_custom_call.1} parent=11 // pred_check
          %p193 = pneg %p68
        $region14: #{tpu_custom_call.1} parent=11 // pred_check_branch
          %195 = sbr.rel (%p193) target = $region16
        $region15: #{tpu_custom_call.1} parent=11 // pred_region
          %197 = vsyncadd [#allocation6], 0
          %s198 = sshll.u32 %s1, 4
          %s199 = int_to_ptr.hbm [resolvable:$true] %s198
          %s200 = sshll.u32 [#allocation5], 4
          %s201 = int_to_ptr.vmem [resolvable:$true] %s200
          %206 = dma.hbm_to_vmem [thread:$0]  %s199, 12288, %s201, [#allocation6], 384, 384, 24
        $region16: #{tpu_custom_call.1} parent=11 // pred_fallthru
          _
        // Predicated region
        $region17: #{tpu_custom_call.1} parent=11 // pred_check
          %p207 = pneg %p89
        $region18: #{tpu_custom_call.1} parent=11 // pred_check_branch
          %209 = sbr.rel (%p207) target = $region20
        $region19: #{tpu_custom_call.1} parent=11 // pred_region
          %211 = vsyncadd [#allocation6], 0
          %s212 = sshll.u32 %s2, 4
          %s213 = int_to_ptr.hbm [resolvable:$true] %s212
          %s214 = sshll.u32 [#allocation7], 4
          %s215 = int_to_ptr.vmem [resolvable:$true] %s214
          %220 = dma.hbm_to_vmem [thread:$0]  %s213, 24576, %s215, [#allocation6], 256, 256, 16
        $region20: #{tpu_custom_call.1} parent=11 // pred_fallthru
          _
        // Predicated region
        $region21: #{tpu_custom_call.1} parent=11 // pred_check
          %p221 = pneg %p110
        $region22: #{tpu_custom_call.1} parent=11 // pred_check_branch
          %223 = sbr.rel (%p221) target = $region24
        $region23: #{tpu_custom_call.1} parent=11 // pred_region
          %225 = vsyncadd [#allocation9], 0
          %s227 = sshll.u32 %s3, 4
          %s228 = int_to_ptr.hbm [resolvable:$true] %s227
          %s229 = sshll.u32 [#allocation8], 4
          %s230 = int_to_ptr.vmem [resolvable:$true] %s229
          %232 = dma.hbm_to_vmem [thread:$0]  %s228, 64, %s230, [#allocation9]
        $region24: #{tpu_custom_call.1} parent=11 // pred_fallthru
          _
        // Predicated region
        $region25: #{tpu_custom_call.1} parent=11 // pred_check
          %p233 = pneg %p131
        $region26: #{tpu_custom_call.1} parent=11 // pred_check_branch
          %235 = sbr.rel (%p233) target = $region28
        $region27: #{tpu_custom_call.1} parent=11 // pred_region
          %237 = vsyncadd [#allocation9], 0
          %s238 = sshll.u32 %s4, 4
          %s239 = int_to_ptr.hbm [resolvable:$true] %s238
          %s240 = sshll.u32 [#allocation10], 4
          %s241 = int_to_ptr.vmem [resolvable:$true] %s240
          %246 = dma.hbm_to_vmem [thread:$0]  %s239, 8192, %s241, [#allocation9], 128, 128, 8
        $region28: #{tpu_custom_call.1} parent=11 // pred_fallthru
          _
        // Predicated region
        $region29: #{tpu_custom_call.1} parent=11 // pred_check
          %p247 = pneg %p152
        $region30: #{tpu_custom_call.1} parent=11 // pred_check_branch
          %249 = sbr.rel (%p247) target = $region32
        $region31: #{tpu_custom_call.1} parent=11 // pred_region
          %251 = vsyncadd [#allocation12], 0
          %s253 = sshll.u32 %s5, 4
          %s254 = int_to_ptr.hbm [resolvable:$true] %s253
          %s255 = sshll.u32 [#allocation11], 4
          %s256 = int_to_ptr.vmem [resolvable:$true] %s255
          %258 = dma.hbm_to_vmem [thread:$0]  %s254, 32, %s256, [#allocation12]
        $region32: #{tpu_custom_call.1} parent=11 // pred_fallthru
          _
      $region12: #{tpu_custom_call.1} parent=5 // pred_fallthru
        _
      %p259 = scmp.lt.s32.totalorder %s21, 4
      // Predicated region
      $region33: #{tpu_custom_call.1} parent=5 // pred_check
        %p260 = pneg %p259
      $region34: #{tpu_custom_call.1} parent=5 // pred_check_branch
        %262 = sbr.rel (%p260) target = $region36
      $region35: #{tpu_custom_call.1} parent=5 // pred_region
        // Predicated region
        $region37: #{tpu_custom_call.1} parent=35 // pred_check
          %p263 = pneg %p41
        $region38: #{tpu_custom_call.1} parent=35 // pred_check_branch
          %265 = sbr.rel (%p263) target = $region40
        $region39: #{tpu_custom_call.1} parent=35 // pred_region
          %s266 = sand.u32 %s31, 1
          %s267 = scalar_lea.sflag [#allocation3], %s266
          %s268 = sand.u32 %s31, 1
          %s269 = smul.addr %s268, 1024
          %s270 = scalar_lea.vmem [#allocation2], %s269
          %s271 = smul.u32 64, %s21
          %273 = vsyncadd %s267, 0
          %s274 = smul.addr %s271, 2
          %s275 = smul.addr %s274, 8
          %s276 = scalar_lea.hbm %s0, %s275
          %s277 = sshll.u32 %s276, 4
          %s278 = int_to_ptr.hbm [resolvable:$true] %s277
          %s279 = sshll.u32 %s270, 4
          %s280 = int_to_ptr.vmem [resolvable:$true] %s279
          %285 = dma.hbm_to_vmem [thread:$0]  %s278, 16384, %s280, %s267, 256, 256, 16
        $region40: #{tpu_custom_call.1} parent=35 // pred_fallthru
          _
      $region36: #{tpu_custom_call.1} parent=5 // pred_fallthru
        _
      %p286 = scmp.le.s32.totalorder 1, %s21
      %p287 = scmp.lt.s32.totalorder %s21, 5
      %p288 = pnand %p286, %p287
      %p289 = pneg %p288
      // Predicated region
      $region41: #{tpu_custom_call.1} parent=5 // pred_check
        _
      $region42: #{tpu_custom_call.1} parent=5 // pred_check_branch
        %291 = sbr.rel (%p288) target = $region44
      $region43: #{tpu_custom_call.1} parent=5 // pred_region
        %s292 = ssub.s32 %s21, 1
        %s293 = sand.u32 %s34, 1
        %s294 = scalar_lea.sflag [#allocation3], %s293
        %s295 = sand.u32 %s34, 1
        %s296 = smul.addr %s295, 1024
        %s297 = scalar_lea.vmem [#allocation2], %s296
        // Predicated region
        $region45: #{tpu_custom_call.1} parent=43 // pred_check
          %p298 = pneg %p47
        $region46: #{tpu_custom_call.1} parent=43 // pred_check_branch
          %300 = sbr.rel (%p298) target = $region48
        $region47: #{tpu_custom_call.1} parent=43 // pred_region
          %302 = dma.done %s294, 16384
        $region48: #{tpu_custom_call.1} parent=43 // pred_fallthru
          _
        // Predicated region
        $region49: #{tpu_custom_call.1} parent=43 // pred_check
          %p303 = pneg %p68
        $region50: #{tpu_custom_call.1} parent=43 // pred_check_branch
          %305 = sbr.rel (%p303) target = $region52
        $region51: #{tpu_custom_call.1} parent=43 // pred_region
          %307 = dma.done [#allocation6], 12288
        $region52: #{tpu_custom_call.1} parent=43 // pred_fallthru
          _
        // Predicated region
        $region53: #{tpu_custom_call.1} parent=43 // pred_check
          %p308 = pneg %p89
        $region54: #{tpu_custom_call.1} parent=43 // pred_check_branch
          %310 = sbr.rel (%p308) target = $region56
        $region55: #{tpu_custom_call.1} parent=43 // pred_region
          %312 = dma.done [#allocation6], 24576
        $region56: #{tpu_custom_call.1} parent=43 // pred_fallthru
          _
        // Predicated region
        $region57: #{tpu_custom_call.1} parent=43 // pred_check
          %p313 = pneg %p110
        $region58: #{tpu_custom_call.1} parent=43 // pred_check_branch
          %315 = sbr.rel (%p313) target = $region60
        $region59: #{tpu_custom_call.1} parent=43 // pred_region
          %317 = dma.done [#allocation9], 64
        $region60: #{tpu_custom_call.1} parent=43 // pred_fallthru
          _
        // Predicated region
        $region61: #{tpu_custom_call.1} parent=43 // pred_check
          %p318 = pneg %p131
        $region62: #{tpu_custom_call.1} parent=43 // pred_check_branch
          %320 = sbr.rel (%p318) target = $region64
        $region63: #{tpu_custom_call.1} parent=43 // pred_region
          %322 = dma.done [#allocation9], 8192
        $region64: #{tpu_custom_call.1} parent=43 // pred_fallthru
          _
        // Predicated region
        $region65: #{tpu_custom_call.1} parent=43 // pred_check
          %p323 = pneg %p152
        $region66: #{tpu_custom_call.1} parent=43 // pred_check_branch
          %325 = sbr.rel (%p323) target = $region68
        $region67: #{tpu_custom_call.1} parent=43 // pred_region
          %327 = dma.done [#allocation12], 32
        $region68: #{tpu_custom_call.1} parent=43 // pred_fallthru
          _
        %s328 = sand.u32 %s34, 1
        %s329 = scalar_lea.sflag [#allocation3], %s328
        %s330 = sand.u32 %s34, 1
        %s331 = smul.addr %s330, 1024
        %s332 = scalar_lea.vmem [#allocation2], %s331
        %p333 = pneg %p47
        %p334 = pneg %p44
        %p335 = pneg %p68
        %p336 = pneg %p65
        %p337 = pneg %p89
        %p338 = pneg %p86
        %p339 = pneg %p110
        %p340 = pneg %p107
        %p341 = pneg %p131
        %p342 = pneg %p128
        %p343 = pneg %p152
        %p344 = pneg %p149
        %p345 = pneg %p178
        %p346 = pneg %p175
        %s347 = sand.u32 %s165, 1
        %s348 = scalar_lea.sflag [#allocation4], %s347
        %s349 = sand.u32 %s165, 1
        %s350 = smul.addr %s349, 1024
        %s351 = scalar_lea.vmem [#allocation13], %s350
        %s352 = smul.u32 64, %s26
        %s353 = smul.u32 64, %s26
        %v354 = vld [vmem:[%s297] sm:$0xff]
        %v355 = vld [vmem:[%s297 + $0x8] sm:$0xff]
        %v356 = vld [vmem:[%s297 + $0x10] sm:$0xff]
        %v357 = vld [vmem:[%s297 + $0x18] sm:$0xff]
        %v358 = vld [vmem:[%s297 + $0x20] sm:$0xff]
        %v359 = vld [vmem:[%s297 + $0x28] sm:$0xff]
        %v360 = vld [vmem:[%s297 + $0x30] sm:$0xff]
        %v361 = vld [vmem:[%s297 + $0x38] sm:$0xff]
        %v362 = vld [vmem:[%s297 + $0x40] sm:$0xff]
        %v363 = vld [vmem:[%s297 + $0x48] sm:$0xff]
        %v364 = vld [vmem:[%s297 + $0x50] sm:$0xff]
        %v365 = vld [vmem:[%s297 + $0x58] sm:$0xff]
        %v366 = vld [vmem:[%s297 + $0x60] sm:$0xff]
        %v367 = vld [vmem:[%s297 + $0x68] sm:$0xff]
        %v368 = vld [vmem:[%s297 + $0x70] sm:$0xff]
        %v369 = vld [vmem:[%s297 + $0x78] sm:$0xff]
        %v370 = vld [vmem:[%s297 + $0x80] sm:$0xff]
        %v371 = vld [vmem:[%s297 + $0x88] sm:$0xff]
        %v372 = vld [vmem:[%s297 + $0x90] sm:$0xff]
        %v373 = vld [vmem:[%s297 + $0x98] sm:$0xff]
        %v374 = vld [vmem:[%s297 + $0xa0] sm:$0xff]
        %v375 = vld [vmem:[%s297 + $0xa8] sm:$0xff]
        %v376 = vld [vmem:[%s297 + $0xb0] sm:$0xff]
        %v377 = vld [vmem:[%s297 + $0xb8] sm:$0xff]
        %v378 = vld [vmem:[%s297 + $0xc0] sm:$0xff]
        %v379 = vld [vmem:[%s297 + $0xc8] sm:$0xff]
        %v380 = vld [vmem:[%s297 + $0xd0] sm:$0xff]
        %v381 = vld [vmem:[%s297 + $0xd8] sm:$0xff]
        %v382 = vld [vmem:[%s297 + $0xe0] sm:$0xff]
        %v383 = vld [vmem:[%s297 + $0xe8] sm:$0xff]
        %v384 = vld [vmem:[%s297 + $0xf0] sm:$0xff]
        %v385 = vld [vmem:[%s297 + $0xf8] sm:$0xff]
        %v386 = vld [vmem:[%s297 + $0x100] sm:$0xff]
        %v387 = vld [vmem:[%s297 + $0x108] sm:$0xff]
        %v388 = vld [vmem:[%s297 + $0x110] sm:$0xff]
        %v389 = vld [vmem:[%s297 + $0x118] sm:$0xff]
        %v390 = vld [vmem:[%s297 + $0x120] sm:$0xff]
        %v391 = vld [vmem:[%s297 + $0x128] sm:$0xff]
        %v392 = vld [vmem:[%s297 + $0x130] sm:$0xff]
        %v393 = vld [vmem:[%s297 + $0x138] sm:$0xff]
        %v394 = vld [vmem:[%s297 + $0x140] sm:$0xff]
        %v395 = vld [vmem:[%s297 + $0x148] sm:$0xff]
        %v396 = vld [vmem:[%s297 + $0x150] sm:$0xff]
        %v397 = vld [vmem:[%s297 + $0x158] sm:$0xff]
        %v398 = vld [vmem:[%s297 + $0x160] sm:$0xff]
        %v399 = vld [vmem:[%s297 + $0x168] sm:$0xff]
        %v400 = vld [vmem:[%s297 + $0x170] sm:$0xff]
        %v401 = vld [vmem:[%s297 + $0x178] sm:$0xff]
        %v402 = vld [vmem:[%s297 + $0x180] sm:$0xff]
        %v403 = vld [vmem:[%s297 + $0x188] sm:$0xff]
        %v404 = vld [vmem:[%s297 + $0x190] sm:$0xff]
        %v405 = vld [vmem:[%s297 + $0x198] sm:$0xff]
        %v406 = vld [vmem:[%s297 + $0x1a0] sm:$0xff]
        %v407 = vld [vmem:[%s297 + $0x1a8] sm:$0xff]
        %v408 = vld [vmem:[%s297 + $0x1b0] sm:$0xff]
        %v409 = vld [vmem:[%s297 + $0x1b8] sm:$0xff]
        %v410 = vld [vmem:[%s297 + $0x1c0] sm:$0xff]
        %v411 = vld [vmem:[%s297 + $0x1c8] sm:$0xff]
        %v412 = vld [vmem:[%s297 + $0x1d0] sm:$0xff]
        %v413 = vld [vmem:[%s297 + $0x1d8] sm:$0xff]
        %v414 = vld [vmem:[%s297 + $0x1e0] sm:$0xff]
        %v415 = vld [vmem:[%s297 + $0x1e8] sm:$0xff]
        %v416 = vld [vmem:[%s297 + $0x1f0] sm:$0xff]
        %v417 = vld [vmem:[%s297 + $0x1f8] sm:$0xff]
        %v418 = vld [vmem:[%s297 + $0x200] sm:$0xff]
        %v419 = vld [vmem:[%s297 + $0x208] sm:$0xff]
        %v420 = vld [vmem:[%s297 + $0x210] sm:$0xff]
        %v421 = vld [vmem:[%s297 + $0x218] sm:$0xff]
        %v422 = vld [vmem:[%s297 + $0x220] sm:$0xff]
        %v423 = vld [vmem:[%s297 + $0x228] sm:$0xff]
        %v424 = vld [vmem:[%s297 + $0x230] sm:$0xff]
        %v425 = vld [vmem:[%s297 + $0x238] sm:$0xff]
        %v426 = vld [vmem:[%s297 + $0x240] sm:$0xff]
        %v427 = vld [vmem:[%s297 + $0x248] sm:$0xff]
        %v428 = vld [vmem:[%s297 + $0x250] sm:$0xff]
        %v429 = vld [vmem:[%s297 + $0x258] sm:$0xff]
        %v430 = vld [vmem:[%s297 + $0x260] sm:$0xff]
        %v431 = vld [vmem:[%s297 + $0x268] sm:$0xff]
        %v432 = vld [vmem:[%s297 + $0x270] sm:$0xff]
        %v433 = vld [vmem:[%s297 + $0x278] sm:$0xff]
        %v434 = vld [vmem:[%s297 + $0x280] sm:$0xff]
        %v435 = vld [vmem:[%s297 + $0x288] sm:$0xff]
        %v436 = vld [vmem:[%s297 + $0x290] sm:$0xff]
        %v437 = vld [vmem:[%s297 + $0x298] sm:$0xff]
        %v438 = vld [vmem:[%s297 + $0x2a0] sm:$0xff]
        %v439 = vld [vmem:[%s297 + $0x2a8] sm:$0xff]
        %v440 = vld [vmem:[%s297 + $0x2b0] sm:$0xff]
        %v441 = vld [vmem:[%s297 + $0x2b8] sm:$0xff]
        %v442 = vld [vmem:[%s297 + $0x2c0] sm:$0xff]
        %v443 = vld [vmem:[%s297 + $0x2c8] sm:$0xff]
        %v444 = vld [vmem:[%s297 + $0x2d0] sm:$0xff]
        %v445 = vld [vmem:[%s297 + $0x2d8] sm:$0xff]
        %v446 = vld [vmem:[%s297 + $0x2e0] sm:$0xff]
        %v447 = vld [vmem:[%s297 + $0x2e8] sm:$0xff]
        %v448 = vld [vmem:[%s297 + $0x2f0] sm:$0xff]
        %v449 = vld [vmem:[%s297 + $0x2f8] sm:$0xff]
        %v450 = vld [vmem:[%s297 + $0x300] sm:$0xff]
        %v451 = vld [vmem:[%s297 + $0x308] sm:$0xff]
        %v452 = vld [vmem:[%s297 + $0x310] sm:$0xff]
        %v453 = vld [vmem:[%s297 + $0x318] sm:$0xff]
        %v454 = vld [vmem:[%s297 + $0x320] sm:$0xff]
        %v455 = vld [vmem:[%s297 + $0x328] sm:$0xff]
        %v456 = vld [vmem:[%s297 + $0x330] sm:$0xff]
        %v457 = vld [vmem:[%s297 + $0x338] sm:$0xff]
        %v458 = vld [vmem:[%s297 + $0x340] sm:$0xff]
        %v459 = vld [vmem:[%s297 + $0x348] sm:$0xff]
        %v460 = vld [vmem:[%s297 + $0x350] sm:$0xff]
        %v461 = vld [vmem:[%s297 + $0x358] sm:$0xff]
        %v462 = vld [vmem:[%s297 + $0x360] sm:$0xff]
        %v463 = vld [vmem:[%s297 + $0x368] sm:$0xff]
        %v464 = vld [vmem:[%s297 + $0x370] sm:$0xff]
        %v465 = vld [vmem:[%s297 + $0x378] sm:$0xff]
        %v466 = vld [vmem:[%s297 + $0x380] sm:$0xff]
        %v467 = vld [vmem:[%s297 + $0x388] sm:$0xff]
        %v468 = vld [vmem:[%s297 + $0x390] sm:$0xff]
        %v469 = vld [vmem:[%s297 + $0x398] sm:$0xff]
        %v470 = vld [vmem:[%s297 + $0x3a0] sm:$0xff]
        %v471 = vld [vmem:[%s297 + $0x3a8] sm:$0xff]
        %v472 = vld [vmem:[%s297 + $0x3b0] sm:$0xff]
        %v473 = vld [vmem:[%s297 + $0x3b8] sm:$0xff]
        %v474 = vld [vmem:[%s297 + $0x3c0] sm:$0xff]
        %v475 = vld [vmem:[%s297 + $0x3c8] sm:$0xff]
        %v476 = vld [vmem:[%s297 + $0x3d0] sm:$0xff]
        %v477 = vld [vmem:[%s297 + $0x3d8] sm:$0xff]
        %v478 = vld [vmem:[%s297 + $0x3e0] sm:$0xff]
        %v479 = vld [vmem:[%s297 + $0x3e8] sm:$0xff]
        %v480 = vld [vmem:[%s297 + $0x3f0] sm:$0xff]
        %v481 = vld [vmem:[%s297 + $0x3f8] sm:$0xff]
        %v482 = vpack.c.bf16 %v356, %v354
        %v483 = vpack.c.bf16 %v357, %v355
        %v484 = vpack.c.bf16 %v360, %v358
        %v485 = vpack.c.bf16 %v361, %v359
        %v486 = vpack.c.bf16 %v364, %v362
        %v487 = vpack.c.bf16 %v365, %v363
        %v488 = vpack.c.bf16 %v368, %v366
        %v489 = vpack.c.bf16 %v369, %v367
        %v490 = vpack.c.bf16 %v372, %v370
        %v491 = vpack.c.bf16 %v373, %v371
        %v492 = vpack.c.bf16 %v376, %v374
        %v493 = vpack.c.bf16 %v377, %v375
        %v494 = vpack.c.bf16 %v380, %v378
        %v495 = vpack.c.bf16 %v381, %v379
        %v496 = vpack.c.bf16 %v384, %v382
        %v497 = vpack.c.bf16 %v385, %v383
        %v498 = vpack.c.bf16 %v388, %v386
        %v499 = vpack.c.bf16 %v389, %v387
        %v500 = vpack.c.bf16 %v392, %v390
        %v501 = vpack.c.bf16 %v393, %v391
        %v502 = vpack.c.bf16 %v396, %v394
        %v503 = vpack.c.bf16 %v397, %v395
        %v504 = vpack.c.bf16 %v400, %v398
        %v505 = vpack.c.bf16 %v401, %v399
        %v506 = vpack.c.bf16 %v404, %v402
        %v507 = vpack.c.bf16 %v405, %v403
        %v508 = vpack.c.bf16 %v408, %v406
        %v509 = vpack.c.bf16 %v409, %v407
        %v510 = vpack.c.bf16 %v412, %v410
        %v511 = vpack.c.bf16 %v413, %v411
        %v512 = vpack.c.bf16 %v416, %v414
        %v513 = vpack.c.bf16 %v417, %v415
        %v514 = vpack.c.bf16 %v420, %v418
        %v515 = vpack.c.bf16 %v421, %v419
        %v516 = vpack.c.bf16 %v424, %v422
        %v517 = vpack.c.bf16 %v425, %v423
        %v518 = vpack.c.bf16 %v428, %v426
        %v519 = vpack.c.bf16 %v429, %v427
        %v520 = vpack.c.bf16 %v432, %v430
        %v521 = vpack.c.bf16 %v433, %v431
        %v522 = vpack.c.bf16 %v436, %v434
        %v523 = vpack.c.bf16 %v437, %v435
        %v524 = vpack.c.bf16 %v440, %v438
        %v525 = vpack.c.bf16 %v441, %v439
        %v526 = vpack.c.bf16 %v444, %v442
        %v527 = vpack.c.bf16 %v445, %v443
        %v528 = vpack.c.bf16 %v448, %v446
        %v529 = vpack.c.bf16 %v449, %v447
        %v530 = vpack.c.bf16 %v452, %v450
        %v531 = vpack.c.bf16 %v453, %v451
        %v532 = vpack.c.bf16 %v456, %v454
        %v533 = vpack.c.bf16 %v457, %v455
        %v534 = vpack.c.bf16 %v460, %v458
        %v535 = vpack.c.bf16 %v461, %v459
        %v536 = vpack.c.bf16 %v464, %v462
        %v537 = vpack.c.bf16 %v465, %v463
        %v538 = vpack.c.bf16 %v468, %v466
        %v539 = vpack.c.bf16 %v469, %v467
        %v540 = vpack.c.bf16 %v472, %v470
        %v541 = vpack.c.bf16 %v473, %v471
        %v542 = vpack.c.bf16 %v476, %v474
        %v543 = vpack.c.bf16 %v477, %v475
        %v544 = vpack.c.bf16 %v480, %v478
        %v545 = vpack.c.bf16 %v481, %v479
        %v546 = vld [vmem:[#allocation5] sm:$0xff]
        %v547 = vld [vmem:[#allocation5 + $0x8] sm:$0xff]
        %v548 = vld [vmem:[#allocation5 + $0x10] sm:$0xff]
        %v549 = vld [vmem:[#allocation5 + $0x18] sm:$0xff]
        %v550 = vld [vmem:[#allocation5 + $0x20] sm:$0xff]
        %v551 = vld [vmem:[#allocation5 + $0x28] sm:$0xff]
        %v552 = vld [vmem:[#allocation5 + $0x30] sm:$0xff]
        %v553 = vld [vmem:[#allocation5 + $0x38] sm:$0xff]
        %v554 = vld [vmem:[#allocation5 + $0x40] sm:$0xff]
        %v555 = vld [vmem:[#allocation5 + $0x48] sm:$0xff]
        %v556 = vld [vmem:[#allocation5 + $0x50] sm:$0xff]
        %v557 = vld [vmem:[#allocation5 + $0x58] sm:$0xff]
        %v558 = vld [vmem:[#allocation5 + $0x60] sm:$0xff]
        %v559 = vld [vmem:[#allocation5 + $0x68] sm:$0xff]
        %v560 = vld [vmem:[#allocation5 + $0x70] sm:$0xff]
        %v561 = vld [vmem:[#allocation5 + $0x78] sm:$0xff]
        %v562 = vld [vmem:[#allocation5 + $0x80] sm:$0xff]
        %v563 = vld [vmem:[#allocation5 + $0x88] sm:$0xff]
        %v564 = vld [vmem:[#allocation5 + $0x90] sm:$0xff]
        %v565 = vld [vmem:[#allocation5 + $0x98] sm:$0xff]
        %v566 = vld [vmem:[#allocation5 + $0xa0] sm:$0xff]
        %v567 = vld [vmem:[#allocation5 + $0xa8] sm:$0xff]
        %v568 = vld [vmem:[#allocation5 + $0xb0] sm:$0xff]
        %v569 = vld [vmem:[#allocation5 + $0xb8] sm:$0xff]
        %v570 = vld [vmem:[#allocation5 + $0xc0] sm:$0xff]
        %v571 = vld [vmem:[#allocation5 + $0xc8] sm:$0xff]
        %v572 = vld [vmem:[#allocation5 + $0xd0] sm:$0xff]
        %v573 = vld [vmem:[#allocation5 + $0xd8] sm:$0xff]
        %v574 = vld [vmem:[#allocation5 + $0xe0] sm:$0xff]
        %v575 = vld [vmem:[#allocation5 + $0xe8] sm:$0xff]
        %v576 = vld [vmem:[#allocation5 + $0xf0] sm:$0xff]
        %v577 = vld [vmem:[#allocation5 + $0xf8] sm:$0xff]
        %v578 = vld [vmem:[#allocation5 + $0x100] sm:$0xff]
        %v579 = vld [vmem:[#allocation5 + $0x108] sm:$0xff]
        %v580 = vld [vmem:[#allocation5 + $0x110] sm:$0xff]
        %v581 = vld [vmem:[#allocation5 + $0x118] sm:$0xff]
        %v582 = vld [vmem:[#allocation5 + $0x120] sm:$0xff]
        %v583 = vld [vmem:[#allocation5 + $0x128] sm:$0xff]
        %v584 = vld [vmem:[#allocation5 + $0x130] sm:$0xff]
        %v585 = vld [vmem:[#allocation5 + $0x138] sm:$0xff]
        %v586 = vld [vmem:[#allocation5 + $0x140] sm:$0xff]
        %v587 = vld [vmem:[#allocation5 + $0x148] sm:$0xff]
        %v588 = vld [vmem:[#allocation5 + $0x150] sm:$0xff]
        %v589 = vld [vmem:[#allocation5 + $0x158] sm:$0xff]
        %v590 = vld [vmem:[#allocation5 + $0x160] sm:$0xff]
        %v591 = vld [vmem:[#allocation5 + $0x168] sm:$0xff]
        %v592 = vld [vmem:[#allocation5 + $0x170] sm:$0xff]
        %v593 = vld [vmem:[#allocation5 + $0x178] sm:$0xff]
        %v594 = vld [vmem:[#allocation5 + $0x180] sm:$0xff]
        %v595 = vld [vmem:[#allocation5 + $0x188] sm:$0xff]
        %v596 = vld [vmem:[#allocation5 + $0x190] sm:$0xff]
        %v597 = vld [vmem:[#allocation5 + $0x198] sm:$0xff]
        %v598 = vld [vmem:[#allocation5 + $0x1a0] sm:$0xff]
        %v599 = vld [vmem:[#allocation5 + $0x1a8] sm:$0xff]
        %v600 = vld [vmem:[#allocation5 + $0x1b0] sm:$0xff]
        %v601 = vld [vmem:[#allocation5 + $0x1b8] sm:$0xff]
        %v602 = vld [vmem:[#allocation5 + $0x1c0] sm:$0xff]
        %v603 = vld [vmem:[#allocation5 + $0x1c8] sm:$0xff]
        %v604 = vld [vmem:[#allocation5 + $0x1d0] sm:$0xff]
        %v605 = vld [vmem:[#allocation5 + $0x1d8] sm:$0xff]
        %v606 = vld [vmem:[#allocation5 + $0x1e0] sm:$0xff]
        %v607 = vld [vmem:[#allocation5 + $0x1e8] sm:$0xff]
        %v608 = vld [vmem:[#allocation5 + $0x1f0] sm:$0xff]
        %v609 = vld [vmem:[#allocation5 + $0x1f8] sm:$0xff]
        %v610 = vld [vmem:[#allocation5 + $0x200] sm:$0xff]
        %v611 = vld [vmem:[#allocation5 + $0x208] sm:$0xff]
        %v612 = vld [vmem:[#allocation5 + $0x210] sm:$0xff]
        %v613 = vld [vmem:[#allocation5 + $0x218] sm:$0xff]
        %v614 = vld [vmem:[#allocation5 + $0x220] sm:$0xff]
        %v615 = vld [vmem:[#allocation5 + $0x228] sm:$0xff]
        %v616 = vld [vmem:[#allocation5 + $0x230] sm:$0xff]
        %v617 = vld [vmem:[#allocation5 + $0x238] sm:$0xff]
        %v618 = vld [vmem:[#allocation5 + $0x240] sm:$0xff]
        %v619 = vld [vmem:[#allocation5 + $0x248] sm:$0xff]
        %v620 = vld [vmem:[#allocation5 + $0x250] sm:$0xff]
        %v621 = vld [vmem:[#allocation5 + $0x258] sm:$0xff]
        %v622 = vld [vmem:[#allocation5 + $0x260] sm:$0xff]
        %v623 = vld [vmem:[#allocation5 + $0x268] sm:$0xff]
        %v624 = vld [vmem:[#allocation5 + $0x270] sm:$0xff]
        %v625 = vld [vmem:[#allocation5 + $0x278] sm:$0xff]
        %v626 = vld [vmem:[#allocation5 + $0x280] sm:$0xff]
        %v627 = vld [vmem:[#allocation5 + $0x288] sm:$0xff]
        %v628 = vld [vmem:[#allocation5 + $0x290] sm:$0xff]
        %v629 = vld [vmem:[#allocation5 + $0x298] sm:$0xff]
        %v630 = vld [vmem:[#allocation5 + $0x2a0] sm:$0xff]
        %v631 = vld [vmem:[#allocation5 + $0x2a8] sm:$0xff]
        %v632 = vld [vmem:[#allocation5 + $0x2b0] sm:$0xff]
        %v633 = vld [vmem:[#allocation5 + $0x2b8] sm:$0xff]
        %v634 = vld [vmem:[#allocation5 + $0x2c0] sm:$0xff]
        %v635 = vld [vmem:[#allocation5 + $0x2c8] sm:$0xff]
        %v636 = vld [vmem:[#allocation5 + $0x2d0] sm:$0xff]
        %v637 = vld [vmem:[#allocation5 + $0x2d8] sm:$0xff]
        %v638 = vld [vmem:[#allocation5 + $0x2e0] sm:$0xff]
        %v639 = vld [vmem:[#allocation5 + $0x2e8] sm:$0xff]
        %v640 = vld [vmem:[#allocation5 + $0x2f0] sm:$0xff]
        %v641 = vld [vmem:[#allocation5 + $0x2f8] sm:$0xff]
        %v738 = vunpack.c.l.b16 %v546
        %v739 = vunpack.c.h.b16 %v546
        %v740 = vunpack.c.l.b16 %v547
        %v741 = vunpack.c.h.b16 %v547
        %v742 = vunpack.c.l.b16 %v548
        %v743 = vunpack.c.h.b16 %v548
        %v744 = vunpack.c.l.b16 %v549
        %v745 = vunpack.c.h.b16 %v549
        %v746 = vunpack.c.l.b16 %v550
        %v747 = vunpack.c.h.b16 %v550
        %v748 = vunpack.c.l.b16 %v551
        %v749 = vunpack.c.h.b16 %v551
        %v750 = vunpack.c.l.b16 %v552
        %v751 = vunpack.c.h.b16 %v552
        %v752 = vunpack.c.l.b16 %v553
        %v753 = vunpack.c.h.b16 %v553
        %v754 = vunpack.c.l.b16 %v554
        %v755 = vunpack.c.h.b16 %v554
        %v756 = vunpack.c.l.b16 %v555
        %v757 = vunpack.c.h.b16 %v555
        %v758 = vunpack.c.l.b16 %v556
        %v759 = vunpack.c.h.b16 %v556
        %v760 = vunpack.c.l.b16 %v557
        %v761 = vunpack.c.h.b16 %v557
        %v762 = vunpack.c.l.b16 %v558
        %v763 = vunpack.c.h.b16 %v558
        %v764 = vunpack.c.l.b16 %v559
        %v765 = vunpack.c.h.b16 %v559
        %v766 = vunpack.c.l.b16 %v560
        %v767 = vunpack.c.h.b16 %v560
        %v768 = vunpack.c.l.b16 %v561
        %v769 = vunpack.c.h.b16 %v561
        %v770 = vunpack.c.l.b16 %v562
        %v771 = vunpack.c.h.b16 %v562
        %v772 = vunpack.c.l.b16 %v563
        %v773 = vunpack.c.h.b16 %v563
        %v774 = vunpack.c.l.b16 %v564
        %v775 = vunpack.c.h.b16 %v564
        %v776 = vunpack.c.l.b16 %v565
        %v777 = vunpack.c.h.b16 %v565
        %v778 = vunpack.c.l.b16 %v566
        %v779 = vunpack.c.h.b16 %v566
        %v780 = vunpack.c.l.b16 %v567
        %v781 = vunpack.c.h.b16 %v567
        %v782 = vunpack.c.l.b16 %v568
        %v783 = vunpack.c.h.b16 %v568
        %v784 = vunpack.c.l.b16 %v569
        %v785 = vunpack.c.h.b16 %v569
        %v786 = vunpack.c.l.b16 %v570
        %v787 = vunpack.c.h.b16 %v570
        %v788 = vunpack.c.l.b16 %v571
        %v789 = vunpack.c.h.b16 %v571
        %v790 = vunpack.c.l.b16 %v572
        %v791 = vunpack.c.h.b16 %v572
        %v792 = vunpack.c.l.b16 %v573
        %v793 = vunpack.c.h.b16 %v573
        %v794 = vunpack.c.l.b16 %v574
        %v795 = vunpack.c.h.b16 %v574
        %v796 = vunpack.c.l.b16 %v575
        %v797 = vunpack.c.h.b16 %v575
        %v798 = vunpack.c.l.b16 %v576
        %v799 = vunpack.c.h.b16 %v576
        %v800 = vunpack.c.l.b16 %v577
        %v801 = vunpack.c.h.b16 %v577
        %v802 = vunpack.c.l.b16 %v578
        %v803 = vunpack.c.h.b16 %v578
        %v804 = vunpack.c.l.b16 %v579
        %v805 = vunpack.c.h.b16 %v579
        %v806 = vunpack.c.l.b16 %v580
        %v807 = vunpack.c.h.b16 %v580
        %v808 = vunpack.c.l.b16 %v581
        %v809 = vunpack.c.h.b16 %v581
        %v810 = vunpack.c.l.b16 %v582
        %v811 = vunpack.c.h.b16 %v582
        %v812 = vunpack.c.l.b16 %v583
        %v813 = vunpack.c.h.b16 %v583
        %v814 = vunpack.c.l.b16 %v584
        %v815 = vunpack.c.h.b16 %v584
        %v816 = vunpack.c.l.b16 %v585
        %v817 = vunpack.c.h.b16 %v585
        %v818 = vunpack.c.l.b16 %v586
        %v819 = vunpack.c.h.b16 %v586
        %v820 = vunpack.c.l.b16 %v587
        %v821 = vunpack.c.h.b16 %v587
        %v822 = vunpack.c.l.b16 %v588
        %v823 = vunpack.c.h.b16 %v588
        %v824 = vunpack.c.l.b16 %v589
        %v825 = vunpack.c.h.b16 %v589
        %v826 = vunpack.c.l.b16 %v590
        %v827 = vunpack.c.h.b16 %v590
        %v828 = vunpack.c.l.b16 %v591
        %v829 = vunpack.c.h.b16 %v591
        %v830 = vunpack.c.l.b16 %v592
        %v831 = vunpack.c.h.b16 %v592
        %v832 = vunpack.c.l.b16 %v593
        %v833 = vunpack.c.h.b16 %v593
        %v834 = vunpack.c.l.b16 %v594
        %v835 = vunpack.c.h.b16 %v594
        %v836 = vunpack.c.l.b16 %v595
        %v837 = vunpack.c.h.b16 %v595
        %v838 = vunpack.c.l.b16 %v596
        %v839 = vunpack.c.h.b16 %v596
        %v840 = vunpack.c.l.b16 %v597
        %v841 = vunpack.c.h.b16 %v597
        %v842 = vunpack.c.l.b16 %v598
        %v843 = vunpack.c.h.b16 %v598
        %v844 = vunpack.c.l.b16 %v599
        %v845 = vunpack.c.h.b16 %v599
        %v846 = vunpack.c.l.b16 %v600
        %v847 = vunpack.c.h.b16 %v600
        %v848 = vunpack.c.l.b16 %v601
        %v849 = vunpack.c.h.b16 %v601
        %v850 = vunpack.c.l.b16 %v602
        %v851 = vunpack.c.h.b16 %v602
        %v852 = vunpack.c.l.b16 %v603
        %v853 = vunpack.c.h.b16 %v603
        %v854 = vunpack.c.l.b16 %v604
        %v855 = vunpack.c.h.b16 %v604
        %v856 = vunpack.c.l.b16 %v605
        %v857 = vunpack.c.h.b16 %v605
        %v858 = vunpack.c.l.b16 %v606
        %v859 = vunpack.c.h.b16 %v606
        %v860 = vunpack.c.l.b16 %v607
        %v861 = vunpack.c.h.b16 %v607
        %v862 = vunpack.c.l.b16 %v608
        %v863 = vunpack.c.h.b16 %v608
        %v864 = vunpack.c.l.b16 %v609
        %v865 = vunpack.c.h.b16 %v609
        %v866 = vunpack.c.l.b16 %v610
        %v867 = vunpack.c.h.b16 %v610
        %v868 = vunpack.c.l.b16 %v611
        %v869 = vunpack.c.h.b16 %v611
        %v870 = vunpack.c.l.b16 %v612
        %v871 = vunpack.c.h.b16 %v612
        %v872 = vunpack.c.l.b16 %v613
        %v873 = vunpack.c.h.b16 %v613
        %v874 = vunpack.c.l.b16 %v614
        %v875 = vunpack.c.h.b16 %v614
        %v876 = vunpack.c.l.b16 %v615
        %v877 = vunpack.c.h.b16 %v615
        %v878 = vunpack.c.l.b16 %v616
        %v879 = vunpack.c.h.b16 %v616
        %v880 = vunpack.c.l.b16 %v617
        %v881 = vunpack.c.h.b16 %v617
        %v882 = vunpack.c.l.b16 %v618
        %v883 = vunpack.c.h.b16 %v618
        %v884 = vunpack.c.l.b16 %v619
        %v885 = vunpack.c.h.b16 %v619
        %v886 = vunpack.c.l.b16 %v620
        %v887 = vunpack.c.h.b16 %v620
        %v888 = vunpack.c.l.b16 %v621
        %v889 = vunpack.c.h.b16 %v621
        %v890 = vunpack.c.l.b16 %v622
        %v891 = vunpack.c.h.b16 %v622
        %v892 = vunpack.c.l.b16 %v623
        %v893 = vunpack.c.h.b16 %v623
        %v894 = vunpack.c.l.b16 %v624
        %v895 = vunpack.c.h.b16 %v624
        %v896 = vunpack.c.l.b16 %v625
        %v897 = vunpack.c.h.b16 %v625
        %v898 = vunpack.c.l.b16 %v626
        %v899 = vunpack.c.h.b16 %v626
        %v900 = vunpack.c.l.b16 %v627
        %v901 = vunpack.c.h.b16 %v627
        %v902 = vunpack.c.l.b16 %v628
        %v903 = vunpack.c.h.b16 %v628
        %v904 = vunpack.c.l.b16 %v629
        %v905 = vunpack.c.h.b16 %v629
        %v906 = vunpack.c.l.b16 %v630
        %v907 = vunpack.c.h.b16 %v630
        %v908 = vunpack.c.l.b16 %v631
        %v909 = vunpack.c.h.b16 %v631
        %v910 = vunpack.c.l.b16 %v632
        %v911 = vunpack.c.h.b16 %v632
        %v912 = vunpack.c.l.b16 %v633
        %v913 = vunpack.c.h.b16 %v633
        %v914 = vunpack.c.l.b16 %v634
        %v915 = vunpack.c.h.b16 %v634
        %v916 = vunpack.c.l.b16 %v635
        %v917 = vunpack.c.h.b16 %v635
        %v918 = vunpack.c.l.b16 %v636
        %v919 = vunpack.c.h.b16 %v636
        %v920 = vunpack.c.l.b16 %v637
        %v921 = vunpack.c.h.b16 %v637
        %v922 = vunpack.c.l.b16 %v638
        %v923 = vunpack.c.h.b16 %v638
        %v924 = vunpack.c.l.b16 %v639
        %v925 = vunpack.c.h.b16 %v639
        %v926 = vunpack.c.l.b16 %v640
        %v927 = vunpack.c.h.b16 %v640
        %v928 = vunpack.c.l.b16 %v641
        %v929 = vunpack.c.h.b16 %v641
        %v930 = vpack.c.b16 %v744, %v738
        %v931 = vpack.c.b16 %v745, %v739
        %v932 = vpack.c.b16 %v746, %v740
        %v933 = vpack.c.b16 %v747, %v741
        %v934 = vpack.c.b16 %v748, %v742
        %v935 = vpack.c.b16 %v749, %v743
        %v936 = vpack.c.b16 %v756, %v750
        %v937 = vpack.c.b16 %v757, %v751
        %v938 = vpack.c.b16 %v758, %v752
        %v939 = vpack.c.b16 %v759, %v753
        %v940 = vpack.c.b16 %v760, %v754
        %v941 = vpack.c.b16 %v761, %v755
        %v942 = vpack.c.b16 %v768, %v762
        %v943 = vpack.c.b16 %v769, %v763
        %v944 = vpack.c.b16 %v770, %v764
        %v945 = vpack.c.b16 %v771, %v765
        %v946 = vpack.c.b16 %v772, %v766
        %v947 = vpack.c.b16 %v773, %v767
        %v948 = vpack.c.b16 %v780, %v774
        %v949 = vpack.c.b16 %v781, %v775
        %v950 = vpack.c.b16 %v782, %v776
        %v951 = vpack.c.b16 %v783, %v777
        %v952 = vpack.c.b16 %v784, %v778
        %v953 = vpack.c.b16 %v785, %v779
        %v954 = vpack.c.b16 %v792, %v786
        %v955 = vpack.c.b16 %v793, %v787
        %v956 = vpack.c.b16 %v794, %v788
        %v957 = vpack.c.b16 %v795, %v789
        %v958 = vpack.c.b16 %v796, %v790
        %v959 = vpack.c.b16 %v797, %v791
        %v960 = vpack.c.b16 %v804, %v798
        %v961 = vpack.c.b16 %v805, %v799
        %v962 = vpack.c.b16 %v806, %v800
        %v963 = vpack.c.b16 %v807, %v801
        %v964 = vpack.c.b16 %v808, %v802
        %v965 = vpack.c.b16 %v809, %v803
        %v966 = vpack.c.b16 %v816, %v810
        %v967 = vpack.c.b16 %v817, %v811
        %v968 = vpack.c.b16 %v818, %v812
        %v969 = vpack.c.b16 %v819, %v813
        %v970 = vpack.c.b16 %v820, %v814
        %v971 = vpack.c.b16 %v821, %v815
        %v972 = vpack.c.b16 %v828, %v822
        %v973 = vpack.c.b16 %v829, %v823
        %v974 = vpack.c.b16 %v830, %v824
        %v975 = vpack.c.b16 %v831, %v825
        %v976 = vpack.c.b16 %v832, %v826
        %v977 = vpack.c.b16 %v833, %v827
        %v978 = vpack.c.b16 %v840, %v834
        %v979 = vpack.c.b16 %v841, %v835
        %v980 = vpack.c.b16 %v842, %v836
        %v981 = vpack.c.b16 %v843, %v837
        %v982 = vpack.c.b16 %v844, %v838
        %v983 = vpack.c.b16 %v845, %v839
        %v984 = vpack.c.b16 %v852, %v846
        %v985 = vpack.c.b16 %v853, %v847
        %v986 = vpack.c.b16 %v854, %v848
        %v987 = vpack.c.b16 %v855, %v849
        %v988 = vpack.c.b16 %v856, %v850
        %v989 = vpack.c.b16 %v857, %v851
        %v990 = vpack.c.b16 %v864, %v858
        %v991 = vpack.c.b16 %v865, %v859
        %v992 = vpack.c.b16 %v866, %v860
        %v993 = vpack.c.b16 %v867, %v861
        %v994 = vpack.c.b16 %v868, %v862
        %v995 = vpack.c.b16 %v869, %v863
        %v996 = vpack.c.b16 %v876, %v870
        %v997 = vpack.c.b16 %v877, %v871
        %v998 = vpack.c.b16 %v878, %v872
        %v999 = vpack.c.b16 %v879, %v873
        %v1000 = vpack.c.b16 %v880, %v874
        %v1001 = vpack.c.b16 %v881, %v875
        %v1002 = vpack.c.b16 %v888, %v882
        %v1003 = vpack.c.b16 %v889, %v883
        %v1004 = vpack.c.b16 %v890, %v884
        %v1005 = vpack.c.b16 %v891, %v885
        %v1006 = vpack.c.b16 %v892, %v886
        %v1007 = vpack.c.b16 %v893, %v887
        %v1008 = vpack.c.b16 %v900, %v894
        %v1009 = vpack.c.b16 %v901, %v895
        %v1010 = vpack.c.b16 %v902, %v896
        %v1011 = vpack.c.b16 %v903, %v897
        %v1012 = vpack.c.b16 %v904, %v898
        %v1013 = vpack.c.b16 %v905, %v899
        %v1014 = vpack.c.b16 %v912, %v906
        %v1015 = vpack.c.b16 %v913, %v907
        %v1016 = vpack.c.b16 %v914, %v908
        %v1017 = vpack.c.b16 %v915, %v909
        %v1018 = vpack.c.b16 %v916, %v910
        %v1019 = vpack.c.b16 %v917, %v911
        %v1020 = vpack.c.b16 %v924, %v918
        %v1021 = vpack.c.b16 %v925, %v919
        %v1022 = vpack.c.b16 %v926, %v920
        %v1023 = vpack.c.b16 %v927, %v921
        %v1024 = vpack.c.b16 %v928, %v922
        %v1025 = vpack.c.b16 %v929, %v923
        %1122 = vmatpush.bf16.msra.mxu0 %v972
        %1123 = vmatpush.bf16.msra.mxu0 %v966
        %1124 = vmatpush.bf16.msra.mxu0 %v960
        %1125 = vmatpush.bf16.msra.mxu0 %v954
        %1126 = vmatpush.bf16.msra.mxu0 %v948
        %1127 = vmatpush.bf16.msra.mxu0 %v942
        %1128 = vmatpush.bf16.msra.mxu0 %v936
        %1129 = vmatpush.bf16.msra.mxu0 %v930
        %1130 = vmatmul.bf16.gmra.mxu0 %v482
        %v1131 = vpop.f32.mrf.mxu0
        %v1132 = vadd.f32 0.0, %v1131
        %v1133 = vpop.f32.mrf.mxu0
        %v1134 = vadd.f32 0.0, %v1133
        %1135 = vmatmul.bf16.gmra.mxu0 %v484
        %v1136 = vpop.f32.mrf.mxu0
        %v1137 = vadd.f32 0.0, %v1136
        %v1138 = vpop.f32.mrf.mxu0
        %v1139 = vadd.f32 0.0, %v1138
        %1140 = vmatmul.bf16.gmra.mxu0 %v486
        %v1141 = vpop.f32.mrf.mxu0
        %v1142 = vadd.f32 0.0, %v1141
        %v1143 = vpop.f32.mrf.mxu0
        %v1144 = vadd.f32 0.0, %v1143
        %1145 = vmatmul.bf16.gmra.mxu0 %v488
        %v1146 = vpop.f32.mrf.mxu0
        %v1147 = vadd.f32 0.0, %v1146
        %v1148 = vpop.f32.mrf.mxu0
        %v1149 = vadd.f32 0.0, %v1148
        %1150 = vmatmul.bf16.gmra.mxu0 %v490
        %v1151 = vpop.f32.mrf.mxu0
        %v1152 = vadd.f32 0.0, %v1151
        %v1153 = vpop.f32.mrf.mxu0
        %v1154 = vadd.f32 0.0, %v1153
        %1155 = vmatmul.bf16.gmra.mxu0 %v492
        %v1156 = vpop.f32.mrf.mxu0
        %v1157 = vadd.f32 0.0, %v1156
        %v1158 = vpop.f32.mrf.mxu0
        %v1159 = vadd.f32 0.0, %v1158
        %1160 = vmatmul.bf16.gmra.mxu0 %v494
        %v1161 = vpop.f32.mrf.mxu0
        %v1162 = vadd.f32 0.0, %v1161
        %v1163 = vpop.f32.mrf.mxu0
        %v1164 = vadd.f32 0.0, %v1163
        %1165 = vmatmul.bf16.gmra.mxu0 %v496
        %v1166 = vpop.f32.mrf.mxu0
        %v1167 = vadd.f32 0.0, %v1166
        %v1168 = vpop.f32.mrf.mxu0
        %v1169 = vadd.f32 0.0, %v1168
        %1170 = vmatmul.bf16.gmra.mxu0 %v498
        %v1171 = vpop.f32.mrf.mxu0
        %v1172 = vadd.f32 0.0, %v1171
        %v1173 = vpop.f32.mrf.mxu0
        %v1174 = vadd.f32 0.0, %v1173
        %1175 = vmatmul.bf16.gmra.mxu0 %v500
        %v1176 = vpop.f32.mrf.mxu0
        %v1177 = vadd.f32 0.0, %v1176
        %v1178 = vpop.f32.mrf.mxu0
        %v1179 = vadd.f32 0.0, %v1178
        %1180 = vmatmul.bf16.gmra.mxu0 %v502
        %v1181 = vpop.f32.mrf.mxu0
        %v1182 = vadd.f32 0.0, %v1181
        %v1183 = vpop.f32.mrf.mxu0
        %v1184 = vadd.f32 0.0, %v1183
        %1185 = vmatmul.bf16.gmra.mxu0 %v504
        %v1186 = vpop.f32.mrf.mxu0
        %v1187 = vadd.f32 0.0, %v1186
        %v1188 = vpop.f32.mrf.mxu0
        %v1189 = vadd.f32 0.0, %v1188
        %1190 = vmatmul.bf16.gmra.mxu0 %v506
        %v1191 = vpop.f32.mrf.mxu0
        %v1192 = vadd.f32 0.0, %v1191
        %v1193 = vpop.f32.mrf.mxu0
        %v1194 = vadd.f32 0.0, %v1193
        %1195 = vmatmul.bf16.gmra.mxu0 %v508
        %v1196 = vpop.f32.mrf.mxu0
        %v1197 = vadd.f32 0.0, %v1196
        %v1198 = vpop.f32.mrf.mxu0
        %v1199 = vadd.f32 0.0, %v1198
        %1200 = vmatmul.bf16.gmra.mxu0 %v510
        %v1201 = vpop.f32.mrf.mxu0
        %v1202 = vadd.f32 0.0, %v1201
        %v1203 = vpop.f32.mrf.mxu0
        %v1204 = vadd.f32 0.0, %v1203
        %1205 = vmatmul.bf16.gmra.mxu0 %v512
        %v1206 = vpop.f32.mrf.mxu0
        %v1207 = vadd.f32 0.0, %v1206
        %v1208 = vpop.f32.mrf.mxu0
        %v1209 = vadd.f32 0.0, %v1208
        %1210 = vmatmul.bf16.gmra.mxu0 %v514
        %v1211 = vpop.f32.mrf.mxu0
        %v1212 = vadd.f32 0.0, %v1211
        %v1213 = vpop.f32.mrf.mxu0
        %v1214 = vadd.f32 0.0, %v1213
        %1215 = vmatmul.bf16.gmra.mxu0 %v516
        %v1216 = vpop.f32.mrf.mxu0
        %v1217 = vadd.f32 0.0, %v1216
        %v1218 = vpop.f32.mrf.mxu0
        %v1219 = vadd.f32 0.0, %v1218
        %1220 = vmatmul.bf16.gmra.mxu0 %v518
        %v1221 = vpop.f32.mrf.mxu0
        %v1222 = vadd.f32 0.0, %v1221
        %v1223 = vpop.f32.mrf.mxu0
        %v1224 = vadd.f32 0.0, %v1223
        %1225 = vmatmul.bf16.gmra.mxu0 %v520
        %v1226 = vpop.f32.mrf.mxu0
        %v1227 = vadd.f32 0.0, %v1226
        %v1228 = vpop.f32.mrf.mxu0
        %v1229 = vadd.f32 0.0, %v1228
        %1230 = vmatmul.bf16.gmra.mxu0 %v522
        %v1231 = vpop.f32.mrf.mxu0
        %v1232 = vadd.f32 0.0, %v1231
        %v1233 = vpop.f32.mrf.mxu0
        %v1234 = vadd.f32 0.0, %v1233
        %1235 = vmatmul.bf16.gmra.mxu0 %v524
        %v1236 = vpop.f32.mrf.mxu0
        %v1237 = vadd.f32 0.0, %v1236
        %v1238 = vpop.f32.mrf.mxu0
        %v1239 = vadd.f32 0.0, %v1238
        %1240 = vmatmul.bf16.gmra.mxu0 %v526
        %v1241 = vpop.f32.mrf.mxu0
        %v1242 = vadd.f32 0.0, %v1241
        %v1243 = vpop.f32.mrf.mxu0
        %v1244 = vadd.f32 0.0, %v1243
        %1245 = vmatmul.bf16.gmra.mxu0 %v528
        %v1246 = vpop.f32.mrf.mxu0
        %v1247 = vadd.f32 0.0, %v1246
        %v1248 = vpop.f32.mrf.mxu0
        %v1249 = vadd.f32 0.0, %v1248
        %1250 = vmatmul.bf16.gmra.mxu0 %v530
        %v1251 = vpop.f32.mrf.mxu0
        %v1252 = vadd.f32 0.0, %v1251
        %v1253 = vpop.f32.mrf.mxu0
        %v1254 = vadd.f32 0.0, %v1253
        %1255 = vmatmul.bf16.gmra.mxu0 %v532
        %v1256 = vpop.f32.mrf.mxu0
        %v1257 = vadd.f32 0.0, %v1256
        %v1258 = vpop.f32.mrf.mxu0
        %v1259 = vadd.f32 0.0, %v1258
        %1260 = vmatmul.bf16.gmra.mxu0 %v534
        %v1261 = vpop.f32.mrf.mxu0
        %v1262 = vadd.f32 0.0, %v1261
        %v1263 = vpop.f32.mrf.mxu0
        %v1264 = vadd.f32 0.0, %v1263
        %1265 = vmatmul.bf16.gmra.mxu0 %v536
        %v1266 = vpop.f32.mrf.mxu0
        %v1267 = vadd.f32 0.0, %v1266
        %v1268 = vpop.f32.mrf.mxu0
        %v1269 = vadd.f32 0.0, %v1268
        %1270 = vmatmul.bf16.gmra.mxu0 %v538
        %v1271 = vpop.f32.mrf.mxu0
        %v1272 = vadd.f32 0.0, %v1271
        %v1273 = vpop.f32.mrf.mxu0
        %v1274 = vadd.f32 0.0, %v1273
        %1275 = vmatmul.bf16.gmra.mxu0 %v540
        %v1276 = vpop.f32.mrf.mxu0
        %v1277 = vadd.f32 0.0, %v1276
        %v1278 = vpop.f32.mrf.mxu0
        %v1279 = vadd.f32 0.0, %v1278
        %1280 = vmatmul.bf16.gmra.mxu0 %v542
        %v1281 = vpop.f32.mrf.mxu0
        %v1282 = vadd.f32 0.0, %v1281
        %v1283 = vpop.f32.mrf.mxu0
        %v1284 = vadd.f32 0.0, %v1283
        %1285 = vmatmul.bf16.gmra.mxu0 %v544
        %v1286 = vpop.f32.mrf.mxu0
        %v1287 = vadd.f32 0.0, %v1286
        %v1288 = vpop.f32.mrf.mxu0
        %v1289 = vadd.f32 0.0, %v1288
        %1290 = vdwg.mxu0
        %1291 = vmatpush.bf16.msra.mxu0 %v1020
        %1292 = vmatpush.bf16.msra.mxu0 %v1014
        %1293 = vmatpush.bf16.msra.mxu0 %v1008
        %1294 = vmatpush.bf16.msra.mxu0 %v1002
        %1295 = vmatpush.bf16.msra.mxu0 %v996
        %1296 = vmatpush.bf16.msra.mxu0 %v990
        %1297 = vmatpush.bf16.msra.mxu0 %v984
        %1298 = vmatpush.bf16.msra.mxu0 %v978
        %1299 = vmatmul.bf16.gmra.mxu0 %v483
        %v1300 = vpop.f32.mrf.mxu0
        %v1301 = vadd.f32 %v1132, %v1300
        %v1302 = vpop.f32.mrf.mxu0
        %v1303 = vadd.f32 %v1134, %v1302
        %1304 = vmatmul.bf16.gmra.mxu0 %v485
        %v1305 = vpop.f32.mrf.mxu0
        %v1306 = vadd.f32 %v1137, %v1305
        %v1307 = vpop.f32.mrf.mxu0
        %v1308 = vadd.f32 %v1139, %v1307
        %1309 = vmatmul.bf16.gmra.mxu0 %v487
        %v1310 = vpop.f32.mrf.mxu0
        %v1311 = vadd.f32 %v1142, %v1310
        %v1312 = vpop.f32.mrf.mxu0
        %v1313 = vadd.f32 %v1144, %v1312
        %1314 = vmatmul.bf16.gmra.mxu0 %v489
        %v1315 = vpop.f32.mrf.mxu0
        %v1316 = vadd.f32 %v1147, %v1315
        %v1317 = vpop.f32.mrf.mxu0
        %v1318 = vadd.f32 %v1149, %v1317
        %1319 = vmatmul.bf16.gmra.mxu0 %v491
        %v1320 = vpop.f32.mrf.mxu0
        %v1321 = vadd.f32 %v1152, %v1320
        %v1322 = vpop.f32.mrf.mxu0
        %v1323 = vadd.f32 %v1154, %v1322
        %1324 = vmatmul.bf16.gmra.mxu0 %v493
        %v1325 = vpop.f32.mrf.mxu0
        %v1326 = vadd.f32 %v1157, %v1325
        %v1327 = vpop.f32.mrf.mxu0
        %v1328 = vadd.f32 %v1159, %v1327
        %1329 = vmatmul.bf16.gmra.mxu0 %v495
        %v1330 = vpop.f32.mrf.mxu0
        %v1331 = vadd.f32 %v1162, %v1330
        %v1332 = vpop.f32.mrf.mxu0
        %v1333 = vadd.f32 %v1164, %v1332
        %1334 = vmatmul.bf16.gmra.mxu0 %v497
        %v1335 = vpop.f32.mrf.mxu0
        %v1336 = vadd.f32 %v1167, %v1335
        %v1337 = vpop.f32.mrf.mxu0
        %v1338 = vadd.f32 %v1169, %v1337
        %1339 = vmatmul.bf16.gmra.mxu0 %v499
        %v1340 = vpop.f32.mrf.mxu0
        %v1341 = vadd.f32 %v1172, %v1340
        %v1342 = vpop.f32.mrf.mxu0
        %v1343 = vadd.f32 %v1174, %v1342
        %1344 = vmatmul.bf16.gmra.mxu0 %v501
        %v1345 = vpop.f32.mrf.mxu0
        %v1346 = vadd.f32 %v1177, %v1345
        %v1347 = vpop.f32.mrf.mxu0
        %v1348 = vadd.f32 %v1179, %v1347
        %1349 = vmatmul.bf16.gmra.mxu0 %v503
        %v1350 = vpop.f32.mrf.mxu0
        %v1351 = vadd.f32 %v1182, %v1350
        %v1352 = vpop.f32.mrf.mxu0
        %v1353 = vadd.f32 %v1184, %v1352
        %1354 = vmatmul.bf16.gmra.mxu0 %v505
        %v1355 = vpop.f32.mrf.mxu0
        %v1356 = vadd.f32 %v1187, %v1355
        %v1357 = vpop.f32.mrf.mxu0
        %v1358 = vadd.f32 %v1189, %v1357
        %1359 = vmatmul.bf16.gmra.mxu0 %v507
        %v1360 = vpop.f32.mrf.mxu0
        %v1361 = vadd.f32 %v1192, %v1360
        %v1362 = vpop.f32.mrf.mxu0
        %v1363 = vadd.f32 %v1194, %v1362
        %1364 = vmatmul.bf16.gmra.mxu0 %v509
        %v1365 = vpop.f32.mrf.mxu0
        %v1366 = vadd.f32 %v1197, %v1365
        %v1367 = vpop.f32.mrf.mxu0
        %v1368 = vadd.f32 %v1199, %v1367
        %1369 = vmatmul.bf16.gmra.mxu0 %v511
        %v1370 = vpop.f32.mrf.mxu0
        %v1371 = vadd.f32 %v1202, %v1370
        %v1372 = vpop.f32.mrf.mxu0
        %v1373 = vadd.f32 %v1204, %v1372
        %1374 = vmatmul.bf16.gmra.mxu0 %v513
        %v1375 = vpop.f32.mrf.mxu0
        %v1376 = vadd.f32 %v1207, %v1375
        %v1377 = vpop.f32.mrf.mxu0
        %v1378 = vadd.f32 %v1209, %v1377
        %1379 = vmatmul.bf16.gmra.mxu0 %v515
        %v1380 = vpop.f32.mrf.mxu0
        %v1381 = vadd.f32 %v1212, %v1380
        %v1382 = vpop.f32.mrf.mxu0
        %v1383 = vadd.f32 %v1214, %v1382
        %1384 = vmatmul.bf16.gmra.mxu0 %v517
        %v1385 = vpop.f32.mrf.mxu0
        %v1386 = vadd.f32 %v1217, %v1385
        %v1387 = vpop.f32.mrf.mxu0
        %v1388 = vadd.f32 %v1219, %v1387
        %1389 = vmatmul.bf16.gmra.mxu0 %v519
        %v1390 = vpop.f32.mrf.mxu0
        %v1391 = vadd.f32 %v1222, %v1390
        %v1392 = vpop.f32.mrf.mxu0
        %v1393 = vadd.f32 %v1224, %v1392
        %1394 = vmatmul.bf16.gmra.mxu0 %v521
        %v1395 = vpop.f32.mrf.mxu0
        %v1396 = vadd.f32 %v1227, %v1395
        %v1397 = vpop.f32.mrf.mxu0
        %v1398 = vadd.f32 %v1229, %v1397
        %1399 = vmatmul.bf16.gmra.mxu0 %v523
        %v1400 = vpop.f32.mrf.mxu0
        %v1401 = vadd.f32 %v1232, %v1400
        %v1402 = vpop.f32.mrf.mxu0
        %v1403 = vadd.f32 %v1234, %v1402
        %1404 = vmatmul.bf16.gmra.mxu0 %v525
        %v1405 = vpop.f32.mrf.mxu0
        %v1406 = vadd.f32 %v1237, %v1405
        %v1407 = vpop.f32.mrf.mxu0
        %v1408 = vadd.f32 %v1239, %v1407
        %1409 = vmatmul.bf16.gmra.mxu0 %v527
        %v1410 = vpop.f32.mrf.mxu0
        %v1411 = vadd.f32 %v1242, %v1410
        %v1412 = vpop.f32.mrf.mxu0
        %v1413 = vadd.f32 %v1244, %v1412
        %1414 = vmatmul.bf16.gmra.mxu0 %v529
        %v1415 = vpop.f32.mrf.mxu0
        %v1416 = vadd.f32 %v1247, %v1415
        %v1417 = vpop.f32.mrf.mxu0
        %v1418 = vadd.f32 %v1249, %v1417
        %1419 = vmatmul.bf16.gmra.mxu0 %v531
        %v1420 = vpop.f32.mrf.mxu0
        %v1421 = vadd.f32 %v1252, %v1420
        %v1422 = vpop.f32.mrf.mxu0
        %v1423 = vadd.f32 %v1254, %v1422
        %1424 = vmatmul.bf16.gmra.mxu0 %v533
        %v1425 = vpop.f32.mrf.mxu0
        %v1426 = vadd.f32 %v1257, %v1425
        %v1427 = vpop.f32.mrf.mxu0
        %v1428 = vadd.f32 %v1259, %v1427
        %1429 = vmatmul.bf16.gmra.mxu0 %v535
        %v1430 = vpop.f32.mrf.mxu0
        %v1431 = vadd.f32 %v1262, %v1430
        %v1432 = vpop.f32.mrf.mxu0
        %v1433 = vadd.f32 %v1264, %v1432
        %1434 = vmatmul.bf16.gmra.mxu0 %v537
        %v1435 = vpop.f32.mrf.mxu0
        %v1436 = vadd.f32 %v1267, %v1435
        %v1437 = vpop.f32.mrf.mxu0
        %v1438 = vadd.f32 %v1269, %v1437
        %1439 = vmatmul.bf16.gmra.mxu0 %v539
        %v1440 = vpop.f32.mrf.mxu0
        %v1441 = vadd.f32 %v1272, %v1440
        %v1442 = vpop.f32.mrf.mxu0
        %v1443 = vadd.f32 %v1274, %v1442
        %1444 = vmatmul.bf16.gmra.mxu0 %v541
        %v1445 = vpop.f32.mrf.mxu0
        %v1446 = vadd.f32 %v1277, %v1445
        %v1447 = vpop.f32.mrf.mxu0
        %v1448 = vadd.f32 %v1279, %v1447
        %1449 = vmatmul.bf16.gmra.mxu0 %v543
        %v1450 = vpop.f32.mrf.mxu0
        %v1451 = vadd.f32 %v1282, %v1450
        %v1452 = vpop.f32.mrf.mxu0
        %v1453 = vadd.f32 %v1284, %v1452
        %1454 = vmatmul.bf16.gmra.mxu0 %v545
        %v1455 = vpop.f32.mrf.mxu0
        %v1456 = vadd.f32 %v1287, %v1455
        %v1457 = vpop.f32.mrf.mxu0
        %v1458 = vadd.f32 %v1289, %v1457
        %1459 = vdwg.mxu0
        %1460 = vmatpush.bf16.msra.mxu0 %v973
        %1461 = vmatpush.bf16.msra.mxu0 %v967
        %1462 = vmatpush.bf16.msra.mxu0 %v961
        %1463 = vmatpush.bf16.msra.mxu0 %v955
        %1464 = vmatpush.bf16.msra.mxu0 %v949
        %1465 = vmatpush.bf16.msra.mxu0 %v943
        %1466 = vmatpush.bf16.msra.mxu0 %v937
        %1467 = vmatpush.bf16.msra.mxu0 %v931
        %1468 = vmatmul.bf16.gmra.mxu0 %v482
        %v1469 = vpop.f32.mrf.mxu0
        %v1470 = vadd.f32 0.0, %v1469
        %v1471 = vpop.f32.mrf.mxu0
        %v1472 = vadd.f32 0.0, %v1471
        %1473 = vmatmul.bf16.gmra.mxu0 %v484
        %v1474 = vpop.f32.mrf.mxu0
        %v1475 = vadd.f32 0.0, %v1474
        %v1476 = vpop.f32.mrf.mxu0
        %v1477 = vadd.f32 0.0, %v1476
        %1478 = vmatmul.bf16.gmra.mxu0 %v486
        %v1479 = vpop.f32.mrf.mxu0
        %v1480 = vadd.f32 0.0, %v1479
        %v1481 = vpop.f32.mrf.mxu0
        %v1482 = vadd.f32 0.0, %v1481
        %1483 = vmatmul.bf16.gmra.mxu0 %v488
        %v1484 = vpop.f32.mrf.mxu0
        %v1485 = vadd.f32 0.0, %v1484
        %v1486 = vpop.f32.mrf.mxu0
        %v1487 = vadd.f32 0.0, %v1486
        %1488 = vmatmul.bf16.gmra.mxu0 %v490
        %v1489 = vpop.f32.mrf.mxu0
        %v1490 = vadd.f32 0.0, %v1489
        %v1491 = vpop.f32.mrf.mxu0
        %v1492 = vadd.f32 0.0, %v1491
        %1493 = vmatmul.bf16.gmra.mxu0 %v492
        %v1494 = vpop.f32.mrf.mxu0
        %v1495 = vadd.f32 0.0, %v1494
        %v1496 = vpop.f32.mrf.mxu0
        %v1497 = vadd.f32 0.0, %v1496
        %1498 = vmatmul.bf16.gmra.mxu0 %v494
        %v1499 = vpop.f32.mrf.mxu0
        %v1500 = vadd.f32 0.0, %v1499
        %v1501 = vpop.f32.mrf.mxu0
        %v1502 = vadd.f32 0.0, %v1501
        %1503 = vmatmul.bf16.gmra.mxu0 %v496
        %v1504 = vpop.f32.mrf.mxu0
        %v1505 = vadd.f32 0.0, %v1504
        %v1506 = vpop.f32.mrf.mxu0
        %v1507 = vadd.f32 0.0, %v1506
        %1508 = vmatmul.bf16.gmra.mxu0 %v498
        %v1509 = vpop.f32.mrf.mxu0
        %v1510 = vadd.f32 0.0, %v1509
        %v1511 = vpop.f32.mrf.mxu0
        %v1512 = vadd.f32 0.0, %v1511
        %1513 = vmatmul.bf16.gmra.mxu0 %v500
        %v1514 = vpop.f32.mrf.mxu0
        %v1515 = vadd.f32 0.0, %v1514
        %v1516 = vpop.f32.mrf.mxu0
        %v1517 = vadd.f32 0.0, %v1516
        %1518 = vmatmul.bf16.gmra.mxu0 %v502
        %v1519 = vpop.f32.mrf.mxu0
        %v1520 = vadd.f32 0.0, %v1519
        %v1521 = vpop.f32.mrf.mxu0
        %v1522 = vadd.f32 0.0, %v1521
        %1523 = vmatmul.bf16.gmra.mxu0 %v504
        %v1524 = vpop.f32.mrf.mxu0
        %v1525 = vadd.f32 0.0, %v1524
        %v1526 = vpop.f32.mrf.mxu0
        %v1527 = vadd.f32 0.0, %v1526
        %1528 = vmatmul.bf16.gmra.mxu0 %v506
        %v1529 = vpop.f32.mrf.mxu0
        %v1530 = vadd.f32 0.0, %v1529
        %v1531 = vpop.f32.mrf.mxu0
        %v1532 = vadd.f32 0.0, %v1531
        %1533 = vmatmul.bf16.gmra.mxu0 %v508
        %v1534 = vpop.f32.mrf.mxu0
        %v1535 = vadd.f32 0.0, %v1534
        %v1536 = vpop.f32.mrf.mxu0
        %v1537 = vadd.f32 0.0, %v1536
        %1538 = vmatmul.bf16.gmra.mxu0 %v510
        %v1539 = vpop.f32.mrf.mxu0
        %v1540 = vadd.f32 0.0, %v1539
        %v1541 = vpop.f32.mrf.mxu0
        %v1542 = vadd.f32 0.0, %v1541
        %1543 = vmatmul.bf16.gmra.mxu0 %v512
        %v1544 = vpop.f32.mrf.mxu0
        %v1545 = vadd.f32 0.0, %v1544
        %v1546 = vpop.f32.mrf.mxu0
        %v1547 = vadd.f32 0.0, %v1546
        %1548 = vmatmul.bf16.gmra.mxu0 %v514
        %v1549 = vpop.f32.mrf.mxu0
        %v1550 = vadd.f32 0.0, %v1549
        %v1551 = vpop.f32.mrf.mxu0
        %v1552 = vadd.f32 0.0, %v1551
        %1553 = vmatmul.bf16.gmra.mxu0 %v516
        %v1554 = vpop.f32.mrf.mxu0
        %v1555 = vadd.f32 0.0, %v1554
        %v1556 = vpop.f32.mrf.mxu0
        %v1557 = vadd.f32 0.0, %v1556
        %1558 = vmatmul.bf16.gmra.mxu0 %v518
        %v1559 = vpop.f32.mrf.mxu0
        %v1560 = vadd.f32 0.0, %v1559
        %v1561 = vpop.f32.mrf.mxu0
        %v1562 = vadd.f32 0.0, %v1561
        %1563 = vmatmul.bf16.gmra.mxu0 %v520
        %v1564 = vpop.f32.mrf.mxu0
        %v1565 = vadd.f32 0.0, %v1564
        %v1566 = vpop.f32.mrf.mxu0
        %v1567 = vadd.f32 0.0, %v1566
        %1568 = vmatmul.bf16.gmra.mxu0 %v522
        %v1569 = vpop.f32.mrf.mxu0
        %v1570 = vadd.f32 0.0, %v1569
        %v1571 = vpop.f32.mrf.mxu0
        %v1572 = vadd.f32 0.0, %v1571
        %1573 = vmatmul.bf16.gmra.mxu0 %v524
        %v1574 = vpop.f32.mrf.mxu0
        %v1575 = vadd.f32 0.0, %v1574
        %v1576 = vpop.f32.mrf.mxu0
        %v1577 = vadd.f32 0.0, %v1576
        %1578 = vmatmul.bf16.gmra.mxu0 %v526
        %v1579 = vpop.f32.mrf.mxu0
        %v1580 = vadd.f32 0.0, %v1579
        %v1581 = vpop.f32.mrf.mxu0
        %v1582 = vadd.f32 0.0, %v1581
        %1583 = vmatmul.bf16.gmra.mxu0 %v528
        %v1584 = vpop.f32.mrf.mxu0
        %v1585 = vadd.f32 0.0, %v1584
        %v1586 = vpop.f32.mrf.mxu0
        %v1587 = vadd.f32 0.0, %v1586
        %1588 = vmatmul.bf16.gmra.mxu0 %v530
        %v1589 = vpop.f32.mrf.mxu0
        %v1590 = vadd.f32 0.0, %v1589
        %v1591 = vpop.f32.mrf.mxu0
        %v1592 = vadd.f32 0.0, %v1591
        %1593 = vmatmul.bf16.gmra.mxu0 %v532
        %v1594 = vpop.f32.mrf.mxu0
        %v1595 = vadd.f32 0.0, %v1594
        %v1596 = vpop.f32.mrf.mxu0
        %v1597 = vadd.f32 0.0, %v1596
        %1598 = vmatmul.bf16.gmra.mxu0 %v534
        %v1599 = vpop.f32.mrf.mxu0
        %v1600 = vadd.f32 0.0, %v1599
        %v1601 = vpop.f32.mrf.mxu0
        %v1602 = vadd.f32 0.0, %v1601
        %1603 = vmatmul.bf16.gmra.mxu0 %v536
        %v1604 = vpop.f32.mrf.mxu0
        %v1605 = vadd.f32 0.0, %v1604
        %v1606 = vpop.f32.mrf.mxu0
        %v1607 = vadd.f32 0.0, %v1606
        %1608 = vmatmul.bf16.gmra.mxu0 %v538
        %v1609 = vpop.f32.mrf.mxu0
        %v1610 = vadd.f32 0.0, %v1609
        %v1611 = vpop.f32.mrf.mxu0
        %v1612 = vadd.f32 0.0, %v1611
        %1613 = vmatmul.bf16.gmra.mxu0 %v540
        %v1614 = vpop.f32.mrf.mxu0
        %v1615 = vadd.f32 0.0, %v1614
        %v1616 = vpop.f32.mrf.mxu0
        %v1617 = vadd.f32 0.0, %v1616
        %1618 = vmatmul.bf16.gmra.mxu0 %v542
        %v1619 = vpop.f32.mrf.mxu0
        %v1620 = vadd.f32 0.0, %v1619
        %v1621 = vpop.f32.mrf.mxu0
        %v1622 = vadd.f32 0.0, %v1621
        %1623 = vmatmul.bf16.gmra.mxu0 %v544
        %v1624 = vpop.f32.mrf.mxu0
        %v1625 = vadd.f32 0.0, %v1624
        %v1626 = vpop.f32.mrf.mxu0
        %v1627 = vadd.f32 0.0, %v1626
        %1628 = vdwg.mxu0
        %1629 = vmatpush.bf16.msra.mxu0 %v1021
        %1630 = vmatpush.bf16.msra.mxu0 %v1015
        %1631 = vmatpush.bf16.msra.mxu0 %v1009
        %1632 = vmatpush.bf16.msra.mxu0 %v1003
        %1633 = vmatpush.bf16.msra.mxu0 %v997
        %1634 = vmatpush.bf16.msra.mxu0 %v991
        %1635 = vmatpush.bf16.msra.mxu0 %v985
        %1636 = vmatpush.bf16.msra.mxu0 %v979
        %1637 = vmatmul.bf16.gmra.mxu0 %v483
        %v1638 = vpop.f32.mrf.mxu0
        %v1639 = vadd.f32 %v1470, %v1638
        %v1640 = vpop.f32.mrf.mxu0
        %v1641 = vadd.f32 %v1472, %v1640
        %1642 = vmatmul.bf16.gmra.mxu0 %v485
        %v1643 = vpop.f32.mrf.mxu0
        %v1644 = vadd.f32 %v1475, %v1643
        %v1645 = vpop.f32.mrf.mxu0
        %v1646 = vadd.f32 %v1477, %v1645
        %1647 = vmatmul.bf16.gmra.mxu0 %v487
        %v1648 = vpop.f32.mrf.mxu0
        %v1649 = vadd.f32 %v1480, %v1648
        %v1650 = vpop.f32.mrf.mxu0
        %v1651 = vadd.f32 %v1482, %v1650
        %1652 = vmatmul.bf16.gmra.mxu0 %v489
        %v1653 = vpop.f32.mrf.mxu0
        %v1654 = vadd.f32 %v1485, %v1653
        %v1655 = vpop.f32.mrf.mxu0
        %v1656 = vadd.f32 %v1487, %v1655
        %1657 = vmatmul.bf16.gmra.mxu0 %v491
        %v1658 = vpop.f32.mrf.mxu0
        %v1659 = vadd.f32 %v1490, %v1658
        %v1660 = vpop.f32.mrf.mxu0
        %v1661 = vadd.f32 %v1492, %v1660
        %1662 = vmatmul.bf16.gmra.mxu0 %v493
        %v1663 = vpop.f32.mrf.mxu0
        %v1664 = vadd.f32 %v1495, %v1663
        %v1665 = vpop.f32.mrf.mxu0
        %v1666 = vadd.f32 %v1497, %v1665
        %1667 = vmatmul.bf16.gmra.mxu0 %v495
        %v1668 = vpop.f32.mrf.mxu0
        %v1669 = vadd.f32 %v1500, %v1668
        %v1670 = vpop.f32.mrf.mxu0
        %v1671 = vadd.f32 %v1502, %v1670
        %1672 = vmatmul.bf16.gmra.mxu0 %v497
        %v1673 = vpop.f32.mrf.mxu0
        %v1674 = vadd.f32 %v1505, %v1673
        %v1675 = vpop.f32.mrf.mxu0
        %v1676 = vadd.f32 %v1507, %v1675
        %1677 = vmatmul.bf16.gmra.mxu0 %v499
        %v1678 = vpop.f32.mrf.mxu0
        %v1679 = vadd.f32 %v1510, %v1678
        %v1680 = vpop.f32.mrf.mxu0
        %v1681 = vadd.f32 %v1512, %v1680
        %1682 = vmatmul.bf16.gmra.mxu0 %v501
        %v1683 = vpop.f32.mrf.mxu0
        %v1684 = vadd.f32 %v1515, %v1683
        %v1685 = vpop.f32.mrf.mxu0
        %v1686 = vadd.f32 %v1517, %v1685
        %1687 = vmatmul.bf16.gmra.mxu0 %v503
        %v1688 = vpop.f32.mrf.mxu0
        %v1689 = vadd.f32 %v1520, %v1688
        %v1690 = vpop.f32.mrf.mxu0
        %v1691 = vadd.f32 %v1522, %v1690
        %1692 = vmatmul.bf16.gmra.mxu0 %v505
        %v1693 = vpop.f32.mrf.mxu0
        %v1694 = vadd.f32 %v1525, %v1693
        %v1695 = vpop.f32.mrf.mxu0
        %v1696 = vadd.f32 %v1527, %v1695
        %1697 = vmatmul.bf16.gmra.mxu0 %v507
        %v1698 = vpop.f32.mrf.mxu0
        %v1699 = vadd.f32 %v1530, %v1698
        %v1700 = vpop.f32.mrf.mxu0
        %v1701 = vadd.f32 %v1532, %v1700
        %1702 = vmatmul.bf16.gmra.mxu0 %v509
        %v1703 = vpop.f32.mrf.mxu0
        %v1704 = vadd.f32 %v1535, %v1703
        %v1705 = vpop.f32.mrf.mxu0
        %v1706 = vadd.f32 %v1537, %v1705
        %1707 = vmatmul.bf16.gmra.mxu0 %v511
        %v1708 = vpop.f32.mrf.mxu0
        %v1709 = vadd.f32 %v1540, %v1708
        %v1710 = vpop.f32.mrf.mxu0
        %v1711 = vadd.f32 %v1542, %v1710
        %1712 = vmatmul.bf16.gmra.mxu0 %v513
        %v1713 = vpop.f32.mrf.mxu0
        %v1714 = vadd.f32 %v1545, %v1713
        %v1715 = vpop.f32.mrf.mxu0
        %v1716 = vadd.f32 %v1547, %v1715
        %1717 = vmatmul.bf16.gmra.mxu0 %v515
        %v1718 = vpop.f32.mrf.mxu0
        %v1719 = vadd.f32 %v1550, %v1718
        %v1720 = vpop.f32.mrf.mxu0
        %v1721 = vadd.f32 %v1552, %v1720
        %1722 = vmatmul.bf16.gmra.mxu0 %v517
        %v1723 = vpop.f32.mrf.mxu0
        %v1724 = vadd.f32 %v1555, %v1723
        %v1725 = vpop.f32.mrf.mxu0
        %v1726 = vadd.f32 %v1557, %v1725
        %1727 = vmatmul.bf16.gmra.mxu0 %v519
        %v1728 = vpop.f32.mrf.mxu0
        %v1729 = vadd.f32 %v1560, %v1728
        %v1730 = vpop.f32.mrf.mxu0
        %v1731 = vadd.f32 %v1562, %v1730
        %1732 = vmatmul.bf16.gmra.mxu0 %v521
        %v1733 = vpop.f32.mrf.mxu0
        %v1734 = vadd.f32 %v1565, %v1733
        %v1735 = vpop.f32.mrf.mxu0
        %v1736 = vadd.f32 %v1567, %v1735
        %1737 = vmatmul.bf16.gmra.mxu0 %v523
        %v1738 = vpop.f32.mrf.mxu0
        %v1739 = vadd.f32 %v1570, %v1738
        %v1740 = vpop.f32.mrf.mxu0
        %v1741 = vadd.f32 %v1572, %v1740
        %1742 = vmatmul.bf16.gmra.mxu0 %v525
        %v1743 = vpop.f32.mrf.mxu0
        %v1744 = vadd.f32 %v1575, %v1743
        %v1745 = vpop.f32.mrf.mxu0
        %v1746 = vadd.f32 %v1577, %v1745
        %1747 = vmatmul.bf16.gmra.mxu0 %v527
        %v1748 = vpop.f32.mrf.mxu0
        %v1749 = vadd.f32 %v1580, %v1748
        %v1750 = vpop.f32.mrf.mxu0
        %v1751 = vadd.f32 %v1582, %v1750
        %1752 = vmatmul.bf16.gmra.mxu0 %v529
        %v1753 = vpop.f32.mrf.mxu0
        %v1754 = vadd.f32 %v1585, %v1753
        %v1755 = vpop.f32.mrf.mxu0
        %v1756 = vadd.f32 %v1587, %v1755
        %1757 = vmatmul.bf16.gmra.mxu0 %v531
        %v1758 = vpop.f32.mrf.mxu0
        %v1759 = vadd.f32 %v1590, %v1758
        %v1760 = vpop.f32.mrf.mxu0
        %v1761 = vadd.f32 %v1592, %v1760
        %1762 = vmatmul.bf16.gmra.mxu0 %v533
        %v1763 = vpop.f32.mrf.mxu0
        %v1764 = vadd.f32 %v1595, %v1763
        %v1765 = vpop.f32.mrf.mxu0
        %v1766 = vadd.f32 %v1597, %v1765
        %1767 = vmatmul.bf16.gmra.mxu0 %v535
        %v1768 = vpop.f32.mrf.mxu0
        %v1769 = vadd.f32 %v1600, %v1768
        %v1770 = vpop.f32.mrf.mxu0
        %v1771 = vadd.f32 %v1602, %v1770
        %1772 = vmatmul.bf16.gmra.mxu0 %v537
        %v1773 = vpop.f32.mrf.mxu0
        %v1774 = vadd.f32 %v1605, %v1773
        %v1775 = vpop.f32.mrf.mxu0
        %v1776 = vadd.f32 %v1607, %v1775
        %1777 = vmatmul.bf16.gmra.mxu0 %v539
        %v1778 = vpop.f32.mrf.mxu0
        %v1779 = vadd.f32 %v1610, %v1778
        %v1780 = vpop.f32.mrf.mxu0
        %v1781 = vadd.f32 %v1612, %v1780
        %1782 = vmatmul.bf16.gmra.mxu0 %v541
        %v1783 = vpop.f32.mrf.mxu0
        %v1784 = vadd.f32 %v1615, %v1783
        %v1785 = vpop.f32.mrf.mxu0
        %v1786 = vadd.f32 %v1617, %v1785
        %1787 = vmatmul.bf16.gmra.mxu0 %v543
        %v1788 = vpop.f32.mrf.mxu0
        %v1789 = vadd.f32 %v1620, %v1788
        %v1790 = vpop.f32.mrf.mxu0
        %v1791 = vadd.f32 %v1622, %v1790
        %1792 = vmatmul.bf16.gmra.mxu0 %v545
        %v1793 = vpop.f32.mrf.mxu0
        %v1794 = vadd.f32 %v1625, %v1793
        %v1795 = vpop.f32.mrf.mxu0
        %v1796 = vadd.f32 %v1627, %v1795
        %1797 = vdwg.mxu0
        %1798 = vmatpush.bf16.msra.mxu0 %v974
        %1799 = vmatpush.bf16.msra.mxu0 %v968
        %1800 = vmatpush.bf16.msra.mxu0 %v962
        %1801 = vmatpush.bf16.msra.mxu0 %v956
        %1802 = vmatpush.bf16.msra.mxu0 %v950
        %1803 = vmatpush.bf16.msra.mxu0 %v944
        %1804 = vmatpush.bf16.msra.mxu0 %v938
        %1805 = vmatpush.bf16.msra.mxu0 %v932
        %1806 = vmatmul.bf16.gmra.mxu0 %v482
        %v1807 = vpop.f32.mrf.mxu0
        %v1808 = vadd.f32 0.0, %v1807
        %v1809 = vpop.f32.mrf.mxu0
        %v1810 = vadd.f32 0.0, %v1809
        %1811 = vmatmul.bf16.gmra.mxu0 %v484
        %v1812 = vpop.f32.mrf.mxu0
        %v1813 = vadd.f32 0.0, %v1812
        %v1814 = vpop.f32.mrf.mxu0
        %v1815 = vadd.f32 0.0, %v1814
        %1816 = vmatmul.bf16.gmra.mxu0 %v486
        %v1817 = vpop.f32.mrf.mxu0
        %v1818 = vadd.f32 0.0, %v1817
        %v1819 = vpop.f32.mrf.mxu0
        %v1820 = vadd.f32 0.0, %v1819
        %1821 = vmatmul.bf16.gmra.mxu0 %v488
        %v1822 = vpop.f32.mrf.mxu0
        %v1823 = vadd.f32 0.0, %v1822
        %v1824 = vpop.f32.mrf.mxu0
        %v1825 = vadd.f32 0.0, %v1824
        %1826 = vmatmul.bf16.gmra.mxu0 %v490
        %v1827 = vpop.f32.mrf.mxu0
        %v1828 = vadd.f32 0.0, %v1827
        %v1829 = vpop.f32.mrf.mxu0
        %v1830 = vadd.f32 0.0, %v1829
        %1831 = vmatmul.bf16.gmra.mxu0 %v492
        %v1832 = vpop.f32.mrf.mxu0
        %v1833 = vadd.f32 0.0, %v1832
        %v1834 = vpop.f32.mrf.mxu0
        %v1835 = vadd.f32 0.0, %v1834
        %1836 = vmatmul.bf16.gmra.mxu0 %v494
        %v1837 = vpop.f32.mrf.mxu0
        %v1838 = vadd.f32 0.0, %v1837
        %v1839 = vpop.f32.mrf.mxu0
        %v1840 = vadd.f32 0.0, %v1839
        %1841 = vmatmul.bf16.gmra.mxu0 %v496
        %v1842 = vpop.f32.mrf.mxu0
        %v1843 = vadd.f32 0.0, %v1842
        %v1844 = vpop.f32.mrf.mxu0
        %v1845 = vadd.f32 0.0, %v1844
        %1846 = vmatmul.bf16.gmra.mxu0 %v498
        %v1847 = vpop.f32.mrf.mxu0
        %v1848 = vadd.f32 0.0, %v1847
        %v1849 = vpop.f32.mrf.mxu0
        %v1850 = vadd.f32 0.0, %v1849
        %1851 = vmatmul.bf16.gmra.mxu0 %v500
        %v1852 = vpop.f32.mrf.mxu0
        %v1853 = vadd.f32 0.0, %v1852
        %v1854 = vpop.f32.mrf.mxu0
        %v1855 = vadd.f32 0.0, %v1854
        %1856 = vmatmul.bf16.gmra.mxu0 %v502
        %v1857 = vpop.f32.mrf.mxu0
        %v1858 = vadd.f32 0.0, %v1857
        %v1859 = vpop.f32.mrf.mxu0
        %v1860 = vadd.f32 0.0, %v1859
        %1861 = vmatmul.bf16.gmra.mxu0 %v504
        %v1862 = vpop.f32.mrf.mxu0
        %v1863 = vadd.f32 0.0, %v1862
        %v1864 = vpop.f32.mrf.mxu0
        %v1865 = vadd.f32 0.0, %v1864
        %1866 = vmatmul.bf16.gmra.mxu0 %v506
        %v1867 = vpop.f32.mrf.mxu0
        %v1868 = vadd.f32 0.0, %v1867
        %v1869 = vpop.f32.mrf.mxu0
        %v1870 = vadd.f32 0.0, %v1869
        %1871 = vmatmul.bf16.gmra.mxu0 %v508
        %v1872 = vpop.f32.mrf.mxu0
        %v1873 = vadd.f32 0.0, %v1872
        %v1874 = vpop.f32.mrf.mxu0
        %v1875 = vadd.f32 0.0, %v1874
        %1876 = vmatmul.bf16.gmra.mxu0 %v510
        %v1877 = vpop.f32.mrf.mxu0
        %v1878 = vadd.f32 0.0, %v1877
        %v1879 = vpop.f32.mrf.mxu0
        %v1880 = vadd.f32 0.0, %v1879
        %1881 = vmatmul.bf16.gmra.mxu0 %v512
        %v1882 = vpop.f32.mrf.mxu0
        %v1883 = vadd.f32 0.0, %v1882
        %v1884 = vpop.f32.mrf.mxu0
        %v1885 = vadd.f32 0.0, %v1884
        %1886 = vmatmul.bf16.gmra.mxu0 %v514
        %v1887 = vpop.f32.mrf.mxu0
        %v1888 = vadd.f32 0.0, %v1887
        %v1889 = vpop.f32.mrf.mxu0
        %v1890 = vadd.f32 0.0, %v1889
        %1891 = vmatmul.bf16.gmra.mxu0 %v516
        %v1892 = vpop.f32.mrf.mxu0
        %v1893 = vadd.f32 0.0, %v1892
        %v1894 = vpop.f32.mrf.mxu0
        %v1895 = vadd.f32 0.0, %v1894
        %1896 = vmatmul.bf16.gmra.mxu0 %v518
        %v1897 = vpop.f32.mrf.mxu0
        %v1898 = vadd.f32 0.0, %v1897
        %v1899 = vpop.f32.mrf.mxu0
        %v1900 = vadd.f32 0.0, %v1899
        %1901 = vmatmul.bf16.gmra.mxu0 %v520
        %v1902 = vpop.f32.mrf.mxu0
        %v1903 = vadd.f32 0.0, %v1902
        %v1904 = vpop.f32.mrf.mxu0
        %v1905 = vadd.f32 0.0, %v1904
        %1906 = vmatmul.bf16.gmra.mxu0 %v522
        %v1907 = vpop.f32.mrf.mxu0
        %v1908 = vadd.f32 0.0, %v1907
        %v1909 = vpop.f32.mrf.mxu0
        %v1910 = vadd.f32 0.0, %v1909
        %1911 = vmatmul.bf16.gmra.mxu0 %v524
        %v1912 = vpop.f32.mrf.mxu0
        %v1913 = vadd.f32 0.0, %v1912
        %v1914 = vpop.f32.mrf.mxu0
        %v1915 = vadd.f32 0.0, %v1914
        %1916 = vmatmul.bf16.gmra.mxu0 %v526
        %v1917 = vpop.f32.mrf.mxu0
        %v1918 = vadd.f32 0.0, %v1917
        %v1919 = vpop.f32.mrf.mxu0
        %v1920 = vadd.f32 0.0, %v1919
        %1921 = vmatmul.bf16.gmra.mxu0 %v528
        %v1922 = vpop.f32.mrf.mxu0
        %v1923 = vadd.f32 0.0, %v1922
        %v1924 = vpop.f32.mrf.mxu0
        %v1925 = vadd.f32 0.0, %v1924
        %1926 = vmatmul.bf16.gmra.mxu0 %v530
        %v1927 = vpop.f32.mrf.mxu0
        %v1928 = vadd.f32 0.0, %v1927
        %v1929 = vpop.f32.mrf.mxu0
        %v1930 = vadd.f32 0.0, %v1929
        %1931 = vmatmul.bf16.gmra.mxu0 %v532
        %v1932 = vpop.f32.mrf.mxu0
        %v1933 = vadd.f32 0.0, %v1932
        %v1934 = vpop.f32.mrf.mxu0
        %v1935 = vadd.f32 0.0, %v1934
        %1936 = vmatmul.bf16.gmra.mxu0 %v534
        %v1937 = vpop.f32.mrf.mxu0
        %v1938 = vadd.f32 0.0, %v1937
        %v1939 = vpop.f32.mrf.mxu0
        %v1940 = vadd.f32 0.0, %v1939
        %1941 = vmatmul.bf16.gmra.mxu0 %v536
        %v1942 = vpop.f32.mrf.mxu0
        %v1943 = vadd.f32 0.0, %v1942
        %v1944 = vpop.f32.mrf.mxu0
        %v1945 = vadd.f32 0.0, %v1944
        %1946 = vmatmul.bf16.gmra.mxu0 %v538
        %v1947 = vpop.f32.mrf.mxu0
        %v1948 = vadd.f32 0.0, %v1947
        %v1949 = vpop.f32.mrf.mxu0
        %v1950 = vadd.f32 0.0, %v1949
        %1951 = vmatmul.bf16.gmra.mxu0 %v540
        %v1952 = vpop.f32.mrf.mxu0
        %v1953 = vadd.f32 0.0, %v1952
        %v1954 = vpop.f32.mrf.mxu0
        %v1955 = vadd.f32 0.0, %v1954
        %1956 = vmatmul.bf16.gmra.mxu0 %v542
        %v1957 = vpop.f32.mrf.mxu0
        %v1958 = vadd.f32 0.0, %v1957
        %v1959 = vpop.f32.mrf.mxu0
        %v1960 = vadd.f32 0.0, %v1959
        %1961 = vmatmul.bf16.gmra.mxu0 %v544
        %v1962 = vpop.f32.mrf.mxu0
        %v1963 = vadd.f32 0.0, %v1962
        %v1964 = vpop.f32.mrf.mxu0
        %v1965 = vadd.f32 0.0, %v1964
        %1966 = vdwg.mxu0
        %1967 = vmatpush.bf16.msra.mxu0 %v1022
        %1968 = vmatpush.bf16.msra.mxu0 %v1016
        %1969 = vmatpush.bf16.msra.mxu0 %v1010
        %1970 = vmatpush.bf16.msra.mxu0 %v1004
        %1971 = vmatpush.bf16.msra.mxu0 %v998
        %1972 = vmatpush.bf16.msra.mxu0 %v992
        %1973 = vmatpush.bf16.msra.mxu0 %v986
        %1974 = vmatpush.bf16.msra.mxu0 %v980
        %1975 = vmatmul.bf16.gmra.mxu0 %v483
        %v1976 = vpop.f32.mrf.mxu0
        %v1977 = vadd.f32 %v1808, %v1976
        %v1978 = vpop.f32.mrf.mxu0
        %v1979 = vadd.f32 %v1810, %v1978
        %1980 = vmatmul.bf16.gmra.mxu0 %v485
        %v1981 = vpop.f32.mrf.mxu0
        %v1982 = vadd.f32 %v1813, %v1981
        %v1983 = vpop.f32.mrf.mxu0
        %v1984 = vadd.f32 %v1815, %v1983
        %1985 = vmatmul.bf16.gmra.mxu0 %v487
        %v1986 = vpop.f32.mrf.mxu0
        %v1987 = vadd.f32 %v1818, %v1986
        %v1988 = vpop.f32.mrf.mxu0
        %v1989 = vadd.f32 %v1820, %v1988
        %1990 = vmatmul.bf16.gmra.mxu0 %v489
        %v1991 = vpop.f32.mrf.mxu0
        %v1992 = vadd.f32 %v1823, %v1991
        %v1993 = vpop.f32.mrf.mxu0
        %v1994 = vadd.f32 %v1825, %v1993
        %1995 = vmatmul.bf16.gmra.mxu0 %v491
        %v1996 = vpop.f32.mrf.mxu0
        %v1997 = vadd.f32 %v1828, %v1996
        %v1998 = vpop.f32.mrf.mxu0
        %v1999 = vadd.f32 %v1830, %v1998
        %2000 = vmatmul.bf16.gmra.mxu0 %v493
        %v2001 = vpop.f32.mrf.mxu0
        %v2002 = vadd.f32 %v1833, %v2001
        %v2003 = vpop.f32.mrf.mxu0
        %v2004 = vadd.f32 %v1835, %v2003
        %2005 = vmatmul.bf16.gmra.mxu0 %v495
        %v2006 = vpop.f32.mrf.mxu0
        %v2007 = vadd.f32 %v1838, %v2006
        %v2008 = vpop.f32.mrf.mxu0
        %v2009 = vadd.f32 %v1840, %v2008
        %2010 = vmatmul.bf16.gmra.mxu0 %v497
        %v2011 = vpop.f32.mrf.mxu0
        %v2012 = vadd.f32 %v1843, %v2011
        %v2013 = vpop.f32.mrf.mxu0
        %v2014 = vadd.f32 %v1845, %v2013
        %2015 = vmatmul.bf16.gmra.mxu0 %v499
        %v2016 = vpop.f32.mrf.mxu0
        %v2017 = vadd.f32 %v1848, %v2016
        %v2018 = vpop.f32.mrf.mxu0
        %v2019 = vadd.f32 %v1850, %v2018
        %2020 = vmatmul.bf16.gmra.mxu0 %v501
        %v2021 = vpop.f32.mrf.mxu0
        %v2022 = vadd.f32 %v1853, %v2021
        %v2023 = vpop.f32.mrf.mxu0
        %v2024 = vadd.f32 %v1855, %v2023
        %2025 = vmatmul.bf16.gmra.mxu0 %v503
        %v2026 = vpop.f32.mrf.mxu0
        %v2027 = vadd.f32 %v1858, %v2026
        %v2028 = vpop.f32.mrf.mxu0
        %v2029 = vadd.f32 %v1860, %v2028
        %2030 = vmatmul.bf16.gmra.mxu0 %v505
        %v2031 = vpop.f32.mrf.mxu0
        %v2032 = vadd.f32 %v1863, %v2031
        %v2033 = vpop.f32.mrf.mxu0
        %v2034 = vadd.f32 %v1865, %v2033
        %2035 = vmatmul.bf16.gmra.mxu0 %v507
        %v2036 = vpop.f32.mrf.mxu0
        %v2037 = vadd.f32 %v1868, %v2036
        %v2038 = vpop.f32.mrf.mxu0
        %v2039 = vadd.f32 %v1870, %v2038
        %2040 = vmatmul.bf16.gmra.mxu0 %v509
        %v2041 = vpop.f32.mrf.mxu0
        %v2042 = vadd.f32 %v1873, %v2041
        %v2043 = vpop.f32.mrf.mxu0
        %v2044 = vadd.f32 %v1875, %v2043
        %2045 = vmatmul.bf16.gmra.mxu0 %v511
        %v2046 = vpop.f32.mrf.mxu0
        %v2047 = vadd.f32 %v1878, %v2046
        %v2048 = vpop.f32.mrf.mxu0
        %v2049 = vadd.f32 %v1880, %v2048
        %2050 = vmatmul.bf16.gmra.mxu0 %v513
        %v2051 = vpop.f32.mrf.mxu0
        %v2052 = vadd.f32 %v1883, %v2051
        %v2053 = vpop.f32.mrf.mxu0
        %v2054 = vadd.f32 %v1885, %v2053
        %2055 = vmatmul.bf16.gmra.mxu0 %v515
        %v2056 = vpop.f32.mrf.mxu0
        %v2057 = vadd.f32 %v1888, %v2056
        %v2058 = vpop.f32.mrf.mxu0
        %v2059 = vadd.f32 %v1890, %v2058
        %2060 = vmatmul.bf16.gmra.mxu0 %v517
        %v2061 = vpop.f32.mrf.mxu0
        %v2062 = vadd.f32 %v1893, %v2061
        %v2063 = vpop.f32.mrf.mxu0
        %v2064 = vadd.f32 %v1895, %v2063
        %2065 = vmatmul.bf16.gmra.mxu0 %v519
        %v2066 = vpop.f32.mrf.mxu0
        %v2067 = vadd.f32 %v1898, %v2066
        %v2068 = vpop.f32.mrf.mxu0
        %v2069 = vadd.f32 %v1900, %v2068
        %2070 = vmatmul.bf16.gmra.mxu0 %v521
        %v2071 = vpop.f32.mrf.mxu0
        %v2072 = vadd.f32 %v1903, %v2071
        %v2073 = vpop.f32.mrf.mxu0
        %v2074 = vadd.f32 %v1905, %v2073
        %2075 = vmatmul.bf16.gmra.mxu0 %v523
        %v2076 = vpop.f32.mrf.mxu0
        %v2077 = vadd.f32 %v1908, %v2076
        %v2078 = vpop.f32.mrf.mxu0
        %v2079 = vadd.f32 %v1910, %v2078
        %2080 = vmatmul.bf16.gmra.mxu0 %v525
        %v2081 = vpop.f32.mrf.mxu0
        %v2082 = vadd.f32 %v1913, %v2081
        %v2083 = vpop.f32.mrf.mxu0
        %v2084 = vadd.f32 %v1915, %v2083
        %2085 = vmatmul.bf16.gmra.mxu0 %v527
        %v2086 = vpop.f32.mrf.mxu0
        %v2087 = vadd.f32 %v1918, %v2086
        %v2088 = vpop.f32.mrf.mxu0
        %v2089 = vadd.f32 %v1920, %v2088
        %2090 = vmatmul.bf16.gmra.mxu0 %v529
        %v2091 = vpop.f32.mrf.mxu0
        %v2092 = vadd.f32 %v1923, %v2091
        %v2093 = vpop.f32.mrf.mxu0
        %v2094 = vadd.f32 %v1925, %v2093
        %2095 = vmatmul.bf16.gmra.mxu0 %v531
        %v2096 = vpop.f32.mrf.mxu0
        %v2097 = vadd.f32 %v1928, %v2096
        %v2098 = vpop.f32.mrf.mxu0
        %v2099 = vadd.f32 %v1930, %v2098
        %2100 = vmatmul.bf16.gmra.mxu0 %v533
        %v2101 = vpop.f32.mrf.mxu0
        %v2102 = vadd.f32 %v1933, %v2101
        %v2103 = vpop.f32.mrf.mxu0
        %v2104 = vadd.f32 %v1935, %v2103
        %2105 = vmatmul.bf16.gmra.mxu0 %v535
        %v2106 = vpop.f32.mrf.mxu0
        %v2107 = vadd.f32 %v1938, %v2106
        %v2108 = vpop.f32.mrf.mxu0
        %v2109 = vadd.f32 %v1940, %v2108
        %2110 = vmatmul.bf16.gmra.mxu0 %v537
        %v2111 = vpop.f32.mrf.mxu0
        %v2112 = vadd.f32 %v1943, %v2111
        %v2113 = vpop.f32.mrf.mxu0
        %v2114 = vadd.f32 %v1945, %v2113
        %2115 = vmatmul.bf16.gmra.mxu0 %v539
        %v2116 = vpop.f32.mrf.mxu0
        %v2117 = vadd.f32 %v1948, %v2116
        %v2118 = vpop.f32.mrf.mxu0
        %v2119 = vadd.f32 %v1950, %v2118
        %2120 = vmatmul.bf16.gmra.mxu0 %v541
        %v2121 = vpop.f32.mrf.mxu0
        %v2122 = vadd.f32 %v1953, %v2121
        %v2123 = vpop.f32.mrf.mxu0
        %v2124 = vadd.f32 %v1955, %v2123
        %2125 = vmatmul.bf16.gmra.mxu0 %v543
        %v2126 = vpop.f32.mrf.mxu0
        %v2127 = vadd.f32 %v1958, %v2126
        %v2128 = vpop.f32.mrf.mxu0
        %v2129 = vadd.f32 %v1960, %v2128
        %2130 = vmatmul.bf16.gmra.mxu0 %v545
        %v2131 = vpop.f32.mrf.mxu0
        %v2132 = vadd.f32 %v1963, %v2131
        %v2133 = vpop.f32.mrf.mxu0
        %v2134 = vadd.f32 %v1965, %v2133
        %2135 = vdwg.mxu0
        %2136 = vmatpush.bf16.msra.mxu0 %v975
        %2137 = vmatpush.bf16.msra.mxu0 %v969
        %2138 = vmatpush.bf16.msra.mxu0 %v963
        %2139 = vmatpush.bf16.msra.mxu0 %v957
        %2140 = vmatpush.bf16.msra.mxu0 %v951
        %2141 = vmatpush.bf16.msra.mxu0 %v945
        %2142 = vmatpush.bf16.msra.mxu0 %v939
        %2143 = vmatpush.bf16.msra.mxu0 %v933
        %2144 = vmatmul.bf16.gmra.mxu0 %v482
        %v2145 = vpop.f32.mrf.mxu0
        %v2146 = vadd.f32 0.0, %v2145
        %v2147 = vpop.f32.mrf.mxu0
        %v2148 = vadd.f32 0.0, %v2147
        %2149 = vmatmul.bf16.gmra.mxu0 %v484
        %v2150 = vpop.f32.mrf.mxu0
        %v2151 = vadd.f32 0.0, %v2150
        %v2152 = vpop.f32.mrf.mxu0
        %v2153 = vadd.f32 0.0, %v2152
        %2154 = vmatmul.bf16.gmra.mxu0 %v486
        %v2155 = vpop.f32.mrf.mxu0
        %v2156 = vadd.f32 0.0, %v2155
        %v2157 = vpop.f32.mrf.mxu0
        %v2158 = vadd.f32 0.0, %v2157
        %2159 = vmatmul.bf16.gmra.mxu0 %v488
        %v2160 = vpop.f32.mrf.mxu0
        %v2161 = vadd.f32 0.0, %v2160
        %v2162 = vpop.f32.mrf.mxu0
        %v2163 = vadd.f32 0.0, %v2162
        %2164 = vmatmul.bf16.gmra.mxu0 %v490
        %v2165 = vpop.f32.mrf.mxu0
        %v2166 = vadd.f32 0.0, %v2165
        %v2167 = vpop.f32.mrf.mxu0
        %v2168 = vadd.f32 0.0, %v2167
        %2169 = vmatmul.bf16.gmra.mxu0 %v492
        %v2170 = vpop.f32.mrf.mxu0
        %v2171 = vadd.f32 0.0, %v2170
        %v2172 = vpop.f32.mrf.mxu0
        %v2173 = vadd.f32 0.0, %v2172
        %2174 = vmatmul.bf16.gmra.mxu0 %v494
        %v2175 = vpop.f32.mrf.mxu0
        %v2176 = vadd.f32 0.0, %v2175
        %v2177 = vpop.f32.mrf.mxu0
        %v2178 = vadd.f32 0.0, %v2177
        %2179 = vmatmul.bf16.gmra.mxu0 %v496
        %v2180 = vpop.f32.mrf.mxu0
        %v2181 = vadd.f32 0.0, %v2180
        %v2182 = vpop.f32.mrf.mxu0
        %v2183 = vadd.f32 0.0, %v2182
        %2184 = vmatmul.bf16.gmra.mxu0 %v498
        %v2185 = vpop.f32.mrf.mxu0
        %v2186 = vadd.f32 0.0, %v2185
        %v2187 = vpop.f32.mrf.mxu0
        %v2188 = vadd.f32 0.0, %v2187
        %2189 = vmatmul.bf16.gmra.mxu0 %v500
        %v2190 = vpop.f32.mrf.mxu0
        %v2191 = vadd.f32 0.0, %v2190
        %v2192 = vpop.f32.mrf.mxu0
        %v2193 = vadd.f32 0.0, %v2192
        %2194 = vmatmul.bf16.gmra.mxu0 %v502
        %v2195 = vpop.f32.mrf.mxu0
        %v2196 = vadd.f32 0.0, %v2195
        %v2197 = vpop.f32.mrf.mxu0
        %v2198 = vadd.f32 0.0, %v2197
        %2199 = vmatmul.bf16.gmra.mxu0 %v504
        %v2200 = vpop.f32.mrf.mxu0
        %v2201 = vadd.f32 0.0, %v2200
        %v2202 = vpop.f32.mrf.mxu0
        %v2203 = vadd.f32 0.0, %v2202
        %2204 = vmatmul.bf16.gmra.mxu0 %v506
        %v2205 = vpop.f32.mrf.mxu0
        %v2206 = vadd.f32 0.0, %v2205
        %v2207 = vpop.f32.mrf.mxu0
        %v2208 = vadd.f32 0.0, %v2207
        %2209 = vmatmul.bf16.gmra.mxu0 %v508
        %v2210 = vpop.f32.mrf.mxu0
        %v2211 = vadd.f32 0.0, %v2210
        %v2212 = vpop.f32.mrf.mxu0
        %v2213 = vadd.f32 0.0, %v2212
        %2214 = vmatmul.bf16.gmra.mxu0 %v510
        %v2215 = vpop.f32.mrf.mxu0
        %v2216 = vadd.f32 0.0, %v2215
        %v2217 = vpop.f32.mrf.mxu0
        %v2218 = vadd.f32 0.0, %v2217
        %2219 = vmatmul.bf16.gmra.mxu0 %v512
        %v2220 = vpop.f32.mrf.mxu0
        %v2221 = vadd.f32 0.0, %v2220
        %v2222 = vpop.f32.mrf.mxu0
        %v2223 = vadd.f32 0.0, %v2222
        %2224 = vmatmul.bf16.gmra.mxu0 %v514
        %v2225 = vpop.f32.mrf.mxu0
        %v2226 = vadd.f32 0.0, %v2225
        %v2227 = vpop.f32.mrf.mxu0
        %v2228 = vadd.f32 0.0, %v2227
        %2229 = vmatmul.bf16.gmra.mxu0 %v516
        %v2230 = vpop.f32.mrf.mxu0
        %v2231 = vadd.f32 0.0, %v2230
        %v2232 = vpop.f32.mrf.mxu0
        %v2233 = vadd.f32 0.0, %v2232
        %2234 = vmatmul.bf16.gmra.mxu0 %v518
        %v2235 = vpop.f32.mrf.mxu0
        %v2236 = vadd.f32 0.0, %v2235
        %v2237 = vpop.f32.mrf.mxu0
        %v2238 = vadd.f32 0.0, %v2237
        %2239 = vmatmul.bf16.gmra.mxu0 %v520
        %v2240 = vpop.f32.mrf.mxu0
        %v2241 = vadd.f32 0.0, %v2240
        %v2242 = vpop.f32.mrf.mxu0
        %v2243 = vadd.f32 0.0, %v2242
        %2244 = vmatmul.bf16.gmra.mxu0 %v522
        %v2245 = vpop.f32.mrf.mxu0
        %v2246 = vadd.f32 0.0, %v2245
        %v2247 = vpop.f32.mrf.mxu0
        %v2248 = vadd.f32 0.0, %v2247
        %2249 = vmatmul.bf16.gmra.mxu0 %v524
        %v2250 = vpop.f32.mrf.mxu0
        %v2251 = vadd.f32 0.0, %v2250
        %v2252 = vpop.f32.mrf.mxu0
        %v2253 = vadd.f32 0.0, %v2252
        %2254 = vmatmul.bf16.gmra.mxu0 %v526
        %v2255 = vpop.f32.mrf.mxu0
        %v2256 = vadd.f32 0.0, %v2255
        %v2257 = vpop.f32.mrf.mxu0
        %v2258 = vadd.f32 0.0, %v2257
        %2259 = vmatmul.bf16.gmra.mxu0 %v528
        %v2260 = vpop.f32.mrf.mxu0
        %v2261 = vadd.f32 0.0, %v2260
        %v2262 = vpop.f32.mrf.mxu0
        %v2263 = vadd.f32 0.0, %v2262
        %2264 = vmatmul.bf16.gmra.mxu0 %v530
        %v2265 = vpop.f32.mrf.mxu0
        %v2266 = vadd.f32 0.0, %v2265
        %v2267 = vpop.f32.mrf.mxu0
        %v2268 = vadd.f32 0.0, %v2267
        %2269 = vmatmul.bf16.gmra.mxu0 %v532
        %v2270 = vpop.f32.mrf.mxu0
        %v2271 = vadd.f32 0.0, %v2270
        %v2272 = vpop.f32.mrf.mxu0
        %v2273 = vadd.f32 0.0, %v2272
        %2274 = vmatmul.bf16.gmra.mxu0 %v534
        %v2275 = vpop.f32.mrf.mxu0
        %v2276 = vadd.f32 0.0, %v2275
        %v2277 = vpop.f32.mrf.mxu0
        %v2278 = vadd.f32 0.0, %v2277
        %2279 = vmatmul.bf16.gmra.mxu0 %v536
        %v2280 = vpop.f32.mrf.mxu0
        %v2281 = vadd.f32 0.0, %v2280
        %v2282 = vpop.f32.mrf.mxu0
        %v2283 = vadd.f32 0.0, %v2282
        %2284 = vmatmul.bf16.gmra.mxu0 %v538
        %v2285 = vpop.f32.mrf.mxu0
        %v2286 = vadd.f32 0.0, %v2285
        %v2287 = vpop.f32.mrf.mxu0
        %v2288 = vadd.f32 0.0, %v2287
        %2289 = vmatmul.bf16.gmra.mxu0 %v540
        %v2290 = vpop.f32.mrf.mxu0
        %v2291 = vadd.f32 0.0, %v2290
        %v2292 = vpop.f32.mrf.mxu0
        %v2293 = vadd.f32 0.0, %v2292
        %2294 = vmatmul.bf16.gmra.mxu0 %v542
        %v2295 = vpop.f32.mrf.mxu0
        %v2296 = vadd.f32 0.0, %v2295
        %v2297 = vpop.f32.mrf.mxu0
        %v2298 = vadd.f32 0.0, %v2297
        %2299 = vmatmul.bf16.gmra.mxu0 %v544
        %v2300 = vpop.f32.mrf.mxu0
        %v2301 = vadd.f32 0.0, %v2300
        %v2302 = vpop.f32.mrf.mxu0
        %v2303 = vadd.f32 0.0, %v2302
        %2304 = vdwg.mxu0
        %2305 = vmatpush.bf16.msra.mxu0 %v1023
        %2306 = vmatpush.bf16.msra.mxu0 %v1017
        %2307 = vmatpush.bf16.msra.mxu0 %v1011
        %2308 = vmatpush.bf16.msra.mxu0 %v1005
        %2309 = vmatpush.bf16.msra.mxu0 %v999
        %2310 = vmatpush.bf16.msra.mxu0 %v993
        %2311 = vmatpush.bf16.msra.mxu0 %v987
        %2312 = vmatpush.bf16.msra.mxu0 %v981
        %2313 = vmatmul.bf16.gmra.mxu0 %v483
        %v2314 = vpop.f32.mrf.mxu0
        %v2315 = vadd.f32 %v2146, %v2314
        %v2316 = vpop.f32.mrf.mxu0
        %v2317 = vadd.f32 %v2148, %v2316
        %2318 = vmatmul.bf16.gmra.mxu0 %v485
        %v2319 = vpop.f32.mrf.mxu0
        %v2320 = vadd.f32 %v2151, %v2319
        %v2321 = vpop.f32.mrf.mxu0
        %v2322 = vadd.f32 %v2153, %v2321
        %2323 = vmatmul.bf16.gmra.mxu0 %v487
        %v2324 = vpop.f32.mrf.mxu0
        %v2325 = vadd.f32 %v2156, %v2324
        %v2326 = vpop.f32.mrf.mxu0
        %v2327 = vadd.f32 %v2158, %v2326
        %2328 = vmatmul.bf16.gmra.mxu0 %v489
        %v2329 = vpop.f32.mrf.mxu0
        %v2330 = vadd.f32 %v2161, %v2329
        %v2331 = vpop.f32.mrf.mxu0
        %v2332 = vadd.f32 %v2163, %v2331
        %2333 = vmatmul.bf16.gmra.mxu0 %v491
        %v2334 = vpop.f32.mrf.mxu0
        %v2335 = vadd.f32 %v2166, %v2334
        %v2336 = vpop.f32.mrf.mxu0
        %v2337 = vadd.f32 %v2168, %v2336
        %2338 = vmatmul.bf16.gmra.mxu0 %v493
        %v2339 = vpop.f32.mrf.mxu0
        %v2340 = vadd.f32 %v2171, %v2339
        %v2341 = vpop.f32.mrf.mxu0
        %v2342 = vadd.f32 %v2173, %v2341
        %2343 = vmatmul.bf16.gmra.mxu0 %v495
        %v2344 = vpop.f32.mrf.mxu0
        %v2345 = vadd.f32 %v2176, %v2344
        %v2346 = vpop.f32.mrf.mxu0
        %v2347 = vadd.f32 %v2178, %v2346
        %2348 = vmatmul.bf16.gmra.mxu0 %v497
        %v2349 = vpop.f32.mrf.mxu0
        %v2350 = vadd.f32 %v2181, %v2349
        %v2351 = vpop.f32.mrf.mxu0
        %v2352 = vadd.f32 %v2183, %v2351
        %2353 = vmatmul.bf16.gmra.mxu0 %v499
        %v2354 = vpop.f32.mrf.mxu0
        %v2355 = vadd.f32 %v2186, %v2354
        %v2356 = vpop.f32.mrf.mxu0
        %v2357 = vadd.f32 %v2188, %v2356
        %2358 = vmatmul.bf16.gmra.mxu0 %v501
        %v2359 = vpop.f32.mrf.mxu0
        %v2360 = vadd.f32 %v2191, %v2359
        %v2361 = vpop.f32.mrf.mxu0
        %v2362 = vadd.f32 %v2193, %v2361
        %2363 = vmatmul.bf16.gmra.mxu0 %v503
        %v2364 = vpop.f32.mrf.mxu0
        %v2365 = vadd.f32 %v2196, %v2364
        %v2366 = vpop.f32.mrf.mxu0
        %v2367 = vadd.f32 %v2198, %v2366
        %2368 = vmatmul.bf16.gmra.mxu0 %v505
        %v2369 = vpop.f32.mrf.mxu0
        %v2370 = vadd.f32 %v2201, %v2369
        %v2371 = vpop.f32.mrf.mxu0
        %v2372 = vadd.f32 %v2203, %v2371
        %2373 = vmatmul.bf16.gmra.mxu0 %v507
        %v2374 = vpop.f32.mrf.mxu0
        %v2375 = vadd.f32 %v2206, %v2374
        %v2376 = vpop.f32.mrf.mxu0
        %v2377 = vadd.f32 %v2208, %v2376
        %2378 = vmatmul.bf16.gmra.mxu0 %v509
        %v2379 = vpop.f32.mrf.mxu0
        %v2380 = vadd.f32 %v2211, %v2379
        %v2381 = vpop.f32.mrf.mxu0
        %v2382 = vadd.f32 %v2213, %v2381
        %2383 = vmatmul.bf16.gmra.mxu0 %v511
        %v2384 = vpop.f32.mrf.mxu0
        %v2385 = vadd.f32 %v2216, %v2384
        %v2386 = vpop.f32.mrf.mxu0
        %v2387 = vadd.f32 %v2218, %v2386
        %2388 = vmatmul.bf16.gmra.mxu0 %v513
        %v2389 = vpop.f32.mrf.mxu0
        %v2390 = vadd.f32 %v2221, %v2389
        %v2391 = vpop.f32.mrf.mxu0
        %v2392 = vadd.f32 %v2223, %v2391
        %2393 = vmatmul.bf16.gmra.mxu0 %v515
        %v2394 = vpop.f32.mrf.mxu0
        %v2395 = vadd.f32 %v2226, %v2394
        %v2396 = vpop.f32.mrf.mxu0
        %v2397 = vadd.f32 %v2228, %v2396
        %2398 = vmatmul.bf16.gmra.mxu0 %v517
        %v2399 = vpop.f32.mrf.mxu0
        %v2400 = vadd.f32 %v2231, %v2399
        %v2401 = vpop.f32.mrf.mxu0
        %v2402 = vadd.f32 %v2233, %v2401
        %2403 = vmatmul.bf16.gmra.mxu0 %v519
        %v2404 = vpop.f32.mrf.mxu0
        %v2405 = vadd.f32 %v2236, %v2404
        %v2406 = vpop.f32.mrf.mxu0
        %v2407 = vadd.f32 %v2238, %v2406
        %2408 = vmatmul.bf16.gmra.mxu0 %v521
        %v2409 = vpop.f32.mrf.mxu0
        %v2410 = vadd.f32 %v2241, %v2409
        %v2411 = vpop.f32.mrf.mxu0
        %v2412 = vadd.f32 %v2243, %v2411
        %2413 = vmatmul.bf16.gmra.mxu0 %v523
        %v2414 = vpop.f32.mrf.mxu0
        %v2415 = vadd.f32 %v2246, %v2414
        %v2416 = vpop.f32.mrf.mxu0
        %v2417 = vadd.f32 %v2248, %v2416
        %2418 = vmatmul.bf16.gmra.mxu0 %v525
        %v2419 = vpop.f32.mrf.mxu0
        %v2420 = vadd.f32 %v2251, %v2419
        %v2421 = vpop.f32.mrf.mxu0
        %v2422 = vadd.f32 %v2253, %v2421
        %2423 = vmatmul.bf16.gmra.mxu0 %v527
        %v2424 = vpop.f32.mrf.mxu0
        %v2425 = vadd.f32 %v2256, %v2424
        %v2426 = vpop.f32.mrf.mxu0
        %v2427 = vadd.f32 %v2258, %v2426
        %2428 = vmatmul.bf16.gmra.mxu0 %v529
        %v2429 = vpop.f32.mrf.mxu0
        %v2430 = vadd.f32 %v2261, %v2429
        %v2431 = vpop.f32.mrf.mxu0
        %v2432 = vadd.f32 %v2263, %v2431
        %2433 = vmatmul.bf16.gmra.mxu0 %v531
        %v2434 = vpop.f32.mrf.mxu0
        %v2435 = vadd.f32 %v2266, %v2434
        %v2436 = vpop.f32.mrf.mxu0
        %v2437 = vadd.f32 %v2268, %v2436
        %2438 = vmatmul.bf16.gmra.mxu0 %v533
        %v2439 = vpop.f32.mrf.mxu0
        %v2440 = vadd.f32 %v2271, %v2439
        %v2441 = vpop.f32.mrf.mxu0
        %v2442 = vadd.f32 %v2273, %v2441
        %2443 = vmatmul.bf16.gmra.mxu0 %v535
        %v2444 = vpop.f32.mrf.mxu0
        %v2445 = vadd.f32 %v2276, %v2444
        %v2446 = vpop.f32.mrf.mxu0
        %v2447 = vadd.f32 %v2278, %v2446
        %2448 = vmatmul.bf16.gmra.mxu0 %v537
        %v2449 = vpop.f32.mrf.mxu0
        %v2450 = vadd.f32 %v2281, %v2449
        %v2451 = vpop.f32.mrf.mxu0
        %v2452 = vadd.f32 %v2283, %v2451
        %2453 = vmatmul.bf16.gmra.mxu0 %v539
        %v2454 = vpop.f32.mrf.mxu0
        %v2455 = vadd.f32 %v2286, %v2454
        %v2456 = vpop.f32.mrf.mxu0
        %v2457 = vadd.f32 %v2288, %v2456
        %2458 = vmatmul.bf16.gmra.mxu0 %v541
        %v2459 = vpop.f32.mrf.mxu0
        %v2460 = vadd.f32 %v2291, %v2459
        %v2461 = vpop.f32.mrf.mxu0
        %v2462 = vadd.f32 %v2293, %v2461
        %2463 = vmatmul.bf16.gmra.mxu0 %v543
        %v2464 = vpop.f32.mrf.mxu0
        %v2465 = vadd.f32 %v2296, %v2464
        %v2466 = vpop.f32.mrf.mxu0
        %v2467 = vadd.f32 %v2298, %v2466
        %2468 = vmatmul.bf16.gmra.mxu0 %v545
        %v2469 = vpop.f32.mrf.mxu0
        %v2470 = vadd.f32 %v2301, %v2469
        %v2471 = vpop.f32.mrf.mxu0
        %v2472 = vadd.f32 %v2303, %v2471
        %2473 = vdwg.mxu0
        %2474 = vmatpush.bf16.msra.mxu0 %v976
        %2475 = vmatpush.bf16.msra.mxu0 %v970
        %2476 = vmatpush.bf16.msra.mxu0 %v964
        %2477 = vmatpush.bf16.msra.mxu0 %v958
        %2478 = vmatpush.bf16.msra.mxu0 %v952
        %2479 = vmatpush.bf16.msra.mxu0 %v946
        %2480 = vmatpush.bf16.msra.mxu0 %v940
        %2481 = vmatpush.bf16.msra.mxu0 %v934
        %2482 = vmatmul.bf16.gmra.mxu0 %v482
        %v2483 = vpop.f32.mrf.mxu0
        %v2484 = vadd.f32 0.0, %v2483
        %v2485 = vpop.f32.mrf.mxu0
        %v2486 = vadd.f32 0.0, %v2485
        %2487 = vmatmul.bf16.gmra.mxu0 %v484
        %v2488 = vpop.f32.mrf.mxu0
        %v2489 = vadd.f32 0.0, %v2488
        %v2490 = vpop.f32.mrf.mxu0
        %v2491 = vadd.f32 0.0, %v2490
        %2492 = vmatmul.bf16.gmra.mxu0 %v486
        %v2493 = vpop.f32.mrf.mxu0
        %v2494 = vadd.f32 0.0, %v2493
        %v2495 = vpop.f32.mrf.mxu0
        %v2496 = vadd.f32 0.0, %v2495
        %2497 = vmatmul.bf16.gmra.mxu0 %v488
        %v2498 = vpop.f32.mrf.mxu0
        %v2499 = vadd.f32 0.0, %v2498
        %v2500 = vpop.f32.mrf.mxu0
        %v2501 = vadd.f32 0.0, %v2500
        %2502 = vmatmul.bf16.gmra.mxu0 %v490
        %v2503 = vpop.f32.mrf.mxu0
        %v2504 = vadd.f32 0.0, %v2503
        %v2505 = vpop.f32.mrf.mxu0
        %v2506 = vadd.f32 0.0, %v2505
        %2507 = vmatmul.bf16.gmra.mxu0 %v492
        %v2508 = vpop.f32.mrf.mxu0
        %v2509 = vadd.f32 0.0, %v2508
        %v2510 = vpop.f32.mrf.mxu0
        %v2511 = vadd.f32 0.0, %v2510
        %2512 = vmatmul.bf16.gmra.mxu0 %v494
        %v2513 = vpop.f32.mrf.mxu0
        %v2514 = vadd.f32 0.0, %v2513
        %v2515 = vpop.f32.mrf.mxu0
        %v2516 = vadd.f32 0.0, %v2515
        %2517 = vmatmul.bf16.gmra.mxu0 %v496
        %v2518 = vpop.f32.mrf.mxu0
        %v2519 = vadd.f32 0.0, %v2518
        %v2520 = vpop.f32.mrf.mxu0
        %v2521 = vadd.f32 0.0, %v2520
        %2522 = vmatmul.bf16.gmra.mxu0 %v498
        %v2523 = vpop.f32.mrf.mxu0
        %v2524 = vadd.f32 0.0, %v2523
        %v2525 = vpop.f32.mrf.mxu0
        %v2526 = vadd.f32 0.0, %v2525
        %2527 = vmatmul.bf16.gmra.mxu0 %v500
        %v2528 = vpop.f32.mrf.mxu0
        %v2529 = vadd.f32 0.0, %v2528
        %v2530 = vpop.f32.mrf.mxu0
        %v2531 = vadd.f32 0.0, %v2530
        %2532 = vmatmul.bf16.gmra.mxu0 %v502
        %v2533 = vpop.f32.mrf.mxu0
        %v2534 = vadd.f32 0.0, %v2533
        %v2535 = vpop.f32.mrf.mxu0
        %v2536 = vadd.f32 0.0, %v2535
        %2537 = vmatmul.bf16.gmra.mxu0 %v504
        %v2538 = vpop.f32.mrf.mxu0
        %v2539 = vadd.f32 0.0, %v2538
        %v2540 = vpop.f32.mrf.mxu0
        %v2541 = vadd.f32 0.0, %v2540
        %2542 = vmatmul.bf16.gmra.mxu0 %v506
        %v2543 = vpop.f32.mrf.mxu0
        %v2544 = vadd.f32 0.0, %v2543
        %v2545 = vpop.f32.mrf.mxu0
        %v2546 = vadd.f32 0.0, %v2545
        %2547 = vmatmul.bf16.gmra.mxu0 %v508
        %v2548 = vpop.f32.mrf.mxu0
        %v2549 = vadd.f32 0.0, %v2548
        %v2550 = vpop.f32.mrf.mxu0
        %v2551 = vadd.f32 0.0, %v2550
        %2552 = vmatmul.bf16.gmra.mxu0 %v510
        %v2553 = vpop.f32.mrf.mxu0
        %v2554 = vadd.f32 0.0, %v2553
        %v2555 = vpop.f32.mrf.mxu0
        %v2556 = vadd.f32 0.0, %v2555
        %2557 = vmatmul.bf16.gmra.mxu0 %v512
        %v2558 = vpop.f32.mrf.mxu0
        %v2559 = vadd.f32 0.0, %v2558
        %v2560 = vpop.f32.mrf.mxu0
        %v2561 = vadd.f32 0.0, %v2560
        %2562 = vmatmul.bf16.gmra.mxu0 %v514
        %v2563 = vpop.f32.mrf.mxu0
        %v2564 = vadd.f32 0.0, %v2563
        %v2565 = vpop.f32.mrf.mxu0
        %v2566 = vadd.f32 0.0, %v2565
        %2567 = vmatmul.bf16.gmra.mxu0 %v516
        %v2568 = vpop.f32.mrf.mxu0
        %v2569 = vadd.f32 0.0, %v2568
        %v2570 = vpop.f32.mrf.mxu0
        %v2571 = vadd.f32 0.0, %v2570
        %2572 = vmatmul.bf16.gmra.mxu0 %v518
        %v2573 = vpop.f32.mrf.mxu0
        %v2574 = vadd.f32 0.0, %v2573
        %v2575 = vpop.f32.mrf.mxu0
        %v2576 = vadd.f32 0.0, %v2575
        %2577 = vmatmul.bf16.gmra.mxu0 %v520
        %v2578 = vpop.f32.mrf.mxu0
        %v2579 = vadd.f32 0.0, %v2578
        %v2580 = vpop.f32.mrf.mxu0
        %v2581 = vadd.f32 0.0, %v2580
        %2582 = vmatmul.bf16.gmra.mxu0 %v522
        %v2583 = vpop.f32.mrf.mxu0
        %v2584 = vadd.f32 0.0, %v2583
        %v2585 = vpop.f32.mrf.mxu0
        %v2586 = vadd.f32 0.0, %v2585
        %2587 = vmatmul.bf16.gmra.mxu0 %v524
        %v2588 = vpop.f32.mrf.mxu0
        %v2589 = vadd.f32 0.0, %v2588
        %v2590 = vpop.f32.mrf.mxu0
        %v2591 = vadd.f32 0.0, %v2590
        %2592 = vmatmul.bf16.gmra.mxu0 %v526
        %v2593 = vpop.f32.mrf.mxu0
        %v2594 = vadd.f32 0.0, %v2593
        %v2595 = vpop.f32.mrf.mxu0
        %v2596 = vadd.f32 0.0, %v2595
        %2597 = vmatmul.bf16.gmra.mxu0 %v528
        %v2598 = vpop.f32.mrf.mxu0
        %v2599 = vadd.f32 0.0, %v2598
        %v2600 = vpop.f32.mrf.mxu0
        %v2601 = vadd.f32 0.0, %v2600
        %2602 = vmatmul.bf16.gmra.mxu0 %v530
        %v2603 = vpop.f32.mrf.mxu0
        %v2604 = vadd.f32 0.0, %v2603
        %v2605 = vpop.f32.mrf.mxu0
        %v2606 = vadd.f32 0.0, %v2605
        %2607 = vmatmul.bf16.gmra.mxu0 %v532
        %v2608 = vpop.f32.mrf.mxu0
        %v2609 = vadd.f32 0.0, %v2608
        %v2610 = vpop.f32.mrf.mxu0
        %v2611 = vadd.f32 0.0, %v2610
        %2612 = vmatmul.bf16.gmra.mxu0 %v534
        %v2613 = vpop.f32.mrf.mxu0
        %v2614 = vadd.f32 0.0, %v2613
        %v2615 = vpop.f32.mrf.mxu0
        %v2616 = vadd.f32 0.0, %v2615
        %2617 = vmatmul.bf16.gmra.mxu0 %v536
        %v2618 = vpop.f32.mrf.mxu0
        %v2619 = vadd.f32 0.0, %v2618
        %v2620 = vpop.f32.mrf.mxu0
        %v2621 = vadd.f32 0.0, %v2620
        %2622 = vmatmul.bf16.gmra.mxu0 %v538
        %v2623 = vpop.f32.mrf.mxu0
        %v2624 = vadd.f32 0.0, %v2623
        %v2625 = vpop.f32.mrf.mxu0
        %v2626 = vadd.f32 0.0, %v2625
        %2627 = vmatmul.bf16.gmra.mxu0 %v540
        %v2628 = vpop.f32.mrf.mxu0
        %v2629 = vadd.f32 0.0, %v2628
        %v2630 = vpop.f32.mrf.mxu0
        %v2631 = vadd.f32 0.0, %v2630
        %2632 = vmatmul.bf16.gmra.mxu0 %v542
        %v2633 = vpop.f32.mrf.mxu0
        %v2634 = vadd.f32 0.0, %v2633
        %v2635 = vpop.f32.mrf.mxu0
        %v2636 = vadd.f32 0.0, %v2635
        %2637 = vmatmul.bf16.gmra.mxu0 %v544
        %v2638 = vpop.f32.mrf.mxu0
        %v2639 = vadd.f32 0.0, %v2638
        %v2640 = vpop.f32.mrf.mxu0
        %v2641 = vadd.f32 0.0, %v2640
        %2642 = vdwg.mxu0
        %2643 = vmatpush.bf16.msra.mxu0 %v1024
        %2644 = vmatpush.bf16.msra.mxu0 %v1018
        %2645 = vmatpush.bf16.msra.mxu0 %v1012
        %2646 = vmatpush.bf16.msra.mxu0 %v1006
        %2647 = vmatpush.bf16.msra.mxu0 %v1000
        %2648 = vmatpush.bf16.msra.mxu0 %v994
        %2649 = vmatpush.bf16.msra.mxu0 %v988
        %2650 = vmatpush.bf16.msra.mxu0 %v982
        %2651 = vmatmul.bf16.gmra.mxu0 %v483
        %v2652 = vpop.f32.mrf.mxu0
        %v2653 = vadd.f32 %v2484, %v2652
        %v2654 = vpop.f32.mrf.mxu0
        %v2655 = vadd.f32 %v2486, %v2654
        %2656 = vmatmul.bf16.gmra.mxu0 %v485
        %v2657 = vpop.f32.mrf.mxu0
        %v2658 = vadd.f32 %v2489, %v2657
        %v2659 = vpop.f32.mrf.mxu0
        %v2660 = vadd.f32 %v2491, %v2659
        %2661 = vmatmul.bf16.gmra.mxu0 %v487
        %v2662 = vpop.f32.mrf.mxu0
        %v2663 = vadd.f32 %v2494, %v2662
        %v2664 = vpop.f32.mrf.mxu0
        %v2665 = vadd.f32 %v2496, %v2664
        %2666 = vmatmul.bf16.gmra.mxu0 %v489
        %v2667 = vpop.f32.mrf.mxu0
        %v2668 = vadd.f32 %v2499, %v2667
        %v2669 = vpop.f32.mrf.mxu0
        %v2670 = vadd.f32 %v2501, %v2669
        %2671 = vmatmul.bf16.gmra.mxu0 %v491
        %v2672 = vpop.f32.mrf.mxu0
        %v2673 = vadd.f32 %v2504, %v2672
        %v2674 = vpop.f32.mrf.mxu0
        %v2675 = vadd.f32 %v2506, %v2674
        %2676 = vmatmul.bf16.gmra.mxu0 %v493
        %v2677 = vpop.f32.mrf.mxu0
        %v2678 = vadd.f32 %v2509, %v2677
        %v2679 = vpop.f32.mrf.mxu0
        %v2680 = vadd.f32 %v2511, %v2679
        %2681 = vmatmul.bf16.gmra.mxu0 %v495
        %v2682 = vpop.f32.mrf.mxu0
        %v2683 = vadd.f32 %v2514, %v2682
        %v2684 = vpop.f32.mrf.mxu0
        %v2685 = vadd.f32 %v2516, %v2684
        %2686 = vmatmul.bf16.gmra.mxu0 %v497
        %v2687 = vpop.f32.mrf.mxu0
        %v2688 = vadd.f32 %v2519, %v2687
        %v2689 = vpop.f32.mrf.mxu0
        %v2690 = vadd.f32 %v2521, %v2689
        %2691 = vmatmul.bf16.gmra.mxu0 %v499
        %v2692 = vpop.f32.mrf.mxu0
        %v2693 = vadd.f32 %v2524, %v2692
        %v2694 = vpop.f32.mrf.mxu0
        %v2695 = vadd.f32 %v2526, %v2694
        %2696 = vmatmul.bf16.gmra.mxu0 %v501
        %v2697 = vpop.f32.mrf.mxu0
        %v2698 = vadd.f32 %v2529, %v2697
        %v2699 = vpop.f32.mrf.mxu0
        %v2700 = vadd.f32 %v2531, %v2699
        %2701 = vmatmul.bf16.gmra.mxu0 %v503
        %v2702 = vpop.f32.mrf.mxu0
        %v2703 = vadd.f32 %v2534, %v2702
        %v2704 = vpop.f32.mrf.mxu0
        %v2705 = vadd.f32 %v2536, %v2704
        %2706 = vmatmul.bf16.gmra.mxu0 %v505
        %v2707 = vpop.f32.mrf.mxu0
        %v2708 = vadd.f32 %v2539, %v2707
        %v2709 = vpop.f32.mrf.mxu0
        %v2710 = vadd.f32 %v2541, %v2709
        %2711 = vmatmul.bf16.gmra.mxu0 %v507
        %v2712 = vpop.f32.mrf.mxu0
        %v2713 = vadd.f32 %v2544, %v2712
        %v2714 = vpop.f32.mrf.mxu0
        %v2715 = vadd.f32 %v2546, %v2714
        %2716 = vmatmul.bf16.gmra.mxu0 %v509
        %v2717 = vpop.f32.mrf.mxu0
        %v2718 = vadd.f32 %v2549, %v2717
        %v2719 = vpop.f32.mrf.mxu0
        %v2720 = vadd.f32 %v2551, %v2719
        %2721 = vmatmul.bf16.gmra.mxu0 %v511
        %v2722 = vpop.f32.mrf.mxu0
        %v2723 = vadd.f32 %v2554, %v2722
        %v2724 = vpop.f32.mrf.mxu0
        %v2725 = vadd.f32 %v2556, %v2724
        %2726 = vmatmul.bf16.gmra.mxu0 %v513
        %v2727 = vpop.f32.mrf.mxu0
        %v2728 = vadd.f32 %v2559, %v2727
        %v2729 = vpop.f32.mrf.mxu0
        %v2730 = vadd.f32 %v2561, %v2729
        %2731 = vmatmul.bf16.gmra.mxu0 %v515
        %v2732 = vpop.f32.mrf.mxu0
        %v2733 = vadd.f32 %v2564, %v2732
        %v2734 = vpop.f32.mrf.mxu0
        %v2735 = vadd.f32 %v2566, %v2734
        %2736 = vmatmul.bf16.gmra.mxu0 %v517
        %v2737 = vpop.f32.mrf.mxu0
        %v2738 = vadd.f32 %v2569, %v2737
        %v2739 = vpop.f32.mrf.mxu0
        %v2740 = vadd.f32 %v2571, %v2739
        %2741 = vmatmul.bf16.gmra.mxu0 %v519
        %v2742 = vpop.f32.mrf.mxu0
        %v2743 = vadd.f32 %v2574, %v2742
        %v2744 = vpop.f32.mrf.mxu0
        %v2745 = vadd.f32 %v2576, %v2744
        %2746 = vmatmul.bf16.gmra.mxu0 %v521
        %v2747 = vpop.f32.mrf.mxu0
        %v2748 = vadd.f32 %v2579, %v2747
        %v2749 = vpop.f32.mrf.mxu0
        %v2750 = vadd.f32 %v2581, %v2749
        %2751 = vmatmul.bf16.gmra.mxu0 %v523
        %v2752 = vpop.f32.mrf.mxu0
        %v2753 = vadd.f32 %v2584, %v2752
        %v2754 = vpop.f32.mrf.mxu0
        %v2755 = vadd.f32 %v2586, %v2754
        %2756 = vmatmul.bf16.gmra.mxu0 %v525
        %v2757 = vpop.f32.mrf.mxu0
        %v2758 = vadd.f32 %v2589, %v2757
        %v2759 = vpop.f32.mrf.mxu0
        %v2760 = vadd.f32 %v2591, %v2759
        %2761 = vmatmul.bf16.gmra.mxu0 %v527
        %v2762 = vpop.f32.mrf.mxu0
        %v2763 = vadd.f32 %v2594, %v2762
        %v2764 = vpop.f32.mrf.mxu0
        %v2765 = vadd.f32 %v2596, %v2764
        %2766 = vmatmul.bf16.gmra.mxu0 %v529
        %v2767 = vpop.f32.mrf.mxu0
        %v2768 = vadd.f32 %v2599, %v2767
        %v2769 = vpop.f32.mrf.mxu0
        %v2770 = vadd.f32 %v2601, %v2769
        %2771 = vmatmul.bf16.gmra.mxu0 %v531
        %v2772 = vpop.f32.mrf.mxu0
        %v2773 = vadd.f32 %v2604, %v2772
        %v2774 = vpop.f32.mrf.mxu0
        %v2775 = vadd.f32 %v2606, %v2774
        %2776 = vmatmul.bf16.gmra.mxu0 %v533
        %v2777 = vpop.f32.mrf.mxu0
        %v2778 = vadd.f32 %v2609, %v2777
        %v2779 = vpop.f32.mrf.mxu0
        %v2780 = vadd.f32 %v2611, %v2779
        %2781 = vmatmul.bf16.gmra.mxu0 %v535
        %v2782 = vpop.f32.mrf.mxu0
        %v2783 = vadd.f32 %v2614, %v2782
        %v2784 = vpop.f32.mrf.mxu0
        %v2785 = vadd.f32 %v2616, %v2784
        %2786 = vmatmul.bf16.gmra.mxu0 %v537
        %v2787 = vpop.f32.mrf.mxu0
        %v2788 = vadd.f32 %v2619, %v2787
        %v2789 = vpop.f32.mrf.mxu0
        %v2790 = vadd.f32 %v2621, %v2789
        %2791 = vmatmul.bf16.gmra.mxu0 %v539
        %v2792 = vpop.f32.mrf.mxu0
        %v2793 = vadd.f32 %v2624, %v2792
        %v2794 = vpop.f32.mrf.mxu0
        %v2795 = vadd.f32 %v2626, %v2794
        %2796 = vmatmul.bf16.gmra.mxu0 %v541
        %v2797 = vpop.f32.mrf.mxu0
        %v2798 = vadd.f32 %v2629, %v2797
        %v2799 = vpop.f32.mrf.mxu0
        %v2800 = vadd.f32 %v2631, %v2799
        %2801 = vmatmul.bf16.gmra.mxu0 %v543
        %v2802 = vpop.f32.mrf.mxu0
        %v2803 = vadd.f32 %v2634, %v2802
        %v2804 = vpop.f32.mrf.mxu0
        %v2805 = vadd.f32 %v2636, %v2804
        %2806 = vmatmul.bf16.gmra.mxu0 %v545
        %v2807 = vpop.f32.mrf.mxu0
        %v2808 = vadd.f32 %v2639, %v2807
        %v2809 = vpop.f32.mrf.mxu0
        %v2810 = vadd.f32 %v2641, %v2809
        %2811 = vdwg.mxu0
        %2812 = vmatpush.bf16.msra.mxu0 %v977
        %2813 = vmatpush.bf16.msra.mxu0 %v971
        %2814 = vmatpush.bf16.msra.mxu0 %v965
        %2815 = vmatpush.bf16.msra.mxu0 %v959
        %2816 = vmatpush.bf16.msra.mxu0 %v953
        %2817 = vmatpush.bf16.msra.mxu0 %v947
        %2818 = vmatpush.bf16.msra.mxu0 %v941
        %2819 = vmatpush.bf16.msra.mxu0 %v935
        %2820 = vmatmul.bf16.gmra.mxu0 %v482
        %v2821 = vpop.f32.mrf.mxu0
        %v2822 = vadd.f32 0.0, %v2821
        %v2823 = vpop.f32.mrf.mxu0
        %v2824 = vadd.f32 0.0, %v2823
        %2825 = vmatmul.bf16.gmra.mxu0 %v484
        %v2826 = vpop.f32.mrf.mxu0
        %v2827 = vadd.f32 0.0, %v2826
        %v2828 = vpop.f32.mrf.mxu0
        %v2829 = vadd.f32 0.0, %v2828
        %2830 = vmatmul.bf16.gmra.mxu0 %v486
        %v2831 = vpop.f32.mrf.mxu0
        %v2832 = vadd.f32 0.0, %v2831
        %v2833 = vpop.f32.mrf.mxu0
        %v2834 = vadd.f32 0.0, %v2833
        %2835 = vmatmul.bf16.gmra.mxu0 %v488
        %v2836 = vpop.f32.mrf.mxu0
        %v2837 = vadd.f32 0.0, %v2836
        %v2838 = vpop.f32.mrf.mxu0
        %v2839 = vadd.f32 0.0, %v2838
        %2840 = vmatmul.bf16.gmra.mxu0 %v490
        %v2841 = vpop.f32.mrf.mxu0
        %v2842 = vadd.f32 0.0, %v2841
        %v2843 = vpop.f32.mrf.mxu0
        %v2844 = vadd.f32 0.0, %v2843
        %2845 = vmatmul.bf16.gmra.mxu0 %v492
        %v2846 = vpop.f32.mrf.mxu0
        %v2847 = vadd.f32 0.0, %v2846
        %v2848 = vpop.f32.mrf.mxu0
        %v2849 = vadd.f32 0.0, %v2848
        %2850 = vmatmul.bf16.gmra.mxu0 %v494
        %v2851 = vpop.f32.mrf.mxu0
        %v2852 = vadd.f32 0.0, %v2851
        %v2853 = vpop.f32.mrf.mxu0
        %v2854 = vadd.f32 0.0, %v2853
        %2855 = vmatmul.bf16.gmra.mxu0 %v496
        %v2856 = vpop.f32.mrf.mxu0
        %v2857 = vadd.f32 0.0, %v2856
        %v2858 = vpop.f32.mrf.mxu0
        %v2859 = vadd.f32 0.0, %v2858
        %2860 = vmatmul.bf16.gmra.mxu0 %v498
        %v2861 = vpop.f32.mrf.mxu0
        %v2862 = vadd.f32 0.0, %v2861
        %v2863 = vpop.f32.mrf.mxu0
        %v2864 = vadd.f32 0.0, %v2863
        %2865 = vmatmul.bf16.gmra.mxu0 %v500
        %v2866 = vpop.f32.mrf.mxu0
        %v2867 = vadd.f32 0.0, %v2866
        %v2868 = vpop.f32.mrf.mxu0
        %v2869 = vadd.f32 0.0, %v2868
        %2870 = vmatmul.bf16.gmra.mxu0 %v502
        %v2871 = vpop.f32.mrf.mxu0
        %v2872 = vadd.f32 0.0, %v2871
        %v2873 = vpop.f32.mrf.mxu0
        %v2874 = vadd.f32 0.0, %v2873
        %2875 = vmatmul.bf16.gmra.mxu0 %v504
        %v2876 = vpop.f32.mrf.mxu0
        %v2877 = vadd.f32 0.0, %v2876
        %v2878 = vpop.f32.mrf.mxu0
        %v2879 = vadd.f32 0.0, %v2878
        %2880 = vmatmul.bf16.gmra.mxu0 %v506
        %v2881 = vpop.f32.mrf.mxu0
        %v2882 = vadd.f32 0.0, %v2881
        %v2883 = vpop.f32.mrf.mxu0
        %v2884 = vadd.f32 0.0, %v2883
        %2885 = vmatmul.bf16.gmra.mxu0 %v508
        %v2886 = vpop.f32.mrf.mxu0
        %v2887 = vadd.f32 0.0, %v2886
        %v2888 = vpop.f32.mrf.mxu0
        %v2889 = vadd.f32 0.0, %v2888
        %2890 = vmatmul.bf16.gmra.mxu0 %v510
        %v2891 = vpop.f32.mrf.mxu0
        %v2892 = vadd.f32 0.0, %v2891
        %v2893 = vpop.f32.mrf.mxu0
        %v2894 = vadd.f32 0.0, %v2893
        %2895 = vmatmul.bf16.gmra.mxu0 %v512
        %v2896 = vpop.f32.mrf.mxu0
        %v2897 = vadd.f32 0.0, %v2896
        %v2898 = vpop.f32.mrf.mxu0
        %v2899 = vadd.f32 0.0, %v2898
        %2900 = vmatmul.bf16.gmra.mxu0 %v514
        %v2901 = vpop.f32.mrf.mxu0
        %v2902 = vadd.f32 0.0, %v2901
        %v2903 = vpop.f32.mrf.mxu0
        %v2904 = vadd.f32 0.0, %v2903
        %2905 = vmatmul.bf16.gmra.mxu0 %v516
        %v2906 = vpop.f32.mrf.mxu0
        %v2907 = vadd.f32 0.0, %v2906
        %v2908 = vpop.f32.mrf.mxu0
        %v2909 = vadd.f32 0.0, %v2908
        %2910 = vmatmul.bf16.gmra.mxu0 %v518
        %v2911 = vpop.f32.mrf.mxu0
        %v2912 = vadd.f32 0.0, %v2911
        %v2913 = vpop.f32.mrf.mxu0
        %v2914 = vadd.f32 0.0, %v2913
        %2915 = vmatmul.bf16.gmra.mxu0 %v520
        %v2916 = vpop.f32.mrf.mxu0
        %v2917 = vadd.f32 0.0, %v2916
        %v2918 = vpop.f32.mrf.mxu0
        %v2919 = vadd.f32 0.0, %v2918
        %2920 = vmatmul.bf16.gmra.mxu0 %v522
        %v2921 = vpop.f32.mrf.mxu0
        %v2922 = vadd.f32 0.0, %v2921
        %v2923 = vpop.f32.mrf.mxu0
        %v2924 = vadd.f32 0.0, %v2923
        %2925 = vmatmul.bf16.gmra.mxu0 %v524
        %v2926 = vpop.f32.mrf.mxu0
        %v2927 = vadd.f32 0.0, %v2926
        %v2928 = vpop.f32.mrf.mxu0
        %v2929 = vadd.f32 0.0, %v2928
        %2930 = vmatmul.bf16.gmra.mxu0 %v526
        %v2931 = vpop.f32.mrf.mxu0
        %v2932 = vadd.f32 0.0, %v2931
        %v2933 = vpop.f32.mrf.mxu0
        %v2934 = vadd.f32 0.0, %v2933
        %2935 = vmatmul.bf16.gmra.mxu0 %v528
        %v2936 = vpop.f32.mrf.mxu0
        %v2937 = vadd.f32 0.0, %v2936
        %v2938 = vpop.f32.mrf.mxu0
        %v2939 = vadd.f32 0.0, %v2938
        %2940 = vmatmul.bf16.gmra.mxu0 %v530
        %v2941 = vpop.f32.mrf.mxu0
        %v2942 = vadd.f32 0.0, %v2941
        %v2943 = vpop.f32.mrf.mxu0
        %v2944 = vadd.f32 0.0, %v2943
        %2945 = vmatmul.bf16.gmra.mxu0 %v532
        %v2946 = vpop.f32.mrf.mxu0
        %v2947 = vadd.f32 0.0, %v2946
        %v2948 = vpop.f32.mrf.mxu0
        %v2949 = vadd.f32 0.0, %v2948
        %2950 = vmatmul.bf16.gmra.mxu0 %v534
        %v2951 = vpop.f32.mrf.mxu0
        %v2952 = vadd.f32 0.0, %v2951
        %v2953 = vpop.f32.mrf.mxu0
        %v2954 = vadd.f32 0.0, %v2953
        %2955 = vmatmul.bf16.gmra.mxu0 %v536
        %v2956 = vpop.f32.mrf.mxu0
        %v2957 = vadd.f32 0.0, %v2956
        %v2958 = vpop.f32.mrf.mxu0
        %v2959 = vadd.f32 0.0, %v2958
        %2960 = vmatmul.bf16.gmra.mxu0 %v538
        %v2961 = vpop.f32.mrf.mxu0
        %v2962 = vadd.f32 0.0, %v2961
        %v2963 = vpop.f32.mrf.mxu0
        %v2964 = vadd.f32 0.0, %v2963
        %2965 = vmatmul.bf16.gmra.mxu0 %v540
        %v2966 = vpop.f32.mrf.mxu0
        %v2967 = vadd.f32 0.0, %v2966
        %v2968 = vpop.f32.mrf.mxu0
        %v2969 = vadd.f32 0.0, %v2968
        %2970 = vmatmul.bf16.gmra.mxu0 %v542
        %v2971 = vpop.f32.mrf.mxu0
        %v2972 = vadd.f32 0.0, %v2971
        %v2973 = vpop.f32.mrf.mxu0
        %v2974 = vadd.f32 0.0, %v2973
        %2975 = vmatmul.bf16.gmra.mxu0 %v544
        %v2976 = vpop.f32.mrf.mxu0
        %v2977 = vadd.f32 0.0, %v2976
        %v2978 = vpop.f32.mrf.mxu0
        %v2979 = vadd.f32 0.0, %v2978
        %2980 = vdwg.mxu0
        %2981 = vmatpush.bf16.msra.mxu0 %v1025
        %2982 = vmatpush.bf16.msra.mxu0 %v1019
        %2983 = vmatpush.bf16.msra.mxu0 %v1013
        %2984 = vmatpush.bf16.msra.mxu0 %v1007
        %2985 = vmatpush.bf16.msra.mxu0 %v1001
        %2986 = vmatpush.bf16.msra.mxu0 %v995
        %2987 = vmatpush.bf16.msra.mxu0 %v989
        %2988 = vmatpush.bf16.msra.mxu0 %v983
        %2989 = vmatmul.bf16.gmra.mxu0 %v483
        %v2990 = vpop.f32.mrf.mxu0
        %v2991 = vadd.f32 %v2822, %v2990
        %v2992 = vpop.f32.mrf.mxu0
        %v2993 = vadd.f32 %v2824, %v2992
        %2994 = vmatmul.bf16.gmra.mxu0 %v485
        %v2995 = vpop.f32.mrf.mxu0
        %v2996 = vadd.f32 %v2827, %v2995
        %v2997 = vpop.f32.mrf.mxu0
        %v2998 = vadd.f32 %v2829, %v2997
        %2999 = vmatmul.bf16.gmra.mxu0 %v487
        %v3000 = vpop.f32.mrf.mxu0
        %v3001 = vadd.f32 %v2832, %v3000
        %v3002 = vpop.f32.mrf.mxu0
        %v3003 = vadd.f32 %v2834, %v3002
        %3004 = vmatmul.bf16.gmra.mxu0 %v489
        %v3005 = vpop.f32.mrf.mxu0
        %v3006 = vadd.f32 %v2837, %v3005
        %v3007 = vpop.f32.mrf.mxu0
        %v3008 = vadd.f32 %v2839, %v3007
        %3009 = vmatmul.bf16.gmra.mxu0 %v491
        %v3010 = vpop.f32.mrf.mxu0
        %v3011 = vadd.f32 %v2842, %v3010
        %v3012 = vpop.f32.mrf.mxu0
        %v3013 = vadd.f32 %v2844, %v3012
        %3014 = vmatmul.bf16.gmra.mxu0 %v493
        %v3015 = vpop.f32.mrf.mxu0
        %v3016 = vadd.f32 %v2847, %v3015
        %v3017 = vpop.f32.mrf.mxu0
        %v3018 = vadd.f32 %v2849, %v3017
        %3019 = vmatmul.bf16.gmra.mxu0 %v495
        %v3020 = vpop.f32.mrf.mxu0
        %v3021 = vadd.f32 %v2852, %v3020
        %v3022 = vpop.f32.mrf.mxu0
        %v3023 = vadd.f32 %v2854, %v3022
        %3024 = vmatmul.bf16.gmra.mxu0 %v497
        %v3025 = vpop.f32.mrf.mxu0
        %v3026 = vadd.f32 %v2857, %v3025
        %v3027 = vpop.f32.mrf.mxu0
        %v3028 = vadd.f32 %v2859, %v3027
        %3029 = vmatmul.bf16.gmra.mxu0 %v499
        %v3030 = vpop.f32.mrf.mxu0
        %v3031 = vadd.f32 %v2862, %v3030
        %v3032 = vpop.f32.mrf.mxu0
        %v3033 = vadd.f32 %v2864, %v3032
        %3034 = vmatmul.bf16.gmra.mxu0 %v501
        %v3035 = vpop.f32.mrf.mxu0
        %v3036 = vadd.f32 %v2867, %v3035
        %v3037 = vpop.f32.mrf.mxu0
        %v3038 = vadd.f32 %v2869, %v3037
        %3039 = vmatmul.bf16.gmra.mxu0 %v503
        %v3040 = vpop.f32.mrf.mxu0
        %v3041 = vadd.f32 %v2872, %v3040
        %v3042 = vpop.f32.mrf.mxu0
        %v3043 = vadd.f32 %v2874, %v3042
        %3044 = vmatmul.bf16.gmra.mxu0 %v505
        %v3045 = vpop.f32.mrf.mxu0
        %v3046 = vadd.f32 %v2877, %v3045
        %v3047 = vpop.f32.mrf.mxu0
        %v3048 = vadd.f32 %v2879, %v3047
        %3049 = vmatmul.bf16.gmra.mxu0 %v507
        %v3050 = vpop.f32.mrf.mxu0
        %v3051 = vadd.f32 %v2882, %v3050
        %v3052 = vpop.f32.mrf.mxu0
        %v3053 = vadd.f32 %v2884, %v3052
        %3054 = vmatmul.bf16.gmra.mxu0 %v509
        %v3055 = vpop.f32.mrf.mxu0
        %v3056 = vadd.f32 %v2887, %v3055
        %v3057 = vpop.f32.mrf.mxu0
        %v3058 = vadd.f32 %v2889, %v3057
        %3059 = vmatmul.bf16.gmra.mxu0 %v511
        %v3060 = vpop.f32.mrf.mxu0
        %v3061 = vadd.f32 %v2892, %v3060
        %v3062 = vpop.f32.mrf.mxu0
        %v3063 = vadd.f32 %v2894, %v3062
        %3064 = vmatmul.bf16.gmra.mxu0 %v513
        %v3065 = vpop.f32.mrf.mxu0
        %v3066 = vadd.f32 %v2897, %v3065
        %v3067 = vpop.f32.mrf.mxu0
        %v3068 = vadd.f32 %v2899, %v3067
        %3069 = vmatmul.bf16.gmra.mxu0 %v515
        %v3070 = vpop.f32.mrf.mxu0
        %v3071 = vadd.f32 %v2902, %v3070
        %v3072 = vpop.f32.mrf.mxu0
        %v3073 = vadd.f32 %v2904, %v3072
        %3074 = vmatmul.bf16.gmra.mxu0 %v517
        %v3075 = vpop.f32.mrf.mxu0
        %v3076 = vadd.f32 %v2907, %v3075
        %v3077 = vpop.f32.mrf.mxu0
        %v3078 = vadd.f32 %v2909, %v3077
        %3079 = vmatmul.bf16.gmra.mxu0 %v519
        %v3080 = vpop.f32.mrf.mxu0
        %v3081 = vadd.f32 %v2912, %v3080
        %v3082 = vpop.f32.mrf.mxu0
        %v3083 = vadd.f32 %v2914, %v3082
        %3084 = vmatmul.bf16.gmra.mxu0 %v521
        %v3085 = vpop.f32.mrf.mxu0
        %v3086 = vadd.f32 %v2917, %v3085
        %v3087 = vpop.f32.mrf.mxu0
        %v3088 = vadd.f32 %v2919, %v3087
        %3089 = vmatmul.bf16.gmra.mxu0 %v523
        %v3090 = vpop.f32.mrf.mxu0
        %v3091 = vadd.f32 %v2922, %v3090
        %v3092 = vpop.f32.mrf.mxu0
        %v3093 = vadd.f32 %v2924, %v3092
        %3094 = vmatmul.bf16.gmra.mxu0 %v525
        %v3095 = vpop.f32.mrf.mxu0
        %v3096 = vadd.f32 %v2927, %v3095
        %v3097 = vpop.f32.mrf.mxu0
        %v3098 = vadd.f32 %v2929, %v3097
        %3099 = vmatmul.bf16.gmra.mxu0 %v527
        %v3100 = vpop.f32.mrf.mxu0
        %v3101 = vadd.f32 %v2932, %v3100
        %v3102 = vpop.f32.mrf.mxu0
        %v3103 = vadd.f32 %v2934, %v3102
        %3104 = vmatmul.bf16.gmra.mxu0 %v529
        %v3105 = vpop.f32.mrf.mxu0
        %v3106 = vadd.f32 %v2937, %v3105
        %v3107 = vpop.f32.mrf.mxu0
        %v3108 = vadd.f32 %v2939, %v3107
        %3109 = vmatmul.bf16.gmra.mxu0 %v531
        %v3110 = vpop.f32.mrf.mxu0
        %v3111 = vadd.f32 %v2942, %v3110
        %v3112 = vpop.f32.mrf.mxu0
        %v3113 = vadd.f32 %v2944, %v3112
        %3114 = vmatmul.bf16.gmra.mxu0 %v533
        %v3115 = vpop.f32.mrf.mxu0
        %v3116 = vadd.f32 %v2947, %v3115
        %v3117 = vpop.f32.mrf.mxu0
        %v3118 = vadd.f32 %v2949, %v3117
        %3119 = vmatmul.bf16.gmra.mxu0 %v535
        %v3120 = vpop.f32.mrf.mxu0
        %v3121 = vadd.f32 %v2952, %v3120
        %v3122 = vpop.f32.mrf.mxu0
        %v3123 = vadd.f32 %v2954, %v3122
        %3124 = vmatmul.bf16.gmra.mxu0 %v537
        %v3125 = vpop.f32.mrf.mxu0
        %v3126 = vadd.f32 %v2957, %v3125
        %v3127 = vpop.f32.mrf.mxu0
        %v3128 = vadd.f32 %v2959, %v3127
        %3129 = vmatmul.bf16.gmra.mxu0 %v539
        %v3130 = vpop.f32.mrf.mxu0
        %v3131 = vadd.f32 %v2962, %v3130
        %v3132 = vpop.f32.mrf.mxu0
        %v3133 = vadd.f32 %v2964, %v3132
        %3134 = vmatmul.bf16.gmra.mxu0 %v541
        %v3135 = vpop.f32.mrf.mxu0
        %v3136 = vadd.f32 %v2967, %v3135
        %v3137 = vpop.f32.mrf.mxu0
        %v3138 = vadd.f32 %v2969, %v3137
        %3139 = vmatmul.bf16.gmra.mxu0 %v543
        %v3140 = vpop.f32.mrf.mxu0
        %v3141 = vadd.f32 %v2972, %v3140
        %v3142 = vpop.f32.mrf.mxu0
        %v3143 = vadd.f32 %v2974, %v3142
        %3144 = vmatmul.bf16.gmra.mxu0 %v545
        %v3145 = vpop.f32.mrf.mxu0
        %v3146 = vadd.f32 %v2977, %v3145
        %v3147 = vpop.f32.mrf.mxu0
        %v3148 = vadd.f32 %v2979, %v3147
        %3149 = vdwg.mxu0
        %v3150 = vtanh.pop %v1301
        %v3151 = vtanh.pop %v1639
        %v3152 = vtanh.pop %v1977
        %v3153 = vtanh.pop %v2315
        %v3154 = vtanh.pop %v2653
        %v3155 = vtanh.pop %v2991
        %v3156 = vtanh.pop %v1303
        %v3157 = vtanh.pop %v1641
        %v3158 = vtanh.pop %v1979
        %v3159 = vtanh.pop %v2317
        %v3160 = vtanh.pop %v2655
        %v3161 = vtanh.pop %v2993
        %v3162 = vtanh.pop %v1306
        %v3163 = vtanh.pop %v1644
        %v3164 = vtanh.pop %v1982
        %v3165 = vtanh.pop %v2320
        %v3166 = vtanh.pop %v2658
        %v3167 = vtanh.pop %v2996
        %v3168 = vtanh.pop %v1308
        %v3169 = vtanh.pop %v1646
        %v3170 = vtanh.pop %v1984
        %v3171 = vtanh.pop %v2322
        %v3172 = vtanh.pop %v2660
        %v3173 = vtanh.pop %v2998
        %v3174 = vtanh.pop %v1311
        %v3175 = vtanh.pop %v1649
        %v3176 = vtanh.pop %v1987
        %v3177 = vtanh.pop %v2325
        %v3178 = vtanh.pop %v2663
        %v3179 = vtanh.pop %v3001
        %v3180 = vtanh.pop %v1313
        %v3181 = vtanh.pop %v1651
        %v3182 = vtanh.pop %v1989
        %v3183 = vtanh.pop %v2327
        %v3184 = vtanh.pop %v2665
        %v3185 = vtanh.pop %v3003
        %v3186 = vtanh.pop %v1316
        %v3187 = vtanh.pop %v1654
        %v3188 = vtanh.pop %v1992
        %v3189 = vtanh.pop %v2330
        %v3190 = vtanh.pop %v2668
        %v3191 = vtanh.pop %v3006
        %v3192 = vtanh.pop %v1318
        %v3193 = vtanh.pop %v1656
        %v3194 = vtanh.pop %v1994
        %v3195 = vtanh.pop %v2332
        %v3196 = vtanh.pop %v2670
        %v3197 = vtanh.pop %v3008
        %v3198 = vtanh.pop %v1321
        %v3199 = vtanh.pop %v1659
        %v3200 = vtanh.pop %v1997
        %v3201 = vtanh.pop %v2335
        %v3202 = vtanh.pop %v2673
        %v3203 = vtanh.pop %v3011
        %v3204 = vtanh.pop %v1323
        %v3205 = vtanh.pop %v1661
        %v3206 = vtanh.pop %v1999
        %v3207 = vtanh.pop %v2337
        %v3208 = vtanh.pop %v2675
        %v3209 = vtanh.pop %v3013
        %v3210 = vtanh.pop %v1326
        %v3211 = vtanh.pop %v1664
        %v3212 = vtanh.pop %v2002
        %v3213 = vtanh.pop %v2340
        %v3214 = vtanh.pop %v2678
        %v3215 = vtanh.pop %v3016
        %v3216 = vtanh.pop %v1328
        %v3217 = vtanh.pop %v1666
        %v3218 = vtanh.pop %v2004
        %v3219 = vtanh.pop %v2342
        %v3220 = vtanh.pop %v2680
        %v3221 = vtanh.pop %v3018
        %v3222 = vtanh.pop %v1331
        %v3223 = vtanh.pop %v1669
        %v3224 = vtanh.pop %v2007
        %v3225 = vtanh.pop %v2345
        %v3226 = vtanh.pop %v2683
        %v3227 = vtanh.pop %v3021
        %v3228 = vtanh.pop %v1333
        %v3229 = vtanh.pop %v1671
        %v3230 = vtanh.pop %v2009
        %v3231 = vtanh.pop %v2347
        %v3232 = vtanh.pop %v2685
        %v3233 = vtanh.pop %v3023
        %v3234 = vtanh.pop %v1336
        %v3235 = vtanh.pop %v1674
        %v3236 = vtanh.pop %v2012
        %v3237 = vtanh.pop %v2350
        %v3238 = vtanh.pop %v2688
        %v3239 = vtanh.pop %v3026
        %v3240 = vtanh.pop %v1338
        %v3241 = vtanh.pop %v1676
        %v3242 = vtanh.pop %v2014
        %v3243 = vtanh.pop %v2352
        %v3244 = vtanh.pop %v2690
        %v3245 = vtanh.pop %v3028
        %v3246 = vtanh.pop %v1341
        %v3247 = vtanh.pop %v1679
        %v3248 = vtanh.pop %v2017
        %v3249 = vtanh.pop %v2355
        %v3250 = vtanh.pop %v2693
        %v3251 = vtanh.pop %v3031
        %v3252 = vtanh.pop %v1343
        %v3253 = vtanh.pop %v1681
        %v3254 = vtanh.pop %v2019
        %v3255 = vtanh.pop %v2357
        %v3256 = vtanh.pop %v2695
        %v3257 = vtanh.pop %v3033
        %v3258 = vtanh.pop %v1346
        %v3259 = vtanh.pop %v1684
        %v3260 = vtanh.pop %v2022
        %v3261 = vtanh.pop %v2360
        %v3262 = vtanh.pop %v2698
        %v3263 = vtanh.pop %v3036
        %v3264 = vtanh.pop %v1348
        %v3265 = vtanh.pop %v1686
        %v3266 = vtanh.pop %v2024
        %v3267 = vtanh.pop %v2362
        %v3268 = vtanh.pop %v2700
        %v3269 = vtanh.pop %v3038
        %v3270 = vtanh.pop %v1351
        %v3271 = vtanh.pop %v1689
        %v3272 = vtanh.pop %v2027
        %v3273 = vtanh.pop %v2365
        %v3274 = vtanh.pop %v2703
        %v3275 = vtanh.pop %v3041
        %v3276 = vtanh.pop %v1353
        %v3277 = vtanh.pop %v1691
        %v3278 = vtanh.pop %v2029
        %v3279 = vtanh.pop %v2367
        %v3280 = vtanh.pop %v2705
        %v3281 = vtanh.pop %v3043
        %v3282 = vtanh.pop %v1356
        %v3283 = vtanh.pop %v1694
        %v3284 = vtanh.pop %v2032
        %v3285 = vtanh.pop %v2370
        %v3286 = vtanh.pop %v2708
        %v3287 = vtanh.pop %v3046
        %v3288 = vtanh.pop %v1358
        %v3289 = vtanh.pop %v1696
        %v3290 = vtanh.pop %v2034
        %v3291 = vtanh.pop %v2372
        %v3292 = vtanh.pop %v2710
        %v3293 = vtanh.pop %v3048
        %v3294 = vtanh.pop %v1361
        %v3295 = vtanh.pop %v1699
        %v3296 = vtanh.pop %v2037
        %v3297 = vtanh.pop %v2375
        %v3298 = vtanh.pop %v2713
        %v3299 = vtanh.pop %v3051
        %v3300 = vtanh.pop %v1363
        %v3301 = vtanh.pop %v1701
        %v3302 = vtanh.pop %v2039
        %v3303 = vtanh.pop %v2377
        %v3304 = vtanh.pop %v2715
        %v3305 = vtanh.pop %v3053
        %v3306 = vtanh.pop %v1366
        %v3307 = vtanh.pop %v1704
        %v3308 = vtanh.pop %v2042
        %v3309 = vtanh.pop %v2380
        %v3310 = vtanh.pop %v2718
        %v3311 = vtanh.pop %v3056
        %v3312 = vtanh.pop %v1368
        %v3313 = vtanh.pop %v1706
        %v3314 = vtanh.pop %v2044
        %v3315 = vtanh.pop %v2382
        %v3316 = vtanh.pop %v2720
        %v3317 = vtanh.pop %v3058
        %v3318 = vtanh.pop %v1371
        %v3319 = vtanh.pop %v1709
        %v3320 = vtanh.pop %v2047
        %v3321 = vtanh.pop %v2385
        %v3322 = vtanh.pop %v2723
        %v3323 = vtanh.pop %v3061
        %v3324 = vtanh.pop %v1373
        %v3325 = vtanh.pop %v1711
        %v3326 = vtanh.pop %v2049
        %v3327 = vtanh.pop %v2387
        %v3328 = vtanh.pop %v2725
        %v3329 = vtanh.pop %v3063
        %v3330 = vtanh.pop %v1376
        %v3331 = vtanh.pop %v1714
        %v3332 = vtanh.pop %v2052
        %v3333 = vtanh.pop %v2390
        %v3334 = vtanh.pop %v2728
        %v3335 = vtanh.pop %v3066
        %v3336 = vtanh.pop %v1378
        %v3337 = vtanh.pop %v1716
        %v3338 = vtanh.pop %v2054
        %v3339 = vtanh.pop %v2392
        %v3340 = vtanh.pop %v2730
        %v3341 = vtanh.pop %v3068
        %v3342 = vtanh.pop %v1381
        %v3343 = vtanh.pop %v1719
        %v3344 = vtanh.pop %v2057
        %v3345 = vtanh.pop %v2395
        %v3346 = vtanh.pop %v2733
        %v3347 = vtanh.pop %v3071
        %v3348 = vtanh.pop %v1383
        %v3349 = vtanh.pop %v1721
        %v3350 = vtanh.pop %v2059
        %v3351 = vtanh.pop %v2397
        %v3352 = vtanh.pop %v2735
        %v3353 = vtanh.pop %v3073
        %v3354 = vtanh.pop %v1386
        %v3355 = vtanh.pop %v1724
        %v3356 = vtanh.pop %v2062
        %v3357 = vtanh.pop %v2400
        %v3358 = vtanh.pop %v2738
        %v3359 = vtanh.pop %v3076
        %v3360 = vtanh.pop %v1388
        %v3361 = vtanh.pop %v1726
        %v3362 = vtanh.pop %v2064
        %v3363 = vtanh.pop %v2402
        %v3364 = vtanh.pop %v2740
        %v3365 = vtanh.pop %v3078
        %v3366 = vtanh.pop %v1391
        %v3367 = vtanh.pop %v1729
        %v3368 = vtanh.pop %v2067
        %v3369 = vtanh.pop %v2405
        %v3370 = vtanh.pop %v2743
        %v3371 = vtanh.pop %v3081
        %v3372 = vtanh.pop %v1393
        %v3373 = vtanh.pop %v1731
        %v3374 = vtanh.pop %v2069
        %v3375 = vtanh.pop %v2407
        %v3376 = vtanh.pop %v2745
        %v3377 = vtanh.pop %v3083
        %v3378 = vtanh.pop %v1396
        %v3379 = vtanh.pop %v1734
        %v3380 = vtanh.pop %v2072
        %v3381 = vtanh.pop %v2410
        %v3382 = vtanh.pop %v2748
        %v3383 = vtanh.pop %v3086
        %v3384 = vtanh.pop %v1398
        %v3385 = vtanh.pop %v1736
        %v3386 = vtanh.pop %v2074
        %v3387 = vtanh.pop %v2412
        %v3388 = vtanh.pop %v2750
        %v3389 = vtanh.pop %v3088
        %v3390 = vtanh.pop %v1401
        %v3391 = vtanh.pop %v1739
        %v3392 = vtanh.pop %v2077
        %v3393 = vtanh.pop %v2415
        %v3394 = vtanh.pop %v2753
        %v3395 = vtanh.pop %v3091
        %v3396 = vtanh.pop %v1403
        %v3397 = vtanh.pop %v1741
        %v3398 = vtanh.pop %v2079
        %v3399 = vtanh.pop %v2417
        %v3400 = vtanh.pop %v2755
        %v3401 = vtanh.pop %v3093
        %v3402 = vtanh.pop %v1406
        %v3403 = vtanh.pop %v1744
        %v3404 = vtanh.pop %v2082
        %v3405 = vtanh.pop %v2420
        %v3406 = vtanh.pop %v2758
        %v3407 = vtanh.pop %v3096
        %v3408 = vtanh.pop %v1408
        %v3409 = vtanh.pop %v1746
        %v3410 = vtanh.pop %v2084
        %v3411 = vtanh.pop %v2422
        %v3412 = vtanh.pop %v2760
        %v3413 = vtanh.pop %v3098
        %v3414 = vtanh.pop %v1411
        %v3415 = vtanh.pop %v1749
        %v3416 = vtanh.pop %v2087
        %v3417 = vtanh.pop %v2425
        %v3418 = vtanh.pop %v2763
        %v3419 = vtanh.pop %v3101
        %v3420 = vtanh.pop %v1413
        %v3421 = vtanh.pop %v1751
        %v3422 = vtanh.pop %v2089
        %v3423 = vtanh.pop %v2427
        %v3424 = vtanh.pop %v2765
        %v3425 = vtanh.pop %v3103
        %v3426 = vtanh.pop %v1416
        %v3427 = vtanh.pop %v1754
        %v3428 = vtanh.pop %v2092
        %v3429 = vtanh.pop %v2430
        %v3430 = vtanh.pop %v2768
        %v3431 = vtanh.pop %v3106
        %v3432 = vtanh.pop %v1418
        %v3433 = vtanh.pop %v1756
        %v3434 = vtanh.pop %v2094
        %v3435 = vtanh.pop %v2432
        %v3436 = vtanh.pop %v2770
        %v3437 = vtanh.pop %v3108
        %v3438 = vtanh.pop %v1421
        %v3439 = vtanh.pop %v1759
        %v3440 = vtanh.pop %v2097
        %v3441 = vtanh.pop %v2435
        %v3442 = vtanh.pop %v2773
        %v3443 = vtanh.pop %v3111
        %v3444 = vtanh.pop %v1423
        %v3445 = vtanh.pop %v1761
        %v3446 = vtanh.pop %v2099
        %v3447 = vtanh.pop %v2437
        %v3448 = vtanh.pop %v2775
        %v3449 = vtanh.pop %v3113
        %v3450 = vtanh.pop %v1426
        %v3451 = vtanh.pop %v1764
        %v3452 = vtanh.pop %v2102
        %v3453 = vtanh.pop %v2440
        %v3454 = vtanh.pop %v2778
        %v3455 = vtanh.pop %v3116
        %v3456 = vtanh.pop %v1428
        %v3457 = vtanh.pop %v1766
        %v3458 = vtanh.pop %v2104
        %v3459 = vtanh.pop %v2442
        %v3460 = vtanh.pop %v2780
        %v3461 = vtanh.pop %v3118
        %v3462 = vtanh.pop %v1431
        %v3463 = vtanh.pop %v1769
        %v3464 = vtanh.pop %v2107
        %v3465 = vtanh.pop %v2445
        %v3466 = vtanh.pop %v2783
        %v3467 = vtanh.pop %v3121
        %v3468 = vtanh.pop %v1433
        %v3469 = vtanh.pop %v1771
        %v3470 = vtanh.pop %v2109
        %v3471 = vtanh.pop %v2447
        %v3472 = vtanh.pop %v2785
        %v3473 = vtanh.pop %v3123
        %v3474 = vtanh.pop %v1436
        %v3475 = vtanh.pop %v1774
        %v3476 = vtanh.pop %v2112
        %v3477 = vtanh.pop %v2450
        %v3478 = vtanh.pop %v2788
        %v3479 = vtanh.pop %v3126
        %v3480 = vtanh.pop %v1438
        %v3481 = vtanh.pop %v1776
        %v3482 = vtanh.pop %v2114
        %v3483 = vtanh.pop %v2452
        %v3484 = vtanh.pop %v2790
        %v3485 = vtanh.pop %v3128
        %v3486 = vtanh.pop %v1441
        %v3487 = vtanh.pop %v1779
        %v3488 = vtanh.pop %v2117
        %v3489 = vtanh.pop %v2455
        %v3490 = vtanh.pop %v2793
        %v3491 = vtanh.pop %v3131
        %v3492 = vtanh.pop %v1443
        %v3493 = vtanh.pop %v1781
        %v3494 = vtanh.pop %v2119
        %v3495 = vtanh.pop %v2457
        %v3496 = vtanh.pop %v2795
        %v3497 = vtanh.pop %v3133
        %v3498 = vtanh.pop %v1446
        %v3499 = vtanh.pop %v1784
        %v3500 = vtanh.pop %v2122
        %v3501 = vtanh.pop %v2460
        %v3502 = vtanh.pop %v2798
        %v3503 = vtanh.pop %v3136
        %v3504 = vtanh.pop %v1448
        %v3505 = vtanh.pop %v1786
        %v3506 = vtanh.pop %v2124
        %v3507 = vtanh.pop %v2462
        %v3508 = vtanh.pop %v2800
        %v3509 = vtanh.pop %v3138
        %v3510 = vtanh.pop %v1451
        %v3511 = vtanh.pop %v1789
        %v3512 = vtanh.pop %v2127
        %v3513 = vtanh.pop %v2465
        %v3514 = vtanh.pop %v2803
        %v3515 = vtanh.pop %v3141
        %v3516 = vtanh.pop %v1453
        %v3517 = vtanh.pop %v1791
        %v3518 = vtanh.pop %v2129
        %v3519 = vtanh.pop %v2467
        %v3520 = vtanh.pop %v2805
        %v3521 = vtanh.pop %v3143
        %v3522 = vtanh.pop %v1456
        %v3523 = vtanh.pop %v1794
        %v3524 = vtanh.pop %v2132
        %v3525 = vtanh.pop %v2470
        %v3526 = vtanh.pop %v2808
        %v3527 = vtanh.pop %v3146
        %v3528 = vtanh.pop %v1458
        %v3529 = vtanh.pop %v1796
        %v3530 = vtanh.pop %v2134
        %v3531 = vtanh.pop %v2472
        %v3532 = vtanh.pop %v2810
        %v3533 = vtanh.pop %v3148
        %v3534 = vpack.c.bf16 %v3156, %v3150
        %v3535 = vpack.c.bf16 %v3157, %v3151
        %v3536 = vpack.c.bf16 %v3158, %v3152
        %v3537 = vpack.c.bf16 %v3159, %v3153
        %v3538 = vpack.c.bf16 %v3160, %v3154
        %v3539 = vpack.c.bf16 %v3161, %v3155
        %v3540 = vpack.c.bf16 %v3168, %v3162
        %v3541 = vpack.c.bf16 %v3169, %v3163
        %v3542 = vpack.c.bf16 %v3170, %v3164
        %v3543 = vpack.c.bf16 %v3171, %v3165
        %v3544 = vpack.c.bf16 %v3172, %v3166
        %v3545 = vpack.c.bf16 %v3173, %v3167
        %v3546 = vpack.c.bf16 %v3180, %v3174
        %v3547 = vpack.c.bf16 %v3181, %v3175
        %v3548 = vpack.c.bf16 %v3182, %v3176
        %v3549 = vpack.c.bf16 %v3183, %v3177
        %v3550 = vpack.c.bf16 %v3184, %v3178
        %v3551 = vpack.c.bf16 %v3185, %v3179
        %v3552 = vpack.c.bf16 %v3192, %v3186
        %v3553 = vpack.c.bf16 %v3193, %v3187
        %v3554 = vpack.c.bf16 %v3194, %v3188
        %v3555 = vpack.c.bf16 %v3195, %v3189
        %v3556 = vpack.c.bf16 %v3196, %v3190
        %v3557 = vpack.c.bf16 %v3197, %v3191
        %v3558 = vpack.c.bf16 %v3204, %v3198
        %v3559 = vpack.c.bf16 %v3205, %v3199
        %v3560 = vpack.c.bf16 %v3206, %v3200
        %v3561 = vpack.c.bf16 %v3207, %v3201
        %v3562 = vpack.c.bf16 %v3208, %v3202
        %v3563 = vpack.c.bf16 %v3209, %v3203
        %v3564 = vpack.c.bf16 %v3216, %v3210
        %v3565 = vpack.c.bf16 %v3217, %v3211
        %v3566 = vpack.c.bf16 %v3218, %v3212
        %v3567 = vpack.c.bf16 %v3219, %v3213
        %v3568 = vpack.c.bf16 %v3220, %v3214
        %v3569 = vpack.c.bf16 %v3221, %v3215
        %v3570 = vpack.c.bf16 %v3228, %v3222
        %v3571 = vpack.c.bf16 %v3229, %v3223
        %v3572 = vpack.c.bf16 %v3230, %v3224
        %v3573 = vpack.c.bf16 %v3231, %v3225
        %v3574 = vpack.c.bf16 %v3232, %v3226
        %v3575 = vpack.c.bf16 %v3233, %v3227
        %v3576 = vpack.c.bf16 %v3240, %v3234
        %v3577 = vpack.c.bf16 %v3241, %v3235
        %v3578 = vpack.c.bf16 %v3242, %v3236
        %v3579 = vpack.c.bf16 %v3243, %v3237
        %v3580 = vpack.c.bf16 %v3244, %v3238
        %v3581 = vpack.c.bf16 %v3245, %v3239
        %v3582 = vpack.c.bf16 %v3252, %v3246
        %v3583 = vpack.c.bf16 %v3253, %v3247
        %v3584 = vpack.c.bf16 %v3254, %v3248
        %v3585 = vpack.c.bf16 %v3255, %v3249
        %v3586 = vpack.c.bf16 %v3256, %v3250
        %v3587 = vpack.c.bf16 %v3257, %v3251
        %v3588 = vpack.c.bf16 %v3264, %v3258
        %v3589 = vpack.c.bf16 %v3265, %v3259
        %v3590 = vpack.c.bf16 %v3266, %v3260
        %v3591 = vpack.c.bf16 %v3267, %v3261
        %v3592 = vpack.c.bf16 %v3268, %v3262
        %v3593 = vpack.c.bf16 %v3269, %v3263
        %v3594 = vpack.c.bf16 %v3276, %v3270
        %v3595 = vpack.c.bf16 %v3277, %v3271
        %v3596 = vpack.c.bf16 %v3278, %v3272
        %v3597 = vpack.c.bf16 %v3279, %v3273
        %v3598 = vpack.c.bf16 %v3280, %v3274
        %v3599 = vpack.c.bf16 %v3281, %v3275
        %v3600 = vpack.c.bf16 %v3288, %v3282
        %v3601 = vpack.c.bf16 %v3289, %v3283
        %v3602 = vpack.c.bf16 %v3290, %v3284
        %v3603 = vpack.c.bf16 %v3291, %v3285
        %v3604 = vpack.c.bf16 %v3292, %v3286
        %v3605 = vpack.c.bf16 %v3293, %v3287
        %v3606 = vpack.c.bf16 %v3300, %v3294
        %v3607 = vpack.c.bf16 %v3301, %v3295
        %v3608 = vpack.c.bf16 %v3302, %v3296
        %v3609 = vpack.c.bf16 %v3303, %v3297
        %v3610 = vpack.c.bf16 %v3304, %v3298
        %v3611 = vpack.c.bf16 %v3305, %v3299
        %v3612 = vpack.c.bf16 %v3312, %v3306
        %v3613 = vpack.c.bf16 %v3313, %v3307
        %v3614 = vpack.c.bf16 %v3314, %v3308
        %v3615 = vpack.c.bf16 %v3315, %v3309
        %v3616 = vpack.c.bf16 %v3316, %v3310
        %v3617 = vpack.c.bf16 %v3317, %v3311
        %v3618 = vpack.c.bf16 %v3324, %v3318
        %v3619 = vpack.c.bf16 %v3325, %v3319
        %v3620 = vpack.c.bf16 %v3326, %v3320
        %v3621 = vpack.c.bf16 %v3327, %v3321
        %v3622 = vpack.c.bf16 %v3328, %v3322
        %v3623 = vpack.c.bf16 %v3329, %v3323
        %v3624 = vpack.c.bf16 %v3336, %v3330
        %v3625 = vpack.c.bf16 %v3337, %v3331
        %v3626 = vpack.c.bf16 %v3338, %v3332
        %v3627 = vpack.c.bf16 %v3339, %v3333
        %v3628 = vpack.c.bf16 %v3340, %v3334
        %v3629 = vpack.c.bf16 %v3341, %v3335
        %v3630 = vpack.c.bf16 %v3348, %v3342
        %v3631 = vpack.c.bf16 %v3349, %v3343
        %v3632 = vpack.c.bf16 %v3350, %v3344
        %v3633 = vpack.c.bf16 %v3351, %v3345
        %v3634 = vpack.c.bf16 %v3352, %v3346
        %v3635 = vpack.c.bf16 %v3353, %v3347
        %v3636 = vpack.c.bf16 %v3360, %v3354
        %v3637 = vpack.c.bf16 %v3361, %v3355
        %v3638 = vpack.c.bf16 %v3362, %v3356
        %v3639 = vpack.c.bf16 %v3363, %v3357
        %v3640 = vpack.c.bf16 %v3364, %v3358
        %v3641 = vpack.c.bf16 %v3365, %v3359
        %v3642 = vpack.c.bf16 %v3372, %v3366
        %v3643 = vpack.c.bf16 %v3373, %v3367
        %v3644 = vpack.c.bf16 %v3374, %v3368
        %v3645 = vpack.c.bf16 %v3375, %v3369
        %v3646 = vpack.c.bf16 %v3376, %v3370
        %v3647 = vpack.c.bf16 %v3377, %v3371
        %v3648 = vpack.c.bf16 %v3384, %v3378
        %v3649 = vpack.c.bf16 %v3385, %v3379
        %v3650 = vpack.c.bf16 %v3386, %v3380
        %v3651 = vpack.c.bf16 %v3387, %v3381
        %v3652 = vpack.c.bf16 %v3388, %v3382
        %v3653 = vpack.c.bf16 %v3389, %v3383
        %v3654 = vpack.c.bf16 %v3396, %v3390
        %v3655 = vpack.c.bf16 %v3397, %v3391
        %v3656 = vpack.c.bf16 %v3398, %v3392
        %v3657 = vpack.c.bf16 %v3399, %v3393
        %v3658 = vpack.c.bf16 %v3400, %v3394
        %v3659 = vpack.c.bf16 %v3401, %v3395
        %v3660 = vpack.c.bf16 %v3408, %v3402
        %v3661 = vpack.c.bf16 %v3409, %v3403
        %v3662 = vpack.c.bf16 %v3410, %v3404
        %v3663 = vpack.c.bf16 %v3411, %v3405
        %v3664 = vpack.c.bf16 %v3412, %v3406
        %v3665 = vpack.c.bf16 %v3413, %v3407
        %v3666 = vpack.c.bf16 %v3420, %v3414
        %v3667 = vpack.c.bf16 %v3421, %v3415
        %v3668 = vpack.c.bf16 %v3422, %v3416
        %v3669 = vpack.c.bf16 %v3423, %v3417
        %v3670 = vpack.c.bf16 %v3424, %v3418
        %v3671 = vpack.c.bf16 %v3425, %v3419
        %v3672 = vpack.c.bf16 %v3432, %v3426
        %v3673 = vpack.c.bf16 %v3433, %v3427
        %v3674 = vpack.c.bf16 %v3434, %v3428
        %v3675 = vpack.c.bf16 %v3435, %v3429
        %v3676 = vpack.c.bf16 %v3436, %v3430
        %v3677 = vpack.c.bf16 %v3437, %v3431
        %v3678 = vpack.c.bf16 %v3444, %v3438
        %v3679 = vpack.c.bf16 %v3445, %v3439
        %v3680 = vpack.c.bf16 %v3446, %v3440
        %v3681 = vpack.c.bf16 %v3447, %v3441
        %v3682 = vpack.c.bf16 %v3448, %v3442
        %v3683 = vpack.c.bf16 %v3449, %v3443
        %v3684 = vpack.c.bf16 %v3456, %v3450
        %v3685 = vpack.c.bf16 %v3457, %v3451
        %v3686 = vpack.c.bf16 %v3458, %v3452
        %v3687 = vpack.c.bf16 %v3459, %v3453
        %v3688 = vpack.c.bf16 %v3460, %v3454
        %v3689 = vpack.c.bf16 %v3461, %v3455
        %v3690 = vpack.c.bf16 %v3468, %v3462
        %v3691 = vpack.c.bf16 %v3469, %v3463
        %v3692 = vpack.c.bf16 %v3470, %v3464
        %v3693 = vpack.c.bf16 %v3471, %v3465
        %v3694 = vpack.c.bf16 %v3472, %v3466
        %v3695 = vpack.c.bf16 %v3473, %v3467
        %v3696 = vpack.c.bf16 %v3480, %v3474
        %v3697 = vpack.c.bf16 %v3481, %v3475
        %v3698 = vpack.c.bf16 %v3482, %v3476
        %v3699 = vpack.c.bf16 %v3483, %v3477
        %v3700 = vpack.c.bf16 %v3484, %v3478
        %v3701 = vpack.c.bf16 %v3485, %v3479
        %v3702 = vpack.c.bf16 %v3492, %v3486
        %v3703 = vpack.c.bf16 %v3493, %v3487
        %v3704 = vpack.c.bf16 %v3494, %v3488
        %v3705 = vpack.c.bf16 %v3495, %v3489
        %v3706 = vpack.c.bf16 %v3496, %v3490
        %v3707 = vpack.c.bf16 %v3497, %v3491
        %v3708 = vpack.c.bf16 %v3504, %v3498
        %v3709 = vpack.c.bf16 %v3505, %v3499
        %v3710 = vpack.c.bf16 %v3506, %v3500
        %v3711 = vpack.c.bf16 %v3507, %v3501
        %v3712 = vpack.c.bf16 %v3508, %v3502
        %v3713 = vpack.c.bf16 %v3509, %v3503
        %v3714 = vpack.c.bf16 %v3516, %v3510
        %v3715 = vpack.c.bf16 %v3517, %v3511
        %v3716 = vpack.c.bf16 %v3518, %v3512
        %v3717 = vpack.c.bf16 %v3519, %v3513
        %v3718 = vpack.c.bf16 %v3520, %v3514
        %v3719 = vpack.c.bf16 %v3521, %v3515
        %v3720 = vpack.c.bf16 %v3528, %v3522
        %v3721 = vpack.c.bf16 %v3529, %v3523
        %v3722 = vpack.c.bf16 %v3530, %v3524
        %v3723 = vpack.c.bf16 %v3531, %v3525
        %v3724 = vpack.c.bf16 %v3532, %v3526
        %v3725 = vpack.c.bf16 %v3533, %v3527
        %v3726 = vld [vmem:[#allocation7] sm:$0xff]
        %v3727 = vld [vmem:[#allocation7 + $0x8] sm:$0xff]
        %v3728 = vld [vmem:[#allocation7 + $0x10] sm:$0xff]
        %v3729 = vld [vmem:[#allocation7 + $0x18] sm:$0xff]
        %v3730 = vld [vmem:[#allocation7 + $0x20] sm:$0xff]
        %v3731 = vld [vmem:[#allocation7 + $0x28] sm:$0xff]
        %v3732 = vld [vmem:[#allocation7 + $0x30] sm:$0xff]
        %v3733 = vld [vmem:[#allocation7 + $0x38] sm:$0xff]
        %v3734 = vld [vmem:[#allocation7 + $0x40] sm:$0xff]
        %v3735 = vld [vmem:[#allocation7 + $0x48] sm:$0xff]
        %v3736 = vld [vmem:[#allocation7 + $0x50] sm:$0xff]
        %v3737 = vld [vmem:[#allocation7 + $0x58] sm:$0xff]
        %v3738 = vld [vmem:[#allocation7 + $0x60] sm:$0xff]
        %v3739 = vld [vmem:[#allocation7 + $0x68] sm:$0xff]
        %v3740 = vld [vmem:[#allocation7 + $0x70] sm:$0xff]
        %v3741 = vld [vmem:[#allocation7 + $0x78] sm:$0xff]
        %v3742 = vld [vmem:[#allocation7 + $0x80] sm:$0xff]
        %v3743 = vld [vmem:[#allocation7 + $0x88] sm:$0xff]
        %v3744 = vld [vmem:[#allocation7 + $0x90] sm:$0xff]
        %v3745 = vld [vmem:[#allocation7 + $0x98] sm:$0xff]
        %v3746 = vld [vmem:[#allocation7 + $0xa0] sm:$0xff]
        %v3747 = vld [vmem:[#allocation7 + $0xa8] sm:$0xff]
        %v3748 = vld [vmem:[#allocation7 + $0xb0] sm:$0xff]
        %v3749 = vld [vmem:[#allocation7 + $0xb8] sm:$0xff]
        %v3750 = vld [vmem:[#allocation7 + $0xc0] sm:$0xff]
        %v3751 = vld [vmem:[#allocation7 + $0xc8] sm:$0xff]
        %v3752 = vld [vmem:[#allocation7 + $0xd0] sm:$0xff]
        %v3753 = vld [vmem:[#allocation7 + $0xd8] sm:$0xff]
        %v3754 = vld [vmem:[#allocation7 + $0xe0] sm:$0xff]
        %v3755 = vld [vmem:[#allocation7 + $0xe8] sm:$0xff]
        %v3756 = vld [vmem:[#allocation7 + $0xf0] sm:$0xff]
        %v3757 = vld [vmem:[#allocation7 + $0xf8] sm:$0xff]
        %v3758 = vld [vmem:[#allocation7 + $0x100] sm:$0xff]
        %v3759 = vld [vmem:[#allocation7 + $0x108] sm:$0xff]
        %v3760 = vld [vmem:[#allocation7 + $0x110] sm:$0xff]
        %v3761 = vld [vmem:[#allocation7 + $0x118] sm:$0xff]
        %v3762 = vld [vmem:[#allocation7 + $0x120] sm:$0xff]
        %v3763 = vld [vmem:[#allocation7 + $0x128] sm:$0xff]
        %v3764 = vld [vmem:[#allocation7 + $0x130] sm:$0xff]
        %v3765 = vld [vmem:[#allocation7 + $0x138] sm:$0xff]
        %v3766 = vld [vmem:[#allocation7 + $0x140] sm:$0xff]
        %v3767 = vld [vmem:[#allocation7 + $0x148] sm:$0xff]
        %v3768 = vld [vmem:[#allocation7 + $0x150] sm:$0xff]
        %v3769 = vld [vmem:[#allocation7 + $0x158] sm:$0xff]
        %v3770 = vld [vmem:[#allocation7 + $0x160] sm:$0xff]
        %v3771 = vld [vmem:[#allocation7 + $0x168] sm:$0xff]
        %v3772 = vld [vmem:[#allocation7 + $0x170] sm:$0xff]
        %v3773 = vld [vmem:[#allocation7 + $0x178] sm:$0xff]
        %v3774 = vld [vmem:[#allocation7 + $0x180] sm:$0xff]
        %v3775 = vld [vmem:[#allocation7 + $0x188] sm:$0xff]
        %v3776 = vld [vmem:[#allocation7 + $0x190] sm:$0xff]
        %v3777 = vld [vmem:[#allocation7 + $0x198] sm:$0xff]
        %v3778 = vld [vmem:[#allocation7 + $0x1a0] sm:$0xff]
        %v3779 = vld [vmem:[#allocation7 + $0x1a8] sm:$0xff]
        %v3780 = vld [vmem:[#allocation7 + $0x1b0] sm:$0xff]
        %v3781 = vld [vmem:[#allocation7 + $0x1b8] sm:$0xff]
        %v3782 = vld [vmem:[#allocation7 + $0x1c0] sm:$0xff]
        %v3783 = vld [vmem:[#allocation7 + $0x1c8] sm:$0xff]
        %v3784 = vld [vmem:[#allocation7 + $0x1d0] sm:$0xff]
        %v3785 = vld [vmem:[#allocation7 + $0x1d8] sm:$0xff]
        %v3786 = vld [vmem:[#allocation7 + $0x1e0] sm:$0xff]
        %v3787 = vld [vmem:[#allocation7 + $0x1e8] sm:$0xff]
        %v3788 = vld [vmem:[#allocation7 + $0x1f0] sm:$0xff]
        %v3789 = vld [vmem:[#allocation7 + $0x1f8] sm:$0xff]
        %v3790 = vld [vmem:[#allocation7 + $0x200] sm:$0xff]
        %v3791 = vld [vmem:[#allocation7 + $0x208] sm:$0xff]
        %v3792 = vld [vmem:[#allocation7 + $0x210] sm:$0xff]
        %v3793 = vld [vmem:[#allocation7 + $0x218] sm:$0xff]
        %v3794 = vld [vmem:[#allocation7 + $0x220] sm:$0xff]
        %v3795 = vld [vmem:[#allocation7 + $0x228] sm:$0xff]
        %v3796 = vld [vmem:[#allocation7 + $0x230] sm:$0xff]
        %v3797 = vld [vmem:[#allocation7 + $0x238] sm:$0xff]
        %v3798 = vld [vmem:[#allocation7 + $0x240] sm:$0xff]
        %v3799 = vld [vmem:[#allocation7 + $0x248] sm:$0xff]
        %v3800 = vld [vmem:[#allocation7 + $0x250] sm:$0xff]
        %v3801 = vld [vmem:[#allocation7 + $0x258] sm:$0xff]
        %v3802 = vld [vmem:[#allocation7 + $0x260] sm:$0xff]
        %v3803 = vld [vmem:[#allocation7 + $0x268] sm:$0xff]
        %v3804 = vld [vmem:[#allocation7 + $0x270] sm:$0xff]
        %v3805 = vld [vmem:[#allocation7 + $0x278] sm:$0xff]
        %v3806 = vld [vmem:[#allocation7 + $0x280] sm:$0xff]
        %v3807 = vld [vmem:[#allocation7 + $0x288] sm:$0xff]
        %v3808 = vld [vmem:[#allocation7 + $0x290] sm:$0xff]
        %v3809 = vld [vmem:[#allocation7 + $0x298] sm:$0xff]
        %v3810 = vld [vmem:[#allocation7 + $0x2a0] sm:$0xff]
        %v3811 = vld [vmem:[#allocation7 + $0x2a8] sm:$0xff]
        %v3812 = vld [vmem:[#allocation7 + $0x2b0] sm:$0xff]
        %v3813 = vld [vmem:[#allocation7 + $0x2b8] sm:$0xff]
        %v3814 = vld [vmem:[#allocation7 + $0x2c0] sm:$0xff]
        %v3815 = vld [vmem:[#allocation7 + $0x2c8] sm:$0xff]
        %v3816 = vld [vmem:[#allocation7 + $0x2d0] sm:$0xff]
        %v3817 = vld [vmem:[#allocation7 + $0x2d8] sm:$0xff]
        %v3818 = vld [vmem:[#allocation7 + $0x2e0] sm:$0xff]
        %v3819 = vld [vmem:[#allocation7 + $0x2e8] sm:$0xff]
        %v3820 = vld [vmem:[#allocation7 + $0x2f0] sm:$0xff]
        %v3821 = vld [vmem:[#allocation7 + $0x2f8] sm:$0xff]
        %v3822 = vld [vmem:[#allocation7 + $0x300] sm:$0xff]
        %v3823 = vld [vmem:[#allocation7 + $0x308] sm:$0xff]
        %v3824 = vld [vmem:[#allocation7 + $0x310] sm:$0xff]
        %v3825 = vld [vmem:[#allocation7 + $0x318] sm:$0xff]
        %v3826 = vld [vmem:[#allocation7 + $0x320] sm:$0xff]
        %v3827 = vld [vmem:[#allocation7 + $0x328] sm:$0xff]
        %v3828 = vld [vmem:[#allocation7 + $0x330] sm:$0xff]
        %v3829 = vld [vmem:[#allocation7 + $0x338] sm:$0xff]
        %v3830 = vld [vmem:[#allocation7 + $0x340] sm:$0xff]
        %v3831 = vld [vmem:[#allocation7 + $0x348] sm:$0xff]
        %v3832 = vld [vmem:[#allocation7 + $0x350] sm:$0xff]
        %v3833 = vld [vmem:[#allocation7 + $0x358] sm:$0xff]
        %v3834 = vld [vmem:[#allocation7 + $0x360] sm:$0xff]
        %v3835 = vld [vmem:[#allocation7 + $0x368] sm:$0xff]
        %v3836 = vld [vmem:[#allocation7 + $0x370] sm:$0xff]
        %v3837 = vld [vmem:[#allocation7 + $0x378] sm:$0xff]
        %v3838 = vld [vmem:[#allocation7 + $0x380] sm:$0xff]
        %v3839 = vld [vmem:[#allocation7 + $0x388] sm:$0xff]
        %v3840 = vld [vmem:[#allocation7 + $0x390] sm:$0xff]
        %v3841 = vld [vmem:[#allocation7 + $0x398] sm:$0xff]
        %v3842 = vld [vmem:[#allocation7 + $0x3a0] sm:$0xff]
        %v3843 = vld [vmem:[#allocation7 + $0x3a8] sm:$0xff]
        %v3844 = vld [vmem:[#allocation7 + $0x3b0] sm:$0xff]
        %v3845 = vld [vmem:[#allocation7 + $0x3b8] sm:$0xff]
        %v3846 = vld [vmem:[#allocation7 + $0x3c0] sm:$0xff]
        %v3847 = vld [vmem:[#allocation7 + $0x3c8] sm:$0xff]
        %v3848 = vld [vmem:[#allocation7 + $0x3d0] sm:$0xff]
        %v3849 = vld [vmem:[#allocation7 + $0x3d8] sm:$0xff]
        %v3850 = vld [vmem:[#allocation7 + $0x3e0] sm:$0xff]
        %v3851 = vld [vmem:[#allocation7 + $0x3e8] sm:$0xff]
        %v3852 = vld [vmem:[#allocation7 + $0x3f0] sm:$0xff]
        %v3853 = vld [vmem:[#allocation7 + $0x3f8] sm:$0xff]
        %v3854 = vld [vmem:[#allocation7 + $0x400] sm:$0xff]
        %v3855 = vld [vmem:[#allocation7 + $0x408] sm:$0xff]
        %v3856 = vld [vmem:[#allocation7 + $0x410] sm:$0xff]
        %v3857 = vld [vmem:[#allocation7 + $0x418] sm:$0xff]
        %v3858 = vld [vmem:[#allocation7 + $0x420] sm:$0xff]
        %v3859 = vld [vmem:[#allocation7 + $0x428] sm:$0xff]
        %v3860 = vld [vmem:[#allocation7 + $0x430] sm:$0xff]
        %v3861 = vld [vmem:[#allocation7 + $0x438] sm:$0xff]
        %v3862 = vld [vmem:[#allocation7 + $0x440] sm:$0xff]
        %v3863 = vld [vmem:[#allocation7 + $0x448] sm:$0xff]
        %v3864 = vld [vmem:[#allocation7 + $0x450] sm:$0xff]
        %v3865 = vld [vmem:[#allocation7 + $0x458] sm:$0xff]
        %v3866 = vld [vmem:[#allocation7 + $0x460] sm:$0xff]
        %v3867 = vld [vmem:[#allocation7 + $0x468] sm:$0xff]
        %v3868 = vld [vmem:[#allocation7 + $0x470] sm:$0xff]
        %v3869 = vld [vmem:[#allocation7 + $0x478] sm:$0xff]
        %v3870 = vld [vmem:[#allocation7 + $0x480] sm:$0xff]
        %v3871 = vld [vmem:[#allocation7 + $0x488] sm:$0xff]
        %v3872 = vld [vmem:[#allocation7 + $0x490] sm:$0xff]
        %v3873 = vld [vmem:[#allocation7 + $0x498] sm:$0xff]
        %v3874 = vld [vmem:[#allocation7 + $0x4a0] sm:$0xff]
        %v3875 = vld [vmem:[#allocation7 + $0x4a8] sm:$0xff]
        %v3876 = vld [vmem:[#allocation7 + $0x4b0] sm:$0xff]
        %v3877 = vld [vmem:[#allocation7 + $0x4b8] sm:$0xff]
        %v3878 = vld [vmem:[#allocation7 + $0x4c0] sm:$0xff]
        %v3879 = vld [vmem:[#allocation7 + $0x4c8] sm:$0xff]
        %v3880 = vld [vmem:[#allocation7 + $0x4d0] sm:$0xff]
        %v3881 = vld [vmem:[#allocation7 + $0x4d8] sm:$0xff]
        %v3882 = vld [vmem:[#allocation7 + $0x4e0] sm:$0xff]
        %v3883 = vld [vmem:[#allocation7 + $0x4e8] sm:$0xff]
        %v3884 = vld [vmem:[#allocation7 + $0x4f0] sm:$0xff]
        %v3885 = vld [vmem:[#allocation7 + $0x4f8] sm:$0xff]
        %v3886 = vld [vmem:[#allocation7 + $0x500] sm:$0xff]
        %v3887 = vld [vmem:[#allocation7 + $0x508] sm:$0xff]
        %v3888 = vld [vmem:[#allocation7 + $0x510] sm:$0xff]
        %v3889 = vld [vmem:[#allocation7 + $0x518] sm:$0xff]
        %v3890 = vld [vmem:[#allocation7 + $0x520] sm:$0xff]
        %v3891 = vld [vmem:[#allocation7 + $0x528] sm:$0xff]
        %v3892 = vld [vmem:[#allocation7 + $0x530] sm:$0xff]
        %v3893 = vld [vmem:[#allocation7 + $0x538] sm:$0xff]
        %v3894 = vld [vmem:[#allocation7 + $0x540] sm:$0xff]
        %v3895 = vld [vmem:[#allocation7 + $0x548] sm:$0xff]
        %v3896 = vld [vmem:[#allocation7 + $0x550] sm:$0xff]
        %v3897 = vld [vmem:[#allocation7 + $0x558] sm:$0xff]
        %v3898 = vld [vmem:[#allocation7 + $0x560] sm:$0xff]
        %v3899 = vld [vmem:[#allocation7 + $0x568] sm:$0xff]
        %v3900 = vld [vmem:[#allocation7 + $0x570] sm:$0xff]
        %v3901 = vld [vmem:[#allocation7 + $0x578] sm:$0xff]
        %v3902 = vld [vmem:[#allocation7 + $0x580] sm:$0xff]
        %v3903 = vld [vmem:[#allocation7 + $0x588] sm:$0xff]
        %v3904 = vld [vmem:[#allocation7 + $0x590] sm:$0xff]
        %v3905 = vld [vmem:[#allocation7 + $0x598] sm:$0xff]
        %v3906 = vld [vmem:[#allocation7 + $0x5a0] sm:$0xff]
        %v3907 = vld [vmem:[#allocation7 + $0x5a8] sm:$0xff]
        %v3908 = vld [vmem:[#allocation7 + $0x5b0] sm:$0xff]
        %v3909 = vld [vmem:[#allocation7 + $0x5b8] sm:$0xff]
        %v3910 = vld [vmem:[#allocation7 + $0x5c0] sm:$0xff]
        %v3911 = vld [vmem:[#allocation7 + $0x5c8] sm:$0xff]
        %v3912 = vld [vmem:[#allocation7 + $0x5d0] sm:$0xff]
        %v3913 = vld [vmem:[#allocation7 + $0x5d8] sm:$0xff]
        %v3914 = vld [vmem:[#allocation7 + $0x5e0] sm:$0xff]
        %v3915 = vld [vmem:[#allocation7 + $0x5e8] sm:$0xff]
        %v3916 = vld [vmem:[#allocation7 + $0x5f0] sm:$0xff]
        %v3917 = vld [vmem:[#allocation7 + $0x5f8] sm:$0xff]
        %v3918 = vld [vmem:[#allocation8] sm:$0xf]
        %v3920 = vperm.slane %v3918, 0
        %v3921 = vperm.slane %v3918, 1
        %v3922 = vperm.slane %v3918, 2
        %v3923 = vperm.slane %v3918, 3
        %v4120 = vunpack.c.l.b16 %v3726
        %v4121 = vunpack.c.h.b16 %v3726
        %v4122 = vunpack.c.l.b16 %v3727
        %v4123 = vunpack.c.h.b16 %v3727
        %v4124 = vunpack.c.l.b16 %v3728
        %v4125 = vunpack.c.h.b16 %v3728
        %v4126 = vunpack.c.l.b16 %v3729
        %v4127 = vunpack.c.h.b16 %v3729
        %v4128 = vunpack.c.l.b16 %v3730
        %v4129 = vunpack.c.h.b16 %v3730
        %v4130 = vunpack.c.l.b16 %v3731
        %v4131 = vunpack.c.h.b16 %v3731
        %v4132 = vunpack.c.l.b16 %v3732
        %v4133 = vunpack.c.h.b16 %v3732
        %v4134 = vunpack.c.l.b16 %v3733
        %v4135 = vunpack.c.h.b16 %v3733
        %v4136 = vunpack.c.l.b16 %v3734
        %v4137 = vunpack.c.h.b16 %v3734
        %v4138 = vunpack.c.l.b16 %v3735
        %v4139 = vunpack.c.h.b16 %v3735
        %v4140 = vunpack.c.l.b16 %v3736
        %v4141 = vunpack.c.h.b16 %v3736
        %v4142 = vunpack.c.l.b16 %v3737
        %v4143 = vunpack.c.h.b16 %v3737
        %v4144 = vunpack.c.l.b16 %v3738
        %v4145 = vunpack.c.h.b16 %v3738
        %v4146 = vunpack.c.l.b16 %v3739
        %v4147 = vunpack.c.h.b16 %v3739
        %v4148 = vunpack.c.l.b16 %v3740
        %v4149 = vunpack.c.h.b16 %v3740
        %v4150 = vunpack.c.l.b16 %v3741
        %v4151 = vunpack.c.h.b16 %v3741
        %v4152 = vunpack.c.l.b16 %v3742
        %v4153 = vunpack.c.h.b16 %v3742
        %v4154 = vunpack.c.l.b16 %v3743
        %v4155 = vunpack.c.h.b16 %v3743
        %v4156 = vunpack.c.l.b16 %v3744
        %v4157 = vunpack.c.h.b16 %v3744
        %v4158 = vunpack.c.l.b16 %v3745
        %v4159 = vunpack.c.h.b16 %v3745
        %v4160 = vunpack.c.l.b16 %v3746
        %v4161 = vunpack.c.h.b16 %v3746
        %v4162 = vunpack.c.l.b16 %v3747
        %v4163 = vunpack.c.h.b16 %v3747
        %v4164 = vunpack.c.l.b16 %v3748
        %v4165 = vunpack.c.h.b16 %v3748
        %v4166 = vunpack.c.l.b16 %v3749
        %v4167 = vunpack.c.h.b16 %v3749
        %v4168 = vunpack.c.l.b16 %v3750
        %v4169 = vunpack.c.h.b16 %v3750
        %v4170 = vunpack.c.l.b16 %v3751
        %v4171 = vunpack.c.h.b16 %v3751
        %v4172 = vunpack.c.l.b16 %v3752
        %v4173 = vunpack.c.h.b16 %v3752
        %v4174 = vunpack.c.l.b16 %v3753
        %v4175 = vunpack.c.h.b16 %v3753
        %v4176 = vunpack.c.l.b16 %v3754
        %v4177 = vunpack.c.h.b16 %v3754
        %v4178 = vunpack.c.l.b16 %v3755
        %v4179 = vunpack.c.h.b16 %v3755
        %v4180 = vunpack.c.l.b16 %v3756
        %v4181 = vunpack.c.h.b16 %v3756
        %v4182 = vunpack.c.l.b16 %v3757
        %v4183 = vunpack.c.h.b16 %v3757
        %v4184 = vunpack.c.l.b16 %v3758
        %v4185 = vunpack.c.h.b16 %v3758
        %v4186 = vunpack.c.l.b16 %v3759
        %v4187 = vunpack.c.h.b16 %v3759
        %v4188 = vunpack.c.l.b16 %v3760
        %v4189 = vunpack.c.h.b16 %v3760
        %v4190 = vunpack.c.l.b16 %v3761
        %v4191 = vunpack.c.h.b16 %v3761
        %v4192 = vunpack.c.l.b16 %v3762
        %v4193 = vunpack.c.h.b16 %v3762
        %v4194 = vunpack.c.l.b16 %v3763
        %v4195 = vunpack.c.h.b16 %v3763
        %v4196 = vunpack.c.l.b16 %v3764
        %v4197 = vunpack.c.h.b16 %v3764
        %v4198 = vunpack.c.l.b16 %v3765
        %v4199 = vunpack.c.h.b16 %v3765
        %v4200 = vunpack.c.l.b16 %v3766
        %v4201 = vunpack.c.h.b16 %v3766
        %v4202 = vunpack.c.l.b16 %v3767
        %v4203 = vunpack.c.h.b16 %v3767
        %v4204 = vunpack.c.l.b16 %v3768
        %v4205 = vunpack.c.h.b16 %v3768
        %v4206 = vunpack.c.l.b16 %v3769
        %v4207 = vunpack.c.h.b16 %v3769
        %v4208 = vunpack.c.l.b16 %v3770
        %v4209 = vunpack.c.h.b16 %v3770
        %v4210 = vunpack.c.l.b16 %v3771
        %v4211 = vunpack.c.h.b16 %v3771
        %v4212 = vunpack.c.l.b16 %v3772
        %v4213 = vunpack.c.h.b16 %v3772
        %v4214 = vunpack.c.l.b16 %v3773
        %v4215 = vunpack.c.h.b16 %v3773
        %v4216 = vunpack.c.l.b16 %v3774
        %v4217 = vunpack.c.h.b16 %v3774
        %v4218 = vunpack.c.l.b16 %v3775
        %v4219 = vunpack.c.h.b16 %v3775
        %v4220 = vunpack.c.l.b16 %v3776
        %v4221 = vunpack.c.h.b16 %v3776
        %v4222 = vunpack.c.l.b16 %v3777
        %v4223 = vunpack.c.h.b16 %v3777
        %v4224 = vunpack.c.l.b16 %v3778
        %v4225 = vunpack.c.h.b16 %v3778
        %v4226 = vunpack.c.l.b16 %v3779
        %v4227 = vunpack.c.h.b16 %v3779
        %v4228 = vunpack.c.l.b16 %v3780
        %v4229 = vunpack.c.h.b16 %v3780
        %v4230 = vunpack.c.l.b16 %v3781
        %v4231 = vunpack.c.h.b16 %v3781
        %v4232 = vunpack.c.l.b16 %v3782
        %v4233 = vunpack.c.h.b16 %v3782
        %v4234 = vunpack.c.l.b16 %v3783
        %v4235 = vunpack.c.h.b16 %v3783
        %v4236 = vunpack.c.l.b16 %v3784
        %v4237 = vunpack.c.h.b16 %v3784
        %v4238 = vunpack.c.l.b16 %v3785
        %v4239 = vunpack.c.h.b16 %v3785
        %v4240 = vunpack.c.l.b16 %v3786
        %v4241 = vunpack.c.h.b16 %v3786
        %v4242 = vunpack.c.l.b16 %v3787
        %v4243 = vunpack.c.h.b16 %v3787
        %v4244 = vunpack.c.l.b16 %v3788
        %v4245 = vunpack.c.h.b16 %v3788
        %v4246 = vunpack.c.l.b16 %v3789
        %v4247 = vunpack.c.h.b16 %v3789
        %v4248 = vunpack.c.l.b16 %v3790
        %v4249 = vunpack.c.h.b16 %v3790
        %v4250 = vunpack.c.l.b16 %v3791
        %v4251 = vunpack.c.h.b16 %v3791
        %v4252 = vunpack.c.l.b16 %v3792
        %v4253 = vunpack.c.h.b16 %v3792
        %v4254 = vunpack.c.l.b16 %v3793
        %v4255 = vunpack.c.h.b16 %v3793
        %v4256 = vunpack.c.l.b16 %v3794
        %v4257 = vunpack.c.h.b16 %v3794
        %v4258 = vunpack.c.l.b16 %v3795
        %v4259 = vunpack.c.h.b16 %v3795
        %v4260 = vunpack.c.l.b16 %v3796
        %v4261 = vunpack.c.h.b16 %v3796
        %v4262 = vunpack.c.l.b16 %v3797
        %v4263 = vunpack.c.h.b16 %v3797
        %v4264 = vunpack.c.l.b16 %v3798
        %v4265 = vunpack.c.h.b16 %v3798
        %v4266 = vunpack.c.l.b16 %v3799
        %v4267 = vunpack.c.h.b16 %v3799
        %v4268 = vunpack.c.l.b16 %v3800
        %v4269 = vunpack.c.h.b16 %v3800
        %v4270 = vunpack.c.l.b16 %v3801
        %v4271 = vunpack.c.h.b16 %v3801
        %v4272 = vunpack.c.l.b16 %v3802
        %v4273 = vunpack.c.h.b16 %v3802
        %v4274 = vunpack.c.l.b16 %v3803
        %v4275 = vunpack.c.h.b16 %v3803
        %v4276 = vunpack.c.l.b16 %v3804
        %v4277 = vunpack.c.h.b16 %v3804
        %v4278 = vunpack.c.l.b16 %v3805
        %v4279 = vunpack.c.h.b16 %v3805
        %v4280 = vunpack.c.l.b16 %v3806
        %v4281 = vunpack.c.h.b16 %v3806
        %v4282 = vunpack.c.l.b16 %v3807
        %v4283 = vunpack.c.h.b16 %v3807
        %v4284 = vunpack.c.l.b16 %v3808
        %v4285 = vunpack.c.h.b16 %v3808
        %v4286 = vunpack.c.l.b16 %v3809
        %v4287 = vunpack.c.h.b16 %v3809
        %v4288 = vunpack.c.l.b16 %v3810
        %v4289 = vunpack.c.h.b16 %v3810
        %v4290 = vunpack.c.l.b16 %v3811
        %v4291 = vunpack.c.h.b16 %v3811
        %v4292 = vunpack.c.l.b16 %v3812
        %v4293 = vunpack.c.h.b16 %v3812
        %v4294 = vunpack.c.l.b16 %v3813
        %v4295 = vunpack.c.h.b16 %v3813
        %v4296 = vunpack.c.l.b16 %v3814
        %v4297 = vunpack.c.h.b16 %v3814
        %v4298 = vunpack.c.l.b16 %v3815
        %v4299 = vunpack.c.h.b16 %v3815
        %v4300 = vunpack.c.l.b16 %v3816
        %v4301 = vunpack.c.h.b16 %v3816
        %v4302 = vunpack.c.l.b16 %v3817
        %v4303 = vunpack.c.h.b16 %v3817
        %v4304 = vunpack.c.l.b16 %v3818
        %v4305 = vunpack.c.h.b16 %v3818
        %v4306 = vunpack.c.l.b16 %v3819
        %v4307 = vunpack.c.h.b16 %v3819
        %v4308 = vunpack.c.l.b16 %v3820
        %v4309 = vunpack.c.h.b16 %v3820
        %v4310 = vunpack.c.l.b16 %v3821
        %v4311 = vunpack.c.h.b16 %v3821
        %v4312 = vunpack.c.l.b16 %v3822
        %v4313 = vunpack.c.h.b16 %v3822
        %v4314 = vunpack.c.l.b16 %v3823
        %v4315 = vunpack.c.h.b16 %v3823
        %v4316 = vunpack.c.l.b16 %v3824
        %v4317 = vunpack.c.h.b16 %v3824
        %v4318 = vunpack.c.l.b16 %v3825
        %v4319 = vunpack.c.h.b16 %v3825
        %v4320 = vunpack.c.l.b16 %v3826
        %v4321 = vunpack.c.h.b16 %v3826
        %v4322 = vunpack.c.l.b16 %v3827
        %v4323 = vunpack.c.h.b16 %v3827
        %v4324 = vunpack.c.l.b16 %v3828
        %v4325 = vunpack.c.h.b16 %v3828
        %v4326 = vunpack.c.l.b16 %v3829
        %v4327 = vunpack.c.h.b16 %v3829
        %v4328 = vunpack.c.l.b16 %v3830
        %v4329 = vunpack.c.h.b16 %v3830
        %v4330 = vunpack.c.l.b16 %v3831
        %v4331 = vunpack.c.h.b16 %v3831
        %v4332 = vunpack.c.l.b16 %v3832
        %v4333 = vunpack.c.h.b16 %v3832
        %v4334 = vunpack.c.l.b16 %v3833
        %v4335 = vunpack.c.h.b16 %v3833
        %v4336 = vunpack.c.l.b16 %v3834
        %v4337 = vunpack.c.h.b16 %v3834
        %v4338 = vunpack.c.l.b16 %v3835
        %v4339 = vunpack.c.h.b16 %v3835
        %v4340 = vunpack.c.l.b16 %v3836
        %v4341 = vunpack.c.h.b16 %v3836
        %v4342 = vunpack.c.l.b16 %v3837
        %v4343 = vunpack.c.h.b16 %v3837
        %v4344 = vunpack.c.l.b16 %v3838
        %v4345 = vunpack.c.h.b16 %v3838
        %v4346 = vunpack.c.l.b16 %v3839
        %v4347 = vunpack.c.h.b16 %v3839
        %v4348 = vunpack.c.l.b16 %v3840
        %v4349 = vunpack.c.h.b16 %v3840
        %v4350 = vunpack.c.l.b16 %v3841
        %v4351 = vunpack.c.h.b16 %v3841
        %v4352 = vunpack.c.l.b16 %v3842
        %v4353 = vunpack.c.h.b16 %v3842
        %v4354 = vunpack.c.l.b16 %v3843
        %v4355 = vunpack.c.h.b16 %v3843
        %v4356 = vunpack.c.l.b16 %v3844
        %v4357 = vunpack.c.h.b16 %v3844
        %v4358 = vunpack.c.l.b16 %v3845
        %v4359 = vunpack.c.h.b16 %v3845
        %v4360 = vunpack.c.l.b16 %v3846
        %v4361 = vunpack.c.h.b16 %v3846
        %v4362 = vunpack.c.l.b16 %v3847
        %v4363 = vunpack.c.h.b16 %v3847
        %v4364 = vunpack.c.l.b16 %v3848
        %v4365 = vunpack.c.h.b16 %v3848
        %v4366 = vunpack.c.l.b16 %v3849
        %v4367 = vunpack.c.h.b16 %v3849
        %v4368 = vunpack.c.l.b16 %v3850
        %v4369 = vunpack.c.h.b16 %v3850
        %v4370 = vunpack.c.l.b16 %v3851
        %v4371 = vunpack.c.h.b16 %v3851
        %v4372 = vunpack.c.l.b16 %v3852
        %v4373 = vunpack.c.h.b16 %v3852
        %v4374 = vunpack.c.l.b16 %v3853
        %v4375 = vunpack.c.h.b16 %v3853
        %v4376 = vunpack.c.l.b16 %v3854
        %v4377 = vunpack.c.h.b16 %v3854
        %v4378 = vunpack.c.l.b16 %v3855
        %v4379 = vunpack.c.h.b16 %v3855
        %v4380 = vunpack.c.l.b16 %v3856
        %v4381 = vunpack.c.h.b16 %v3856
        %v4382 = vunpack.c.l.b16 %v3857
        %v4383 = vunpack.c.h.b16 %v3857
        %v4384 = vunpack.c.l.b16 %v3858
        %v4385 = vunpack.c.h.b16 %v3858
        %v4386 = vunpack.c.l.b16 %v3859
        %v4387 = vunpack.c.h.b16 %v3859
        %v4388 = vunpack.c.l.b16 %v3860
        %v4389 = vunpack.c.h.b16 %v3860
        %v4390 = vunpack.c.l.b16 %v3861
        %v4391 = vunpack.c.h.b16 %v3861
        %v4392 = vunpack.c.l.b16 %v3862
        %v4393 = vunpack.c.h.b16 %v3862
        %v4394 = vunpack.c.l.b16 %v3863
        %v4395 = vunpack.c.h.b16 %v3863
        %v4396 = vunpack.c.l.b16 %v3864
        %v4397 = vunpack.c.h.b16 %v3864
        %v4398 = vunpack.c.l.b16 %v3865
        %v4399 = vunpack.c.h.b16 %v3865
        %v4400 = vunpack.c.l.b16 %v3866
        %v4401 = vunpack.c.h.b16 %v3866
        %v4402 = vunpack.c.l.b16 %v3867
        %v4403 = vunpack.c.h.b16 %v3867
        %v4404 = vunpack.c.l.b16 %v3868
        %v4405 = vunpack.c.h.b16 %v3868
        %v4406 = vunpack.c.l.b16 %v3869
        %v4407 = vunpack.c.h.b16 %v3869
        %v4408 = vunpack.c.l.b16 %v3870
        %v4409 = vunpack.c.h.b16 %v3870
        %v4410 = vunpack.c.l.b16 %v3871
        %v4411 = vunpack.c.h.b16 %v3871
        %v4412 = vunpack.c.l.b16 %v3872
        %v4413 = vunpack.c.h.b16 %v3872
        %v4414 = vunpack.c.l.b16 %v3873
        %v4415 = vunpack.c.h.b16 %v3873
        %v4416 = vunpack.c.l.b16 %v3874
        %v4417 = vunpack.c.h.b16 %v3874
        %v4418 = vunpack.c.l.b16 %v3875
        %v4419 = vunpack.c.h.b16 %v3875
        %v4420 = vunpack.c.l.b16 %v3876
        %v4421 = vunpack.c.h.b16 %v3876
        %v4422 = vunpack.c.l.b16 %v3877
        %v4423 = vunpack.c.h.b16 %v3877
        %v4424 = vunpack.c.l.b16 %v3878
        %v4425 = vunpack.c.h.b16 %v3878
        %v4426 = vunpack.c.l.b16 %v3879
        %v4427 = vunpack.c.h.b16 %v3879
        %v4428 = vunpack.c.l.b16 %v3880
        %v4429 = vunpack.c.h.b16 %v3880
        %v4430 = vunpack.c.l.b16 %v3881
        %v4431 = vunpack.c.h.b16 %v3881
        %v4432 = vunpack.c.l.b16 %v3882
        %v4433 = vunpack.c.h.b16 %v3882
        %v4434 = vunpack.c.l.b16 %v3883
        %v4435 = vunpack.c.h.b16 %v3883
        %v4436 = vunpack.c.l.b16 %v3884
        %v4437 = vunpack.c.h.b16 %v3884
        %v4438 = vunpack.c.l.b16 %v3885
        %v4439 = vunpack.c.h.b16 %v3885
        %v4440 = vunpack.c.l.b16 %v3886
        %v4441 = vunpack.c.h.b16 %v3886
        %v4442 = vunpack.c.l.b16 %v3887
        %v4443 = vunpack.c.h.b16 %v3887
        %v4444 = vunpack.c.l.b16 %v3888
        %v4445 = vunpack.c.h.b16 %v3888
        %v4446 = vunpack.c.l.b16 %v3889
        %v4447 = vunpack.c.h.b16 %v3889
        %v4448 = vunpack.c.l.b16 %v3890
        %v4449 = vunpack.c.h.b16 %v3890
        %v4450 = vunpack.c.l.b16 %v3891
        %v4451 = vunpack.c.h.b16 %v3891
        %v4452 = vunpack.c.l.b16 %v3892
        %v4453 = vunpack.c.h.b16 %v3892
        %v4454 = vunpack.c.l.b16 %v3893
        %v4455 = vunpack.c.h.b16 %v3893
        %v4456 = vunpack.c.l.b16 %v3894
        %v4457 = vunpack.c.h.b16 %v3894
        %v4458 = vunpack.c.l.b16 %v3895
        %v4459 = vunpack.c.h.b16 %v3895
        %v4460 = vunpack.c.l.b16 %v3896
        %v4461 = vunpack.c.h.b16 %v3896
        %v4462 = vunpack.c.l.b16 %v3897
        %v4463 = vunpack.c.h.b16 %v3897
        %v4464 = vunpack.c.l.b16 %v3898
        %v4465 = vunpack.c.h.b16 %v3898
        %v4466 = vunpack.c.l.b16 %v3899
        %v4467 = vunpack.c.h.b16 %v3899
        %v4468 = vunpack.c.l.b16 %v3900
        %v4469 = vunpack.c.h.b16 %v3900
        %v4470 = vunpack.c.l.b16 %v3901
        %v4471 = vunpack.c.h.b16 %v3901
        %v4472 = vunpack.c.l.b16 %v3902
        %v4473 = vunpack.c.h.b16 %v3902
        %v4474 = vunpack.c.l.b16 %v3903
        %v4475 = vunpack.c.h.b16 %v3903
        %v4476 = vunpack.c.l.b16 %v3904
        %v4477 = vunpack.c.h.b16 %v3904
        %v4478 = vunpack.c.l.b16 %v3905
        %v4479 = vunpack.c.h.b16 %v3905
        %v4480 = vunpack.c.l.b16 %v3906
        %v4481 = vunpack.c.h.b16 %v3906
        %v4482 = vunpack.c.l.b16 %v3907
        %v4483 = vunpack.c.h.b16 %v3907
        %v4484 = vunpack.c.l.b16 %v3908
        %v4485 = vunpack.c.h.b16 %v3908
        %v4486 = vunpack.c.l.b16 %v3909
        %v4487 = vunpack.c.h.b16 %v3909
        %v4488 = vunpack.c.l.b16 %v3910
        %v4489 = vunpack.c.h.b16 %v3910
        %v4490 = vunpack.c.l.b16 %v3911
        %v4491 = vunpack.c.h.b16 %v3911
        %v4492 = vunpack.c.l.b16 %v3912
        %v4493 = vunpack.c.h.b16 %v3912
        %v4494 = vunpack.c.l.b16 %v3913
        %v4495 = vunpack.c.h.b16 %v3913
        %v4496 = vunpack.c.l.b16 %v3914
        %v4497 = vunpack.c.h.b16 %v3914
        %v4498 = vunpack.c.l.b16 %v3915
        %v4499 = vunpack.c.h.b16 %v3915
        %v4500 = vunpack.c.l.b16 %v3916
        %v4501 = vunpack.c.h.b16 %v3916
        %v4502 = vunpack.c.l.b16 %v3917
        %v4503 = vunpack.c.h.b16 %v3917
        %v4504 = vpack.c.b16 %v4124, %v4120
        %v4505 = vpack.c.b16 %v4125, %v4121
        %v4506 = vpack.c.b16 %v4126, %v4122
        %v4507 = vpack.c.b16 %v4127, %v4123
        %v4508 = vpack.c.b16 %v4132, %v4128
        %v4509 = vpack.c.b16 %v4133, %v4129
        %v4510 = vpack.c.b16 %v4134, %v4130
        %v4511 = vpack.c.b16 %v4135, %v4131
        %v4512 = vpack.c.b16 %v4140, %v4136
        %v4513 = vpack.c.b16 %v4141, %v4137
        %v4514 = vpack.c.b16 %v4142, %v4138
        %v4515 = vpack.c.b16 %v4143, %v4139
        %v4516 = vpack.c.b16 %v4148, %v4144
        %v4517 = vpack.c.b16 %v4149, %v4145
        %v4518 = vpack.c.b16 %v4150, %v4146
        %v4519 = vpack.c.b16 %v4151, %v4147
        %v4520 = vpack.c.b16 %v4156, %v4152
        %v4521 = vpack.c.b16 %v4157, %v4153
        %v4522 = vpack.c.b16 %v4158, %v4154
        %v4523 = vpack.c.b16 %v4159, %v4155
        %v4524 = vpack.c.b16 %v4164, %v4160
        %v4525 = vpack.c.b16 %v4165, %v4161
        %v4526 = vpack.c.b16 %v4166, %v4162
        %v4527 = vpack.c.b16 %v4167, %v4163
        %v4528 = vpack.c.b16 %v4172, %v4168
        %v4529 = vpack.c.b16 %v4173, %v4169
        %v4530 = vpack.c.b16 %v4174, %v4170
        %v4531 = vpack.c.b16 %v4175, %v4171
        %v4532 = vpack.c.b16 %v4180, %v4176
        %v4533 = vpack.c.b16 %v4181, %v4177
        %v4534 = vpack.c.b16 %v4182, %v4178
        %v4535 = vpack.c.b16 %v4183, %v4179
        %v4536 = vpack.c.b16 %v4188, %v4184
        %v4537 = vpack.c.b16 %v4189, %v4185
        %v4538 = vpack.c.b16 %v4190, %v4186
        %v4539 = vpack.c.b16 %v4191, %v4187
        %v4540 = vpack.c.b16 %v4196, %v4192
        %v4541 = vpack.c.b16 %v4197, %v4193
        %v4542 = vpack.c.b16 %v4198, %v4194
        %v4543 = vpack.c.b16 %v4199, %v4195
        %v4544 = vpack.c.b16 %v4204, %v4200
        %v4545 = vpack.c.b16 %v4205, %v4201
        %v4546 = vpack.c.b16 %v4206, %v4202
        %v4547 = vpack.c.b16 %v4207, %v4203
        %v4548 = vpack.c.b16 %v4212, %v4208
        %v4549 = vpack.c.b16 %v4213, %v4209
        %v4550 = vpack.c.b16 %v4214, %v4210
        %v4551 = vpack.c.b16 %v4215, %v4211
        %v4552 = vpack.c.b16 %v4220, %v4216
        %v4553 = vpack.c.b16 %v4221, %v4217
        %v4554 = vpack.c.b16 %v4222, %v4218
        %v4555 = vpack.c.b16 %v4223, %v4219
        %v4556 = vpack.c.b16 %v4228, %v4224
        %v4557 = vpack.c.b16 %v4229, %v4225
        %v4558 = vpack.c.b16 %v4230, %v4226
        %v4559 = vpack.c.b16 %v4231, %v4227
        %v4560 = vpack.c.b16 %v4236, %v4232
        %v4561 = vpack.c.b16 %v4237, %v4233
        %v4562 = vpack.c.b16 %v4238, %v4234
        %v4563 = vpack.c.b16 %v4239, %v4235
        %v4564 = vpack.c.b16 %v4244, %v4240
        %v4565 = vpack.c.b16 %v4245, %v4241
        %v4566 = vpack.c.b16 %v4246, %v4242
        %v4567 = vpack.c.b16 %v4247, %v4243
        %v4568 = vpack.c.b16 %v4252, %v4248
        %v4569 = vpack.c.b16 %v4253, %v4249
        %v4570 = vpack.c.b16 %v4254, %v4250
        %v4571 = vpack.c.b16 %v4255, %v4251
        %v4572 = vpack.c.b16 %v4260, %v4256
        %v4573 = vpack.c.b16 %v4261, %v4257
        %v4574 = vpack.c.b16 %v4262, %v4258
        %v4575 = vpack.c.b16 %v4263, %v4259
        %v4576 = vpack.c.b16 %v4268, %v4264
        %v4577 = vpack.c.b16 %v4269, %v4265
        %v4578 = vpack.c.b16 %v4270, %v4266
        %v4579 = vpack.c.b16 %v4271, %v4267
        %v4580 = vpack.c.b16 %v4276, %v4272
        %v4581 = vpack.c.b16 %v4277, %v4273
        %v4582 = vpack.c.b16 %v4278, %v4274
        %v4583 = vpack.c.b16 %v4279, %v4275
        %v4584 = vpack.c.b16 %v4284, %v4280
        %v4585 = vpack.c.b16 %v4285, %v4281
        %v4586 = vpack.c.b16 %v4286, %v4282
        %v4587 = vpack.c.b16 %v4287, %v4283
        %v4588 = vpack.c.b16 %v4292, %v4288
        %v4589 = vpack.c.b16 %v4293, %v4289
        %v4590 = vpack.c.b16 %v4294, %v4290
        %v4591 = vpack.c.b16 %v4295, %v4291
        %v4592 = vpack.c.b16 %v4300, %v4296
        %v4593 = vpack.c.b16 %v4301, %v4297
        %v4594 = vpack.c.b16 %v4302, %v4298
        %v4595 = vpack.c.b16 %v4303, %v4299
        %v4596 = vpack.c.b16 %v4308, %v4304
        %v4597 = vpack.c.b16 %v4309, %v4305
        %v4598 = vpack.c.b16 %v4310, %v4306
        %v4599 = vpack.c.b16 %v4311, %v4307
        %v4600 = vpack.c.b16 %v4316, %v4312
        %v4601 = vpack.c.b16 %v4317, %v4313
        %v4602 = vpack.c.b16 %v4318, %v4314
        %v4603 = vpack.c.b16 %v4319, %v4315
        %v4604 = vpack.c.b16 %v4324, %v4320
        %v4605 = vpack.c.b16 %v4325, %v4321
        %v4606 = vpack.c.b16 %v4326, %v4322
        %v4607 = vpack.c.b16 %v4327, %v4323
        %v4608 = vpack.c.b16 %v4332, %v4328
        %v4609 = vpack.c.b16 %v4333, %v4329
        %v4610 = vpack.c.b16 %v4334, %v4330
        %v4611 = vpack.c.b16 %v4335, %v4331
        %v4612 = vpack.c.b16 %v4340, %v4336
        %v4613 = vpack.c.b16 %v4341, %v4337
        %v4614 = vpack.c.b16 %v4342, %v4338
        %v4615 = vpack.c.b16 %v4343, %v4339
        %v4616 = vpack.c.b16 %v4348, %v4344
        %v4617 = vpack.c.b16 %v4349, %v4345
        %v4618 = vpack.c.b16 %v4350, %v4346
        %v4619 = vpack.c.b16 %v4351, %v4347
        %v4620 = vpack.c.b16 %v4356, %v4352
        %v4621 = vpack.c.b16 %v4357, %v4353
        %v4622 = vpack.c.b16 %v4358, %v4354
        %v4623 = vpack.c.b16 %v4359, %v4355
        %v4624 = vpack.c.b16 %v4364, %v4360
        %v4625 = vpack.c.b16 %v4365, %v4361
        %v4626 = vpack.c.b16 %v4366, %v4362
        %v4627 = vpack.c.b16 %v4367, %v4363
        %v4628 = vpack.c.b16 %v4372, %v4368
        %v4629 = vpack.c.b16 %v4373, %v4369
        %v4630 = vpack.c.b16 %v4374, %v4370
        %v4631 = vpack.c.b16 %v4375, %v4371
        %v4632 = vpack.c.b16 %v4380, %v4376
        %v4633 = vpack.c.b16 %v4381, %v4377
        %v4634 = vpack.c.b16 %v4382, %v4378
        %v4635 = vpack.c.b16 %v4383, %v4379
        %v4636 = vpack.c.b16 %v4388, %v4384
        %v4637 = vpack.c.b16 %v4389, %v4385
        %v4638 = vpack.c.b16 %v4390, %v4386
        %v4639 = vpack.c.b16 %v4391, %v4387
        %v4640 = vpack.c.b16 %v4396, %v4392
        %v4641 = vpack.c.b16 %v4397, %v4393
        %v4642 = vpack.c.b16 %v4398, %v4394
        %v4643 = vpack.c.b16 %v4399, %v4395
        %v4644 = vpack.c.b16 %v4404, %v4400
        %v4645 = vpack.c.b16 %v4405, %v4401
        %v4646 = vpack.c.b16 %v4406, %v4402
        %v4647 = vpack.c.b16 %v4407, %v4403
        %v4648 = vpack.c.b16 %v4412, %v4408
        %v4649 = vpack.c.b16 %v4413, %v4409
        %v4650 = vpack.c.b16 %v4414, %v4410
        %v4651 = vpack.c.b16 %v4415, %v4411
        %v4652 = vpack.c.b16 %v4420, %v4416
        %v4653 = vpack.c.b16 %v4421, %v4417
        %v4654 = vpack.c.b16 %v4422, %v4418
        %v4655 = vpack.c.b16 %v4423, %v4419
        %v4656 = vpack.c.b16 %v4428, %v4424
        %v4657 = vpack.c.b16 %v4429, %v4425
        %v4658 = vpack.c.b16 %v4430, %v4426
        %v4659 = vpack.c.b16 %v4431, %v4427
        %v4660 = vpack.c.b16 %v4436, %v4432
        %v4661 = vpack.c.b16 %v4437, %v4433
        %v4662 = vpack.c.b16 %v4438, %v4434
        %v4663 = vpack.c.b16 %v4439, %v4435
        %v4664 = vpack.c.b16 %v4444, %v4440
        %v4665 = vpack.c.b16 %v4445, %v4441
        %v4666 = vpack.c.b16 %v4446, %v4442
        %v4667 = vpack.c.b16 %v4447, %v4443
        %v4668 = vpack.c.b16 %v4452, %v4448
        %v4669 = vpack.c.b16 %v4453, %v4449
        %v4670 = vpack.c.b16 %v4454, %v4450
        %v4671 = vpack.c.b16 %v4455, %v4451
        %v4672 = vpack.c.b16 %v4460, %v4456
        %v4673 = vpack.c.b16 %v4461, %v4457
        %v4674 = vpack.c.b16 %v4462, %v4458
        %v4675 = vpack.c.b16 %v4463, %v4459
        %v4676 = vpack.c.b16 %v4468, %v4464
        %v4677 = vpack.c.b16 %v4469, %v4465
        %v4678 = vpack.c.b16 %v4470, %v4466
        %v4679 = vpack.c.b16 %v4471, %v4467
        %v4680 = vpack.c.b16 %v4476, %v4472
        %v4681 = vpack.c.b16 %v4477, %v4473
        %v4682 = vpack.c.b16 %v4478, %v4474
        %v4683 = vpack.c.b16 %v4479, %v4475
        %v4684 = vpack.c.b16 %v4484, %v4480
        %v4685 = vpack.c.b16 %v4485, %v4481
        %v4686 = vpack.c.b16 %v4486, %v4482
        %v4687 = vpack.c.b16 %v4487, %v4483
        %v4688 = vpack.c.b16 %v4492, %v4488
        %v4689 = vpack.c.b16 %v4493, %v4489
        %v4690 = vpack.c.b16 %v4494, %v4490
        %v4691 = vpack.c.b16 %v4495, %v4491
        %v4692 = vpack.c.b16 %v4500, %v4496
        %v4693 = vpack.c.b16 %v4501, %v4497
        %v4694 = vpack.c.b16 %v4502, %v4498
        %v4695 = vpack.c.b16 %v4503, %v4499
        %4888 = vmatpush.bf16.msra.mxu0 %v4532
        %4889 = vmatpush.bf16.msra.mxu0 %v4528
        %4890 = vmatpush.bf16.msra.mxu0 %v4524
        %4891 = vmatpush.bf16.msra.mxu0 %v4520
        %4892 = vmatpush.bf16.msra.mxu0 %v4516
        %4893 = vmatpush.bf16.msra.mxu0 %v4512
        %4894 = vmatpush.bf16.msra.mxu0 %v4508
        %4895 = vmatpush.bf16.msra.mxu0 %v4504
        %4896 = vmatmul.bf16.gmra.mxu0 %v3534
        %v4897 = vpop.f32.mrf.mxu0
        %v4898 = vadd.f32 %v3920, %v4897
        %v4899 = vpop.f32.mrf.mxu0
        %v4900 = vadd.f32 %v3920, %v4899
        %4901 = vmatmul.bf16.gmra.mxu0 %v3540
        %v4902 = vpop.f32.mrf.mxu0
        %v4903 = vadd.f32 %v3920, %v4902
        %v4904 = vpop.f32.mrf.mxu0
        %v4905 = vadd.f32 %v3920, %v4904
        %4906 = vmatmul.bf16.gmra.mxu0 %v3546
        %v4907 = vpop.f32.mrf.mxu0
        %v4908 = vadd.f32 %v3920, %v4907
        %v4909 = vpop.f32.mrf.mxu0
        %v4910 = vadd.f32 %v3920, %v4909
        %4911 = vmatmul.bf16.gmra.mxu0 %v3552
        %v4912 = vpop.f32.mrf.mxu0
        %v4913 = vadd.f32 %v3920, %v4912
        %v4914 = vpop.f32.mrf.mxu0
        %v4915 = vadd.f32 %v3920, %v4914
        %4916 = vmatmul.bf16.gmra.mxu0 %v3558
        %v4917 = vpop.f32.mrf.mxu0
        %v4918 = vadd.f32 %v3920, %v4917
        %v4919 = vpop.f32.mrf.mxu0
        %v4920 = vadd.f32 %v3920, %v4919
        %4921 = vmatmul.bf16.gmra.mxu0 %v3564
        %v4922 = vpop.f32.mrf.mxu0
        %v4923 = vadd.f32 %v3920, %v4922
        %v4924 = vpop.f32.mrf.mxu0
        %v4925 = vadd.f32 %v3920, %v4924
        %4926 = vmatmul.bf16.gmra.mxu0 %v3570
        %v4927 = vpop.f32.mrf.mxu0
        %v4928 = vadd.f32 %v3920, %v4927
        %v4929 = vpop.f32.mrf.mxu0
        %v4930 = vadd.f32 %v3920, %v4929
        %4931 = vmatmul.bf16.gmra.mxu0 %v3576
        %v4932 = vpop.f32.mrf.mxu0
        %v4933 = vadd.f32 %v3920, %v4932
        %v4934 = vpop.f32.mrf.mxu0
        %v4935 = vadd.f32 %v3920, %v4934
        %4936 = vmatmul.bf16.gmra.mxu0 %v3582
        %v4937 = vpop.f32.mrf.mxu0
        %v4938 = vadd.f32 %v3920, %v4937
        %v4939 = vpop.f32.mrf.mxu0
        %v4940 = vadd.f32 %v3920, %v4939
        %4941 = vmatmul.bf16.gmra.mxu0 %v3588
        %v4942 = vpop.f32.mrf.mxu0
        %v4943 = vadd.f32 %v3920, %v4942
        %v4944 = vpop.f32.mrf.mxu0
        %v4945 = vadd.f32 %v3920, %v4944
        %4946 = vmatmul.bf16.gmra.mxu0 %v3594
        %v4947 = vpop.f32.mrf.mxu0
        %v4948 = vadd.f32 %v3920, %v4947
        %v4949 = vpop.f32.mrf.mxu0
        %v4950 = vadd.f32 %v3920, %v4949
        %4951 = vmatmul.bf16.gmra.mxu0 %v3600
        %v4952 = vpop.f32.mrf.mxu0
        %v4953 = vadd.f32 %v3920, %v4952
        %v4954 = vpop.f32.mrf.mxu0
        %v4955 = vadd.f32 %v3920, %v4954
        %4956 = vmatmul.bf16.gmra.mxu0 %v3606
        %v4957 = vpop.f32.mrf.mxu0
        %v4958 = vadd.f32 %v3920, %v4957
        %v4959 = vpop.f32.mrf.mxu0
        %v4960 = vadd.f32 %v3920, %v4959
        %4961 = vmatmul.bf16.gmra.mxu0 %v3612
        %v4962 = vpop.f32.mrf.mxu0
        %v4963 = vadd.f32 %v3920, %v4962
        %v4964 = vpop.f32.mrf.mxu0
        %v4965 = vadd.f32 %v3920, %v4964
        %4966 = vmatmul.bf16.gmra.mxu0 %v3618
        %v4967 = vpop.f32.mrf.mxu0
        %v4968 = vadd.f32 %v3920, %v4967
        %v4969 = vpop.f32.mrf.mxu0
        %v4970 = vadd.f32 %v3920, %v4969
        %4971 = vmatmul.bf16.gmra.mxu0 %v3624
        %v4972 = vpop.f32.mrf.mxu0
        %v4973 = vadd.f32 %v3920, %v4972
        %v4974 = vpop.f32.mrf.mxu0
        %v4975 = vadd.f32 %v3920, %v4974
        %4976 = vmatmul.bf16.gmra.mxu0 %v3630
        %v4977 = vpop.f32.mrf.mxu0
        %v4978 = vadd.f32 %v3920, %v4977
        %v4979 = vpop.f32.mrf.mxu0
        %v4980 = vadd.f32 %v3920, %v4979
        %4981 = vmatmul.bf16.gmra.mxu0 %v3636
        %v4982 = vpop.f32.mrf.mxu0
        %v4983 = vadd.f32 %v3920, %v4982
        %v4984 = vpop.f32.mrf.mxu0
        %v4985 = vadd.f32 %v3920, %v4984
        %4986 = vmatmul.bf16.gmra.mxu0 %v3642
        %v4987 = vpop.f32.mrf.mxu0
        %v4988 = vadd.f32 %v3920, %v4987
        %v4989 = vpop.f32.mrf.mxu0
        %v4990 = vadd.f32 %v3920, %v4989
        %4991 = vmatmul.bf16.gmra.mxu0 %v3648
        %v4992 = vpop.f32.mrf.mxu0
        %v4993 = vadd.f32 %v3920, %v4992
        %v4994 = vpop.f32.mrf.mxu0
        %v4995 = vadd.f32 %v3920, %v4994
        %4996 = vmatmul.bf16.gmra.mxu0 %v3654
        %v4997 = vpop.f32.mrf.mxu0
        %v4998 = vadd.f32 %v3920, %v4997
        %v4999 = vpop.f32.mrf.mxu0
        %v5000 = vadd.f32 %v3920, %v4999
        %5001 = vmatmul.bf16.gmra.mxu0 %v3660
        %v5002 = vpop.f32.mrf.mxu0
        %v5003 = vadd.f32 %v3920, %v5002
        %v5004 = vpop.f32.mrf.mxu0
        %v5005 = vadd.f32 %v3920, %v5004
        %5006 = vmatmul.bf16.gmra.mxu0 %v3666
        %v5007 = vpop.f32.mrf.mxu0
        %v5008 = vadd.f32 %v3920, %v5007
        %v5009 = vpop.f32.mrf.mxu0
        %v5010 = vadd.f32 %v3920, %v5009
        %5011 = vmatmul.bf16.gmra.mxu0 %v3672
        %v5012 = vpop.f32.mrf.mxu0
        %v5013 = vadd.f32 %v3920, %v5012
        %v5014 = vpop.f32.mrf.mxu0
        %v5015 = vadd.f32 %v3920, %v5014
        %5016 = vmatmul.bf16.gmra.mxu0 %v3678
        %v5017 = vpop.f32.mrf.mxu0
        %v5018 = vadd.f32 %v3920, %v5017
        %v5019 = vpop.f32.mrf.mxu0
        %v5020 = vadd.f32 %v3920, %v5019
        %5021 = vmatmul.bf16.gmra.mxu0 %v3684
        %v5022 = vpop.f32.mrf.mxu0
        %v5023 = vadd.f32 %v3920, %v5022
        %v5024 = vpop.f32.mrf.mxu0
        %v5025 = vadd.f32 %v3920, %v5024
        %5026 = vmatmul.bf16.gmra.mxu0 %v3690
        %v5027 = vpop.f32.mrf.mxu0
        %v5028 = vadd.f32 %v3920, %v5027
        %v5029 = vpop.f32.mrf.mxu0
        %v5030 = vadd.f32 %v3920, %v5029
        %5031 = vmatmul.bf16.gmra.mxu0 %v3696
        %v5032 = vpop.f32.mrf.mxu0
        %v5033 = vadd.f32 %v3920, %v5032
        %v5034 = vpop.f32.mrf.mxu0
        %v5035 = vadd.f32 %v3920, %v5034
        %5036 = vmatmul.bf16.gmra.mxu0 %v3702
        %v5037 = vpop.f32.mrf.mxu0
        %v5038 = vadd.f32 %v3920, %v5037
        %v5039 = vpop.f32.mrf.mxu0
        %v5040 = vadd.f32 %v3920, %v5039
        %5041 = vmatmul.bf16.gmra.mxu0 %v3708
        %v5042 = vpop.f32.mrf.mxu0
        %v5043 = vadd.f32 %v3920, %v5042
        %v5044 = vpop.f32.mrf.mxu0
        %v5045 = vadd.f32 %v3920, %v5044
        %5046 = vmatmul.bf16.gmra.mxu0 %v3714
        %v5047 = vpop.f32.mrf.mxu0
        %v5048 = vadd.f32 %v3920, %v5047
        %v5049 = vpop.f32.mrf.mxu0
        %v5050 = vadd.f32 %v3920, %v5049
        %5051 = vmatmul.bf16.gmra.mxu0 %v3720
        %v5052 = vpop.f32.mrf.mxu0
        %v5053 = vadd.f32 %v3920, %v5052
        %v5054 = vpop.f32.mrf.mxu0
        %v5055 = vadd.f32 %v3920, %v5054
        %5056 = vdwg.mxu0
        %5057 = vmatpush.bf16.msra.mxu0 %v4564
        %5058 = vmatpush.bf16.msra.mxu0 %v4560
        %5059 = vmatpush.bf16.msra.mxu0 %v4556
        %5060 = vmatpush.bf16.msra.mxu0 %v4552
        %5061 = vmatpush.bf16.msra.mxu0 %v4548
        %5062 = vmatpush.bf16.msra.mxu0 %v4544
        %5063 = vmatpush.bf16.msra.mxu0 %v4540
        %5064 = vmatpush.bf16.msra.mxu0 %v4536
        %5065 = vmatmul.bf16.gmra.mxu0 %v3535
        %v5066 = vpop.f32.mrf.mxu0
        %v5067 = vadd.f32 %v4898, %v5066
        %v5068 = vpop.f32.mrf.mxu0
        %v5069 = vadd.f32 %v4900, %v5068
        %5070 = vmatmul.bf16.gmra.mxu0 %v3541
        %v5071 = vpop.f32.mrf.mxu0
        %v5072 = vadd.f32 %v4903, %v5071
        %v5073 = vpop.f32.mrf.mxu0
        %v5074 = vadd.f32 %v4905, %v5073
        %5075 = vmatmul.bf16.gmra.mxu0 %v3547
        %v5076 = vpop.f32.mrf.mxu0
        %v5077 = vadd.f32 %v4908, %v5076
        %v5078 = vpop.f32.mrf.mxu0
        %v5079 = vadd.f32 %v4910, %v5078
        %5080 = vmatmul.bf16.gmra.mxu0 %v3553
        %v5081 = vpop.f32.mrf.mxu0
        %v5082 = vadd.f32 %v4913, %v5081
        %v5083 = vpop.f32.mrf.mxu0
        %v5084 = vadd.f32 %v4915, %v5083
        %5085 = vmatmul.bf16.gmra.mxu0 %v3559
        %v5086 = vpop.f32.mrf.mxu0
        %v5087 = vadd.f32 %v4918, %v5086
        %v5088 = vpop.f32.mrf.mxu0
        %v5089 = vadd.f32 %v4920, %v5088
        %5090 = vmatmul.bf16.gmra.mxu0 %v3565
        %v5091 = vpop.f32.mrf.mxu0
        %v5092 = vadd.f32 %v4923, %v5091
        %v5093 = vpop.f32.mrf.mxu0
        %v5094 = vadd.f32 %v4925, %v5093
        %5095 = vmatmul.bf16.gmra.mxu0 %v3571
        %v5096 = vpop.f32.mrf.mxu0
        %v5097 = vadd.f32 %v4928, %v5096
        %v5098 = vpop.f32.mrf.mxu0
        %v5099 = vadd.f32 %v4930, %v5098
        %5100 = vmatmul.bf16.gmra.mxu0 %v3577
        %v5101 = vpop.f32.mrf.mxu0
        %v5102 = vadd.f32 %v4933, %v5101
        %v5103 = vpop.f32.mrf.mxu0
        %v5104 = vadd.f32 %v4935, %v5103
        %5105 = vmatmul.bf16.gmra.mxu0 %v3583
        %v5106 = vpop.f32.mrf.mxu0
        %v5107 = vadd.f32 %v4938, %v5106
        %v5108 = vpop.f32.mrf.mxu0
        %v5109 = vadd.f32 %v4940, %v5108
        %5110 = vmatmul.bf16.gmra.mxu0 %v3589
        %v5111 = vpop.f32.mrf.mxu0
        %v5112 = vadd.f32 %v4943, %v5111
        %v5113 = vpop.f32.mrf.mxu0
        %v5114 = vadd.f32 %v4945, %v5113
        %5115 = vmatmul.bf16.gmra.mxu0 %v3595
        %v5116 = vpop.f32.mrf.mxu0
        %v5117 = vadd.f32 %v4948, %v5116
        %v5118 = vpop.f32.mrf.mxu0
        %v5119 = vadd.f32 %v4950, %v5118
        %5120 = vmatmul.bf16.gmra.mxu0 %v3601
        %v5121 = vpop.f32.mrf.mxu0
        %v5122 = vadd.f32 %v4953, %v5121
        %v5123 = vpop.f32.mrf.mxu0
        %v5124 = vadd.f32 %v4955, %v5123
        %5125 = vmatmul.bf16.gmra.mxu0 %v3607
        %v5126 = vpop.f32.mrf.mxu0
        %v5127 = vadd.f32 %v4958, %v5126
        %v5128 = vpop.f32.mrf.mxu0
        %v5129 = vadd.f32 %v4960, %v5128
        %5130 = vmatmul.bf16.gmra.mxu0 %v3613
        %v5131 = vpop.f32.mrf.mxu0
        %v5132 = vadd.f32 %v4963, %v5131
        %v5133 = vpop.f32.mrf.mxu0
        %v5134 = vadd.f32 %v4965, %v5133
        %5135 = vmatmul.bf16.gmra.mxu0 %v3619
        %v5136 = vpop.f32.mrf.mxu0
        %v5137 = vadd.f32 %v4968, %v5136
        %v5138 = vpop.f32.mrf.mxu0
        %v5139 = vadd.f32 %v4970, %v5138
        %5140 = vmatmul.bf16.gmra.mxu0 %v3625
        %v5141 = vpop.f32.mrf.mxu0
        %v5142 = vadd.f32 %v4973, %v5141
        %v5143 = vpop.f32.mrf.mxu0
        %v5144 = vadd.f32 %v4975, %v5143
        %5145 = vmatmul.bf16.gmra.mxu0 %v3631
        %v5146 = vpop.f32.mrf.mxu0
        %v5147 = vadd.f32 %v4978, %v5146
        %v5148 = vpop.f32.mrf.mxu0
        %v5149 = vadd.f32 %v4980, %v5148
        %5150 = vmatmul.bf16.gmra.mxu0 %v3637
        %v5151 = vpop.f32.mrf.mxu0
        %v5152 = vadd.f32 %v4983, %v5151
        %v5153 = vpop.f32.mrf.mxu0
        %v5154 = vadd.f32 %v4985, %v5153
        %5155 = vmatmul.bf16.gmra.mxu0 %v3643
        %v5156 = vpop.f32.mrf.mxu0
        %v5157 = vadd.f32 %v4988, %v5156
        %v5158 = vpop.f32.mrf.mxu0
        %v5159 = vadd.f32 %v4990, %v5158
        %5160 = vmatmul.bf16.gmra.mxu0 %v3649
        %v5161 = vpop.f32.mrf.mxu0
        %v5162 = vadd.f32 %v4993, %v5161
        %v5163 = vpop.f32.mrf.mxu0
        %v5164 = vadd.f32 %v4995, %v5163
        %5165 = vmatmul.bf16.gmra.mxu0 %v3655
        %v5166 = vpop.f32.mrf.mxu0
        %v5167 = vadd.f32 %v4998, %v5166
        %v5168 = vpop.f32.mrf.mxu0
        %v5169 = vadd.f32 %v5000, %v5168
        %5170 = vmatmul.bf16.gmra.mxu0 %v3661
        %v5171 = vpop.f32.mrf.mxu0
        %v5172 = vadd.f32 %v5003, %v5171
        %v5173 = vpop.f32.mrf.mxu0
        %v5174 = vadd.f32 %v5005, %v5173
        %5175 = vmatmul.bf16.gmra.mxu0 %v3667
        %v5176 = vpop.f32.mrf.mxu0
        %v5177 = vadd.f32 %v5008, %v5176
        %v5178 = vpop.f32.mrf.mxu0
        %v5179 = vadd.f32 %v5010, %v5178
        %5180 = vmatmul.bf16.gmra.mxu0 %v3673
        %v5181 = vpop.f32.mrf.mxu0
        %v5182 = vadd.f32 %v5013, %v5181
        %v5183 = vpop.f32.mrf.mxu0
        %v5184 = vadd.f32 %v5015, %v5183
        %5185 = vmatmul.bf16.gmra.mxu0 %v3679
        %v5186 = vpop.f32.mrf.mxu0
        %v5187 = vadd.f32 %v5018, %v5186
        %v5188 = vpop.f32.mrf.mxu0
        %v5189 = vadd.f32 %v5020, %v5188
        %5190 = vmatmul.bf16.gmra.mxu0 %v3685
        %v5191 = vpop.f32.mrf.mxu0
        %v5192 = vadd.f32 %v5023, %v5191
        %v5193 = vpop.f32.mrf.mxu0
        %v5194 = vadd.f32 %v5025, %v5193
        %5195 = vmatmul.bf16.gmra.mxu0 %v3691
        %v5196 = vpop.f32.mrf.mxu0
        %v5197 = vadd.f32 %v5028, %v5196
        %v5198 = vpop.f32.mrf.mxu0
        %v5199 = vadd.f32 %v5030, %v5198
        %5200 = vmatmul.bf16.gmra.mxu0 %v3697
        %v5201 = vpop.f32.mrf.mxu0
        %v5202 = vadd.f32 %v5033, %v5201
        %v5203 = vpop.f32.mrf.mxu0
        %v5204 = vadd.f32 %v5035, %v5203
        %5205 = vmatmul.bf16.gmra.mxu0 %v3703
        %v5206 = vpop.f32.mrf.mxu0
        %v5207 = vadd.f32 %v5038, %v5206
        %v5208 = vpop.f32.mrf.mxu0
        %v5209 = vadd.f32 %v5040, %v5208
        %5210 = vmatmul.bf16.gmra.mxu0 %v3709
        %v5211 = vpop.f32.mrf.mxu0
        %v5212 = vadd.f32 %v5043, %v5211
        %v5213 = vpop.f32.mrf.mxu0
        %v5214 = vadd.f32 %v5045, %v5213
        %5215 = vmatmul.bf16.gmra.mxu0 %v3715
        %v5216 = vpop.f32.mrf.mxu0
        %v5217 = vadd.f32 %v5048, %v5216
        %v5218 = vpop.f32.mrf.mxu0
        %v5219 = vadd.f32 %v5050, %v5218
        %5220 = vmatmul.bf16.gmra.mxu0 %v3721
        %v5221 = vpop.f32.mrf.mxu0
        %v5222 = vadd.f32 %v5053, %v5221
        %v5223 = vpop.f32.mrf.mxu0
        %v5224 = vadd.f32 %v5055, %v5223
        %5225 = vdwg.mxu0
        %5226 = vmatpush.bf16.msra.mxu0 %v4596
        %5227 = vmatpush.bf16.msra.mxu0 %v4592
        %5228 = vmatpush.bf16.msra.mxu0 %v4588
        %5229 = vmatpush.bf16.msra.mxu0 %v4584
        %5230 = vmatpush.bf16.msra.mxu0 %v4580
        %5231 = vmatpush.bf16.msra.mxu0 %v4576
        %5232 = vmatpush.bf16.msra.mxu0 %v4572
        %5233 = vmatpush.bf16.msra.mxu0 %v4568
        %5234 = vmatmul.bf16.gmra.mxu0 %v3536
        %v5235 = vpop.f32.mrf.mxu0
        %v5236 = vadd.f32 %v5067, %v5235
        %v5237 = vpop.f32.mrf.mxu0
        %v5238 = vadd.f32 %v5069, %v5237
        %5239 = vmatmul.bf16.gmra.mxu0 %v3542
        %v5240 = vpop.f32.mrf.mxu0
        %v5241 = vadd.f32 %v5072, %v5240
        %v5242 = vpop.f32.mrf.mxu0
        %v5243 = vadd.f32 %v5074, %v5242
        %5244 = vmatmul.bf16.gmra.mxu0 %v3548
        %v5245 = vpop.f32.mrf.mxu0
        %v5246 = vadd.f32 %v5077, %v5245
        %v5247 = vpop.f32.mrf.mxu0
        %v5248 = vadd.f32 %v5079, %v5247
        %5249 = vmatmul.bf16.gmra.mxu0 %v3554
        %v5250 = vpop.f32.mrf.mxu0
        %v5251 = vadd.f32 %v5082, %v5250
        %v5252 = vpop.f32.mrf.mxu0
        %v5253 = vadd.f32 %v5084, %v5252
        %5254 = vmatmul.bf16.gmra.mxu0 %v3560
        %v5255 = vpop.f32.mrf.mxu0
        %v5256 = vadd.f32 %v5087, %v5255
        %v5257 = vpop.f32.mrf.mxu0
        %v5258 = vadd.f32 %v5089, %v5257
        %5259 = vmatmul.bf16.gmra.mxu0 %v3566
        %v5260 = vpop.f32.mrf.mxu0
        %v5261 = vadd.f32 %v5092, %v5260
        %v5262 = vpop.f32.mrf.mxu0
        %v5263 = vadd.f32 %v5094, %v5262
        %5264 = vmatmul.bf16.gmra.mxu0 %v3572
        %v5265 = vpop.f32.mrf.mxu0
        %v5266 = vadd.f32 %v5097, %v5265
        %v5267 = vpop.f32.mrf.mxu0
        %v5268 = vadd.f32 %v5099, %v5267
        %5269 = vmatmul.bf16.gmra.mxu0 %v3578
        %v5270 = vpop.f32.mrf.mxu0
        %v5271 = vadd.f32 %v5102, %v5270
        %v5272 = vpop.f32.mrf.mxu0
        %v5273 = vadd.f32 %v5104, %v5272
        %5274 = vmatmul.bf16.gmra.mxu0 %v3584
        %v5275 = vpop.f32.mrf.mxu0
        %v5276 = vadd.f32 %v5107, %v5275
        %v5277 = vpop.f32.mrf.mxu0
        %v5278 = vadd.f32 %v5109, %v5277
        %5279 = vmatmul.bf16.gmra.mxu0 %v3590
        %v5280 = vpop.f32.mrf.mxu0
        %v5281 = vadd.f32 %v5112, %v5280
        %v5282 = vpop.f32.mrf.mxu0
        %v5283 = vadd.f32 %v5114, %v5282
        %5284 = vmatmul.bf16.gmra.mxu0 %v3596
        %v5285 = vpop.f32.mrf.mxu0
        %v5286 = vadd.f32 %v5117, %v5285
        %v5287 = vpop.f32.mrf.mxu0
        %v5288 = vadd.f32 %v5119, %v5287
        %5289 = vmatmul.bf16.gmra.mxu0 %v3602
        %v5290 = vpop.f32.mrf.mxu0
        %v5291 = vadd.f32 %v5122, %v5290
        %v5292 = vpop.f32.mrf.mxu0
        %v5293 = vadd.f32 %v5124, %v5292
        %5294 = vmatmul.bf16.gmra.mxu0 %v3608
        %v5295 = vpop.f32.mrf.mxu0
        %v5296 = vadd.f32 %v5127, %v5295
        %v5297 = vpop.f32.mrf.mxu0
        %v5298 = vadd.f32 %v5129, %v5297
        %5299 = vmatmul.bf16.gmra.mxu0 %v3614
        %v5300 = vpop.f32.mrf.mxu0
        %v5301 = vadd.f32 %v5132, %v5300
        %v5302 = vpop.f32.mrf.mxu0
        %v5303 = vadd.f32 %v5134, %v5302
        %5304 = vmatmul.bf16.gmra.mxu0 %v3620
        %v5305 = vpop.f32.mrf.mxu0
        %v5306 = vadd.f32 %v5137, %v5305
        %v5307 = vpop.f32.mrf.mxu0
        %v5308 = vadd.f32 %v5139, %v5307
        %5309 = vmatmul.bf16.gmra.mxu0 %v3626
        %v5310 = vpop.f32.mrf.mxu0
        %v5311 = vadd.f32 %v5142, %v5310
        %v5312 = vpop.f32.mrf.mxu0
        %v5313 = vadd.f32 %v5144, %v5312
        %5314 = vmatmul.bf16.gmra.mxu0 %v3632
        %v5315 = vpop.f32.mrf.mxu0
        %v5316 = vadd.f32 %v5147, %v5315
        %v5317 = vpop.f32.mrf.mxu0
        %v5318 = vadd.f32 %v5149, %v5317
        %5319 = vmatmul.bf16.gmra.mxu0 %v3638
        %v5320 = vpop.f32.mrf.mxu0
        %v5321 = vadd.f32 %v5152, %v5320
        %v5322 = vpop.f32.mrf.mxu0
        %v5323 = vadd.f32 %v5154, %v5322
        %5324 = vmatmul.bf16.gmra.mxu0 %v3644
        %v5325 = vpop.f32.mrf.mxu0
        %v5326 = vadd.f32 %v5157, %v5325
        %v5327 = vpop.f32.mrf.mxu0
        %v5328 = vadd.f32 %v5159, %v5327
        %5329 = vmatmul.bf16.gmra.mxu0 %v3650
        %v5330 = vpop.f32.mrf.mxu0
        %v5331 = vadd.f32 %v5162, %v5330
        %v5332 = vpop.f32.mrf.mxu0
        %v5333 = vadd.f32 %v5164, %v5332
        %5334 = vmatmul.bf16.gmra.mxu0 %v3656
        %v5335 = vpop.f32.mrf.mxu0
        %v5336 = vadd.f32 %v5167, %v5335
        %v5337 = vpop.f32.mrf.mxu0
        %v5338 = vadd.f32 %v5169, %v5337
        %5339 = vmatmul.bf16.gmra.mxu0 %v3662
        %v5340 = vpop.f32.mrf.mxu0
        %v5341 = vadd.f32 %v5172, %v5340
        %v5342 = vpop.f32.mrf.mxu0
        %v5343 = vadd.f32 %v5174, %v5342
        %5344 = vmatmul.bf16.gmra.mxu0 %v3668
        %v5345 = vpop.f32.mrf.mxu0
        %v5346 = vadd.f32 %v5177, %v5345
        %v5347 = vpop.f32.mrf.mxu0
        %v5348 = vadd.f32 %v5179, %v5347
        %5349 = vmatmul.bf16.gmra.mxu0 %v3674
        %v5350 = vpop.f32.mrf.mxu0
        %v5351 = vadd.f32 %v5182, %v5350
        %v5352 = vpop.f32.mrf.mxu0
        %v5353 = vadd.f32 %v5184, %v5352
        %5354 = vmatmul.bf16.gmra.mxu0 %v3680
        %v5355 = vpop.f32.mrf.mxu0
        %v5356 = vadd.f32 %v5187, %v5355
        %v5357 = vpop.f32.mrf.mxu0
        %v5358 = vadd.f32 %v5189, %v5357
        %5359 = vmatmul.bf16.gmra.mxu0 %v3686
        %v5360 = vpop.f32.mrf.mxu0
        %v5361 = vadd.f32 %v5192, %v5360
        %v5362 = vpop.f32.mrf.mxu0
        %v5363 = vadd.f32 %v5194, %v5362
        %5364 = vmatmul.bf16.gmra.mxu0 %v3692
        %v5365 = vpop.f32.mrf.mxu0
        %v5366 = vadd.f32 %v5197, %v5365
        %v5367 = vpop.f32.mrf.mxu0
        %v5368 = vadd.f32 %v5199, %v5367
        %5369 = vmatmul.bf16.gmra.mxu0 %v3698
        %v5370 = vpop.f32.mrf.mxu0
        %v5371 = vadd.f32 %v5202, %v5370
        %v5372 = vpop.f32.mrf.mxu0
        %v5373 = vadd.f32 %v5204, %v5372
        %5374 = vmatmul.bf16.gmra.mxu0 %v3704
        %v5375 = vpop.f32.mrf.mxu0
        %v5376 = vadd.f32 %v5207, %v5375
        %v5377 = vpop.f32.mrf.mxu0
        %v5378 = vadd.f32 %v5209, %v5377
        %5379 = vmatmul.bf16.gmra.mxu0 %v3710
        %v5380 = vpop.f32.mrf.mxu0
        %v5381 = vadd.f32 %v5212, %v5380
        %v5382 = vpop.f32.mrf.mxu0
        %v5383 = vadd.f32 %v5214, %v5382
        %5384 = vmatmul.bf16.gmra.mxu0 %v3716
        %v5385 = vpop.f32.mrf.mxu0
        %v5386 = vadd.f32 %v5217, %v5385
        %v5387 = vpop.f32.mrf.mxu0
        %v5388 = vadd.f32 %v5219, %v5387
        %5389 = vmatmul.bf16.gmra.mxu0 %v3722
        %v5390 = vpop.f32.mrf.mxu0
        %v5391 = vadd.f32 %v5222, %v5390
        %v5392 = vpop.f32.mrf.mxu0
        %v5393 = vadd.f32 %v5224, %v5392
        %5394 = vdwg.mxu0
        %5395 = vmatpush.bf16.msra.mxu0 %v4628
        %5396 = vmatpush.bf16.msra.mxu0 %v4624
        %5397 = vmatpush.bf16.msra.mxu0 %v4620
        %5398 = vmatpush.bf16.msra.mxu0 %v4616
        %5399 = vmatpush.bf16.msra.mxu0 %v4612
        %5400 = vmatpush.bf16.msra.mxu0 %v4608
        %5401 = vmatpush.bf16.msra.mxu0 %v4604
        %5402 = vmatpush.bf16.msra.mxu0 %v4600
        %5403 = vmatmul.bf16.gmra.mxu0 %v3537
        %v5404 = vpop.f32.mrf.mxu0
        %v5405 = vadd.f32 %v5236, %v5404
        %v5406 = vpop.f32.mrf.mxu0
        %v5407 = vadd.f32 %v5238, %v5406
        %5408 = vmatmul.bf16.gmra.mxu0 %v3543
        %v5409 = vpop.f32.mrf.mxu0
        %v5410 = vadd.f32 %v5241, %v5409
        %v5411 = vpop.f32.mrf.mxu0
        %v5412 = vadd.f32 %v5243, %v5411
        %5413 = vmatmul.bf16.gmra.mxu0 %v3549
        %v5414 = vpop.f32.mrf.mxu0
        %v5415 = vadd.f32 %v5246, %v5414
        %v5416 = vpop.f32.mrf.mxu0
        %v5417 = vadd.f32 %v5248, %v5416
        %5418 = vmatmul.bf16.gmra.mxu0 %v3555
        %v5419 = vpop.f32.mrf.mxu0
        %v5420 = vadd.f32 %v5251, %v5419
        %v5421 = vpop.f32.mrf.mxu0
        %v5422 = vadd.f32 %v5253, %v5421
        %5423 = vmatmul.bf16.gmra.mxu0 %v3561
        %v5424 = vpop.f32.mrf.mxu0
        %v5425 = vadd.f32 %v5256, %v5424
        %v5426 = vpop.f32.mrf.mxu0
        %v5427 = vadd.f32 %v5258, %v5426
        %5428 = vmatmul.bf16.gmra.mxu0 %v3567
        %v5429 = vpop.f32.mrf.mxu0
        %v5430 = vadd.f32 %v5261, %v5429
        %v5431 = vpop.f32.mrf.mxu0
        %v5432 = vadd.f32 %v5263, %v5431
        %5433 = vmatmul.bf16.gmra.mxu0 %v3573
        %v5434 = vpop.f32.mrf.mxu0
        %v5435 = vadd.f32 %v5266, %v5434
        %v5436 = vpop.f32.mrf.mxu0
        %v5437 = vadd.f32 %v5268, %v5436
        %5438 = vmatmul.bf16.gmra.mxu0 %v3579
        %v5439 = vpop.f32.mrf.mxu0
        %v5440 = vadd.f32 %v5271, %v5439
        %v5441 = vpop.f32.mrf.mxu0
        %v5442 = vadd.f32 %v5273, %v5441
        %5443 = vmatmul.bf16.gmra.mxu0 %v3585
        %v5444 = vpop.f32.mrf.mxu0
        %v5445 = vadd.f32 %v5276, %v5444
        %v5446 = vpop.f32.mrf.mxu0
        %v5447 = vadd.f32 %v5278, %v5446
        %5448 = vmatmul.bf16.gmra.mxu0 %v3591
        %v5449 = vpop.f32.mrf.mxu0
        %v5450 = vadd.f32 %v5281, %v5449
        %v5451 = vpop.f32.mrf.mxu0
        %v5452 = vadd.f32 %v5283, %v5451
        %5453 = vmatmul.bf16.gmra.mxu0 %v3597
        %v5454 = vpop.f32.mrf.mxu0
        %v5455 = vadd.f32 %v5286, %v5454
        %v5456 = vpop.f32.mrf.mxu0
        %v5457 = vadd.f32 %v5288, %v5456
        %5458 = vmatmul.bf16.gmra.mxu0 %v3603
        %v5459 = vpop.f32.mrf.mxu0
        %v5460 = vadd.f32 %v5291, %v5459
        %v5461 = vpop.f32.mrf.mxu0
        %v5462 = vadd.f32 %v5293, %v5461
        %5463 = vmatmul.bf16.gmra.mxu0 %v3609
        %v5464 = vpop.f32.mrf.mxu0
        %v5465 = vadd.f32 %v5296, %v5464
        %v5466 = vpop.f32.mrf.mxu0
        %v5467 = vadd.f32 %v5298, %v5466
        %5468 = vmatmul.bf16.gmra.mxu0 %v3615
        %v5469 = vpop.f32.mrf.mxu0
        %v5470 = vadd.f32 %v5301, %v5469
        %v5471 = vpop.f32.mrf.mxu0
        %v5472 = vadd.f32 %v5303, %v5471
        %5473 = vmatmul.bf16.gmra.mxu0 %v3621
        %v5474 = vpop.f32.mrf.mxu0
        %v5475 = vadd.f32 %v5306, %v5474
        %v5476 = vpop.f32.mrf.mxu0
        %v5477 = vadd.f32 %v5308, %v5476
        %5478 = vmatmul.bf16.gmra.mxu0 %v3627
        %v5479 = vpop.f32.mrf.mxu0
        %v5480 = vadd.f32 %v5311, %v5479
        %v5481 = vpop.f32.mrf.mxu0
        %v5482 = vadd.f32 %v5313, %v5481
        %5483 = vmatmul.bf16.gmra.mxu0 %v3633
        %v5484 = vpop.f32.mrf.mxu0
        %v5485 = vadd.f32 %v5316, %v5484
        %v5486 = vpop.f32.mrf.mxu0
        %v5487 = vadd.f32 %v5318, %v5486
        %5488 = vmatmul.bf16.gmra.mxu0 %v3639
        %v5489 = vpop.f32.mrf.mxu0
        %v5490 = vadd.f32 %v5321, %v5489
        %v5491 = vpop.f32.mrf.mxu0
        %v5492 = vadd.f32 %v5323, %v5491
        %5493 = vmatmul.bf16.gmra.mxu0 %v3645
        %v5494 = vpop.f32.mrf.mxu0
        %v5495 = vadd.f32 %v5326, %v5494
        %v5496 = vpop.f32.mrf.mxu0
        %v5497 = vadd.f32 %v5328, %v5496
        %5498 = vmatmul.bf16.gmra.mxu0 %v3651
        %v5499 = vpop.f32.mrf.mxu0
        %v5500 = vadd.f32 %v5331, %v5499
        %v5501 = vpop.f32.mrf.mxu0
        %v5502 = vadd.f32 %v5333, %v5501
        %5503 = vmatmul.bf16.gmra.mxu0 %v3657
        %v5504 = vpop.f32.mrf.mxu0
        %v5505 = vadd.f32 %v5336, %v5504
        %v5506 = vpop.f32.mrf.mxu0
        %v5507 = vadd.f32 %v5338, %v5506
        %5508 = vmatmul.bf16.gmra.mxu0 %v3663
        %v5509 = vpop.f32.mrf.mxu0
        %v5510 = vadd.f32 %v5341, %v5509
        %v5511 = vpop.f32.mrf.mxu0
        %v5512 = vadd.f32 %v5343, %v5511
        %5513 = vmatmul.bf16.gmra.mxu0 %v3669
        %v5514 = vpop.f32.mrf.mxu0
        %v5515 = vadd.f32 %v5346, %v5514
        %v5516 = vpop.f32.mrf.mxu0
        %v5517 = vadd.f32 %v5348, %v5516
        %5518 = vmatmul.bf16.gmra.mxu0 %v3675
        %v5519 = vpop.f32.mrf.mxu0
        %v5520 = vadd.f32 %v5351, %v5519
        %v5521 = vpop.f32.mrf.mxu0
        %v5522 = vadd.f32 %v5353, %v5521
        %5523 = vmatmul.bf16.gmra.mxu0 %v3681
        %v5524 = vpop.f32.mrf.mxu0
        %v5525 = vadd.f32 %v5356, %v5524
        %v5526 = vpop.f32.mrf.mxu0
        %v5527 = vadd.f32 %v5358, %v5526
        %5528 = vmatmul.bf16.gmra.mxu0 %v3687
        %v5529 = vpop.f32.mrf.mxu0
        %v5530 = vadd.f32 %v5361, %v5529
        %v5531 = vpop.f32.mrf.mxu0
        %v5532 = vadd.f32 %v5363, %v5531
        %5533 = vmatmul.bf16.gmra.mxu0 %v3693
        %v5534 = vpop.f32.mrf.mxu0
        %v5535 = vadd.f32 %v5366, %v5534
        %v5536 = vpop.f32.mrf.mxu0
        %v5537 = vadd.f32 %v5368, %v5536
        %5538 = vmatmul.bf16.gmra.mxu0 %v3699
        %v5539 = vpop.f32.mrf.mxu0
        %v5540 = vadd.f32 %v5371, %v5539
        %v5541 = vpop.f32.mrf.mxu0
        %v5542 = vadd.f32 %v5373, %v5541
        %5543 = vmatmul.bf16.gmra.mxu0 %v3705
        %v5544 = vpop.f32.mrf.mxu0
        %v5545 = vadd.f32 %v5376, %v5544
        %v5546 = vpop.f32.mrf.mxu0
        %v5547 = vadd.f32 %v5378, %v5546
        %5548 = vmatmul.bf16.gmra.mxu0 %v3711
        %v5549 = vpop.f32.mrf.mxu0
        %v5550 = vadd.f32 %v5381, %v5549
        %v5551 = vpop.f32.mrf.mxu0
        %v5552 = vadd.f32 %v5383, %v5551
        %5553 = vmatmul.bf16.gmra.mxu0 %v3717
        %v5554 = vpop.f32.mrf.mxu0
        %v5555 = vadd.f32 %v5386, %v5554
        %v5556 = vpop.f32.mrf.mxu0
        %v5557 = vadd.f32 %v5388, %v5556
        %5558 = vmatmul.bf16.gmra.mxu0 %v3723
        %v5559 = vpop.f32.mrf.mxu0
        %v5560 = vadd.f32 %v5391, %v5559
        %v5561 = vpop.f32.mrf.mxu0
        %v5562 = vadd.f32 %v5393, %v5561
        %5563 = vdwg.mxu0
        %5564 = vmatpush.bf16.msra.mxu0 %v4660
        %5565 = vmatpush.bf16.msra.mxu0 %v4656
        %5566 = vmatpush.bf16.msra.mxu0 %v4652
        %5567 = vmatpush.bf16.msra.mxu0 %v4648
        %5568 = vmatpush.bf16.msra.mxu0 %v4644
        %5569 = vmatpush.bf16.msra.mxu0 %v4640
        %5570 = vmatpush.bf16.msra.mxu0 %v4636
        %5571 = vmatpush.bf16.msra.mxu0 %v4632
        %5572 = vmatmul.bf16.gmra.mxu0 %v3538
        %v5573 = vpop.f32.mrf.mxu0
        %v5574 = vadd.f32 %v5405, %v5573
        %v5575 = vpop.f32.mrf.mxu0
        %v5576 = vadd.f32 %v5407, %v5575
        %5577 = vmatmul.bf16.gmra.mxu0 %v3544
        %v5578 = vpop.f32.mrf.mxu0
        %v5579 = vadd.f32 %v5410, %v5578
        %v5580 = vpop.f32.mrf.mxu0
        %v5581 = vadd.f32 %v5412, %v5580
        %5582 = vmatmul.bf16.gmra.mxu0 %v3550
        %v5583 = vpop.f32.mrf.mxu0
        %v5584 = vadd.f32 %v5415, %v5583
        %v5585 = vpop.f32.mrf.mxu0
        %v5586 = vadd.f32 %v5417, %v5585
        %5587 = vmatmul.bf16.gmra.mxu0 %v3556
        %v5588 = vpop.f32.mrf.mxu0
        %v5589 = vadd.f32 %v5420, %v5588
        %v5590 = vpop.f32.mrf.mxu0
        %v5591 = vadd.f32 %v5422, %v5590
        %5592 = vmatmul.bf16.gmra.mxu0 %v3562
        %v5593 = vpop.f32.mrf.mxu0
        %v5594 = vadd.f32 %v5425, %v5593
        %v5595 = vpop.f32.mrf.mxu0
        %v5596 = vadd.f32 %v5427, %v5595
        %5597 = vmatmul.bf16.gmra.mxu0 %v3568
        %v5598 = vpop.f32.mrf.mxu0
        %v5599 = vadd.f32 %v5430, %v5598
        %v5600 = vpop.f32.mrf.mxu0
        %v5601 = vadd.f32 %v5432, %v5600
        %5602 = vmatmul.bf16.gmra.mxu0 %v3574
        %v5603 = vpop.f32.mrf.mxu0
        %v5604 = vadd.f32 %v5435, %v5603
        %v5605 = vpop.f32.mrf.mxu0
        %v5606 = vadd.f32 %v5437, %v5605
        %5607 = vmatmul.bf16.gmra.mxu0 %v3580
        %v5608 = vpop.f32.mrf.mxu0
        %v5609 = vadd.f32 %v5440, %v5608
        %v5610 = vpop.f32.mrf.mxu0
        %v5611 = vadd.f32 %v5442, %v5610
        %5612 = vmatmul.bf16.gmra.mxu0 %v3586
        %v5613 = vpop.f32.mrf.mxu0
        %v5614 = vadd.f32 %v5445, %v5613
        %v5615 = vpop.f32.mrf.mxu0
        %v5616 = vadd.f32 %v5447, %v5615
        %5617 = vmatmul.bf16.gmra.mxu0 %v3592
        %v5618 = vpop.f32.mrf.mxu0
        %v5619 = vadd.f32 %v5450, %v5618
        %v5620 = vpop.f32.mrf.mxu0
        %v5621 = vadd.f32 %v5452, %v5620
        %5622 = vmatmul.bf16.gmra.mxu0 %v3598
        %v5623 = vpop.f32.mrf.mxu0
        %v5624 = vadd.f32 %v5455, %v5623
        %v5625 = vpop.f32.mrf.mxu0
        %v5626 = vadd.f32 %v5457, %v5625
        %5627 = vmatmul.bf16.gmra.mxu0 %v3604
        %v5628 = vpop.f32.mrf.mxu0
        %v5629 = vadd.f32 %v5460, %v5628
        %v5630 = vpop.f32.mrf.mxu0
        %v5631 = vadd.f32 %v5462, %v5630
        %5632 = vmatmul.bf16.gmra.mxu0 %v3610
        %v5633 = vpop.f32.mrf.mxu0
        %v5634 = vadd.f32 %v5465, %v5633
        %v5635 = vpop.f32.mrf.mxu0
        %v5636 = vadd.f32 %v5467, %v5635
        %5637 = vmatmul.bf16.gmra.mxu0 %v3616
        %v5638 = vpop.f32.mrf.mxu0
        %v5639 = vadd.f32 %v5470, %v5638
        %v5640 = vpop.f32.mrf.mxu0
        %v5641 = vadd.f32 %v5472, %v5640
        %5642 = vmatmul.bf16.gmra.mxu0 %v3622
        %v5643 = vpop.f32.mrf.mxu0
        %v5644 = vadd.f32 %v5475, %v5643
        %v5645 = vpop.f32.mrf.mxu0
        %v5646 = vadd.f32 %v5477, %v5645
        %5647 = vmatmul.bf16.gmra.mxu0 %v3628
        %v5648 = vpop.f32.mrf.mxu0
        %v5649 = vadd.f32 %v5480, %v5648
        %v5650 = vpop.f32.mrf.mxu0
        %v5651 = vadd.f32 %v5482, %v5650
        %5652 = vmatmul.bf16.gmra.mxu0 %v3634
        %v5653 = vpop.f32.mrf.mxu0
        %v5654 = vadd.f32 %v5485, %v5653
        %v5655 = vpop.f32.mrf.mxu0
        %v5656 = vadd.f32 %v5487, %v5655
        %5657 = vmatmul.bf16.gmra.mxu0 %v3640
        %v5658 = vpop.f32.mrf.mxu0
        %v5659 = vadd.f32 %v5490, %v5658
        %v5660 = vpop.f32.mrf.mxu0
        %v5661 = vadd.f32 %v5492, %v5660
        %5662 = vmatmul.bf16.gmra.mxu0 %v3646
        %v5663 = vpop.f32.mrf.mxu0
        %v5664 = vadd.f32 %v5495, %v5663
        %v5665 = vpop.f32.mrf.mxu0
        %v5666 = vadd.f32 %v5497, %v5665
        %5667 = vmatmul.bf16.gmra.mxu0 %v3652
        %v5668 = vpop.f32.mrf.mxu0
        %v5669 = vadd.f32 %v5500, %v5668
        %v5670 = vpop.f32.mrf.mxu0
        %v5671 = vadd.f32 %v5502, %v5670
        %5672 = vmatmul.bf16.gmra.mxu0 %v3658
        %v5673 = vpop.f32.mrf.mxu0
        %v5674 = vadd.f32 %v5505, %v5673
        %v5675 = vpop.f32.mrf.mxu0
        %v5676 = vadd.f32 %v5507, %v5675
        %5677 = vmatmul.bf16.gmra.mxu0 %v3664
        %v5678 = vpop.f32.mrf.mxu0
        %v5679 = vadd.f32 %v5510, %v5678
        %v5680 = vpop.f32.mrf.mxu0
        %v5681 = vadd.f32 %v5512, %v5680
        %5682 = vmatmul.bf16.gmra.mxu0 %v3670
        %v5683 = vpop.f32.mrf.mxu0
        %v5684 = vadd.f32 %v5515, %v5683
        %v5685 = vpop.f32.mrf.mxu0
        %v5686 = vadd.f32 %v5517, %v5685
        %5687 = vmatmul.bf16.gmra.mxu0 %v3676
        %v5688 = vpop.f32.mrf.mxu0
        %v5689 = vadd.f32 %v5520, %v5688
        %v5690 = vpop.f32.mrf.mxu0
        %v5691 = vadd.f32 %v5522, %v5690
        %5692 = vmatmul.bf16.gmra.mxu0 %v3682
        %v5693 = vpop.f32.mrf.mxu0
        %v5694 = vadd.f32 %v5525, %v5693
        %v5695 = vpop.f32.mrf.mxu0
        %v5696 = vadd.f32 %v5527, %v5695
        %5697 = vmatmul.bf16.gmra.mxu0 %v3688
        %v5698 = vpop.f32.mrf.mxu0
        %v5699 = vadd.f32 %v5530, %v5698
        %v5700 = vpop.f32.mrf.mxu0
        %v5701 = vadd.f32 %v5532, %v5700
        %5702 = vmatmul.bf16.gmra.mxu0 %v3694
        %v5703 = vpop.f32.mrf.mxu0
        %v5704 = vadd.f32 %v5535, %v5703
        %v5705 = vpop.f32.mrf.mxu0
        %v5706 = vadd.f32 %v5537, %v5705
        %5707 = vmatmul.bf16.gmra.mxu0 %v3700
        %v5708 = vpop.f32.mrf.mxu0
        %v5709 = vadd.f32 %v5540, %v5708
        %v5710 = vpop.f32.mrf.mxu0
        %v5711 = vadd.f32 %v5542, %v5710
        %5712 = vmatmul.bf16.gmra.mxu0 %v3706
        %v5713 = vpop.f32.mrf.mxu0
        %v5714 = vadd.f32 %v5545, %v5713
        %v5715 = vpop.f32.mrf.mxu0
        %v5716 = vadd.f32 %v5547, %v5715
        %5717 = vmatmul.bf16.gmra.mxu0 %v3712
        %v5718 = vpop.f32.mrf.mxu0
        %v5719 = vadd.f32 %v5550, %v5718
        %v5720 = vpop.f32.mrf.mxu0
        %v5721 = vadd.f32 %v5552, %v5720
        %5722 = vmatmul.bf16.gmra.mxu0 %v3718
        %v5723 = vpop.f32.mrf.mxu0
        %v5724 = vadd.f32 %v5555, %v5723
        %v5725 = vpop.f32.mrf.mxu0
        %v5726 = vadd.f32 %v5557, %v5725
        %5727 = vmatmul.bf16.gmra.mxu0 %v3724
        %v5728 = vpop.f32.mrf.mxu0
        %v5729 = vadd.f32 %v5560, %v5728
        %v5730 = vpop.f32.mrf.mxu0
        %v5731 = vadd.f32 %v5562, %v5730
        %5732 = vdwg.mxu0
        %5733 = vmatpush.bf16.msra.mxu0 %v4692
        %5734 = vmatpush.bf16.msra.mxu0 %v4688
        %5735 = vmatpush.bf16.msra.mxu0 %v4684
        %5736 = vmatpush.bf16.msra.mxu0 %v4680
        %5737 = vmatpush.bf16.msra.mxu0 %v4676
        %5738 = vmatpush.bf16.msra.mxu0 %v4672
        %5739 = vmatpush.bf16.msra.mxu0 %v4668
        %5740 = vmatpush.bf16.msra.mxu0 %v4664
        %5741 = vmatmul.bf16.gmra.mxu0 %v3539
        %v5742 = vpop.f32.mrf.mxu0
        %v5743 = vadd.f32 %v5574, %v5742
        %v5744 = vpop.f32.mrf.mxu0
        %v5745 = vadd.f32 %v5576, %v5744
        %5746 = vmatmul.bf16.gmra.mxu0 %v3545
        %v5747 = vpop.f32.mrf.mxu0
        %v5748 = vadd.f32 %v5579, %v5747
        %v5749 = vpop.f32.mrf.mxu0
        %v5750 = vadd.f32 %v5581, %v5749
        %5751 = vmatmul.bf16.gmra.mxu0 %v3551
        %v5752 = vpop.f32.mrf.mxu0
        %v5753 = vadd.f32 %v5584, %v5752
        %v5754 = vpop.f32.mrf.mxu0
        %v5755 = vadd.f32 %v5586, %v5754
        %5756 = vmatmul.bf16.gmra.mxu0 %v3557
        %v5757 = vpop.f32.mrf.mxu0
        %v5758 = vadd.f32 %v5589, %v5757
        %v5759 = vpop.f32.mrf.mxu0
        %v5760 = vadd.f32 %v5591, %v5759
        %5761 = vmatmul.bf16.gmra.mxu0 %v3563
        %v5762 = vpop.f32.mrf.mxu0
        %v5763 = vadd.f32 %v5594, %v5762
        %v5764 = vpop.f32.mrf.mxu0
        %v5765 = vadd.f32 %v5596, %v5764
        %5766 = vmatmul.bf16.gmra.mxu0 %v3569
        %v5767 = vpop.f32.mrf.mxu0
        %v5768 = vadd.f32 %v5599, %v5767
        %v5769 = vpop.f32.mrf.mxu0
        %v5770 = vadd.f32 %v5601, %v5769
        %5771 = vmatmul.bf16.gmra.mxu0 %v3575
        %v5772 = vpop.f32.mrf.mxu0
        %v5773 = vadd.f32 %v5604, %v5772
        %v5774 = vpop.f32.mrf.mxu0
        %v5775 = vadd.f32 %v5606, %v5774
        %5776 = vmatmul.bf16.gmra.mxu0 %v3581
        %v5777 = vpop.f32.mrf.mxu0
        %v5778 = vadd.f32 %v5609, %v5777
        %v5779 = vpop.f32.mrf.mxu0
        %v5780 = vadd.f32 %v5611, %v5779
        %5781 = vmatmul.bf16.gmra.mxu0 %v3587
        %v5782 = vpop.f32.mrf.mxu0
        %v5783 = vadd.f32 %v5614, %v5782
        %v5784 = vpop.f32.mrf.mxu0
        %v5785 = vadd.f32 %v5616, %v5784
        %5786 = vmatmul.bf16.gmra.mxu0 %v3593
        %v5787 = vpop.f32.mrf.mxu0
        %v5788 = vadd.f32 %v5619, %v5787
        %v5789 = vpop.f32.mrf.mxu0
        %v5790 = vadd.f32 %v5621, %v5789
        %5791 = vmatmul.bf16.gmra.mxu0 %v3599
        %v5792 = vpop.f32.mrf.mxu0
        %v5793 = vadd.f32 %v5624, %v5792
        %v5794 = vpop.f32.mrf.mxu0
        %v5795 = vadd.f32 %v5626, %v5794
        %5796 = vmatmul.bf16.gmra.mxu0 %v3605
        %v5797 = vpop.f32.mrf.mxu0
        %v5798 = vadd.f32 %v5629, %v5797
        %v5799 = vpop.f32.mrf.mxu0
        %v5800 = vadd.f32 %v5631, %v5799
        %5801 = vmatmul.bf16.gmra.mxu0 %v3611
        %v5802 = vpop.f32.mrf.mxu0
        %v5803 = vadd.f32 %v5634, %v5802
        %v5804 = vpop.f32.mrf.mxu0
        %v5805 = vadd.f32 %v5636, %v5804
        %5806 = vmatmul.bf16.gmra.mxu0 %v3617
        %v5807 = vpop.f32.mrf.mxu0
        %v5808 = vadd.f32 %v5639, %v5807
        %v5809 = vpop.f32.mrf.mxu0
        %v5810 = vadd.f32 %v5641, %v5809
        %5811 = vmatmul.bf16.gmra.mxu0 %v3623
        %v5812 = vpop.f32.mrf.mxu0
        %v5813 = vadd.f32 %v5644, %v5812
        %v5814 = vpop.f32.mrf.mxu0
        %v5815 = vadd.f32 %v5646, %v5814
        %5816 = vmatmul.bf16.gmra.mxu0 %v3629
        %v5817 = vpop.f32.mrf.mxu0
        %v5818 = vadd.f32 %v5649, %v5817
        %v5819 = vpop.f32.mrf.mxu0
        %v5820 = vadd.f32 %v5651, %v5819
        %5821 = vmatmul.bf16.gmra.mxu0 %v3635
        %v5822 = vpop.f32.mrf.mxu0
        %v5823 = vadd.f32 %v5654, %v5822
        %v5824 = vpop.f32.mrf.mxu0
        %v5825 = vadd.f32 %v5656, %v5824
        %5826 = vmatmul.bf16.gmra.mxu0 %v3641
        %v5827 = vpop.f32.mrf.mxu0
        %v5828 = vadd.f32 %v5659, %v5827
        %v5829 = vpop.f32.mrf.mxu0
        %v5830 = vadd.f32 %v5661, %v5829
        %5831 = vmatmul.bf16.gmra.mxu0 %v3647
        %v5832 = vpop.f32.mrf.mxu0
        %v5833 = vadd.f32 %v5664, %v5832
        %v5834 = vpop.f32.mrf.mxu0
        %v5835 = vadd.f32 %v5666, %v5834
        %5836 = vmatmul.bf16.gmra.mxu0 %v3653
        %v5837 = vpop.f32.mrf.mxu0
        %v5838 = vadd.f32 %v5669, %v5837
        %v5839 = vpop.f32.mrf.mxu0
        %v5840 = vadd.f32 %v5671, %v5839
        %5841 = vmatmul.bf16.gmra.mxu0 %v3659
        %v5842 = vpop.f32.mrf.mxu0
        %v5843 = vadd.f32 %v5674, %v5842
        %v5844 = vpop.f32.mrf.mxu0
        %v5845 = vadd.f32 %v5676, %v5844
        %5846 = vmatmul.bf16.gmra.mxu0 %v3665
        %v5847 = vpop.f32.mrf.mxu0
        %v5848 = vadd.f32 %v5679, %v5847
        %v5849 = vpop.f32.mrf.mxu0
        %v5850 = vadd.f32 %v5681, %v5849
        %5851 = vmatmul.bf16.gmra.mxu0 %v3671
        %v5852 = vpop.f32.mrf.mxu0
        %v5853 = vadd.f32 %v5684, %v5852
        %v5854 = vpop.f32.mrf.mxu0
        %v5855 = vadd.f32 %v5686, %v5854
        %5856 = vmatmul.bf16.gmra.mxu0 %v3677
        %v5857 = vpop.f32.mrf.mxu0
        %v5858 = vadd.f32 %v5689, %v5857
        %v5859 = vpop.f32.mrf.mxu0
        %v5860 = vadd.f32 %v5691, %v5859
        %5861 = vmatmul.bf16.gmra.mxu0 %v3683
        %v5862 = vpop.f32.mrf.mxu0
        %v5863 = vadd.f32 %v5694, %v5862
        %v5864 = vpop.f32.mrf.mxu0
        %v5865 = vadd.f32 %v5696, %v5864
        %5866 = vmatmul.bf16.gmra.mxu0 %v3689
        %v5867 = vpop.f32.mrf.mxu0
        %v5868 = vadd.f32 %v5699, %v5867
        %v5869 = vpop.f32.mrf.mxu0
        %v5870 = vadd.f32 %v5701, %v5869
        %5871 = vmatmul.bf16.gmra.mxu0 %v3695
        %v5872 = vpop.f32.mrf.mxu0
        %v5873 = vadd.f32 %v5704, %v5872
        %v5874 = vpop.f32.mrf.mxu0
        %v5875 = vadd.f32 %v5706, %v5874
        %5876 = vmatmul.bf16.gmra.mxu0 %v3701
        %v5877 = vpop.f32.mrf.mxu0
        %v5878 = vadd.f32 %v5709, %v5877
        %v5879 = vpop.f32.mrf.mxu0
        %v5880 = vadd.f32 %v5711, %v5879
        %5881 = vmatmul.bf16.gmra.mxu0 %v3707
        %v5882 = vpop.f32.mrf.mxu0
        %v5883 = vadd.f32 %v5714, %v5882
        %v5884 = vpop.f32.mrf.mxu0
        %v5885 = vadd.f32 %v5716, %v5884
        %5886 = vmatmul.bf16.gmra.mxu0 %v3713
        %v5887 = vpop.f32.mrf.mxu0
        %v5888 = vadd.f32 %v5719, %v5887
        %v5889 = vpop.f32.mrf.mxu0
        %v5890 = vadd.f32 %v5721, %v5889
        %5891 = vmatmul.bf16.gmra.mxu0 %v3719
        %v5892 = vpop.f32.mrf.mxu0
        %v5893 = vadd.f32 %v5724, %v5892
        %v5894 = vpop.f32.mrf.mxu0
        %v5895 = vadd.f32 %v5726, %v5894
        %5896 = vmatmul.bf16.gmra.mxu0 %v3725
        %v5897 = vpop.f32.mrf.mxu0
        %v5898 = vadd.f32 %v5729, %v5897
        %v5899 = vpop.f32.mrf.mxu0
        %v5900 = vadd.f32 %v5731, %v5899
        %5901 = vdwg.mxu0
        %5902 = vmatpush.bf16.msra.mxu0 %v4533
        %5903 = vmatpush.bf16.msra.mxu0 %v4529
        %5904 = vmatpush.bf16.msra.mxu0 %v4525
        %5905 = vmatpush.bf16.msra.mxu0 %v4521
        %5906 = vmatpush.bf16.msra.mxu0 %v4517
        %5907 = vmatpush.bf16.msra.mxu0 %v4513
        %5908 = vmatpush.bf16.msra.mxu0 %v4509
        %5909 = vmatpush.bf16.msra.mxu0 %v4505
        %5910 = vmatmul.bf16.gmra.mxu0 %v3534
        %v5911 = vpop.f32.mrf.mxu0
        %v5912 = vadd.f32 %v3921, %v5911
        %v5913 = vpop.f32.mrf.mxu0
        %v5914 = vadd.f32 %v3921, %v5913
        %5915 = vmatmul.bf16.gmra.mxu0 %v3540
        %v5916 = vpop.f32.mrf.mxu0
        %v5917 = vadd.f32 %v3921, %v5916
        %v5918 = vpop.f32.mrf.mxu0
        %v5919 = vadd.f32 %v3921, %v5918
        %5920 = vmatmul.bf16.gmra.mxu0 %v3546
        %v5921 = vpop.f32.mrf.mxu0
        %v5922 = vadd.f32 %v3921, %v5921
        %v5923 = vpop.f32.mrf.mxu0
        %v5924 = vadd.f32 %v3921, %v5923
        %5925 = vmatmul.bf16.gmra.mxu0 %v3552
        %v5926 = vpop.f32.mrf.mxu0
        %v5927 = vadd.f32 %v3921, %v5926
        %v5928 = vpop.f32.mrf.mxu0
        %v5929 = vadd.f32 %v3921, %v5928
        %5930 = vmatmul.bf16.gmra.mxu0 %v3558
        %v5931 = vpop.f32.mrf.mxu0
        %v5932 = vadd.f32 %v3921, %v5931
        %v5933 = vpop.f32.mrf.mxu0
        %v5934 = vadd.f32 %v3921, %v5933
        %5935 = vmatmul.bf16.gmra.mxu0 %v3564
        %v5936 = vpop.f32.mrf.mxu0
        %v5937 = vadd.f32 %v3921, %v5936
        %v5938 = vpop.f32.mrf.mxu0
        %v5939 = vadd.f32 %v3921, %v5938
        %5940 = vmatmul.bf16.gmra.mxu0 %v3570
        %v5941 = vpop.f32.mrf.mxu0
        %v5942 = vadd.f32 %v3921, %v5941
        %v5943 = vpop.f32.mrf.mxu0
        %v5944 = vadd.f32 %v3921, %v5943
        %5945 = vmatmul.bf16.gmra.mxu0 %v3576
        %v5946 = vpop.f32.mrf.mxu0
        %v5947 = vadd.f32 %v3921, %v5946
        %v5948 = vpop.f32.mrf.mxu0
        %v5949 = vadd.f32 %v3921, %v5948
        %5950 = vmatmul.bf16.gmra.mxu0 %v3582
        %v5951 = vpop.f32.mrf.mxu0
        %v5952 = vadd.f32 %v3921, %v5951
        %v5953 = vpop.f32.mrf.mxu0
        %v5954 = vadd.f32 %v3921, %v5953
        %5955 = vmatmul.bf16.gmra.mxu0 %v3588
        %v5956 = vpop.f32.mrf.mxu0
        %v5957 = vadd.f32 %v3921, %v5956
        %v5958 = vpop.f32.mrf.mxu0
        %v5959 = vadd.f32 %v3921, %v5958
        %5960 = vmatmul.bf16.gmra.mxu0 %v3594
        %v5961 = vpop.f32.mrf.mxu0
        %v5962 = vadd.f32 %v3921, %v5961
        %v5963 = vpop.f32.mrf.mxu0
        %v5964 = vadd.f32 %v3921, %v5963
        %5965 = vmatmul.bf16.gmra.mxu0 %v3600
        %v5966 = vpop.f32.mrf.mxu0
        %v5967 = vadd.f32 %v3921, %v5966
        %v5968 = vpop.f32.mrf.mxu0
        %v5969 = vadd.f32 %v3921, %v5968
        %5970 = vmatmul.bf16.gmra.mxu0 %v3606
        %v5971 = vpop.f32.mrf.mxu0
        %v5972 = vadd.f32 %v3921, %v5971
        %v5973 = vpop.f32.mrf.mxu0
        %v5974 = vadd.f32 %v3921, %v5973
        %5975 = vmatmul.bf16.gmra.mxu0 %v3612
        %v5976 = vpop.f32.mrf.mxu0
        %v5977 = vadd.f32 %v3921, %v5976
        %v5978 = vpop.f32.mrf.mxu0
        %v5979 = vadd.f32 %v3921, %v5978
        %5980 = vmatmul.bf16.gmra.mxu0 %v3618
        %v5981 = vpop.f32.mrf.mxu0
        %v5982 = vadd.f32 %v3921, %v5981
        %v5983 = vpop.f32.mrf.mxu0
        %v5984 = vadd.f32 %v3921, %v5983
        %5985 = vmatmul.bf16.gmra.mxu0 %v3624
        %v5986 = vpop.f32.mrf.mxu0
        %v5987 = vadd.f32 %v3921, %v5986
        %v5988 = vpop.f32.mrf.mxu0
        %v5989 = vadd.f32 %v3921, %v5988
        %5990 = vmatmul.bf16.gmra.mxu0 %v3630
        %v5991 = vpop.f32.mrf.mxu0
        %v5992 = vadd.f32 %v3921, %v5991
        %v5993 = vpop.f32.mrf.mxu0
        %v5994 = vadd.f32 %v3921, %v5993
        %5995 = vmatmul.bf16.gmra.mxu0 %v3636
        %v5996 = vpop.f32.mrf.mxu0
        %v5997 = vadd.f32 %v3921, %v5996
        %v5998 = vpop.f32.mrf.mxu0
        %v5999 = vadd.f32 %v3921, %v5998
        %6000 = vmatmul.bf16.gmra.mxu0 %v3642
        %v6001 = vpop.f32.mrf.mxu0
        %v6002 = vadd.f32 %v3921, %v6001
        %v6003 = vpop.f32.mrf.mxu0
        %v6004 = vadd.f32 %v3921, %v6003
        %6005 = vmatmul.bf16.gmra.mxu0 %v3648
        %v6006 = vpop.f32.mrf.mxu0
        %v6007 = vadd.f32 %v3921, %v6006
        %v6008 = vpop.f32.mrf.mxu0
        %v6009 = vadd.f32 %v3921, %v6008
        %6010 = vmatmul.bf16.gmra.mxu0 %v3654
        %v6011 = vpop.f32.mrf.mxu0
        %v6012 = vadd.f32 %v3921, %v6011
        %v6013 = vpop.f32.mrf.mxu0
        %v6014 = vadd.f32 %v3921, %v6013
        %6015 = vmatmul.bf16.gmra.mxu0 %v3660
        %v6016 = vpop.f32.mrf.mxu0
        %v6017 = vadd.f32 %v3921, %v6016
        %v6018 = vpop.f32.mrf.mxu0
        %v6019 = vadd.f32 %v3921, %v6018
        %6020 = vmatmul.bf16.gmra.mxu0 %v3666
        %v6021 = vpop.f32.mrf.mxu0
        %v6022 = vadd.f32 %v3921, %v6021
        %v6023 = vpop.f32.mrf.mxu0
        %v6024 = vadd.f32 %v3921, %v6023
        %6025 = vmatmul.bf16.gmra.mxu0 %v3672
        %v6026 = vpop.f32.mrf.mxu0
        %v6027 = vadd.f32 %v3921, %v6026
        %v6028 = vpop.f32.mrf.mxu0
        %v6029 = vadd.f32 %v3921, %v6028
        %6030 = vmatmul.bf16.gmra.mxu0 %v3678
        %v6031 = vpop.f32.mrf.mxu0
        %v6032 = vadd.f32 %v3921, %v6031
        %v6033 = vpop.f32.mrf.mxu0
        %v6034 = vadd.f32 %v3921, %v6033
        %6035 = vmatmul.bf16.gmra.mxu0 %v3684
        %v6036 = vpop.f32.mrf.mxu0
        %v6037 = vadd.f32 %v3921, %v6036
        %v6038 = vpop.f32.mrf.mxu0
        %v6039 = vadd.f32 %v3921, %v6038
        %6040 = vmatmul.bf16.gmra.mxu0 %v3690
        %v6041 = vpop.f32.mrf.mxu0
        %v6042 = vadd.f32 %v3921, %v6041
        %v6043 = vpop.f32.mrf.mxu0
        %v6044 = vadd.f32 %v3921, %v6043
        %6045 = vmatmul.bf16.gmra.mxu0 %v3696
        %v6046 = vpop.f32.mrf.mxu0
        %v6047 = vadd.f32 %v3921, %v6046
        %v6048 = vpop.f32.mrf.mxu0
        %v6049 = vadd.f32 %v3921, %v6048
        %6050 = vmatmul.bf16.gmra.mxu0 %v3702
        %v6051 = vpop.f32.mrf.mxu0
        %v6052 = vadd.f32 %v3921, %v6051
        %v6053 = vpop.f32.mrf.mxu0
        %v6054 = vadd.f32 %v3921, %v6053
        %6055 = vmatmul.bf16.gmra.mxu0 %v3708
        %v6056 = vpop.f32.mrf.mxu0
        %v6057 = vadd.f32 %v3921, %v6056
        %v6058 = vpop.f32.mrf.mxu0
        %v6059 = vadd.f32 %v3921, %v6058
        %6060 = vmatmul.bf16.gmra.mxu0 %v3714
        %v6061 = vpop.f32.mrf.mxu0
        %v6062 = vadd.f32 %v3921, %v6061
        %v6063 = vpop.f32.mrf.mxu0
        %v6064 = vadd.f32 %v3921, %v6063
        %6065 = vmatmul.bf16.gmra.mxu0 %v3720
        %v6066 = vpop.f32.mrf.mxu0
        %v6067 = vadd.f32 %v3921, %v6066
        %v6068 = vpop.f32.mrf.mxu0
        %v6069 = vadd.f32 %v3921, %v6068
        %6070 = vdwg.mxu0
        %6071 = vmatpush.bf16.msra.mxu0 %v4565
        %6072 = vmatpush.bf16.msra.mxu0 %v4561
        %6073 = vmatpush.bf16.msra.mxu0 %v4557
        %6074 = vmatpush.bf16.msra.mxu0 %v4553
        %6075 = vmatpush.bf16.msra.mxu0 %v4549
        %6076 = vmatpush.bf16.msra.mxu0 %v4545
        %6077 = vmatpush.bf16.msra.mxu0 %v4541
        %6078 = vmatpush.bf16.msra.mxu0 %v4537
        %6079 = vmatmul.bf16.gmra.mxu0 %v3535
        %v6080 = vpop.f32.mrf.mxu0
        %v6081 = vadd.f32 %v5912, %v6080
        %v6082 = vpop.f32.mrf.mxu0
        %v6083 = vadd.f32 %v5914, %v6082
        %6084 = vmatmul.bf16.gmra.mxu0 %v3541
        %v6085 = vpop.f32.mrf.mxu0
        %v6086 = vadd.f32 %v5917, %v6085
        %v6087 = vpop.f32.mrf.mxu0
        %v6088 = vadd.f32 %v5919, %v6087
        %6089 = vmatmul.bf16.gmra.mxu0 %v3547
        %v6090 = vpop.f32.mrf.mxu0
        %v6091 = vadd.f32 %v5922, %v6090
        %v6092 = vpop.f32.mrf.mxu0
        %v6093 = vadd.f32 %v5924, %v6092
        %6094 = vmatmul.bf16.gmra.mxu0 %v3553
        %v6095 = vpop.f32.mrf.mxu0
        %v6096 = vadd.f32 %v5927, %v6095
        %v6097 = vpop.f32.mrf.mxu0
        %v6098 = vadd.f32 %v5929, %v6097
        %6099 = vmatmul.bf16.gmra.mxu0 %v3559
        %v6100 = vpop.f32.mrf.mxu0
        %v6101 = vadd.f32 %v5932, %v6100
        %v6102 = vpop.f32.mrf.mxu0
        %v6103 = vadd.f32 %v5934, %v6102
        %6104 = vmatmul.bf16.gmra.mxu0 %v3565
        %v6105 = vpop.f32.mrf.mxu0
        %v6106 = vadd.f32 %v5937, %v6105
        %v6107 = vpop.f32.mrf.mxu0
        %v6108 = vadd.f32 %v5939, %v6107
        %6109 = vmatmul.bf16.gmra.mxu0 %v3571
        %v6110 = vpop.f32.mrf.mxu0
        %v6111 = vadd.f32 %v5942, %v6110
        %v6112 = vpop.f32.mrf.mxu0
        %v6113 = vadd.f32 %v5944, %v6112
        %6114 = vmatmul.bf16.gmra.mxu0 %v3577
        %v6115 = vpop.f32.mrf.mxu0
        %v6116 = vadd.f32 %v5947, %v6115
        %v6117 = vpop.f32.mrf.mxu0
        %v6118 = vadd.f32 %v5949, %v6117
        %6119 = vmatmul.bf16.gmra.mxu0 %v3583
        %v6120 = vpop.f32.mrf.mxu0
        %v6121 = vadd.f32 %v5952, %v6120
        %v6122 = vpop.f32.mrf.mxu0
        %v6123 = vadd.f32 %v5954, %v6122
        %6124 = vmatmul.bf16.gmra.mxu0 %v3589
        %v6125 = vpop.f32.mrf.mxu0
        %v6126 = vadd.f32 %v5957, %v6125
        %v6127 = vpop.f32.mrf.mxu0
        %v6128 = vadd.f32 %v5959, %v6127
        %6129 = vmatmul.bf16.gmra.mxu0 %v3595
        %v6130 = vpop.f32.mrf.mxu0
        %v6131 = vadd.f32 %v5962, %v6130
        %v6132 = vpop.f32.mrf.mxu0
        %v6133 = vadd.f32 %v5964, %v6132
        %6134 = vmatmul.bf16.gmra.mxu0 %v3601
        %v6135 = vpop.f32.mrf.mxu0
        %v6136 = vadd.f32 %v5967, %v6135
        %v6137 = vpop.f32.mrf.mxu0
        %v6138 = vadd.f32 %v5969, %v6137
        %6139 = vmatmul.bf16.gmra.mxu0 %v3607
        %v6140 = vpop.f32.mrf.mxu0
        %v6141 = vadd.f32 %v5972, %v6140
        %v6142 = vpop.f32.mrf.mxu0
        %v6143 = vadd.f32 %v5974, %v6142
        %6144 = vmatmul.bf16.gmra.mxu0 %v3613
        %v6145 = vpop.f32.mrf.mxu0
        %v6146 = vadd.f32 %v5977, %v6145
        %v6147 = vpop.f32.mrf.mxu0
        %v6148 = vadd.f32 %v5979, %v6147
        %6149 = vmatmul.bf16.gmra.mxu0 %v3619
        %v6150 = vpop.f32.mrf.mxu0
        %v6151 = vadd.f32 %v5982, %v6150
        %v6152 = vpop.f32.mrf.mxu0
        %v6153 = vadd.f32 %v5984, %v6152
        %6154 = vmatmul.bf16.gmra.mxu0 %v3625
        %v6155 = vpop.f32.mrf.mxu0
        %v6156 = vadd.f32 %v5987, %v6155
        %v6157 = vpop.f32.mrf.mxu0
        %v6158 = vadd.f32 %v5989, %v6157
        %6159 = vmatmul.bf16.gmra.mxu0 %v3631
        %v6160 = vpop.f32.mrf.mxu0
        %v6161 = vadd.f32 %v5992, %v6160
        %v6162 = vpop.f32.mrf.mxu0
        %v6163 = vadd.f32 %v5994, %v6162
        %6164 = vmatmul.bf16.gmra.mxu0 %v3637
        %v6165 = vpop.f32.mrf.mxu0
        %v6166 = vadd.f32 %v5997, %v6165
        %v6167 = vpop.f32.mrf.mxu0
        %v6168 = vadd.f32 %v5999, %v6167
        %6169 = vmatmul.bf16.gmra.mxu0 %v3643
        %v6170 = vpop.f32.mrf.mxu0
        %v6171 = vadd.f32 %v6002, %v6170
        %v6172 = vpop.f32.mrf.mxu0
        %v6173 = vadd.f32 %v6004, %v6172
        %6174 = vmatmul.bf16.gmra.mxu0 %v3649
        %v6175 = vpop.f32.mrf.mxu0
        %v6176 = vadd.f32 %v6007, %v6175
        %v6177 = vpop.f32.mrf.mxu0
        %v6178 = vadd.f32 %v6009, %v6177
        %6179 = vmatmul.bf16.gmra.mxu0 %v3655
        %v6180 = vpop.f32.mrf.mxu0
        %v6181 = vadd.f32 %v6012, %v6180
        %v6182 = vpop.f32.mrf.mxu0
        %v6183 = vadd.f32 %v6014, %v6182
        %6184 = vmatmul.bf16.gmra.mxu0 %v3661
        %v6185 = vpop.f32.mrf.mxu0
        %v6186 = vadd.f32 %v6017, %v6185
        %v6187 = vpop.f32.mrf.mxu0
        %v6188 = vadd.f32 %v6019, %v6187
        %6189 = vmatmul.bf16.gmra.mxu0 %v3667
        %v6190 = vpop.f32.mrf.mxu0
        %v6191 = vadd.f32 %v6022, %v6190
        %v6192 = vpop.f32.mrf.mxu0
        %v6193 = vadd.f32 %v6024, %v6192
        %6194 = vmatmul.bf16.gmra.mxu0 %v3673
        %v6195 = vpop.f32.mrf.mxu0
        %v6196 = vadd.f32 %v6027, %v6195
        %v6197 = vpop.f32.mrf.mxu0
        %v6198 = vadd.f32 %v6029, %v6197
        %6199 = vmatmul.bf16.gmra.mxu0 %v3679
        %v6200 = vpop.f32.mrf.mxu0
        %v6201 = vadd.f32 %v6032, %v6200
        %v6202 = vpop.f32.mrf.mxu0
        %v6203 = vadd.f32 %v6034, %v6202
        %6204 = vmatmul.bf16.gmra.mxu0 %v3685
        %v6205 = vpop.f32.mrf.mxu0
        %v6206 = vadd.f32 %v6037, %v6205
        %v6207 = vpop.f32.mrf.mxu0
        %v6208 = vadd.f32 %v6039, %v6207
        %6209 = vmatmul.bf16.gmra.mxu0 %v3691
        %v6210 = vpop.f32.mrf.mxu0
        %v6211 = vadd.f32 %v6042, %v6210
        %v6212 = vpop.f32.mrf.mxu0
        %v6213 = vadd.f32 %v6044, %v6212
        %6214 = vmatmul.bf16.gmra.mxu0 %v3697
        %v6215 = vpop.f32.mrf.mxu0
        %v6216 = vadd.f32 %v6047, %v6215
        %v6217 = vpop.f32.mrf.mxu0
        %v6218 = vadd.f32 %v6049, %v6217
        %6219 = vmatmul.bf16.gmra.mxu0 %v3703
        %v6220 = vpop.f32.mrf.mxu0
        %v6221 = vadd.f32 %v6052, %v6220
        %v6222 = vpop.f32.mrf.mxu0
        %v6223 = vadd.f32 %v6054, %v6222
        %6224 = vmatmul.bf16.gmra.mxu0 %v3709
        %v6225 = vpop.f32.mrf.mxu0
        %v6226 = vadd.f32 %v6057, %v6225
        %v6227 = vpop.f32.mrf.mxu0
        %v6228 = vadd.f32 %v6059, %v6227
        %6229 = vmatmul.bf16.gmra.mxu0 %v3715
        %v6230 = vpop.f32.mrf.mxu0
        %v6231 = vadd.f32 %v6062, %v6230
        %v6232 = vpop.f32.mrf.mxu0
        %v6233 = vadd.f32 %v6064, %v6232
        %6234 = vmatmul.bf16.gmra.mxu0 %v3721
        %v6235 = vpop.f32.mrf.mxu0
        %v6236 = vadd.f32 %v6067, %v6235
        %v6237 = vpop.f32.mrf.mxu0
        %v6238 = vadd.f32 %v6069, %v6237
        %6239 = vdwg.mxu0
        %6240 = vmatpush.bf16.msra.mxu0 %v4597
        %6241 = vmatpush.bf16.msra.mxu0 %v4593
        %6242 = vmatpush.bf16.msra.mxu0 %v4589
        %6243 = vmatpush.bf16.msra.mxu0 %v4585
        %6244 = vmatpush.bf16.msra.mxu0 %v4581
        %6245 = vmatpush.bf16.msra.mxu0 %v4577
        %6246 = vmatpush.bf16.msra.mxu0 %v4573
        %6247 = vmatpush.bf16.msra.mxu0 %v4569
        %6248 = vmatmul.bf16.gmra.mxu0 %v3536
        %v6249 = vpop.f32.mrf.mxu0
        %v6250 = vadd.f32 %v6081, %v6249
        %v6251 = vpop.f32.mrf.mxu0
        %v6252 = vadd.f32 %v6083, %v6251
        %6253 = vmatmul.bf16.gmra.mxu0 %v3542
        %v6254 = vpop.f32.mrf.mxu0
        %v6255 = vadd.f32 %v6086, %v6254
        %v6256 = vpop.f32.mrf.mxu0
        %v6257 = vadd.f32 %v6088, %v6256
        %6258 = vmatmul.bf16.gmra.mxu0 %v3548
        %v6259 = vpop.f32.mrf.mxu0
        %v6260 = vadd.f32 %v6091, %v6259
        %v6261 = vpop.f32.mrf.mxu0
        %v6262 = vadd.f32 %v6093, %v6261
        %6263 = vmatmul.bf16.gmra.mxu0 %v3554
        %v6264 = vpop.f32.mrf.mxu0
        %v6265 = vadd.f32 %v6096, %v6264
        %v6266 = vpop.f32.mrf.mxu0
        %v6267 = vadd.f32 %v6098, %v6266
        %6268 = vmatmul.bf16.gmra.mxu0 %v3560
        %v6269 = vpop.f32.mrf.mxu0
        %v6270 = vadd.f32 %v6101, %v6269
        %v6271 = vpop.f32.mrf.mxu0
        %v6272 = vadd.f32 %v6103, %v6271
        %6273 = vmatmul.bf16.gmra.mxu0 %v3566
        %v6274 = vpop.f32.mrf.mxu0
        %v6275 = vadd.f32 %v6106, %v6274
        %v6276 = vpop.f32.mrf.mxu0
        %v6277 = vadd.f32 %v6108, %v6276
        %6278 = vmatmul.bf16.gmra.mxu0 %v3572
        %v6279 = vpop.f32.mrf.mxu0
        %v6280 = vadd.f32 %v6111, %v6279
        %v6281 = vpop.f32.mrf.mxu0
        %v6282 = vadd.f32 %v6113, %v6281
        %6283 = vmatmul.bf16.gmra.mxu0 %v3578
        %v6284 = vpop.f32.mrf.mxu0
        %v6285 = vadd.f32 %v6116, %v6284
        %v6286 = vpop.f32.mrf.mxu0
        %v6287 = vadd.f32 %v6118, %v6286
        %6288 = vmatmul.bf16.gmra.mxu0 %v3584
        %v6289 = vpop.f32.mrf.mxu0
        %v6290 = vadd.f32 %v6121, %v6289
        %v6291 = vpop.f32.mrf.mxu0
        %v6292 = vadd.f32 %v6123, %v6291
        %6293 = vmatmul.bf16.gmra.mxu0 %v3590
        %v6294 = vpop.f32.mrf.mxu0
        %v6295 = vadd.f32 %v6126, %v6294
        %v6296 = vpop.f32.mrf.mxu0
        %v6297 = vadd.f32 %v6128, %v6296
        %6298 = vmatmul.bf16.gmra.mxu0 %v3596
        %v6299 = vpop.f32.mrf.mxu0
        %v6300 = vadd.f32 %v6131, %v6299
        %v6301 = vpop.f32.mrf.mxu0
        %v6302 = vadd.f32 %v6133, %v6301
        %6303 = vmatmul.bf16.gmra.mxu0 %v3602
        %v6304 = vpop.f32.mrf.mxu0
        %v6305 = vadd.f32 %v6136, %v6304
        %v6306 = vpop.f32.mrf.mxu0
        %v6307 = vadd.f32 %v6138, %v6306
        %6308 = vmatmul.bf16.gmra.mxu0 %v3608
        %v6309 = vpop.f32.mrf.mxu0
        %v6310 = vadd.f32 %v6141, %v6309
        %v6311 = vpop.f32.mrf.mxu0
        %v6312 = vadd.f32 %v6143, %v6311
        %6313 = vmatmul.bf16.gmra.mxu0 %v3614
        %v6314 = vpop.f32.mrf.mxu0
        %v6315 = vadd.f32 %v6146, %v6314
        %v6316 = vpop.f32.mrf.mxu0
        %v6317 = vadd.f32 %v6148, %v6316
        %6318 = vmatmul.bf16.gmra.mxu0 %v3620
        %v6319 = vpop.f32.mrf.mxu0
        %v6320 = vadd.f32 %v6151, %v6319
        %v6321 = vpop.f32.mrf.mxu0
        %v6322 = vadd.f32 %v6153, %v6321
        %6323 = vmatmul.bf16.gmra.mxu0 %v3626
        %v6324 = vpop.f32.mrf.mxu0
        %v6325 = vadd.f32 %v6156, %v6324
        %v6326 = vpop.f32.mrf.mxu0
        %v6327 = vadd.f32 %v6158, %v6326
        %6328 = vmatmul.bf16.gmra.mxu0 %v3632
        %v6329 = vpop.f32.mrf.mxu0
        %v6330 = vadd.f32 %v6161, %v6329
        %v6331 = vpop.f32.mrf.mxu0
        %v6332 = vadd.f32 %v6163, %v6331
        %6333 = vmatmul.bf16.gmra.mxu0 %v3638
        %v6334 = vpop.f32.mrf.mxu0
        %v6335 = vadd.f32 %v6166, %v6334
        %v6336 = vpop.f32.mrf.mxu0
        %v6337 = vadd.f32 %v6168, %v6336
        %6338 = vmatmul.bf16.gmra.mxu0 %v3644
        %v6339 = vpop.f32.mrf.mxu0
        %v6340 = vadd.f32 %v6171, %v6339
        %v6341 = vpop.f32.mrf.mxu0
        %v6342 = vadd.f32 %v6173, %v6341
        %6343 = vmatmul.bf16.gmra.mxu0 %v3650
        %v6344 = vpop.f32.mrf.mxu0
        %v6345 = vadd.f32 %v6176, %v6344
        %v6346 = vpop.f32.mrf.mxu0
        %v6347 = vadd.f32 %v6178, %v6346
        %6348 = vmatmul.bf16.gmra.mxu0 %v3656
        %v6349 = vpop.f32.mrf.mxu0
        %v6350 = vadd.f32 %v6181, %v6349
        %v6351 = vpop.f32.mrf.mxu0
        %v6352 = vadd.f32 %v6183, %v6351
        %6353 = vmatmul.bf16.gmra.mxu0 %v3662
        %v6354 = vpop.f32.mrf.mxu0
        %v6355 = vadd.f32 %v6186, %v6354
        %v6356 = vpop.f32.mrf.mxu0
        %v6357 = vadd.f32 %v6188, %v6356
        %6358 = vmatmul.bf16.gmra.mxu0 %v3668
        %v6359 = vpop.f32.mrf.mxu0
        %v6360 = vadd.f32 %v6191, %v6359
        %v6361 = vpop.f32.mrf.mxu0
        %v6362 = vadd.f32 %v6193, %v6361
        %6363 = vmatmul.bf16.gmra.mxu0 %v3674
        %v6364 = vpop.f32.mrf.mxu0
        %v6365 = vadd.f32 %v6196, %v6364
        %v6366 = vpop.f32.mrf.mxu0
        %v6367 = vadd.f32 %v6198, %v6366
        %6368 = vmatmul.bf16.gmra.mxu0 %v3680
        %v6369 = vpop.f32.mrf.mxu0
        %v6370 = vadd.f32 %v6201, %v6369
        %v6371 = vpop.f32.mrf.mxu0
        %v6372 = vadd.f32 %v6203, %v6371
        %6373 = vmatmul.bf16.gmra.mxu0 %v3686
        %v6374 = vpop.f32.mrf.mxu0
        %v6375 = vadd.f32 %v6206, %v6374
        %v6376 = vpop.f32.mrf.mxu0
        %v6377 = vadd.f32 %v6208, %v6376
        %6378 = vmatmul.bf16.gmra.mxu0 %v3692
        %v6379 = vpop.f32.mrf.mxu0
        %v6380 = vadd.f32 %v6211, %v6379
        %v6381 = vpop.f32.mrf.mxu0
        %v6382 = vadd.f32 %v6213, %v6381
        %6383 = vmatmul.bf16.gmra.mxu0 %v3698
        %v6384 = vpop.f32.mrf.mxu0
        %v6385 = vadd.f32 %v6216, %v6384
        %v6386 = vpop.f32.mrf.mxu0
        %v6387 = vadd.f32 %v6218, %v6386
        %6388 = vmatmul.bf16.gmra.mxu0 %v3704
        %v6389 = vpop.f32.mrf.mxu0
        %v6390 = vadd.f32 %v6221, %v6389
        %v6391 = vpop.f32.mrf.mxu0
        %v6392 = vadd.f32 %v6223, %v6391
        %6393 = vmatmul.bf16.gmra.mxu0 %v3710
        %v6394 = vpop.f32.mrf.mxu0
        %v6395 = vadd.f32 %v6226, %v6394
        %v6396 = vpop.f32.mrf.mxu0
        %v6397 = vadd.f32 %v6228, %v6396
        %6398 = vmatmul.bf16.gmra.mxu0 %v3716
        %v6399 = vpop.f32.mrf.mxu0
        %v6400 = vadd.f32 %v6231, %v6399
        %v6401 = vpop.f32.mrf.mxu0
        %v6402 = vadd.f32 %v6233, %v6401
        %6403 = vmatmul.bf16.gmra.mxu0 %v3722
        %v6404 = vpop.f32.mrf.mxu0
        %v6405 = vadd.f32 %v6236, %v6404
        %v6406 = vpop.f32.mrf.mxu0
        %v6407 = vadd.f32 %v6238, %v6406
        %6408 = vdwg.mxu0
        %6409 = vmatpush.bf16.msra.mxu0 %v4629
        %6410 = vmatpush.bf16.msra.mxu0 %v4625
        %6411 = vmatpush.bf16.msra.mxu0 %v4621
        %6412 = vmatpush.bf16.msra.mxu0 %v4617
        %6413 = vmatpush.bf16.msra.mxu0 %v4613
        %6414 = vmatpush.bf16.msra.mxu0 %v4609
        %6415 = vmatpush.bf16.msra.mxu0 %v4605
        %6416 = vmatpush.bf16.msra.mxu0 %v4601
        %6417 = vmatmul.bf16.gmra.mxu0 %v3537
        %v6418 = vpop.f32.mrf.mxu0
        %v6419 = vadd.f32 %v6250, %v6418
        %v6420 = vpop.f32.mrf.mxu0
        %v6421 = vadd.f32 %v6252, %v6420
        %6422 = vmatmul.bf16.gmra.mxu0 %v3543
        %v6423 = vpop.f32.mrf.mxu0
        %v6424 = vadd.f32 %v6255, %v6423
        %v6425 = vpop.f32.mrf.mxu0
        %v6426 = vadd.f32 %v6257, %v6425
        %6427 = vmatmul.bf16.gmra.mxu0 %v3549
        %v6428 = vpop.f32.mrf.mxu0
        %v6429 = vadd.f32 %v6260, %v6428
        %v6430 = vpop.f32.mrf.mxu0
        %v6431 = vadd.f32 %v6262, %v6430
        %6432 = vmatmul.bf16.gmra.mxu0 %v3555
        %v6433 = vpop.f32.mrf.mxu0
        %v6434 = vadd.f32 %v6265, %v6433
        %v6435 = vpop.f32.mrf.mxu0
        %v6436 = vadd.f32 %v6267, %v6435
        %6437 = vmatmul.bf16.gmra.mxu0 %v3561
        %v6438 = vpop.f32.mrf.mxu0
        %v6439 = vadd.f32 %v6270, %v6438
        %v6440 = vpop.f32.mrf.mxu0
        %v6441 = vadd.f32 %v6272, %v6440
        %6442 = vmatmul.bf16.gmra.mxu0 %v3567
        %v6443 = vpop.f32.mrf.mxu0
        %v6444 = vadd.f32 %v6275, %v6443
        %v6445 = vpop.f32.mrf.mxu0
        %v6446 = vadd.f32 %v6277, %v6445
        %6447 = vmatmul.bf16.gmra.mxu0 %v3573
        %v6448 = vpop.f32.mrf.mxu0
        %v6449 = vadd.f32 %v6280, %v6448
        %v6450 = vpop.f32.mrf.mxu0
        %v6451 = vadd.f32 %v6282, %v6450
        %6452 = vmatmul.bf16.gmra.mxu0 %v3579
        %v6453 = vpop.f32.mrf.mxu0
        %v6454 = vadd.f32 %v6285, %v6453
        %v6455 = vpop.f32.mrf.mxu0
        %v6456 = vadd.f32 %v6287, %v6455
        %6457 = vmatmul.bf16.gmra.mxu0 %v3585
        %v6458 = vpop.f32.mrf.mxu0
        %v6459 = vadd.f32 %v6290, %v6458
        %v6460 = vpop.f32.mrf.mxu0
        %v6461 = vadd.f32 %v6292, %v6460
        %6462 = vmatmul.bf16.gmra.mxu0 %v3591
        %v6463 = vpop.f32.mrf.mxu0
        %v6464 = vadd.f32 %v6295, %v6463
        %v6465 = vpop.f32.mrf.mxu0
        %v6466 = vadd.f32 %v6297, %v6465
        %6467 = vmatmul.bf16.gmra.mxu0 %v3597
        %v6468 = vpop.f32.mrf.mxu0
        %v6469 = vadd.f32 %v6300, %v6468
        %v6470 = vpop.f32.mrf.mxu0
        %v6471 = vadd.f32 %v6302, %v6470
        %6472 = vmatmul.bf16.gmra.mxu0 %v3603
        %v6473 = vpop.f32.mrf.mxu0
        %v6474 = vadd.f32 %v6305, %v6473
        %v6475 = vpop.f32.mrf.mxu0
        %v6476 = vadd.f32 %v6307, %v6475
        %6477 = vmatmul.bf16.gmra.mxu0 %v3609
        %v6478 = vpop.f32.mrf.mxu0
        %v6479 = vadd.f32 %v6310, %v6478
        %v6480 = vpop.f32.mrf.mxu0
        %v6481 = vadd.f32 %v6312, %v6480
        %6482 = vmatmul.bf16.gmra.mxu0 %v3615
        %v6483 = vpop.f32.mrf.mxu0
        %v6484 = vadd.f32 %v6315, %v6483
        %v6485 = vpop.f32.mrf.mxu0
        %v6486 = vadd.f32 %v6317, %v6485
        %6487 = vmatmul.bf16.gmra.mxu0 %v3621
        %v6488 = vpop.f32.mrf.mxu0
        %v6489 = vadd.f32 %v6320, %v6488
        %v6490 = vpop.f32.mrf.mxu0
        %v6491 = vadd.f32 %v6322, %v6490
        %6492 = vmatmul.bf16.gmra.mxu0 %v3627
        %v6493 = vpop.f32.mrf.mxu0
        %v6494 = vadd.f32 %v6325, %v6493
        %v6495 = vpop.f32.mrf.mxu0
        %v6496 = vadd.f32 %v6327, %v6495
        %6497 = vmatmul.bf16.gmra.mxu0 %v3633
        %v6498 = vpop.f32.mrf.mxu0
        %v6499 = vadd.f32 %v6330, %v6498
        %v6500 = vpop.f32.mrf.mxu0
        %v6501 = vadd.f32 %v6332, %v6500
        %6502 = vmatmul.bf16.gmra.mxu0 %v3639
        %v6503 = vpop.f32.mrf.mxu0
        %v6504 = vadd.f32 %v6335, %v6503
        %v6505 = vpop.f32.mrf.mxu0
        %v6506 = vadd.f32 %v6337, %v6505
        %6507 = vmatmul.bf16.gmra.mxu0 %v3645
        %v6508 = vpop.f32.mrf.mxu0
        %v6509 = vadd.f32 %v6340, %v6508
        %v6510 = vpop.f32.mrf.mxu0
        %v6511 = vadd.f32 %v6342, %v6510
        %6512 = vmatmul.bf16.gmra.mxu0 %v3651
        %v6513 = vpop.f32.mrf.mxu0
        %v6514 = vadd.f32 %v6345, %v6513
        %v6515 = vpop.f32.mrf.mxu0
        %v6516 = vadd.f32 %v6347, %v6515
        %6517 = vmatmul.bf16.gmra.mxu0 %v3657
        %v6518 = vpop.f32.mrf.mxu0
        %v6519 = vadd.f32 %v6350, %v6518
        %v6520 = vpop.f32.mrf.mxu0
        %v6521 = vadd.f32 %v6352, %v6520
        %6522 = vmatmul.bf16.gmra.mxu0 %v3663
        %v6523 = vpop.f32.mrf.mxu0
        %v6524 = vadd.f32 %v6355, %v6523
        %v6525 = vpop.f32.mrf.mxu0
        %v6526 = vadd.f32 %v6357, %v6525
        %6527 = vmatmul.bf16.gmra.mxu0 %v3669
        %v6528 = vpop.f32.mrf.mxu0
        %v6529 = vadd.f32 %v6360, %v6528
        %v6530 = vpop.f32.mrf.mxu0
        %v6531 = vadd.f32 %v6362, %v6530
        %6532 = vmatmul.bf16.gmra.mxu0 %v3675
        %v6533 = vpop.f32.mrf.mxu0
        %v6534 = vadd.f32 %v6365, %v6533
        %v6535 = vpop.f32.mrf.mxu0
        %v6536 = vadd.f32 %v6367, %v6535
        %6537 = vmatmul.bf16.gmra.mxu0 %v3681
        %v6538 = vpop.f32.mrf.mxu0
        %v6539 = vadd.f32 %v6370, %v6538
        %v6540 = vpop.f32.mrf.mxu0
        %v6541 = vadd.f32 %v6372, %v6540
        %6542 = vmatmul.bf16.gmra.mxu0 %v3687
        %v6543 = vpop.f32.mrf.mxu0
        %v6544 = vadd.f32 %v6375, %v6543
        %v6545 = vpop.f32.mrf.mxu0
        %v6546 = vadd.f32 %v6377, %v6545
        %6547 = vmatmul.bf16.gmra.mxu0 %v3693
        %v6548 = vpop.f32.mrf.mxu0
        %v6549 = vadd.f32 %v6380, %v6548
        %v6550 = vpop.f32.mrf.mxu0
        %v6551 = vadd.f32 %v6382, %v6550
        %6552 = vmatmul.bf16.gmra.mxu0 %v3699
        %v6553 = vpop.f32.mrf.mxu0
        %v6554 = vadd.f32 %v6385, %v6553
        %v6555 = vpop.f32.mrf.mxu0
        %v6556 = vadd.f32 %v6387, %v6555
        %6557 = vmatmul.bf16.gmra.mxu0 %v3705
        %v6558 = vpop.f32.mrf.mxu0
        %v6559 = vadd.f32 %v6390, %v6558
        %v6560 = vpop.f32.mrf.mxu0
        %v6561 = vadd.f32 %v6392, %v6560
        %6562 = vmatmul.bf16.gmra.mxu0 %v3711
        %v6563 = vpop.f32.mrf.mxu0
        %v6564 = vadd.f32 %v6395, %v6563
        %v6565 = vpop.f32.mrf.mxu0
        %v6566 = vadd.f32 %v6397, %v6565
        %6567 = vmatmul.bf16.gmra.mxu0 %v3717
        %v6568 = vpop.f32.mrf.mxu0
        %v6569 = vadd.f32 %v6400, %v6568
        %v6570 = vpop.f32.mrf.mxu0
        %v6571 = vadd.f32 %v6402, %v6570
        %6572 = vmatmul.bf16.gmra.mxu0 %v3723
        %v6573 = vpop.f32.mrf.mxu0
        %v6574 = vadd.f32 %v6405, %v6573
        %v6575 = vpop.f32.mrf.mxu0
        %v6576 = vadd.f32 %v6407, %v6575
        %6577 = vdwg.mxu0
        %6578 = vmatpush.bf16.msra.mxu0 %v4661
        %6579 = vmatpush.bf16.msra.mxu0 %v4657
        %6580 = vmatpush.bf16.msra.mxu0 %v4653
        %6581 = vmatpush.bf16.msra.mxu0 %v4649
        %6582 = vmatpush.bf16.msra.mxu0 %v4645
        %6583 = vmatpush.bf16.msra.mxu0 %v4641
        %6584 = vmatpush.bf16.msra.mxu0 %v4637
        %6585 = vmatpush.bf16.msra.mxu0 %v4633
        %6586 = vmatmul.bf16.gmra.mxu0 %v3538
        %v6587 = vpop.f32.mrf.mxu0
        %v6588 = vadd.f32 %v6419, %v6587
        %v6589 = vpop.f32.mrf.mxu0
        %v6590 = vadd.f32 %v6421, %v6589
        %6591 = vmatmul.bf16.gmra.mxu0 %v3544
        %v6592 = vpop.f32.mrf.mxu0
        %v6593 = vadd.f32 %v6424, %v6592
        %v6594 = vpop.f32.mrf.mxu0
        %v6595 = vadd.f32 %v6426, %v6594
        %6596 = vmatmul.bf16.gmra.mxu0 %v3550
        %v6597 = vpop.f32.mrf.mxu0
        %v6598 = vadd.f32 %v6429, %v6597
        %v6599 = vpop.f32.mrf.mxu0
        %v6600 = vadd.f32 %v6431, %v6599
        %6601 = vmatmul.bf16.gmra.mxu0 %v3556
        %v6602 = vpop.f32.mrf.mxu0
        %v6603 = vadd.f32 %v6434, %v6602
        %v6604 = vpop.f32.mrf.mxu0
        %v6605 = vadd.f32 %v6436, %v6604
        %6606 = vmatmul.bf16.gmra.mxu0 %v3562
        %v6607 = vpop.f32.mrf.mxu0
        %v6608 = vadd.f32 %v6439, %v6607
        %v6609 = vpop.f32.mrf.mxu0
        %v6610 = vadd.f32 %v6441, %v6609
        %6611 = vmatmul.bf16.gmra.mxu0 %v3568
        %v6612 = vpop.f32.mrf.mxu0
        %v6613 = vadd.f32 %v6444, %v6612
        %v6614 = vpop.f32.mrf.mxu0
        %v6615 = vadd.f32 %v6446, %v6614
        %6616 = vmatmul.bf16.gmra.mxu0 %v3574
        %v6617 = vpop.f32.mrf.mxu0
        %v6618 = vadd.f32 %v6449, %v6617
        %v6619 = vpop.f32.mrf.mxu0
        %v6620 = vadd.f32 %v6451, %v6619
        %6621 = vmatmul.bf16.gmra.mxu0 %v3580
        %v6622 = vpop.f32.mrf.mxu0
        %v6623 = vadd.f32 %v6454, %v6622
        %v6624 = vpop.f32.mrf.mxu0
        %v6625 = vadd.f32 %v6456, %v6624
        %6626 = vmatmul.bf16.gmra.mxu0 %v3586
        %v6627 = vpop.f32.mrf.mxu0
        %v6628 = vadd.f32 %v6459, %v6627
        %v6629 = vpop.f32.mrf.mxu0
        %v6630 = vadd.f32 %v6461, %v6629
        %6631 = vmatmul.bf16.gmra.mxu0 %v3592
        %v6632 = vpop.f32.mrf.mxu0
        %v6633 = vadd.f32 %v6464, %v6632
        %v6634 = vpop.f32.mrf.mxu0
        %v6635 = vadd.f32 %v6466, %v6634
        %6636 = vmatmul.bf16.gmra.mxu0 %v3598
        %v6637 = vpop.f32.mrf.mxu0
        %v6638 = vadd.f32 %v6469, %v6637
        %v6639 = vpop.f32.mrf.mxu0
        %v6640 = vadd.f32 %v6471, %v6639
        %6641 = vmatmul.bf16.gmra.mxu0 %v3604
        %v6642 = vpop.f32.mrf.mxu0
        %v6643 = vadd.f32 %v6474, %v6642
        %v6644 = vpop.f32.mrf.mxu0
        %v6645 = vadd.f32 %v6476, %v6644
        %6646 = vmatmul.bf16.gmra.mxu0 %v3610
        %v6647 = vpop.f32.mrf.mxu0
        %v6648 = vadd.f32 %v6479, %v6647
        %v6649 = vpop.f32.mrf.mxu0
        %v6650 = vadd.f32 %v6481, %v6649
        %6651 = vmatmul.bf16.gmra.mxu0 %v3616
        %v6652 = vpop.f32.mrf.mxu0
        %v6653 = vadd.f32 %v6484, %v6652
        %v6654 = vpop.f32.mrf.mxu0
        %v6655 = vadd.f32 %v6486, %v6654
        %6656 = vmatmul.bf16.gmra.mxu0 %v3622
        %v6657 = vpop.f32.mrf.mxu0
        %v6658 = vadd.f32 %v6489, %v6657
        %v6659 = vpop.f32.mrf.mxu0
        %v6660 = vadd.f32 %v6491, %v6659
        %6661 = vmatmul.bf16.gmra.mxu0 %v3628
        %v6662 = vpop.f32.mrf.mxu0
        %v6663 = vadd.f32 %v6494, %v6662
        %v6664 = vpop.f32.mrf.mxu0
        %v6665 = vadd.f32 %v6496, %v6664
        %6666 = vmatmul.bf16.gmra.mxu0 %v3634
        %v6667 = vpop.f32.mrf.mxu0
        %v6668 = vadd.f32 %v6499, %v6667
        %v6669 = vpop.f32.mrf.mxu0
        %v6670 = vadd.f32 %v6501, %v6669
        %6671 = vmatmul.bf16.gmra.mxu0 %v3640
        %v6672 = vpop.f32.mrf.mxu0
        %v6673 = vadd.f32 %v6504, %v6672
        %v6674 = vpop.f32.mrf.mxu0
        %v6675 = vadd.f32 %v6506, %v6674
        %6676 = vmatmul.bf16.gmra.mxu0 %v3646
        %v6677 = vpop.f32.mrf.mxu0
        %v6678 = vadd.f32 %v6509, %v6677
        %v6679 = vpop.f32.mrf.mxu0
        %v6680 = vadd.f32 %v6511, %v6679
        %6681 = vmatmul.bf16.gmra.mxu0 %v3652
        %v6682 = vpop.f32.mrf.mxu0
        %v6683 = vadd.f32 %v6514, %v6682
        %v6684 = vpop.f32.mrf.mxu0
        %v6685 = vadd.f32 %v6516, %v6684
        %6686 = vmatmul.bf16.gmra.mxu0 %v3658
        %v6687 = vpop.f32.mrf.mxu0
        %v6688 = vadd.f32 %v6519, %v6687
        %v6689 = vpop.f32.mrf.mxu0
        %v6690 = vadd.f32 %v6521, %v6689
        %6691 = vmatmul.bf16.gmra.mxu0 %v3664
        %v6692 = vpop.f32.mrf.mxu0
        %v6693 = vadd.f32 %v6524, %v6692
        %v6694 = vpop.f32.mrf.mxu0
        %v6695 = vadd.f32 %v6526, %v6694
        %6696 = vmatmul.bf16.gmra.mxu0 %v3670
        %v6697 = vpop.f32.mrf.mxu0
        %v6698 = vadd.f32 %v6529, %v6697
        %v6699 = vpop.f32.mrf.mxu0
        %v6700 = vadd.f32 %v6531, %v6699
        %6701 = vmatmul.bf16.gmra.mxu0 %v3676
        %v6702 = vpop.f32.mrf.mxu0
        %v6703 = vadd.f32 %v6534, %v6702
        %v6704 = vpop.f32.mrf.mxu0
        %v6705 = vadd.f32 %v6536, %v6704
        %6706 = vmatmul.bf16.gmra.mxu0 %v3682
        %v6707 = vpop.f32.mrf.mxu0
        %v6708 = vadd.f32 %v6539, %v6707
        %v6709 = vpop.f32.mrf.mxu0
        %v6710 = vadd.f32 %v6541, %v6709
        %6711 = vmatmul.bf16.gmra.mxu0 %v3688
        %v6712 = vpop.f32.mrf.mxu0
        %v6713 = vadd.f32 %v6544, %v6712
        %v6714 = vpop.f32.mrf.mxu0
        %v6715 = vadd.f32 %v6546, %v6714
        %6716 = vmatmul.bf16.gmra.mxu0 %v3694
        %v6717 = vpop.f32.mrf.mxu0
        %v6718 = vadd.f32 %v6549, %v6717
        %v6719 = vpop.f32.mrf.mxu0
        %v6720 = vadd.f32 %v6551, %v6719
        %6721 = vmatmul.bf16.gmra.mxu0 %v3700
        %v6722 = vpop.f32.mrf.mxu0
        %v6723 = vadd.f32 %v6554, %v6722
        %v6724 = vpop.f32.mrf.mxu0
        %v6725 = vadd.f32 %v6556, %v6724
        %6726 = vmatmul.bf16.gmra.mxu0 %v3706
        %v6727 = vpop.f32.mrf.mxu0
        %v6728 = vadd.f32 %v6559, %v6727
        %v6729 = vpop.f32.mrf.mxu0
        %v6730 = vadd.f32 %v6561, %v6729
        %6731 = vmatmul.bf16.gmra.mxu0 %v3712
        %v6732 = vpop.f32.mrf.mxu0
        %v6733 = vadd.f32 %v6564, %v6732
        %v6734 = vpop.f32.mrf.mxu0
        %v6735 = vadd.f32 %v6566, %v6734
        %6736 = vmatmul.bf16.gmra.mxu0 %v3718
        %v6737 = vpop.f32.mrf.mxu0
        %v6738 = vadd.f32 %v6569, %v6737
        %v6739 = vpop.f32.mrf.mxu0
        %v6740 = vadd.f32 %v6571, %v6739
        %6741 = vmatmul.bf16.gmra.mxu0 %v3724
        %v6742 = vpop.f32.mrf.mxu0
        %v6743 = vadd.f32 %v6574, %v6742
        %v6744 = vpop.f32.mrf.mxu0
        %v6745 = vadd.f32 %v6576, %v6744
        %6746 = vdwg.mxu0
        %6747 = vmatpush.bf16.msra.mxu0 %v4693
        %6748 = vmatpush.bf16.msra.mxu0 %v4689
        %6749 = vmatpush.bf16.msra.mxu0 %v4685
        %6750 = vmatpush.bf16.msra.mxu0 %v4681
        %6751 = vmatpush.bf16.msra.mxu0 %v4677
        %6752 = vmatpush.bf16.msra.mxu0 %v4673
        %6753 = vmatpush.bf16.msra.mxu0 %v4669
        %6754 = vmatpush.bf16.msra.mxu0 %v4665
        %6755 = vmatmul.bf16.gmra.mxu0 %v3539
        %v6756 = vpop.f32.mrf.mxu0
        %v6757 = vadd.f32 %v6588, %v6756
        %v6758 = vpop.f32.mrf.mxu0
        %v6759 = vadd.f32 %v6590, %v6758
        %6760 = vmatmul.bf16.gmra.mxu0 %v3545
        %v6761 = vpop.f32.mrf.mxu0
        %v6762 = vadd.f32 %v6593, %v6761
        %v6763 = vpop.f32.mrf.mxu0
        %v6764 = vadd.f32 %v6595, %v6763
        %6765 = vmatmul.bf16.gmra.mxu0 %v3551
        %v6766 = vpop.f32.mrf.mxu0
        %v6767 = vadd.f32 %v6598, %v6766
        %v6768 = vpop.f32.mrf.mxu0
        %v6769 = vadd.f32 %v6600, %v6768
        %6770 = vmatmul.bf16.gmra.mxu0 %v3557
        %v6771 = vpop.f32.mrf.mxu0
        %v6772 = vadd.f32 %v6603, %v6771
        %v6773 = vpop.f32.mrf.mxu0
        %v6774 = vadd.f32 %v6605, %v6773
        %6775 = vmatmul.bf16.gmra.mxu0 %v3563
        %v6776 = vpop.f32.mrf.mxu0
        %v6777 = vadd.f32 %v6608, %v6776
        %v6778 = vpop.f32.mrf.mxu0
        %v6779 = vadd.f32 %v6610, %v6778
        %6780 = vmatmul.bf16.gmra.mxu0 %v3569
        %v6781 = vpop.f32.mrf.mxu0
        %v6782 = vadd.f32 %v6613, %v6781
        %v6783 = vpop.f32.mrf.mxu0
        %v6784 = vadd.f32 %v6615, %v6783
        %6785 = vmatmul.bf16.gmra.mxu0 %v3575
        %v6786 = vpop.f32.mrf.mxu0
        %v6787 = vadd.f32 %v6618, %v6786
        %v6788 = vpop.f32.mrf.mxu0
        %v6789 = vadd.f32 %v6620, %v6788
        %6790 = vmatmul.bf16.gmra.mxu0 %v3581
        %v6791 = vpop.f32.mrf.mxu0
        %v6792 = vadd.f32 %v6623, %v6791
        %v6793 = vpop.f32.mrf.mxu0
        %v6794 = vadd.f32 %v6625, %v6793
        %6795 = vmatmul.bf16.gmra.mxu0 %v3587
        %v6796 = vpop.f32.mrf.mxu0
        %v6797 = vadd.f32 %v6628, %v6796
        %v6798 = vpop.f32.mrf.mxu0
        %v6799 = vadd.f32 %v6630, %v6798
        %6800 = vmatmul.bf16.gmra.mxu0 %v3593
        %v6801 = vpop.f32.mrf.mxu0
        %v6802 = vadd.f32 %v6633, %v6801
        %v6803 = vpop.f32.mrf.mxu0
        %v6804 = vadd.f32 %v6635, %v6803
        %6805 = vmatmul.bf16.gmra.mxu0 %v3599
        %v6806 = vpop.f32.mrf.mxu0
        %v6807 = vadd.f32 %v6638, %v6806
        %v6808 = vpop.f32.mrf.mxu0
        %v6809 = vadd.f32 %v6640, %v6808
        %6810 = vmatmul.bf16.gmra.mxu0 %v3605
        %v6811 = vpop.f32.mrf.mxu0
        %v6812 = vadd.f32 %v6643, %v6811
        %v6813 = vpop.f32.mrf.mxu0
        %v6814 = vadd.f32 %v6645, %v6813
        %6815 = vmatmul.bf16.gmra.mxu0 %v3611
        %v6816 = vpop.f32.mrf.mxu0
        %v6817 = vadd.f32 %v6648, %v6816
        %v6818 = vpop.f32.mrf.mxu0
        %v6819 = vadd.f32 %v6650, %v6818
        %6820 = vmatmul.bf16.gmra.mxu0 %v3617
        %v6821 = vpop.f32.mrf.mxu0
        %v6822 = vadd.f32 %v6653, %v6821
        %v6823 = vpop.f32.mrf.mxu0
        %v6824 = vadd.f32 %v6655, %v6823
        %6825 = vmatmul.bf16.gmra.mxu0 %v3623
        %v6826 = vpop.f32.mrf.mxu0
        %v6827 = vadd.f32 %v6658, %v6826
        %v6828 = vpop.f32.mrf.mxu0
        %v6829 = vadd.f32 %v6660, %v6828
        %6830 = vmatmul.bf16.gmra.mxu0 %v3629
        %v6831 = vpop.f32.mrf.mxu0
        %v6832 = vadd.f32 %v6663, %v6831
        %v6833 = vpop.f32.mrf.mxu0
        %v6834 = vadd.f32 %v6665, %v6833
        %6835 = vmatmul.bf16.gmra.mxu0 %v3635
        %v6836 = vpop.f32.mrf.mxu0
        %v6837 = vadd.f32 %v6668, %v6836
        %v6838 = vpop.f32.mrf.mxu0
        %v6839 = vadd.f32 %v6670, %v6838
        %6840 = vmatmul.bf16.gmra.mxu0 %v3641
        %v6841 = vpop.f32.mrf.mxu0
        %v6842 = vadd.f32 %v6673, %v6841
        %v6843 = vpop.f32.mrf.mxu0
        %v6844 = vadd.f32 %v6675, %v6843
        %6845 = vmatmul.bf16.gmra.mxu0 %v3647
        %v6846 = vpop.f32.mrf.mxu0
        %v6847 = vadd.f32 %v6678, %v6846
        %v6848 = vpop.f32.mrf.mxu0
        %v6849 = vadd.f32 %v6680, %v6848
        %6850 = vmatmul.bf16.gmra.mxu0 %v3653
        %v6851 = vpop.f32.mrf.mxu0
        %v6852 = vadd.f32 %v6683, %v6851
        %v6853 = vpop.f32.mrf.mxu0
        %v6854 = vadd.f32 %v6685, %v6853
        %6855 = vmatmul.bf16.gmra.mxu0 %v3659
        %v6856 = vpop.f32.mrf.mxu0
        %v6857 = vadd.f32 %v6688, %v6856
        %v6858 = vpop.f32.mrf.mxu0
        %v6859 = vadd.f32 %v6690, %v6858
        %6860 = vmatmul.bf16.gmra.mxu0 %v3665
        %v6861 = vpop.f32.mrf.mxu0
        %v6862 = vadd.f32 %v6693, %v6861
        %v6863 = vpop.f32.mrf.mxu0
        %v6864 = vadd.f32 %v6695, %v6863
        %6865 = vmatmul.bf16.gmra.mxu0 %v3671
        %v6866 = vpop.f32.mrf.mxu0
        %v6867 = vadd.f32 %v6698, %v6866
        %v6868 = vpop.f32.mrf.mxu0
        %v6869 = vadd.f32 %v6700, %v6868
        %6870 = vmatmul.bf16.gmra.mxu0 %v3677
        %v6871 = vpop.f32.mrf.mxu0
        %v6872 = vadd.f32 %v6703, %v6871
        %v6873 = vpop.f32.mrf.mxu0
        %v6874 = vadd.f32 %v6705, %v6873
        %6875 = vmatmul.bf16.gmra.mxu0 %v3683
        %v6876 = vpop.f32.mrf.mxu0
        %v6877 = vadd.f32 %v6708, %v6876
        %v6878 = vpop.f32.mrf.mxu0
        %v6879 = vadd.f32 %v6710, %v6878
        %6880 = vmatmul.bf16.gmra.mxu0 %v3689
        %v6881 = vpop.f32.mrf.mxu0
        %v6882 = vadd.f32 %v6713, %v6881
        %v6883 = vpop.f32.mrf.mxu0
        %v6884 = vadd.f32 %v6715, %v6883
        %6885 = vmatmul.bf16.gmra.mxu0 %v3695
        %v6886 = vpop.f32.mrf.mxu0
        %v6887 = vadd.f32 %v6718, %v6886
        %v6888 = vpop.f32.mrf.mxu0
        %v6889 = vadd.f32 %v6720, %v6888
        %6890 = vmatmul.bf16.gmra.mxu0 %v3701
        %v6891 = vpop.f32.mrf.mxu0
        %v6892 = vadd.f32 %v6723, %v6891
        %v6893 = vpop.f32.mrf.mxu0
        %v6894 = vadd.f32 %v6725, %v6893
        %6895 = vmatmul.bf16.gmra.mxu0 %v3707
        %v6896 = vpop.f32.mrf.mxu0
        %v6897 = vadd.f32 %v6728, %v6896
        %v6898 = vpop.f32.mrf.mxu0
        %v6899 = vadd.f32 %v6730, %v6898
        %6900 = vmatmul.bf16.gmra.mxu0 %v3713
        %v6901 = vpop.f32.mrf.mxu0
        %v6902 = vadd.f32 %v6733, %v6901
        %v6903 = vpop.f32.mrf.mxu0
        %v6904 = vadd.f32 %v6735, %v6903
        %6905 = vmatmul.bf16.gmra.mxu0 %v3719
        %v6906 = vpop.f32.mrf.mxu0
        %v6907 = vadd.f32 %v6738, %v6906
        %v6908 = vpop.f32.mrf.mxu0
        %v6909 = vadd.f32 %v6740, %v6908
        %6910 = vmatmul.bf16.gmra.mxu0 %v3725
        %v6911 = vpop.f32.mrf.mxu0
        %v6912 = vadd.f32 %v6743, %v6911
        %v6913 = vpop.f32.mrf.mxu0
        %v6914 = vadd.f32 %v6745, %v6913
        %6915 = vdwg.mxu0
        %6916 = vmatpush.bf16.msra.mxu0 %v4534
        %6917 = vmatpush.bf16.msra.mxu0 %v4530
        %6918 = vmatpush.bf16.msra.mxu0 %v4526
        %6919 = vmatpush.bf16.msra.mxu0 %v4522
        %6920 = vmatpush.bf16.msra.mxu0 %v4518
        %6921 = vmatpush.bf16.msra.mxu0 %v4514
        %6922 = vmatpush.bf16.msra.mxu0 %v4510
        %6923 = vmatpush.bf16.msra.mxu0 %v4506
        %6924 = vmatmul.bf16.gmra.mxu0 %v3534
        %v6925 = vpop.f32.mrf.mxu0
        %v6926 = vadd.f32 %v3922, %v6925
        %v6927 = vpop.f32.mrf.mxu0
        %v6928 = vadd.f32 %v3922, %v6927
        %6929 = vmatmul.bf16.gmra.mxu0 %v3540
        %v6930 = vpop.f32.mrf.mxu0
        %v6931 = vadd.f32 %v3922, %v6930
        %v6932 = vpop.f32.mrf.mxu0
        %v6933 = vadd.f32 %v3922, %v6932
        %6934 = vmatmul.bf16.gmra.mxu0 %v3546
        %v6935 = vpop.f32.mrf.mxu0
        %v6936 = vadd.f32 %v3922, %v6935
        %v6937 = vpop.f32.mrf.mxu0
        %v6938 = vadd.f32 %v3922, %v6937
        %6939 = vmatmul.bf16.gmra.mxu0 %v3552
        %v6940 = vpop.f32.mrf.mxu0
        %v6941 = vadd.f32 %v3922, %v6940
        %v6942 = vpop.f32.mrf.mxu0
        %v6943 = vadd.f32 %v3922, %v6942
        %6944 = vmatmul.bf16.gmra.mxu0 %v3558
        %v6945 = vpop.f32.mrf.mxu0
        %v6946 = vadd.f32 %v3922, %v6945
        %v6947 = vpop.f32.mrf.mxu0
        %v6948 = vadd.f32 %v3922, %v6947
        %6949 = vmatmul.bf16.gmra.mxu0 %v3564
        %v6950 = vpop.f32.mrf.mxu0
        %v6951 = vadd.f32 %v3922, %v6950
        %v6952 = vpop.f32.mrf.mxu0
        %v6953 = vadd.f32 %v3922, %v6952
        %6954 = vmatmul.bf16.gmra.mxu0 %v3570
        %v6955 = vpop.f32.mrf.mxu0
        %v6956 = vadd.f32 %v3922, %v6955
        %v6957 = vpop.f32.mrf.mxu0
        %v6958 = vadd.f32 %v3922, %v6957
        %6959 = vmatmul.bf16.gmra.mxu0 %v3576
        %v6960 = vpop.f32.mrf.mxu0
        %v6961 = vadd.f32 %v3922, %v6960
        %v6962 = vpop.f32.mrf.mxu0
        %v6963 = vadd.f32 %v3922, %v6962
        %6964 = vmatmul.bf16.gmra.mxu0 %v3582
        %v6965 = vpop.f32.mrf.mxu0
        %v6966 = vadd.f32 %v3922, %v6965
        %v6967 = vpop.f32.mrf.mxu0
        %v6968 = vadd.f32 %v3922, %v6967
        %6969 = vmatmul.bf16.gmra.mxu0 %v3588
        %v6970 = vpop.f32.mrf.mxu0
        %v6971 = vadd.f32 %v3922, %v6970
        %v6972 = vpop.f32.mrf.mxu0
        %v6973 = vadd.f32 %v3922, %v6972
        %6974 = vmatmul.bf16.gmra.mxu0 %v3594
        %v6975 = vpop.f32.mrf.mxu0
        %v6976 = vadd.f32 %v3922, %v6975
        %v6977 = vpop.f32.mrf.mxu0
        %v6978 = vadd.f32 %v3922, %v6977
        %6979 = vmatmul.bf16.gmra.mxu0 %v3600
        %v6980 = vpop.f32.mrf.mxu0
        %v6981 = vadd.f32 %v3922, %v6980
        %v6982 = vpop.f32.mrf.mxu0
        %v6983 = vadd.f32 %v3922, %v6982
        %6984 = vmatmul.bf16.gmra.mxu0 %v3606
        %v6985 = vpop.f32.mrf.mxu0
        %v6986 = vadd.f32 %v3922, %v6985
        %v6987 = vpop.f32.mrf.mxu0
        %v6988 = vadd.f32 %v3922, %v6987
        %6989 = vmatmul.bf16.gmra.mxu0 %v3612
        %v6990 = vpop.f32.mrf.mxu0
        %v6991 = vadd.f32 %v3922, %v6990
        %v6992 = vpop.f32.mrf.mxu0
        %v6993 = vadd.f32 %v3922, %v6992
        %6994 = vmatmul.bf16.gmra.mxu0 %v3618
        %v6995 = vpop.f32.mrf.mxu0
        %v6996 = vadd.f32 %v3922, %v6995
        %v6997 = vpop.f32.mrf.mxu0
        %v6998 = vadd.f32 %v3922, %v6997
        %6999 = vmatmul.bf16.gmra.mxu0 %v3624
        %v7000 = vpop.f32.mrf.mxu0
        %v7001 = vadd.f32 %v3922, %v7000
        %v7002 = vpop.f32.mrf.mxu0
        %v7003 = vadd.f32 %v3922, %v7002
        %7004 = vmatmul.bf16.gmra.mxu0 %v3630
        %v7005 = vpop.f32.mrf.mxu0
        %v7006 = vadd.f32 %v3922, %v7005
        %v7007 = vpop.f32.mrf.mxu0
        %v7008 = vadd.f32 %v3922, %v7007
        %7009 = vmatmul.bf16.gmra.mxu0 %v3636
        %v7010 = vpop.f32.mrf.mxu0
        %v7011 = vadd.f32 %v3922, %v7010
        %v7012 = vpop.f32.mrf.mxu0
        %v7013 = vadd.f32 %v3922, %v7012
        %7014 = vmatmul.bf16.gmra.mxu0 %v3642
        %v7015 = vpop.f32.mrf.mxu0
        %v7016 = vadd.f32 %v3922, %v7015
        %v7017 = vpop.f32.mrf.mxu0
        %v7018 = vadd.f32 %v3922, %v7017
        %7019 = vmatmul.bf16.gmra.mxu0 %v3648
        %v7020 = vpop.f32.mrf.mxu0
        %v7021 = vadd.f32 %v3922, %v7020
        %v7022 = vpop.f32.mrf.mxu0
        %v7023 = vadd.f32 %v3922, %v7022
        %7024 = vmatmul.bf16.gmra.mxu0 %v3654
        %v7025 = vpop.f32.mrf.mxu0
        %v7026 = vadd.f32 %v3922, %v7025
        %v7027 = vpop.f32.mrf.mxu0
        %v7028 = vadd.f32 %v3922, %v7027
        %7029 = vmatmul.bf16.gmra.mxu0 %v3660
        %v7030 = vpop.f32.mrf.mxu0
        %v7031 = vadd.f32 %v3922, %v7030
        %v7032 = vpop.f32.mrf.mxu0
        %v7033 = vadd.f32 %v3922, %v7032
        %7034 = vmatmul.bf16.gmra.mxu0 %v3666
        %v7035 = vpop.f32.mrf.mxu0
        %v7036 = vadd.f32 %v3922, %v7035
        %v7037 = vpop.f32.mrf.mxu0
        %v7038 = vadd.f32 %v3922, %v7037
        %7039 = vmatmul.bf16.gmra.mxu0 %v3672
        %v7040 = vpop.f32.mrf.mxu0
        %v7041 = vadd.f32 %v3922, %v7040
        %v7042 = vpop.f32.mrf.mxu0
        %v7043 = vadd.f32 %v3922, %v7042
        %7044 = vmatmul.bf16.gmra.mxu0 %v3678
        %v7045 = vpop.f32.mrf.mxu0
        %v7046 = vadd.f32 %v3922, %v7045
        %v7047 = vpop.f32.mrf.mxu0
        %v7048 = vadd.f32 %v3922, %v7047
        %7049 = vmatmul.bf16.gmra.mxu0 %v3684
        %v7050 = vpop.f32.mrf.mxu0
        %v7051 = vadd.f32 %v3922, %v7050
        %v7052 = vpop.f32.mrf.mxu0
        %v7053 = vadd.f32 %v3922, %v7052
        %7054 = vmatmul.bf16.gmra.mxu0 %v3690
        %v7055 = vpop.f32.mrf.mxu0
        %v7056 = vadd.f32 %v3922, %v7055
        %v7057 = vpop.f32.mrf.mxu0
        %v7058 = vadd.f32 %v3922, %v7057
        %7059 = vmatmul.bf16.gmra.mxu0 %v3696
        %v7060 = vpop.f32.mrf.mxu0
        %v7061 = vadd.f32 %v3922, %v7060
        %v7062 = vpop.f32.mrf.mxu0
        %v7063 = vadd.f32 %v3922, %v7062
        %7064 = vmatmul.bf16.gmra.mxu0 %v3702
        %v7065 = vpop.f32.mrf.mxu0
        %v7066 = vadd.f32 %v3922, %v7065
        %v7067 = vpop.f32.mrf.mxu0
        %v7068 = vadd.f32 %v3922, %v7067
        %7069 = vmatmul.bf16.gmra.mxu0 %v3708
        %v7070 = vpop.f32.mrf.mxu0
        %v7071 = vadd.f32 %v3922, %v7070
        %v7072 = vpop.f32.mrf.mxu0
        %v7073 = vadd.f32 %v3922, %v7072
        %7074 = vmatmul.bf16.gmra.mxu0 %v3714
        %v7075 = vpop.f32.mrf.mxu0
        %v7076 = vadd.f32 %v3922, %v7075
        %v7077 = vpop.f32.mrf.mxu0
        %v7078 = vadd.f32 %v3922, %v7077
        %7079 = vmatmul.bf16.gmra.mxu0 %v3720
        %v7080 = vpop.f32.mrf.mxu0
        %v7081 = vadd.f32 %v3922, %v7080
        %v7082 = vpop.f32.mrf.mxu0
        %v7083 = vadd.f32 %v3922, %v7082
        %7084 = vdwg.mxu0
        %7085 = vmatpush.bf16.msra.mxu0 %v4566
        %7086 = vmatpush.bf16.msra.mxu0 %v4562
        %7087 = vmatpush.bf16.msra.mxu0 %v4558
        %7088 = vmatpush.bf16.msra.mxu0 %v4554
        %7089 = vmatpush.bf16.msra.mxu0 %v4550
        %7090 = vmatpush.bf16.msra.mxu0 %v4546
        %7091 = vmatpush.bf16.msra.mxu0 %v4542
        %7092 = vmatpush.bf16.msra.mxu0 %v4538
        %7093 = vmatmul.bf16.gmra.mxu0 %v3535
        %v7094 = vpop.f32.mrf.mxu0
        %v7095 = vadd.f32 %v6926, %v7094
        %v7096 = vpop.f32.mrf.mxu0
        %v7097 = vadd.f32 %v6928, %v7096
        %7098 = vmatmul.bf16.gmra.mxu0 %v3541
        %v7099 = vpop.f32.mrf.mxu0
        %v7100 = vadd.f32 %v6931, %v7099
        %v7101 = vpop.f32.mrf.mxu0
        %v7102 = vadd.f32 %v6933, %v7101
        %7103 = vmatmul.bf16.gmra.mxu0 %v3547
        %v7104 = vpop.f32.mrf.mxu0
        %v7105 = vadd.f32 %v6936, %v7104
        %v7106 = vpop.f32.mrf.mxu0
        %v7107 = vadd.f32 %v6938, %v7106
        %7108 = vmatmul.bf16.gmra.mxu0 %v3553
        %v7109 = vpop.f32.mrf.mxu0
        %v7110 = vadd.f32 %v6941, %v7109
        %v7111 = vpop.f32.mrf.mxu0
        %v7112 = vadd.f32 %v6943, %v7111
        %7113 = vmatmul.bf16.gmra.mxu0 %v3559
        %v7114 = vpop.f32.mrf.mxu0
        %v7115 = vadd.f32 %v6946, %v7114
        %v7116 = vpop.f32.mrf.mxu0
        %v7117 = vadd.f32 %v6948, %v7116
        %7118 = vmatmul.bf16.gmra.mxu0 %v3565
        %v7119 = vpop.f32.mrf.mxu0
        %v7120 = vadd.f32 %v6951, %v7119
        %v7121 = vpop.f32.mrf.mxu0
        %v7122 = vadd.f32 %v6953, %v7121
        %7123 = vmatmul.bf16.gmra.mxu0 %v3571
        %v7124 = vpop.f32.mrf.mxu0
        %v7125 = vadd.f32 %v6956, %v7124
        %v7126 = vpop.f32.mrf.mxu0
        %v7127 = vadd.f32 %v6958, %v7126
        %7128 = vmatmul.bf16.gmra.mxu0 %v3577
        %v7129 = vpop.f32.mrf.mxu0
        %v7130 = vadd.f32 %v6961, %v7129
        %v7131 = vpop.f32.mrf.mxu0
        %v7132 = vadd.f32 %v6963, %v7131
        %7133 = vmatmul.bf16.gmra.mxu0 %v3583
        %v7134 = vpop.f32.mrf.mxu0
        %v7135 = vadd.f32 %v6966, %v7134
        %v7136 = vpop.f32.mrf.mxu0
        %v7137 = vadd.f32 %v6968, %v7136
        %7138 = vmatmul.bf16.gmra.mxu0 %v3589
        %v7139 = vpop.f32.mrf.mxu0
        %v7140 = vadd.f32 %v6971, %v7139
        %v7141 = vpop.f32.mrf.mxu0
        %v7142 = vadd.f32 %v6973, %v7141
        %7143 = vmatmul.bf16.gmra.mxu0 %v3595
        %v7144 = vpop.f32.mrf.mxu0
        %v7145 = vadd.f32 %v6976, %v7144
        %v7146 = vpop.f32.mrf.mxu0
        %v7147 = vadd.f32 %v6978, %v7146
        %7148 = vmatmul.bf16.gmra.mxu0 %v3601
        %v7149 = vpop.f32.mrf.mxu0
        %v7150 = vadd.f32 %v6981, %v7149
        %v7151 = vpop.f32.mrf.mxu0
        %v7152 = vadd.f32 %v6983, %v7151
        %7153 = vmatmul.bf16.gmra.mxu0 %v3607
        %v7154 = vpop.f32.mrf.mxu0
        %v7155 = vadd.f32 %v6986, %v7154
        %v7156 = vpop.f32.mrf.mxu0
        %v7157 = vadd.f32 %v6988, %v7156
        %7158 = vmatmul.bf16.gmra.mxu0 %v3613
        %v7159 = vpop.f32.mrf.mxu0
        %v7160 = vadd.f32 %v6991, %v7159
        %v7161 = vpop.f32.mrf.mxu0
        %v7162 = vadd.f32 %v6993, %v7161
        %7163 = vmatmul.bf16.gmra.mxu0 %v3619
        %v7164 = vpop.f32.mrf.mxu0
        %v7165 = vadd.f32 %v6996, %v7164
        %v7166 = vpop.f32.mrf.mxu0
        %v7167 = vadd.f32 %v6998, %v7166
        %7168 = vmatmul.bf16.gmra.mxu0 %v3625
        %v7169 = vpop.f32.mrf.mxu0
        %v7170 = vadd.f32 %v7001, %v7169
        %v7171 = vpop.f32.mrf.mxu0
        %v7172 = vadd.f32 %v7003, %v7171
        %7173 = vmatmul.bf16.gmra.mxu0 %v3631
        %v7174 = vpop.f32.mrf.mxu0
        %v7175 = vadd.f32 %v7006, %v7174
        %v7176 = vpop.f32.mrf.mxu0
        %v7177 = vadd.f32 %v7008, %v7176
        %7178 = vmatmul.bf16.gmra.mxu0 %v3637
        %v7179 = vpop.f32.mrf.mxu0
        %v7180 = vadd.f32 %v7011, %v7179
        %v7181 = vpop.f32.mrf.mxu0
        %v7182 = vadd.f32 %v7013, %v7181
        %7183 = vmatmul.bf16.gmra.mxu0 %v3643
        %v7184 = vpop.f32.mrf.mxu0
        %v7185 = vadd.f32 %v7016, %v7184
        %v7186 = vpop.f32.mrf.mxu0
        %v7187 = vadd.f32 %v7018, %v7186
        %7188 = vmatmul.bf16.gmra.mxu0 %v3649
        %v7189 = vpop.f32.mrf.mxu0
        %v7190 = vadd.f32 %v7021, %v7189
        %v7191 = vpop.f32.mrf.mxu0
        %v7192 = vadd.f32 %v7023, %v7191
        %7193 = vmatmul.bf16.gmra.mxu0 %v3655
        %v7194 = vpop.f32.mrf.mxu0
        %v7195 = vadd.f32 %v7026, %v7194
        %v7196 = vpop.f32.mrf.mxu0
        %v7197 = vadd.f32 %v7028, %v7196
        %7198 = vmatmul.bf16.gmra.mxu0 %v3661
        %v7199 = vpop.f32.mrf.mxu0
        %v7200 = vadd.f32 %v7031, %v7199
        %v7201 = vpop.f32.mrf.mxu0
        %v7202 = vadd.f32 %v7033, %v7201
        %7203 = vmatmul.bf16.gmra.mxu0 %v3667
        %v7204 = vpop.f32.mrf.mxu0
        %v7205 = vadd.f32 %v7036, %v7204
        %v7206 = vpop.f32.mrf.mxu0
        %v7207 = vadd.f32 %v7038, %v7206
        %7208 = vmatmul.bf16.gmra.mxu0 %v3673
        %v7209 = vpop.f32.mrf.mxu0
        %v7210 = vadd.f32 %v7041, %v7209
        %v7211 = vpop.f32.mrf.mxu0
        %v7212 = vadd.f32 %v7043, %v7211
        %7213 = vmatmul.bf16.gmra.mxu0 %v3679
        %v7214 = vpop.f32.mrf.mxu0
        %v7215 = vadd.f32 %v7046, %v7214
        %v7216 = vpop.f32.mrf.mxu0
        %v7217 = vadd.f32 %v7048, %v7216
        %7218 = vmatmul.bf16.gmra.mxu0 %v3685
        %v7219 = vpop.f32.mrf.mxu0
        %v7220 = vadd.f32 %v7051, %v7219
        %v7221 = vpop.f32.mrf.mxu0
        %v7222 = vadd.f32 %v7053, %v7221
        %7223 = vmatmul.bf16.gmra.mxu0 %v3691
        %v7224 = vpop.f32.mrf.mxu0
        %v7225 = vadd.f32 %v7056, %v7224
        %v7226 = vpop.f32.mrf.mxu0
        %v7227 = vadd.f32 %v7058, %v7226
        %7228 = vmatmul.bf16.gmra.mxu0 %v3697
        %v7229 = vpop.f32.mrf.mxu0
        %v7230 = vadd.f32 %v7061, %v7229
        %v7231 = vpop.f32.mrf.mxu0
        %v7232 = vadd.f32 %v7063, %v7231
        %7233 = vmatmul.bf16.gmra.mxu0 %v3703
        %v7234 = vpop.f32.mrf.mxu0
        %v7235 = vadd.f32 %v7066, %v7234
        %v7236 = vpop.f32.mrf.mxu0
        %v7237 = vadd.f32 %v7068, %v7236
        %7238 = vmatmul.bf16.gmra.mxu0 %v3709
        %v7239 = vpop.f32.mrf.mxu0
        %v7240 = vadd.f32 %v7071, %v7239
        %v7241 = vpop.f32.mrf.mxu0
        %v7242 = vadd.f32 %v7073, %v7241
        %7243 = vmatmul.bf16.gmra.mxu0 %v3715
        %v7244 = vpop.f32.mrf.mxu0
        %v7245 = vadd.f32 %v7076, %v7244
        %v7246 = vpop.f32.mrf.mxu0
        %v7247 = vadd.f32 %v7078, %v7246
        %7248 = vmatmul.bf16.gmra.mxu0 %v3721
        %v7249 = vpop.f32.mrf.mxu0
        %v7250 = vadd.f32 %v7081, %v7249
        %v7251 = vpop.f32.mrf.mxu0
        %v7252 = vadd.f32 %v7083, %v7251
        %7253 = vdwg.mxu0
        %7254 = vmatpush.bf16.msra.mxu0 %v4598
        %7255 = vmatpush.bf16.msra.mxu0 %v4594
        %7256 = vmatpush.bf16.msra.mxu0 %v4590
        %7257 = vmatpush.bf16.msra.mxu0 %v4586
        %7258 = vmatpush.bf16.msra.mxu0 %v4582
        %7259 = vmatpush.bf16.msra.mxu0 %v4578
        %7260 = vmatpush.bf16.msra.mxu0 %v4574
        %7261 = vmatpush.bf16.msra.mxu0 %v4570
        %7262 = vmatmul.bf16.gmra.mxu0 %v3536
        %v7263 = vpop.f32.mrf.mxu0
        %v7264 = vadd.f32 %v7095, %v7263
        %v7265 = vpop.f32.mrf.mxu0
        %v7266 = vadd.f32 %v7097, %v7265
        %7267 = vmatmul.bf16.gmra.mxu0 %v3542
        %v7268 = vpop.f32.mrf.mxu0
        %v7269 = vadd.f32 %v7100, %v7268
        %v7270 = vpop.f32.mrf.mxu0
        %v7271 = vadd.f32 %v7102, %v7270
        %7272 = vmatmul.bf16.gmra.mxu0 %v3548
        %v7273 = vpop.f32.mrf.mxu0
        %v7274 = vadd.f32 %v7105, %v7273
        %v7275 = vpop.f32.mrf.mxu0
        %v7276 = vadd.f32 %v7107, %v7275
        %7277 = vmatmul.bf16.gmra.mxu0 %v3554
        %v7278 = vpop.f32.mrf.mxu0
        %v7279 = vadd.f32 %v7110, %v7278
        %v7280 = vpop.f32.mrf.mxu0
        %v7281 = vadd.f32 %v7112, %v7280
        %7282 = vmatmul.bf16.gmra.mxu0 %v3560
        %v7283 = vpop.f32.mrf.mxu0
        %v7284 = vadd.f32 %v7115, %v7283
        %v7285 = vpop.f32.mrf.mxu0
        %v7286 = vadd.f32 %v7117, %v7285
        %7287 = vmatmul.bf16.gmra.mxu0 %v3566
        %v7288 = vpop.f32.mrf.mxu0
        %v7289 = vadd.f32 %v7120, %v7288
        %v7290 = vpop.f32.mrf.mxu0
        %v7291 = vadd.f32 %v7122, %v7290
        %7292 = vmatmul.bf16.gmra.mxu0 %v3572
        %v7293 = vpop.f32.mrf.mxu0
        %v7294 = vadd.f32 %v7125, %v7293
        %v7295 = vpop.f32.mrf.mxu0
        %v7296 = vadd.f32 %v7127, %v7295
        %7297 = vmatmul.bf16.gmra.mxu0 %v3578
        %v7298 = vpop.f32.mrf.mxu0
        %v7299 = vadd.f32 %v7130, %v7298
        %v7300 = vpop.f32.mrf.mxu0
        %v7301 = vadd.f32 %v7132, %v7300
        %7302 = vmatmul.bf16.gmra.mxu0 %v3584
        %v7303 = vpop.f32.mrf.mxu0
        %v7304 = vadd.f32 %v7135, %v7303
        %v7305 = vpop.f32.mrf.mxu0
        %v7306 = vadd.f32 %v7137, %v7305
        %7307 = vmatmul.bf16.gmra.mxu0 %v3590
        %v7308 = vpop.f32.mrf.mxu0
        %v7309 = vadd.f32 %v7140, %v7308
        %v7310 = vpop.f32.mrf.mxu0
        %v7311 = vadd.f32 %v7142, %v7310
        %7312 = vmatmul.bf16.gmra.mxu0 %v3596
        %v7313 = vpop.f32.mrf.mxu0
        %v7314 = vadd.f32 %v7145, %v7313
        %v7315 = vpop.f32.mrf.mxu0
        %v7316 = vadd.f32 %v7147, %v7315
        %7317 = vmatmul.bf16.gmra.mxu0 %v3602
        %v7318 = vpop.f32.mrf.mxu0
        %v7319 = vadd.f32 %v7150, %v7318
        %v7320 = vpop.f32.mrf.mxu0
        %v7321 = vadd.f32 %v7152, %v7320
        %7322 = vmatmul.bf16.gmra.mxu0 %v3608
        %v7323 = vpop.f32.mrf.mxu0
        %v7324 = vadd.f32 %v7155, %v7323
        %v7325 = vpop.f32.mrf.mxu0
        %v7326 = vadd.f32 %v7157, %v7325
        %7327 = vmatmul.bf16.gmra.mxu0 %v3614
        %v7328 = vpop.f32.mrf.mxu0
        %v7329 = vadd.f32 %v7160, %v7328
        %v7330 = vpop.f32.mrf.mxu0
        %v7331 = vadd.f32 %v7162, %v7330
        %7332 = vmatmul.bf16.gmra.mxu0 %v3620
        %v7333 = vpop.f32.mrf.mxu0
        %v7334 = vadd.f32 %v7165, %v7333
        %v7335 = vpop.f32.mrf.mxu0
        %v7336 = vadd.f32 %v7167, %v7335
        %7337 = vmatmul.bf16.gmra.mxu0 %v3626
        %v7338 = vpop.f32.mrf.mxu0
        %v7339 = vadd.f32 %v7170, %v7338
        %v7340 = vpop.f32.mrf.mxu0
        %v7341 = vadd.f32 %v7172, %v7340
        %7342 = vmatmul.bf16.gmra.mxu0 %v3632
        %v7343 = vpop.f32.mrf.mxu0
        %v7344 = vadd.f32 %v7175, %v7343
        %v7345 = vpop.f32.mrf.mxu0
        %v7346 = vadd.f32 %v7177, %v7345
        %7347 = vmatmul.bf16.gmra.mxu0 %v3638
        %v7348 = vpop.f32.mrf.mxu0
        %v7349 = vadd.f32 %v7180, %v7348
        %v7350 = vpop.f32.mrf.mxu0
        %v7351 = vadd.f32 %v7182, %v7350
        %7352 = vmatmul.bf16.gmra.mxu0 %v3644
        %v7353 = vpop.f32.mrf.mxu0
        %v7354 = vadd.f32 %v7185, %v7353
        %v7355 = vpop.f32.mrf.mxu0
        %v7356 = vadd.f32 %v7187, %v7355
        %7357 = vmatmul.bf16.gmra.mxu0 %v3650
        %v7358 = vpop.f32.mrf.mxu0
        %v7359 = vadd.f32 %v7190, %v7358
        %v7360 = vpop.f32.mrf.mxu0
        %v7361 = vadd.f32 %v7192, %v7360
        %7362 = vmatmul.bf16.gmra.mxu0 %v3656
        %v7363 = vpop.f32.mrf.mxu0
        %v7364 = vadd.f32 %v7195, %v7363
        %v7365 = vpop.f32.mrf.mxu0
        %v7366 = vadd.f32 %v7197, %v7365
        %7367 = vmatmul.bf16.gmra.mxu0 %v3662
        %v7368 = vpop.f32.mrf.mxu0
        %v7369 = vadd.f32 %v7200, %v7368
        %v7370 = vpop.f32.mrf.mxu0
        %v7371 = vadd.f32 %v7202, %v7370
        %7372 = vmatmul.bf16.gmra.mxu0 %v3668
        %v7373 = vpop.f32.mrf.mxu0
        %v7374 = vadd.f32 %v7205, %v7373
        %v7375 = vpop.f32.mrf.mxu0
        %v7376 = vadd.f32 %v7207, %v7375
        %7377 = vmatmul.bf16.gmra.mxu0 %v3674
        %v7378 = vpop.f32.mrf.mxu0
        %v7379 = vadd.f32 %v7210, %v7378
        %v7380 = vpop.f32.mrf.mxu0
        %v7381 = vadd.f32 %v7212, %v7380
        %7382 = vmatmul.bf16.gmra.mxu0 %v3680
        %v7383 = vpop.f32.mrf.mxu0
        %v7384 = vadd.f32 %v7215, %v7383
        %v7385 = vpop.f32.mrf.mxu0
        %v7386 = vadd.f32 %v7217, %v7385
        %7387 = vmatmul.bf16.gmra.mxu0 %v3686
        %v7388 = vpop.f32.mrf.mxu0
        %v7389 = vadd.f32 %v7220, %v7388
        %v7390 = vpop.f32.mrf.mxu0
        %v7391 = vadd.f32 %v7222, %v7390
        %7392 = vmatmul.bf16.gmra.mxu0 %v3692
        %v7393 = vpop.f32.mrf.mxu0
        %v7394 = vadd.f32 %v7225, %v7393
        %v7395 = vpop.f32.mrf.mxu0
        %v7396 = vadd.f32 %v7227, %v7395
        %7397 = vmatmul.bf16.gmra.mxu0 %v3698
        %v7398 = vpop.f32.mrf.mxu0
        %v7399 = vadd.f32 %v7230, %v7398
        %v7400 = vpop.f32.mrf.mxu0
        %v7401 = vadd.f32 %v7232, %v7400
        %7402 = vmatmul.bf16.gmra.mxu0 %v3704
        %v7403 = vpop.f32.mrf.mxu0
        %v7404 = vadd.f32 %v7235, %v7403
        %v7405 = vpop.f32.mrf.mxu0
        %v7406 = vadd.f32 %v7237, %v7405
        %7407 = vmatmul.bf16.gmra.mxu0 %v3710
        %v7408 = vpop.f32.mrf.mxu0
        %v7409 = vadd.f32 %v7240, %v7408
        %v7410 = vpop.f32.mrf.mxu0
        %v7411 = vadd.f32 %v7242, %v7410
        %7412 = vmatmul.bf16.gmra.mxu0 %v3716
        %v7413 = vpop.f32.mrf.mxu0
        %v7414 = vadd.f32 %v7245, %v7413
        %v7415 = vpop.f32.mrf.mxu0
        %v7416 = vadd.f32 %v7247, %v7415
        %7417 = vmatmul.bf16.gmra.mxu0 %v3722
        %v7418 = vpop.f32.mrf.mxu0
        %v7419 = vadd.f32 %v7250, %v7418
        %v7420 = vpop.f32.mrf.mxu0
        %v7421 = vadd.f32 %v7252, %v7420
        %7422 = vdwg.mxu0
        %7423 = vmatpush.bf16.msra.mxu0 %v4630
        %7424 = vmatpush.bf16.msra.mxu0 %v4626
        %7425 = vmatpush.bf16.msra.mxu0 %v4622
        %7426 = vmatpush.bf16.msra.mxu0 %v4618
        %7427 = vmatpush.bf16.msra.mxu0 %v4614
        %7428 = vmatpush.bf16.msra.mxu0 %v4610
        %7429 = vmatpush.bf16.msra.mxu0 %v4606
        %7430 = vmatpush.bf16.msra.mxu0 %v4602
        %7431 = vmatmul.bf16.gmra.mxu0 %v3537
        %v7432 = vpop.f32.mrf.mxu0
        %v7433 = vadd.f32 %v7264, %v7432
        %v7434 = vpop.f32.mrf.mxu0
        %v7435 = vadd.f32 %v7266, %v7434
        %7436 = vmatmul.bf16.gmra.mxu0 %v3543
        %v7437 = vpop.f32.mrf.mxu0
        %v7438 = vadd.f32 %v7269, %v7437
        %v7439 = vpop.f32.mrf.mxu0
        %v7440 = vadd.f32 %v7271, %v7439
        %7441 = vmatmul.bf16.gmra.mxu0 %v3549
        %v7442 = vpop.f32.mrf.mxu0
        %v7443 = vadd.f32 %v7274, %v7442
        %v7444 = vpop.f32.mrf.mxu0
        %v7445 = vadd.f32 %v7276, %v7444
        %7446 = vmatmul.bf16.gmra.mxu0 %v3555
        %v7447 = vpop.f32.mrf.mxu0
        %v7448 = vadd.f32 %v7279, %v7447
        %v7449 = vpop.f32.mrf.mxu0
        %v7450 = vadd.f32 %v7281, %v7449
        %7451 = vmatmul.bf16.gmra.mxu0 %v3561
        %v7452 = vpop.f32.mrf.mxu0
        %v7453 = vadd.f32 %v7284, %v7452
        %v7454 = vpop.f32.mrf.mxu0
        %v7455 = vadd.f32 %v7286, %v7454
        %7456 = vmatmul.bf16.gmra.mxu0 %v3567
        %v7457 = vpop.f32.mrf.mxu0
        %v7458 = vadd.f32 %v7289, %v7457
        %v7459 = vpop.f32.mrf.mxu0
        %v7460 = vadd.f32 %v7291, %v7459
        %7461 = vmatmul.bf16.gmra.mxu0 %v3573
        %v7462 = vpop.f32.mrf.mxu0
        %v7463 = vadd.f32 %v7294, %v7462
        %v7464 = vpop.f32.mrf.mxu0
        %v7465 = vadd.f32 %v7296, %v7464
        %7466 = vmatmul.bf16.gmra.mxu0 %v3579
        %v7467 = vpop.f32.mrf.mxu0
        %v7468 = vadd.f32 %v7299, %v7467
        %v7469 = vpop.f32.mrf.mxu0
        %v7470 = vadd.f32 %v7301, %v7469
        %7471 = vmatmul.bf16.gmra.mxu0 %v3585
        %v7472 = vpop.f32.mrf.mxu0
        %v7473 = vadd.f32 %v7304, %v7472
        %v7474 = vpop.f32.mrf.mxu0
        %v7475 = vadd.f32 %v7306, %v7474
        %7476 = vmatmul.bf16.gmra.mxu0 %v3591
        %v7477 = vpop.f32.mrf.mxu0
        %v7478 = vadd.f32 %v7309, %v7477
        %v7479 = vpop.f32.mrf.mxu0
        %v7480 = vadd.f32 %v7311, %v7479
        %7481 = vmatmul.bf16.gmra.mxu0 %v3597
        %v7482 = vpop.f32.mrf.mxu0
        %v7483 = vadd.f32 %v7314, %v7482
        %v7484 = vpop.f32.mrf.mxu0
        %v7485 = vadd.f32 %v7316, %v7484
        %7486 = vmatmul.bf16.gmra.mxu0 %v3603
        %v7487 = vpop.f32.mrf.mxu0
        %v7488 = vadd.f32 %v7319, %v7487
        %v7489 = vpop.f32.mrf.mxu0
        %v7490 = vadd.f32 %v7321, %v7489
        %7491 = vmatmul.bf16.gmra.mxu0 %v3609
        %v7492 = vpop.f32.mrf.mxu0
        %v7493 = vadd.f32 %v7324, %v7492
        %v7494 = vpop.f32.mrf.mxu0
        %v7495 = vadd.f32 %v7326, %v7494
        %7496 = vmatmul.bf16.gmra.mxu0 %v3615
        %v7497 = vpop.f32.mrf.mxu0
        %v7498 = vadd.f32 %v7329, %v7497
        %v7499 = vpop.f32.mrf.mxu0
        %v7500 = vadd.f32 %v7331, %v7499
        %7501 = vmatmul.bf16.gmra.mxu0 %v3621
        %v7502 = vpop.f32.mrf.mxu0
        %v7503 = vadd.f32 %v7334, %v7502
        %v7504 = vpop.f32.mrf.mxu0
        %v7505 = vadd.f32 %v7336, %v7504
        %7506 = vmatmul.bf16.gmra.mxu0 %v3627
        %v7507 = vpop.f32.mrf.mxu0
        %v7508 = vadd.f32 %v7339, %v7507
        %v7509 = vpop.f32.mrf.mxu0
        %v7510 = vadd.f32 %v7341, %v7509
        %7511 = vmatmul.bf16.gmra.mxu0 %v3633
        %v7512 = vpop.f32.mrf.mxu0
        %v7513 = vadd.f32 %v7344, %v7512
        %v7514 = vpop.f32.mrf.mxu0
        %v7515 = vadd.f32 %v7346, %v7514
        %7516 = vmatmul.bf16.gmra.mxu0 %v3639
        %v7517 = vpop.f32.mrf.mxu0
        %v7518 = vadd.f32 %v7349, %v7517
        %v7519 = vpop.f32.mrf.mxu0
        %v7520 = vadd.f32 %v7351, %v7519
        %7521 = vmatmul.bf16.gmra.mxu0 %v3645
        %v7522 = vpop.f32.mrf.mxu0
        %v7523 = vadd.f32 %v7354, %v7522
        %v7524 = vpop.f32.mrf.mxu0
        %v7525 = vadd.f32 %v7356, %v7524
        %7526 = vmatmul.bf16.gmra.mxu0 %v3651
        %v7527 = vpop.f32.mrf.mxu0
        %v7528 = vadd.f32 %v7359, %v7527
        %v7529 = vpop.f32.mrf.mxu0
        %v7530 = vadd.f32 %v7361, %v7529
        %7531 = vmatmul.bf16.gmra.mxu0 %v3657
        %v7532 = vpop.f32.mrf.mxu0
        %v7533 = vadd.f32 %v7364, %v7532
        %v7534 = vpop.f32.mrf.mxu0
        %v7535 = vadd.f32 %v7366, %v7534
        %7536 = vmatmul.bf16.gmra.mxu0 %v3663
        %v7537 = vpop.f32.mrf.mxu0
        %v7538 = vadd.f32 %v7369, %v7537
        %v7539 = vpop.f32.mrf.mxu0
        %v7540 = vadd.f32 %v7371, %v7539
        %7541 = vmatmul.bf16.gmra.mxu0 %v3669
        %v7542 = vpop.f32.mrf.mxu0
        %v7543 = vadd.f32 %v7374, %v7542
        %v7544 = vpop.f32.mrf.mxu0
        %v7545 = vadd.f32 %v7376, %v7544
        %7546 = vmatmul.bf16.gmra.mxu0 %v3675
        %v7547 = vpop.f32.mrf.mxu0
        %v7548 = vadd.f32 %v7379, %v7547
        %v7549 = vpop.f32.mrf.mxu0
        %v7550 = vadd.f32 %v7381, %v7549
        %7551 = vmatmul.bf16.gmra.mxu0 %v3681
        %v7552 = vpop.f32.mrf.mxu0
        %v7553 = vadd.f32 %v7384, %v7552
        %v7554 = vpop.f32.mrf.mxu0
        %v7555 = vadd.f32 %v7386, %v7554
        %7556 = vmatmul.bf16.gmra.mxu0 %v3687
        %v7557 = vpop.f32.mrf.mxu0
        %v7558 = vadd.f32 %v7389, %v7557
        %v7559 = vpop.f32.mrf.mxu0
        %v7560 = vadd.f32 %v7391, %v7559
        %7561 = vmatmul.bf16.gmra.mxu0 %v3693
        %v7562 = vpop.f32.mrf.mxu0
        %v7563 = vadd.f32 %v7394, %v7562
        %v7564 = vpop.f32.mrf.mxu0
        %v7565 = vadd.f32 %v7396, %v7564
        %7566 = vmatmul.bf16.gmra.mxu0 %v3699
        %v7567 = vpop.f32.mrf.mxu0
        %v7568 = vadd.f32 %v7399, %v7567
        %v7569 = vpop.f32.mrf.mxu0
        %v7570 = vadd.f32 %v7401, %v7569
        %7571 = vmatmul.bf16.gmra.mxu0 %v3705
        %v7572 = vpop.f32.mrf.mxu0
        %v7573 = vadd.f32 %v7404, %v7572
        %v7574 = vpop.f32.mrf.mxu0
        %v7575 = vadd.f32 %v7406, %v7574
        %7576 = vmatmul.bf16.gmra.mxu0 %v3711
        %v7577 = vpop.f32.mrf.mxu0
        %v7578 = vadd.f32 %v7409, %v7577
        %v7579 = vpop.f32.mrf.mxu0
        %v7580 = vadd.f32 %v7411, %v7579
        %7581 = vmatmul.bf16.gmra.mxu0 %v3717
        %v7582 = vpop.f32.mrf.mxu0
        %v7583 = vadd.f32 %v7414, %v7582
        %v7584 = vpop.f32.mrf.mxu0
        %v7585 = vadd.f32 %v7416, %v7584
        %7586 = vmatmul.bf16.gmra.mxu0 %v3723
        %v7587 = vpop.f32.mrf.mxu0
        %v7588 = vadd.f32 %v7419, %v7587
        %v7589 = vpop.f32.mrf.mxu0
        %v7590 = vadd.f32 %v7421, %v7589
        %7591 = vdwg.mxu0
        %7592 = vmatpush.bf16.msra.mxu0 %v4662
        %7593 = vmatpush.bf16.msra.mxu0 %v4658
        %7594 = vmatpush.bf16.msra.mxu0 %v4654
        %7595 = vmatpush.bf16.msra.mxu0 %v4650
        %7596 = vmatpush.bf16.msra.mxu0 %v4646
        %7597 = vmatpush.bf16.msra.mxu0 %v4642
        %7598 = vmatpush.bf16.msra.mxu0 %v4638
        %7599 = vmatpush.bf16.msra.mxu0 %v4634
        %7600 = vmatmul.bf16.gmra.mxu0 %v3538
        %v7601 = vpop.f32.mrf.mxu0
        %v7602 = vadd.f32 %v7433, %v7601
        %v7603 = vpop.f32.mrf.mxu0
        %v7604 = vadd.f32 %v7435, %v7603
        %7605 = vmatmul.bf16.gmra.mxu0 %v3544
        %v7606 = vpop.f32.mrf.mxu0
        %v7607 = vadd.f32 %v7438, %v7606
        %v7608 = vpop.f32.mrf.mxu0
        %v7609 = vadd.f32 %v7440, %v7608
        %7610 = vmatmul.bf16.gmra.mxu0 %v3550
        %v7611 = vpop.f32.mrf.mxu0
        %v7612 = vadd.f32 %v7443, %v7611
        %v7613 = vpop.f32.mrf.mxu0
        %v7614 = vadd.f32 %v7445, %v7613
        %7615 = vmatmul.bf16.gmra.mxu0 %v3556
        %v7616 = vpop.f32.mrf.mxu0
        %v7617 = vadd.f32 %v7448, %v7616
        %v7618 = vpop.f32.mrf.mxu0
        %v7619 = vadd.f32 %v7450, %v7618
        %7620 = vmatmul.bf16.gmra.mxu0 %v3562
        %v7621 = vpop.f32.mrf.mxu0
        %v7622 = vadd.f32 %v7453, %v7621
        %v7623 = vpop.f32.mrf.mxu0
        %v7624 = vadd.f32 %v7455, %v7623
        %7625 = vmatmul.bf16.gmra.mxu0 %v3568
        %v7626 = vpop.f32.mrf.mxu0
        %v7627 = vadd.f32 %v7458, %v7626
        %v7628 = vpop.f32.mrf.mxu0
        %v7629 = vadd.f32 %v7460, %v7628
        %7630 = vmatmul.bf16.gmra.mxu0 %v3574
        %v7631 = vpop.f32.mrf.mxu0
        %v7632 = vadd.f32 %v7463, %v7631
        %v7633 = vpop.f32.mrf.mxu0
        %v7634 = vadd.f32 %v7465, %v7633
        %7635 = vmatmul.bf16.gmra.mxu0 %v3580
        %v7636 = vpop.f32.mrf.mxu0
        %v7637 = vadd.f32 %v7468, %v7636
        %v7638 = vpop.f32.mrf.mxu0
        %v7639 = vadd.f32 %v7470, %v7638
        %7640 = vmatmul.bf16.gmra.mxu0 %v3586
        %v7641 = vpop.f32.mrf.mxu0
        %v7642 = vadd.f32 %v7473, %v7641
        %v7643 = vpop.f32.mrf.mxu0
        %v7644 = vadd.f32 %v7475, %v7643
        %7645 = vmatmul.bf16.gmra.mxu0 %v3592
        %v7646 = vpop.f32.mrf.mxu0
        %v7647 = vadd.f32 %v7478, %v7646
        %v7648 = vpop.f32.mrf.mxu0
        %v7649 = vadd.f32 %v7480, %v7648
        %7650 = vmatmul.bf16.gmra.mxu0 %v3598
        %v7651 = vpop.f32.mrf.mxu0
        %v7652 = vadd.f32 %v7483, %v7651
        %v7653 = vpop.f32.mrf.mxu0
        %v7654 = vadd.f32 %v7485, %v7653
        %7655 = vmatmul.bf16.gmra.mxu0 %v3604
        %v7656 = vpop.f32.mrf.mxu0
        %v7657 = vadd.f32 %v7488, %v7656
        %v7658 = vpop.f32.mrf.mxu0
        %v7659 = vadd.f32 %v7490, %v7658
        %7660 = vmatmul.bf16.gmra.mxu0 %v3610
        %v7661 = vpop.f32.mrf.mxu0
        %v7662 = vadd.f32 %v7493, %v7661
        %v7663 = vpop.f32.mrf.mxu0
        %v7664 = vadd.f32 %v7495, %v7663
        %7665 = vmatmul.bf16.gmra.mxu0 %v3616
        %v7666 = vpop.f32.mrf.mxu0
        %v7667 = vadd.f32 %v7498, %v7666
        %v7668 = vpop.f32.mrf.mxu0
        %v7669 = vadd.f32 %v7500, %v7668
        %7670 = vmatmul.bf16.gmra.mxu0 %v3622
        %v7671 = vpop.f32.mrf.mxu0
        %v7672 = vadd.f32 %v7503, %v7671
        %v7673 = vpop.f32.mrf.mxu0
        %v7674 = vadd.f32 %v7505, %v7673
        %7675 = vmatmul.bf16.gmra.mxu0 %v3628
        %v7676 = vpop.f32.mrf.mxu0
        %v7677 = vadd.f32 %v7508, %v7676
        %v7678 = vpop.f32.mrf.mxu0
        %v7679 = vadd.f32 %v7510, %v7678
        %7680 = vmatmul.bf16.gmra.mxu0 %v3634
        %v7681 = vpop.f32.mrf.mxu0
        %v7682 = vadd.f32 %v7513, %v7681
        %v7683 = vpop.f32.mrf.mxu0
        %v7684 = vadd.f32 %v7515, %v7683
        %7685 = vmatmul.bf16.gmra.mxu0 %v3640
        %v7686 = vpop.f32.mrf.mxu0
        %v7687 = vadd.f32 %v7518, %v7686
        %v7688 = vpop.f32.mrf.mxu0
        %v7689 = vadd.f32 %v7520, %v7688
        %7690 = vmatmul.bf16.gmra.mxu0 %v3646
        %v7691 = vpop.f32.mrf.mxu0
        %v7692 = vadd.f32 %v7523, %v7691
        %v7693 = vpop.f32.mrf.mxu0
        %v7694 = vadd.f32 %v7525, %v7693
        %7695 = vmatmul.bf16.gmra.mxu0 %v3652
        %v7696 = vpop.f32.mrf.mxu0
        %v7697 = vadd.f32 %v7528, %v7696
        %v7698 = vpop.f32.mrf.mxu0
        %v7699 = vadd.f32 %v7530, %v7698
        %7700 = vmatmul.bf16.gmra.mxu0 %v3658
        %v7701 = vpop.f32.mrf.mxu0
        %v7702 = vadd.f32 %v7533, %v7701
        %v7703 = vpop.f32.mrf.mxu0
        %v7704 = vadd.f32 %v7535, %v7703
        %7705 = vmatmul.bf16.gmra.mxu0 %v3664
        %v7706 = vpop.f32.mrf.mxu0
        %v7707 = vadd.f32 %v7538, %v7706
        %v7708 = vpop.f32.mrf.mxu0
        %v7709 = vadd.f32 %v7540, %v7708
        %7710 = vmatmul.bf16.gmra.mxu0 %v3670
        %v7711 = vpop.f32.mrf.mxu0
        %v7712 = vadd.f32 %v7543, %v7711
        %v7713 = vpop.f32.mrf.mxu0
        %v7714 = vadd.f32 %v7545, %v7713
        %7715 = vmatmul.bf16.gmra.mxu0 %v3676
        %v7716 = vpop.f32.mrf.mxu0
        %v7717 = vadd.f32 %v7548, %v7716
        %v7718 = vpop.f32.mrf.mxu0
        %v7719 = vadd.f32 %v7550, %v7718
        %7720 = vmatmul.bf16.gmra.mxu0 %v3682
        %v7721 = vpop.f32.mrf.mxu0
        %v7722 = vadd.f32 %v7553, %v7721
        %v7723 = vpop.f32.mrf.mxu0
        %v7724 = vadd.f32 %v7555, %v7723
        %7725 = vmatmul.bf16.gmra.mxu0 %v3688
        %v7726 = vpop.f32.mrf.mxu0
        %v7727 = vadd.f32 %v7558, %v7726
        %v7728 = vpop.f32.mrf.mxu0
        %v7729 = vadd.f32 %v7560, %v7728
        %7730 = vmatmul.bf16.gmra.mxu0 %v3694
        %v7731 = vpop.f32.mrf.mxu0
        %v7732 = vadd.f32 %v7563, %v7731
        %v7733 = vpop.f32.mrf.mxu0
        %v7734 = vadd.f32 %v7565, %v7733
        %7735 = vmatmul.bf16.gmra.mxu0 %v3700
        %v7736 = vpop.f32.mrf.mxu0
        %v7737 = vadd.f32 %v7568, %v7736
        %v7738 = vpop.f32.mrf.mxu0
        %v7739 = vadd.f32 %v7570, %v7738
        %7740 = vmatmul.bf16.gmra.mxu0 %v3706
        %v7741 = vpop.f32.mrf.mxu0
        %v7742 = vadd.f32 %v7573, %v7741
        %v7743 = vpop.f32.mrf.mxu0
        %v7744 = vadd.f32 %v7575, %v7743
        %7745 = vmatmul.bf16.gmra.mxu0 %v3712
        %v7746 = vpop.f32.mrf.mxu0
        %v7747 = vadd.f32 %v7578, %v7746
        %v7748 = vpop.f32.mrf.mxu0
        %v7749 = vadd.f32 %v7580, %v7748
        %7750 = vmatmul.bf16.gmra.mxu0 %v3718
        %v7751 = vpop.f32.mrf.mxu0
        %v7752 = vadd.f32 %v7583, %v7751
        %v7753 = vpop.f32.mrf.mxu0
        %v7754 = vadd.f32 %v7585, %v7753
        %7755 = vmatmul.bf16.gmra.mxu0 %v3724
        %v7756 = vpop.f32.mrf.mxu0
        %v7757 = vadd.f32 %v7588, %v7756
        %v7758 = vpop.f32.mrf.mxu0
        %v7759 = vadd.f32 %v7590, %v7758
        %7760 = vdwg.mxu0
        %7761 = vmatpush.bf16.msra.mxu0 %v4694
        %7762 = vmatpush.bf16.msra.mxu0 %v4690
        %7763 = vmatpush.bf16.msra.mxu0 %v4686
        %7764 = vmatpush.bf16.msra.mxu0 %v4682
        %7765 = vmatpush.bf16.msra.mxu0 %v4678
        %7766 = vmatpush.bf16.msra.mxu0 %v4674
        %7767 = vmatpush.bf16.msra.mxu0 %v4670
        %7768 = vmatpush.bf16.msra.mxu0 %v4666
        %7769 = vmatmul.bf16.gmra.mxu0 %v3539
        %v7770 = vpop.f32.mrf.mxu0
        %v7771 = vadd.f32 %v7602, %v7770
        %v7772 = vpop.f32.mrf.mxu0
        %v7773 = vadd.f32 %v7604, %v7772
        %7774 = vmatmul.bf16.gmra.mxu0 %v3545
        %v7775 = vpop.f32.mrf.mxu0
        %v7776 = vadd.f32 %v7607, %v7775
        %v7777 = vpop.f32.mrf.mxu0
        %v7778 = vadd.f32 %v7609, %v7777
        %7779 = vmatmul.bf16.gmra.mxu0 %v3551
        %v7780 = vpop.f32.mrf.mxu0
        %v7781 = vadd.f32 %v7612, %v7780
        %v7782 = vpop.f32.mrf.mxu0
        %v7783 = vadd.f32 %v7614, %v7782
        %7784 = vmatmul.bf16.gmra.mxu0 %v3557
        %v7785 = vpop.f32.mrf.mxu0
        %v7786 = vadd.f32 %v7617, %v7785
        %v7787 = vpop.f32.mrf.mxu0
        %v7788 = vadd.f32 %v7619, %v7787
        %7789 = vmatmul.bf16.gmra.mxu0 %v3563
        %v7790 = vpop.f32.mrf.mxu0
        %v7791 = vadd.f32 %v7622, %v7790
        %v7792 = vpop.f32.mrf.mxu0
        %v7793 = vadd.f32 %v7624, %v7792
        %7794 = vmatmul.bf16.gmra.mxu0 %v3569
        %v7795 = vpop.f32.mrf.mxu0
        %v7796 = vadd.f32 %v7627, %v7795
        %v7797 = vpop.f32.mrf.mxu0
        %v7798 = vadd.f32 %v7629, %v7797
        %7799 = vmatmul.bf16.gmra.mxu0 %v3575
        %v7800 = vpop.f32.mrf.mxu0
        %v7801 = vadd.f32 %v7632, %v7800
        %v7802 = vpop.f32.mrf.mxu0
        %v7803 = vadd.f32 %v7634, %v7802
        %7804 = vmatmul.bf16.gmra.mxu0 %v3581
        %v7805 = vpop.f32.mrf.mxu0
        %v7806 = vadd.f32 %v7637, %v7805
        %v7807 = vpop.f32.mrf.mxu0
        %v7808 = vadd.f32 %v7639, %v7807
        %7809 = vmatmul.bf16.gmra.mxu0 %v3587
        %v7810 = vpop.f32.mrf.mxu0
        %v7811 = vadd.f32 %v7642, %v7810
        %v7812 = vpop.f32.mrf.mxu0
        %v7813 = vadd.f32 %v7644, %v7812
        %7814 = vmatmul.bf16.gmra.mxu0 %v3593
        %v7815 = vpop.f32.mrf.mxu0
        %v7816 = vadd.f32 %v7647, %v7815
        %v7817 = vpop.f32.mrf.mxu0
        %v7818 = vadd.f32 %v7649, %v7817
        %7819 = vmatmul.bf16.gmra.mxu0 %v3599
        %v7820 = vpop.f32.mrf.mxu0
        %v7821 = vadd.f32 %v7652, %v7820
        %v7822 = vpop.f32.mrf.mxu0
        %v7823 = vadd.f32 %v7654, %v7822
        %7824 = vmatmul.bf16.gmra.mxu0 %v3605
        %v7825 = vpop.f32.mrf.mxu0
        %v7826 = vadd.f32 %v7657, %v7825
        %v7827 = vpop.f32.mrf.mxu0
        %v7828 = vadd.f32 %v7659, %v7827
        %7829 = vmatmul.bf16.gmra.mxu0 %v3611
        %v7830 = vpop.f32.mrf.mxu0
        %v7831 = vadd.f32 %v7662, %v7830
        %v7832 = vpop.f32.mrf.mxu0
        %v7833 = vadd.f32 %v7664, %v7832
        %7834 = vmatmul.bf16.gmra.mxu0 %v3617
        %v7835 = vpop.f32.mrf.mxu0
        %v7836 = vadd.f32 %v7667, %v7835
        %v7837 = vpop.f32.mrf.mxu0
        %v7838 = vadd.f32 %v7669, %v7837
        %7839 = vmatmul.bf16.gmra.mxu0 %v3623
        %v7840 = vpop.f32.mrf.mxu0
        %v7841 = vadd.f32 %v7672, %v7840
        %v7842 = vpop.f32.mrf.mxu0
        %v7843 = vadd.f32 %v7674, %v7842
        %7844 = vmatmul.bf16.gmra.mxu0 %v3629
        %v7845 = vpop.f32.mrf.mxu0
        %v7846 = vadd.f32 %v7677, %v7845
        %v7847 = vpop.f32.mrf.mxu0
        %v7848 = vadd.f32 %v7679, %v7847
        %7849 = vmatmul.bf16.gmra.mxu0 %v3635
        %v7850 = vpop.f32.mrf.mxu0
        %v7851 = vadd.f32 %v7682, %v7850
        %v7852 = vpop.f32.mrf.mxu0
        %v7853 = vadd.f32 %v7684, %v7852
        %7854 = vmatmul.bf16.gmra.mxu0 %v3641
        %v7855 = vpop.f32.mrf.mxu0
        %v7856 = vadd.f32 %v7687, %v7855
        %v7857 = vpop.f32.mrf.mxu0
        %v7858 = vadd.f32 %v7689, %v7857
        %7859 = vmatmul.bf16.gmra.mxu0 %v3647
        %v7860 = vpop.f32.mrf.mxu0
        %v7861 = vadd.f32 %v7692, %v7860
        %v7862 = vpop.f32.mrf.mxu0
        %v7863 = vadd.f32 %v7694, %v7862
        %7864 = vmatmul.bf16.gmra.mxu0 %v3653
        %v7865 = vpop.f32.mrf.mxu0
        %v7866 = vadd.f32 %v7697, %v7865
        %v7867 = vpop.f32.mrf.mxu0
        %v7868 = vadd.f32 %v7699, %v7867
        %7869 = vmatmul.bf16.gmra.mxu0 %v3659
        %v7870 = vpop.f32.mrf.mxu0
        %v7871 = vadd.f32 %v7702, %v7870
        %v7872 = vpop.f32.mrf.mxu0
        %v7873 = vadd.f32 %v7704, %v7872
        %7874 = vmatmul.bf16.gmra.mxu0 %v3665
        %v7875 = vpop.f32.mrf.mxu0
        %v7876 = vadd.f32 %v7707, %v7875
        %v7877 = vpop.f32.mrf.mxu0
        %v7878 = vadd.f32 %v7709, %v7877
        %7879 = vmatmul.bf16.gmra.mxu0 %v3671
        %v7880 = vpop.f32.mrf.mxu0
        %v7881 = vadd.f32 %v7712, %v7880
        %v7882 = vpop.f32.mrf.mxu0
        %v7883 = vadd.f32 %v7714, %v7882
        %7884 = vmatmul.bf16.gmra.mxu0 %v3677
        %v7885 = vpop.f32.mrf.mxu0
        %v7886 = vadd.f32 %v7717, %v7885
        %v7887 = vpop.f32.mrf.mxu0
        %v7888 = vadd.f32 %v7719, %v7887
        %7889 = vmatmul.bf16.gmra.mxu0 %v3683
        %v7890 = vpop.f32.mrf.mxu0
        %v7891 = vadd.f32 %v7722, %v7890
        %v7892 = vpop.f32.mrf.mxu0
        %v7893 = vadd.f32 %v7724, %v7892
        %7894 = vmatmul.bf16.gmra.mxu0 %v3689
        %v7895 = vpop.f32.mrf.mxu0
        %v7896 = vadd.f32 %v7727, %v7895
        %v7897 = vpop.f32.mrf.mxu0
        %v7898 = vadd.f32 %v7729, %v7897
        %7899 = vmatmul.bf16.gmra.mxu0 %v3695
        %v7900 = vpop.f32.mrf.mxu0
        %v7901 = vadd.f32 %v7732, %v7900
        %v7902 = vpop.f32.mrf.mxu0
        %v7903 = vadd.f32 %v7734, %v7902
        %7904 = vmatmul.bf16.gmra.mxu0 %v3701
        %v7905 = vpop.f32.mrf.mxu0
        %v7906 = vadd.f32 %v7737, %v7905
        %v7907 = vpop.f32.mrf.mxu0
        %v7908 = vadd.f32 %v7739, %v7907
        %7909 = vmatmul.bf16.gmra.mxu0 %v3707
        %v7910 = vpop.f32.mrf.mxu0
        %v7911 = vadd.f32 %v7742, %v7910
        %v7912 = vpop.f32.mrf.mxu0
        %v7913 = vadd.f32 %v7744, %v7912
        %7914 = vmatmul.bf16.gmra.mxu0 %v3713
        %v7915 = vpop.f32.mrf.mxu0
        %v7916 = vadd.f32 %v7747, %v7915
        %v7917 = vpop.f32.mrf.mxu0
        %v7918 = vadd.f32 %v7749, %v7917
        %7919 = vmatmul.bf16.gmra.mxu0 %v3719
        %v7920 = vpop.f32.mrf.mxu0
        %v7921 = vadd.f32 %v7752, %v7920
        %v7922 = vpop.f32.mrf.mxu0
        %v7923 = vadd.f32 %v7754, %v7922
        %7924 = vmatmul.bf16.gmra.mxu0 %v3725
        %v7925 = vpop.f32.mrf.mxu0
        %v7926 = vadd.f32 %v7757, %v7925
        %v7927 = vpop.f32.mrf.mxu0
        %v7928 = vadd.f32 %v7759, %v7927
        %7929 = vdwg.mxu0
        %7930 = vmatpush.bf16.msra.mxu0 %v4535
        %7931 = vmatpush.bf16.msra.mxu0 %v4531
        %7932 = vmatpush.bf16.msra.mxu0 %v4527
        %7933 = vmatpush.bf16.msra.mxu0 %v4523
        %7934 = vmatpush.bf16.msra.mxu0 %v4519
        %7935 = vmatpush.bf16.msra.mxu0 %v4515
        %7936 = vmatpush.bf16.msra.mxu0 %v4511
        %7937 = vmatpush.bf16.msra.mxu0 %v4507
        %7938 = vmatmul.bf16.gmra.mxu0 %v3534
        %v7939 = vpop.f32.mrf.mxu0
        %v7940 = vadd.f32 %v3923, %v7939
        %v7941 = vpop.f32.mrf.mxu0
        %v7942 = vadd.f32 %v3923, %v7941
        %7943 = vmatmul.bf16.gmra.mxu0 %v3540
        %v7944 = vpop.f32.mrf.mxu0
        %v7945 = vadd.f32 %v3923, %v7944
        %v7946 = vpop.f32.mrf.mxu0
        %v7947 = vadd.f32 %v3923, %v7946
        %7948 = vmatmul.bf16.gmra.mxu0 %v3546
        %v7949 = vpop.f32.mrf.mxu0
        %v7950 = vadd.f32 %v3923, %v7949
        %v7951 = vpop.f32.mrf.mxu0
        %v7952 = vadd.f32 %v3923, %v7951
        %7953 = vmatmul.bf16.gmra.mxu0 %v3552
        %v7954 = vpop.f32.mrf.mxu0
        %v7955 = vadd.f32 %v3923, %v7954
        %v7956 = vpop.f32.mrf.mxu0
        %v7957 = vadd.f32 %v3923, %v7956
        %7958 = vmatmul.bf16.gmra.mxu0 %v3558
        %v7959 = vpop.f32.mrf.mxu0
        %v7960 = vadd.f32 %v3923, %v7959
        %v7961 = vpop.f32.mrf.mxu0
        %v7962 = vadd.f32 %v3923, %v7961
        %7963 = vmatmul.bf16.gmra.mxu0 %v3564
        %v7964 = vpop.f32.mrf.mxu0
        %v7965 = vadd.f32 %v3923, %v7964
        %v7966 = vpop.f32.mrf.mxu0
        %v7967 = vadd.f32 %v3923, %v7966
        %7968 = vmatmul.bf16.gmra.mxu0 %v3570
        %v7969 = vpop.f32.mrf.mxu0
        %v7970 = vadd.f32 %v3923, %v7969
        %v7971 = vpop.f32.mrf.mxu0
        %v7972 = vadd.f32 %v3923, %v7971
        %7973 = vmatmul.bf16.gmra.mxu0 %v3576
        %v7974 = vpop.f32.mrf.mxu0
        %v7975 = vadd.f32 %v3923, %v7974
        %v7976 = vpop.f32.mrf.mxu0
        %v7977 = vadd.f32 %v3923, %v7976
        %7978 = vmatmul.bf16.gmra.mxu0 %v3582
        %v7979 = vpop.f32.mrf.mxu0
        %v7980 = vadd.f32 %v3923, %v7979
        %v7981 = vpop.f32.mrf.mxu0
        %v7982 = vadd.f32 %v3923, %v7981
        %7983 = vmatmul.bf16.gmra.mxu0 %v3588
        %v7984 = vpop.f32.mrf.mxu0
        %v7985 = vadd.f32 %v3923, %v7984
        %v7986 = vpop.f32.mrf.mxu0
        %v7987 = vadd.f32 %v3923, %v7986
        %7988 = vmatmul.bf16.gmra.mxu0 %v3594
        %v7989 = vpop.f32.mrf.mxu0
        %v7990 = vadd.f32 %v3923, %v7989
        %v7991 = vpop.f32.mrf.mxu0
        %v7992 = vadd.f32 %v3923, %v7991
        %7993 = vmatmul.bf16.gmra.mxu0 %v3600
        %v7994 = vpop.f32.mrf.mxu0
        %v7995 = vadd.f32 %v3923, %v7994
        %v7996 = vpop.f32.mrf.mxu0
        %v7997 = vadd.f32 %v3923, %v7996
        %7998 = vmatmul.bf16.gmra.mxu0 %v3606
        %v7999 = vpop.f32.mrf.mxu0
        %v8000 = vadd.f32 %v3923, %v7999
        %v8001 = vpop.f32.mrf.mxu0
        %v8002 = vadd.f32 %v3923, %v8001
        %8003 = vmatmul.bf16.gmra.mxu0 %v3612
        %v8004 = vpop.f32.mrf.mxu0
        %v8005 = vadd.f32 %v3923, %v8004
        %v8006 = vpop.f32.mrf.mxu0
        %v8007 = vadd.f32 %v3923, %v8006
        %8008 = vmatmul.bf16.gmra.mxu0 %v3618
        %v8009 = vpop.f32.mrf.mxu0
        %v8010 = vadd.f32 %v3923, %v8009
        %v8011 = vpop.f32.mrf.mxu0
        %v8012 = vadd.f32 %v3923, %v8011
        %8013 = vmatmul.bf16.gmra.mxu0 %v3624
        %v8014 = vpop.f32.mrf.mxu0
        %v8015 = vadd.f32 %v3923, %v8014
        %v8016 = vpop.f32.mrf.mxu0
        %v8017 = vadd.f32 %v3923, %v8016
        %8018 = vmatmul.bf16.gmra.mxu0 %v3630
        %v8019 = vpop.f32.mrf.mxu0
        %v8020 = vadd.f32 %v3923, %v8019
        %v8021 = vpop.f32.mrf.mxu0
        %v8022 = vadd.f32 %v3923, %v8021
        %8023 = vmatmul.bf16.gmra.mxu0 %v3636
        %v8024 = vpop.f32.mrf.mxu0
        %v8025 = vadd.f32 %v3923, %v8024
        %v8026 = vpop.f32.mrf.mxu0
        %v8027 = vadd.f32 %v3923, %v8026
        %8028 = vmatmul.bf16.gmra.mxu0 %v3642
        %v8029 = vpop.f32.mrf.mxu0
        %v8030 = vadd.f32 %v3923, %v8029
        %v8031 = vpop.f32.mrf.mxu0
        %v8032 = vadd.f32 %v3923, %v8031
        %8033 = vmatmul.bf16.gmra.mxu0 %v3648
        %v8034 = vpop.f32.mrf.mxu0
        %v8035 = vadd.f32 %v3923, %v8034
        %v8036 = vpop.f32.mrf.mxu0
        %v8037 = vadd.f32 %v3923, %v8036
        %8038 = vmatmul.bf16.gmra.mxu0 %v3654
        %v8039 = vpop.f32.mrf.mxu0
        %v8040 = vadd.f32 %v3923, %v8039
        %v8041 = vpop.f32.mrf.mxu0
        %v8042 = vadd.f32 %v3923, %v8041
        %8043 = vmatmul.bf16.gmra.mxu0 %v3660
        %v8044 = vpop.f32.mrf.mxu0
        %v8045 = vadd.f32 %v3923, %v8044
        %v8046 = vpop.f32.mrf.mxu0
        %v8047 = vadd.f32 %v3923, %v8046
        %8048 = vmatmul.bf16.gmra.mxu0 %v3666
        %v8049 = vpop.f32.mrf.mxu0
        %v8050 = vadd.f32 %v3923, %v8049
        %v8051 = vpop.f32.mrf.mxu0
        %v8052 = vadd.f32 %v3923, %v8051
        %8053 = vmatmul.bf16.gmra.mxu0 %v3672
        %v8054 = vpop.f32.mrf.mxu0
        %v8055 = vadd.f32 %v3923, %v8054
        %v8056 = vpop.f32.mrf.mxu0
        %v8057 = vadd.f32 %v3923, %v8056
        %8058 = vmatmul.bf16.gmra.mxu0 %v3678
        %v8059 = vpop.f32.mrf.mxu0
        %v8060 = vadd.f32 %v3923, %v8059
        %v8061 = vpop.f32.mrf.mxu0
        %v8062 = vadd.f32 %v3923, %v8061
        %8063 = vmatmul.bf16.gmra.mxu0 %v3684
        %v8064 = vpop.f32.mrf.mxu0
        %v8065 = vadd.f32 %v3923, %v8064
        %v8066 = vpop.f32.mrf.mxu0
        %v8067 = vadd.f32 %v3923, %v8066
        %8068 = vmatmul.bf16.gmra.mxu0 %v3690
        %v8069 = vpop.f32.mrf.mxu0
        %v8070 = vadd.f32 %v3923, %v8069
        %v8071 = vpop.f32.mrf.mxu0
        %v8072 = vadd.f32 %v3923, %v8071
        %8073 = vmatmul.bf16.gmra.mxu0 %v3696
        %v8074 = vpop.f32.mrf.mxu0
        %v8075 = vadd.f32 %v3923, %v8074
        %v8076 = vpop.f32.mrf.mxu0
        %v8077 = vadd.f32 %v3923, %v8076
        %8078 = vmatmul.bf16.gmra.mxu0 %v3702
        %v8079 = vpop.f32.mrf.mxu0
        %v8080 = vadd.f32 %v3923, %v8079
        %v8081 = vpop.f32.mrf.mxu0
        %v8082 = vadd.f32 %v3923, %v8081
        %8083 = vmatmul.bf16.gmra.mxu0 %v3708
        %v8084 = vpop.f32.mrf.mxu0
        %v8085 = vadd.f32 %v3923, %v8084
        %v8086 = vpop.f32.mrf.mxu0
        %v8087 = vadd.f32 %v3923, %v8086
        %8088 = vmatmul.bf16.gmra.mxu0 %v3714
        %v8089 = vpop.f32.mrf.mxu0
        %v8090 = vadd.f32 %v3923, %v8089
        %v8091 = vpop.f32.mrf.mxu0
        %v8092 = vadd.f32 %v3923, %v8091
        %8093 = vmatmul.bf16.gmra.mxu0 %v3720
        %v8094 = vpop.f32.mrf.mxu0
        %v8095 = vadd.f32 %v3923, %v8094
        %v8096 = vpop.f32.mrf.mxu0
        %v8097 = vadd.f32 %v3923, %v8096
        %8098 = vdwg.mxu0
        %8099 = vmatpush.bf16.msra.mxu0 %v4567
        %8100 = vmatpush.bf16.msra.mxu0 %v4563
        %8101 = vmatpush.bf16.msra.mxu0 %v4559
        %8102 = vmatpush.bf16.msra.mxu0 %v4555
        %8103 = vmatpush.bf16.msra.mxu0 %v4551
        %8104 = vmatpush.bf16.msra.mxu0 %v4547
        %8105 = vmatpush.bf16.msra.mxu0 %v4543
        %8106 = vmatpush.bf16.msra.mxu0 %v4539
        %8107 = vmatmul.bf16.gmra.mxu0 %v3535
        %v8108 = vpop.f32.mrf.mxu0
        %v8109 = vadd.f32 %v7940, %v8108
        %v8110 = vpop.f32.mrf.mxu0
        %v8111 = vadd.f32 %v7942, %v8110
        %8112 = vmatmul.bf16.gmra.mxu0 %v3541
        %v8113 = vpop.f32.mrf.mxu0
        %v8114 = vadd.f32 %v7945, %v8113
        %v8115 = vpop.f32.mrf.mxu0
        %v8116 = vadd.f32 %v7947, %v8115
        %8117 = vmatmul.bf16.gmra.mxu0 %v3547
        %v8118 = vpop.f32.mrf.mxu0
        %v8119 = vadd.f32 %v7950, %v8118
        %v8120 = vpop.f32.mrf.mxu0
        %v8121 = vadd.f32 %v7952, %v8120
        %8122 = vmatmul.bf16.gmra.mxu0 %v3553
        %v8123 = vpop.f32.mrf.mxu0
        %v8124 = vadd.f32 %v7955, %v8123
        %v8125 = vpop.f32.mrf.mxu0
        %v8126 = vadd.f32 %v7957, %v8125
        %8127 = vmatmul.bf16.gmra.mxu0 %v3559
        %v8128 = vpop.f32.mrf.mxu0
        %v8129 = vadd.f32 %v7960, %v8128
        %v8130 = vpop.f32.mrf.mxu0
        %v8131 = vadd.f32 %v7962, %v8130
        %8132 = vmatmul.bf16.gmra.mxu0 %v3565
        %v8133 = vpop.f32.mrf.mxu0
        %v8134 = vadd.f32 %v7965, %v8133
        %v8135 = vpop.f32.mrf.mxu0
        %v8136 = vadd.f32 %v7967, %v8135
        %8137 = vmatmul.bf16.gmra.mxu0 %v3571
        %v8138 = vpop.f32.mrf.mxu0
        %v8139 = vadd.f32 %v7970, %v8138
        %v8140 = vpop.f32.mrf.mxu0
        %v8141 = vadd.f32 %v7972, %v8140
        %8142 = vmatmul.bf16.gmra.mxu0 %v3577
        %v8143 = vpop.f32.mrf.mxu0
        %v8144 = vadd.f32 %v7975, %v8143
        %v8145 = vpop.f32.mrf.mxu0
        %v8146 = vadd.f32 %v7977, %v8145
        %8147 = vmatmul.bf16.gmra.mxu0 %v3583
        %v8148 = vpop.f32.mrf.mxu0
        %v8149 = vadd.f32 %v7980, %v8148
        %v8150 = vpop.f32.mrf.mxu0
        %v8151 = vadd.f32 %v7982, %v8150
        %8152 = vmatmul.bf16.gmra.mxu0 %v3589
        %v8153 = vpop.f32.mrf.mxu0
        %v8154 = vadd.f32 %v7985, %v8153
        %v8155 = vpop.f32.mrf.mxu0
        %v8156 = vadd.f32 %v7987, %v8155
        %8157 = vmatmul.bf16.gmra.mxu0 %v3595
        %v8158 = vpop.f32.mrf.mxu0
        %v8159 = vadd.f32 %v7990, %v8158
        %v8160 = vpop.f32.mrf.mxu0
        %v8161 = vadd.f32 %v7992, %v8160
        %8162 = vmatmul.bf16.gmra.mxu0 %v3601
        %v8163 = vpop.f32.mrf.mxu0
        %v8164 = vadd.f32 %v7995, %v8163
        %v8165 = vpop.f32.mrf.mxu0
        %v8166 = vadd.f32 %v7997, %v8165
        %8167 = vmatmul.bf16.gmra.mxu0 %v3607
        %v8168 = vpop.f32.mrf.mxu0
        %v8169 = vadd.f32 %v8000, %v8168
        %v8170 = vpop.f32.mrf.mxu0
        %v8171 = vadd.f32 %v8002, %v8170
        %8172 = vmatmul.bf16.gmra.mxu0 %v3613
        %v8173 = vpop.f32.mrf.mxu0
        %v8174 = vadd.f32 %v8005, %v8173
        %v8175 = vpop.f32.mrf.mxu0
        %v8176 = vadd.f32 %v8007, %v8175
        %8177 = vmatmul.bf16.gmra.mxu0 %v3619
        %v8178 = vpop.f32.mrf.mxu0
        %v8179 = vadd.f32 %v8010, %v8178
        %v8180 = vpop.f32.mrf.mxu0
        %v8181 = vadd.f32 %v8012, %v8180
        %8182 = vmatmul.bf16.gmra.mxu0 %v3625
        %v8183 = vpop.f32.mrf.mxu0
        %v8184 = vadd.f32 %v8015, %v8183
        %v8185 = vpop.f32.mrf.mxu0
        %v8186 = vadd.f32 %v8017, %v8185
        %8187 = vmatmul.bf16.gmra.mxu0 %v3631
        %v8188 = vpop.f32.mrf.mxu0
        %v8189 = vadd.f32 %v8020, %v8188
        %v8190 = vpop.f32.mrf.mxu0
        %v8191 = vadd.f32 %v8022, %v8190
        %8192 = vmatmul.bf16.gmra.mxu0 %v3637
        %v8193 = vpop.f32.mrf.mxu0
        %v8194 = vadd.f32 %v8025, %v8193
        %v8195 = vpop.f32.mrf.mxu0
        %v8196 = vadd.f32 %v8027, %v8195
        %8197 = vmatmul.bf16.gmra.mxu0 %v3643
        %v8198 = vpop.f32.mrf.mxu0
        %v8199 = vadd.f32 %v8030, %v8198
        %v8200 = vpop.f32.mrf.mxu0
        %v8201 = vadd.f32 %v8032, %v8200
        %8202 = vmatmul.bf16.gmra.mxu0 %v3649
        %v8203 = vpop.f32.mrf.mxu0
        %v8204 = vadd.f32 %v8035, %v8203
        %v8205 = vpop.f32.mrf.mxu0
        %v8206 = vadd.f32 %v8037, %v8205
        %8207 = vmatmul.bf16.gmra.mxu0 %v3655
        %v8208 = vpop.f32.mrf.mxu0
        %v8209 = vadd.f32 %v8040, %v8208
        %v8210 = vpop.f32.mrf.mxu0
        %v8211 = vadd.f32 %v8042, %v8210
        %8212 = vmatmul.bf16.gmra.mxu0 %v3661
        %v8213 = vpop.f32.mrf.mxu0
        %v8214 = vadd.f32 %v8045, %v8213
        %v8215 = vpop.f32.mrf.mxu0
        %v8216 = vadd.f32 %v8047, %v8215
        %8217 = vmatmul.bf16.gmra.mxu0 %v3667
        %v8218 = vpop.f32.mrf.mxu0
        %v8219 = vadd.f32 %v8050, %v8218
        %v8220 = vpop.f32.mrf.mxu0
        %v8221 = vadd.f32 %v8052, %v8220
        %8222 = vmatmul.bf16.gmra.mxu0 %v3673
        %v8223 = vpop.f32.mrf.mxu0
        %v8224 = vadd.f32 %v8055, %v8223
        %v8225 = vpop.f32.mrf.mxu0
        %v8226 = vadd.f32 %v8057, %v8225
        %8227 = vmatmul.bf16.gmra.mxu0 %v3679
        %v8228 = vpop.f32.mrf.mxu0
        %v8229 = vadd.f32 %v8060, %v8228
        %v8230 = vpop.f32.mrf.mxu0
        %v8231 = vadd.f32 %v8062, %v8230
        %8232 = vmatmul.bf16.gmra.mxu0 %v3685
        %v8233 = vpop.f32.mrf.mxu0
        %v8234 = vadd.f32 %v8065, %v8233
        %v8235 = vpop.f32.mrf.mxu0
        %v8236 = vadd.f32 %v8067, %v8235
        %8237 = vmatmul.bf16.gmra.mxu0 %v3691
        %v8238 = vpop.f32.mrf.mxu0
        %v8239 = vadd.f32 %v8070, %v8238
        %v8240 = vpop.f32.mrf.mxu0
        %v8241 = vadd.f32 %v8072, %v8240
        %8242 = vmatmul.bf16.gmra.mxu0 %v3697
        %v8243 = vpop.f32.mrf.mxu0
        %v8244 = vadd.f32 %v8075, %v8243
        %v8245 = vpop.f32.mrf.mxu0
        %v8246 = vadd.f32 %v8077, %v8245
        %8247 = vmatmul.bf16.gmra.mxu0 %v3703
        %v8248 = vpop.f32.mrf.mxu0
        %v8249 = vadd.f32 %v8080, %v8248
        %v8250 = vpop.f32.mrf.mxu0
        %v8251 = vadd.f32 %v8082, %v8250
        %8252 = vmatmul.bf16.gmra.mxu0 %v3709
        %v8253 = vpop.f32.mrf.mxu0
        %v8254 = vadd.f32 %v8085, %v8253
        %v8255 = vpop.f32.mrf.mxu0
        %v8256 = vadd.f32 %v8087, %v8255
        %8257 = vmatmul.bf16.gmra.mxu0 %v3715
        %v8258 = vpop.f32.mrf.mxu0
        %v8259 = vadd.f32 %v8090, %v8258
        %v8260 = vpop.f32.mrf.mxu0
        %v8261 = vadd.f32 %v8092, %v8260
        %8262 = vmatmul.bf16.gmra.mxu0 %v3721
        %v8263 = vpop.f32.mrf.mxu0
        %v8264 = vadd.f32 %v8095, %v8263
        %v8265 = vpop.f32.mrf.mxu0
        %v8266 = vadd.f32 %v8097, %v8265
        %8267 = vdwg.mxu0
        %8268 = vmatpush.bf16.msra.mxu0 %v4599
        %8269 = vmatpush.bf16.msra.mxu0 %v4595
        %8270 = vmatpush.bf16.msra.mxu0 %v4591
        %8271 = vmatpush.bf16.msra.mxu0 %v4587
        %8272 = vmatpush.bf16.msra.mxu0 %v4583
        %8273 = vmatpush.bf16.msra.mxu0 %v4579
        %8274 = vmatpush.bf16.msra.mxu0 %v4575
        %8275 = vmatpush.bf16.msra.mxu0 %v4571
        %8276 = vmatmul.bf16.gmra.mxu0 %v3536
        %v8277 = vpop.f32.mrf.mxu0
        %v8278 = vadd.f32 %v8109, %v8277
        %v8279 = vpop.f32.mrf.mxu0
        %v8280 = vadd.f32 %v8111, %v8279
        %8281 = vmatmul.bf16.gmra.mxu0 %v3542
        %v8282 = vpop.f32.mrf.mxu0
        %v8283 = vadd.f32 %v8114, %v8282
        %v8284 = vpop.f32.mrf.mxu0
        %v8285 = vadd.f32 %v8116, %v8284
        %8286 = vmatmul.bf16.gmra.mxu0 %v3548
        %v8287 = vpop.f32.mrf.mxu0
        %v8288 = vadd.f32 %v8119, %v8287
        %v8289 = vpop.f32.mrf.mxu0
        %v8290 = vadd.f32 %v8121, %v8289
        %8291 = vmatmul.bf16.gmra.mxu0 %v3554
        %v8292 = vpop.f32.mrf.mxu0
        %v8293 = vadd.f32 %v8124, %v8292
        %v8294 = vpop.f32.mrf.mxu0
        %v8295 = vadd.f32 %v8126, %v8294
        %8296 = vmatmul.bf16.gmra.mxu0 %v3560
        %v8297 = vpop.f32.mrf.mxu0
        %v8298 = vadd.f32 %v8129, %v8297
        %v8299 = vpop.f32.mrf.mxu0
        %v8300 = vadd.f32 %v8131, %v8299
        %8301 = vmatmul.bf16.gmra.mxu0 %v3566
        %v8302 = vpop.f32.mrf.mxu0
        %v8303 = vadd.f32 %v8134, %v8302
        %v8304 = vpop.f32.mrf.mxu0
        %v8305 = vadd.f32 %v8136, %v8304
        %8306 = vmatmul.bf16.gmra.mxu0 %v3572
        %v8307 = vpop.f32.mrf.mxu0
        %v8308 = vadd.f32 %v8139, %v8307
        %v8309 = vpop.f32.mrf.mxu0
        %v8310 = vadd.f32 %v8141, %v8309
        %8311 = vmatmul.bf16.gmra.mxu0 %v3578
        %v8312 = vpop.f32.mrf.mxu0
        %v8313 = vadd.f32 %v8144, %v8312
        %v8314 = vpop.f32.mrf.mxu0
        %v8315 = vadd.f32 %v8146, %v8314
        %8316 = vmatmul.bf16.gmra.mxu0 %v3584
        %v8317 = vpop.f32.mrf.mxu0
        %v8318 = vadd.f32 %v8149, %v8317
        %v8319 = vpop.f32.mrf.mxu0
        %v8320 = vadd.f32 %v8151, %v8319
        %8321 = vmatmul.bf16.gmra.mxu0 %v3590
        %v8322 = vpop.f32.mrf.mxu0
        %v8323 = vadd.f32 %v8154, %v8322
        %v8324 = vpop.f32.mrf.mxu0
        %v8325 = vadd.f32 %v8156, %v8324
        %8326 = vmatmul.bf16.gmra.mxu0 %v3596
        %v8327 = vpop.f32.mrf.mxu0
        %v8328 = vadd.f32 %v8159, %v8327
        %v8329 = vpop.f32.mrf.mxu0
        %v8330 = vadd.f32 %v8161, %v8329
        %8331 = vmatmul.bf16.gmra.mxu0 %v3602
        %v8332 = vpop.f32.mrf.mxu0
        %v8333 = vadd.f32 %v8164, %v8332
        %v8334 = vpop.f32.mrf.mxu0
        %v8335 = vadd.f32 %v8166, %v8334
        %8336 = vmatmul.bf16.gmra.mxu0 %v3608
        %v8337 = vpop.f32.mrf.mxu0
        %v8338 = vadd.f32 %v8169, %v8337
        %v8339 = vpop.f32.mrf.mxu0
        %v8340 = vadd.f32 %v8171, %v8339
        %8341 = vmatmul.bf16.gmra.mxu0 %v3614
        %v8342 = vpop.f32.mrf.mxu0
        %v8343 = vadd.f32 %v8174, %v8342
        %v8344 = vpop.f32.mrf.mxu0
        %v8345 = vadd.f32 %v8176, %v8344
        %8346 = vmatmul.bf16.gmra.mxu0 %v3620
        %v8347 = vpop.f32.mrf.mxu0
        %v8348 = vadd.f32 %v8179, %v8347
        %v8349 = vpop.f32.mrf.mxu0
        %v8350 = vadd.f32 %v8181, %v8349
        %8351 = vmatmul.bf16.gmra.mxu0 %v3626
        %v8352 = vpop.f32.mrf.mxu0
        %v8353 = vadd.f32 %v8184, %v8352
        %v8354 = vpop.f32.mrf.mxu0
        %v8355 = vadd.f32 %v8186, %v8354
        %8356 = vmatmul.bf16.gmra.mxu0 %v3632
        %v8357 = vpop.f32.mrf.mxu0
        %v8358 = vadd.f32 %v8189, %v8357
        %v8359 = vpop.f32.mrf.mxu0
        %v8360 = vadd.f32 %v8191, %v8359
        %8361 = vmatmul.bf16.gmra.mxu0 %v3638
        %v8362 = vpop.f32.mrf.mxu0
        %v8363 = vadd.f32 %v8194, %v8362
        %v8364 = vpop.f32.mrf.mxu0
        %v8365 = vadd.f32 %v8196, %v8364
        %8366 = vmatmul.bf16.gmra.mxu0 %v3644
        %v8367 = vpop.f32.mrf.mxu0
        %v8368 = vadd.f32 %v8199, %v8367
        %v8369 = vpop.f32.mrf.mxu0
        %v8370 = vadd.f32 %v8201, %v8369
        %8371 = vmatmul.bf16.gmra.mxu0 %v3650
        %v8372 = vpop.f32.mrf.mxu0
        %v8373 = vadd.f32 %v8204, %v8372
        %v8374 = vpop.f32.mrf.mxu0
        %v8375 = vadd.f32 %v8206, %v8374
        %8376 = vmatmul.bf16.gmra.mxu0 %v3656
        %v8377 = vpop.f32.mrf.mxu0
        %v8378 = vadd.f32 %v8209, %v8377
        %v8379 = vpop.f32.mrf.mxu0
        %v8380 = vadd.f32 %v8211, %v8379
        %8381 = vmatmul.bf16.gmra.mxu0 %v3662
        %v8382 = vpop.f32.mrf.mxu0
        %v8383 = vadd.f32 %v8214, %v8382
        %v8384 = vpop.f32.mrf.mxu0
        %v8385 = vadd.f32 %v8216, %v8384
        %8386 = vmatmul.bf16.gmra.mxu0 %v3668
        %v8387 = vpop.f32.mrf.mxu0
        %v8388 = vadd.f32 %v8219, %v8387
        %v8389 = vpop.f32.mrf.mxu0
        %v8390 = vadd.f32 %v8221, %v8389
        %8391 = vmatmul.bf16.gmra.mxu0 %v3674
        %v8392 = vpop.f32.mrf.mxu0
        %v8393 = vadd.f32 %v8224, %v8392
        %v8394 = vpop.f32.mrf.mxu0
        %v8395 = vadd.f32 %v8226, %v8394
        %8396 = vmatmul.bf16.gmra.mxu0 %v3680
        %v8397 = vpop.f32.mrf.mxu0
        %v8398 = vadd.f32 %v8229, %v8397
        %v8399 = vpop.f32.mrf.mxu0
        %v8400 = vadd.f32 %v8231, %v8399
        %8401 = vmatmul.bf16.gmra.mxu0 %v3686
        %v8402 = vpop.f32.mrf.mxu0
        %v8403 = vadd.f32 %v8234, %v8402
        %v8404 = vpop.f32.mrf.mxu0
        %v8405 = vadd.f32 %v8236, %v8404
        %8406 = vmatmul.bf16.gmra.mxu0 %v3692
        %v8407 = vpop.f32.mrf.mxu0
        %v8408 = vadd.f32 %v8239, %v8407
        %v8409 = vpop.f32.mrf.mxu0
        %v8410 = vadd.f32 %v8241, %v8409
        %8411 = vmatmul.bf16.gmra.mxu0 %v3698
        %v8412 = vpop.f32.mrf.mxu0
        %v8413 = vadd.f32 %v8244, %v8412
        %v8414 = vpop.f32.mrf.mxu0
        %v8415 = vadd.f32 %v8246, %v8414
        %8416 = vmatmul.bf16.gmra.mxu0 %v3704
        %v8417 = vpop.f32.mrf.mxu0
        %v8418 = vadd.f32 %v8249, %v8417
        %v8419 = vpop.f32.mrf.mxu0
        %v8420 = vadd.f32 %v8251, %v8419
        %8421 = vmatmul.bf16.gmra.mxu0 %v3710
        %v8422 = vpop.f32.mrf.mxu0
        %v8423 = vadd.f32 %v8254, %v8422
        %v8424 = vpop.f32.mrf.mxu0
        %v8425 = vadd.f32 %v8256, %v8424
        %8426 = vmatmul.bf16.gmra.mxu0 %v3716
        %v8427 = vpop.f32.mrf.mxu0
        %v8428 = vadd.f32 %v8259, %v8427
        %v8429 = vpop.f32.mrf.mxu0
        %v8430 = vadd.f32 %v8261, %v8429
        %8431 = vmatmul.bf16.gmra.mxu0 %v3722
        %v8432 = vpop.f32.mrf.mxu0
        %v8433 = vadd.f32 %v8264, %v8432
        %v8434 = vpop.f32.mrf.mxu0
        %v8435 = vadd.f32 %v8266, %v8434
        %8436 = vdwg.mxu0
        %8437 = vmatpush.bf16.msra.mxu0 %v4631
        %8438 = vmatpush.bf16.msra.mxu0 %v4627
        %8439 = vmatpush.bf16.msra.mxu0 %v4623
        %8440 = vmatpush.bf16.msra.mxu0 %v4619
        %8441 = vmatpush.bf16.msra.mxu0 %v4615
        %8442 = vmatpush.bf16.msra.mxu0 %v4611
        %8443 = vmatpush.bf16.msra.mxu0 %v4607
        %8444 = vmatpush.bf16.msra.mxu0 %v4603
        %8445 = vmatmul.bf16.gmra.mxu0 %v3537
        %v8446 = vpop.f32.mrf.mxu0
        %v8447 = vadd.f32 %v8278, %v8446
        %v8448 = vpop.f32.mrf.mxu0
        %v8449 = vadd.f32 %v8280, %v8448
        %8450 = vmatmul.bf16.gmra.mxu0 %v3543
        %v8451 = vpop.f32.mrf.mxu0
        %v8452 = vadd.f32 %v8283, %v8451
        %v8453 = vpop.f32.mrf.mxu0
        %v8454 = vadd.f32 %v8285, %v8453
        %8455 = vmatmul.bf16.gmra.mxu0 %v3549
        %v8456 = vpop.f32.mrf.mxu0
        %v8457 = vadd.f32 %v8288, %v8456
        %v8458 = vpop.f32.mrf.mxu0
        %v8459 = vadd.f32 %v8290, %v8458
        %8460 = vmatmul.bf16.gmra.mxu0 %v3555
        %v8461 = vpop.f32.mrf.mxu0
        %v8462 = vadd.f32 %v8293, %v8461
        %v8463 = vpop.f32.mrf.mxu0
        %v8464 = vadd.f32 %v8295, %v8463
        %8465 = vmatmul.bf16.gmra.mxu0 %v3561
        %v8466 = vpop.f32.mrf.mxu0
        %v8467 = vadd.f32 %v8298, %v8466
        %v8468 = vpop.f32.mrf.mxu0
        %v8469 = vadd.f32 %v8300, %v8468
        %8470 = vmatmul.bf16.gmra.mxu0 %v3567
        %v8471 = vpop.f32.mrf.mxu0
        %v8472 = vadd.f32 %v8303, %v8471
        %v8473 = vpop.f32.mrf.mxu0
        %v8474 = vadd.f32 %v8305, %v8473
        %8475 = vmatmul.bf16.gmra.mxu0 %v3573
        %v8476 = vpop.f32.mrf.mxu0
        %v8477 = vadd.f32 %v8308, %v8476
        %v8478 = vpop.f32.mrf.mxu0
        %v8479 = vadd.f32 %v8310, %v8478
        %8480 = vmatmul.bf16.gmra.mxu0 %v3579
        %v8481 = vpop.f32.mrf.mxu0
        %v8482 = vadd.f32 %v8313, %v8481
        %v8483 = vpop.f32.mrf.mxu0
        %v8484 = vadd.f32 %v8315, %v8483
        %8485 = vmatmul.bf16.gmra.mxu0 %v3585
        %v8486 = vpop.f32.mrf.mxu0
        %v8487 = vadd.f32 %v8318, %v8486
        %v8488 = vpop.f32.mrf.mxu0
        %v8489 = vadd.f32 %v8320, %v8488
        %8490 = vmatmul.bf16.gmra.mxu0 %v3591
        %v8491 = vpop.f32.mrf.mxu0
        %v8492 = vadd.f32 %v8323, %v8491
        %v8493 = vpop.f32.mrf.mxu0
        %v8494 = vadd.f32 %v8325, %v8493
        %8495 = vmatmul.bf16.gmra.mxu0 %v3597
        %v8496 = vpop.f32.mrf.mxu0
        %v8497 = vadd.f32 %v8328, %v8496
        %v8498 = vpop.f32.mrf.mxu0
        %v8499 = vadd.f32 %v8330, %v8498
        %8500 = vmatmul.bf16.gmra.mxu0 %v3603
        %v8501 = vpop.f32.mrf.mxu0
        %v8502 = vadd.f32 %v8333, %v8501
        %v8503 = vpop.f32.mrf.mxu0
        %v8504 = vadd.f32 %v8335, %v8503
        %8505 = vmatmul.bf16.gmra.mxu0 %v3609
        %v8506 = vpop.f32.mrf.mxu0
        %v8507 = vadd.f32 %v8338, %v8506
        %v8508 = vpop.f32.mrf.mxu0
        %v8509 = vadd.f32 %v8340, %v8508
        %8510 = vmatmul.bf16.gmra.mxu0 %v3615
        %v8511 = vpop.f32.mrf.mxu0
        %v8512 = vadd.f32 %v8343, %v8511
        %v8513 = vpop.f32.mrf.mxu0
        %v8514 = vadd.f32 %v8345, %v8513
        %8515 = vmatmul.bf16.gmra.mxu0 %v3621
        %v8516 = vpop.f32.mrf.mxu0
        %v8517 = vadd.f32 %v8348, %v8516
        %v8518 = vpop.f32.mrf.mxu0
        %v8519 = vadd.f32 %v8350, %v8518
        %8520 = vmatmul.bf16.gmra.mxu0 %v3627
        %v8521 = vpop.f32.mrf.mxu0
        %v8522 = vadd.f32 %v8353, %v8521
        %v8523 = vpop.f32.mrf.mxu0
        %v8524 = vadd.f32 %v8355, %v8523
        %8525 = vmatmul.bf16.gmra.mxu0 %v3633
        %v8526 = vpop.f32.mrf.mxu0
        %v8527 = vadd.f32 %v8358, %v8526
        %v8528 = vpop.f32.mrf.mxu0
        %v8529 = vadd.f32 %v8360, %v8528
        %8530 = vmatmul.bf16.gmra.mxu0 %v3639
        %v8531 = vpop.f32.mrf.mxu0
        %v8532 = vadd.f32 %v8363, %v8531
        %v8533 = vpop.f32.mrf.mxu0
        %v8534 = vadd.f32 %v8365, %v8533
        %8535 = vmatmul.bf16.gmra.mxu0 %v3645
        %v8536 = vpop.f32.mrf.mxu0
        %v8537 = vadd.f32 %v8368, %v8536
        %v8538 = vpop.f32.mrf.mxu0
        %v8539 = vadd.f32 %v8370, %v8538
        %8540 = vmatmul.bf16.gmra.mxu0 %v3651
        %v8541 = vpop.f32.mrf.mxu0
        %v8542 = vadd.f32 %v8373, %v8541
        %v8543 = vpop.f32.mrf.mxu0
        %v8544 = vadd.f32 %v8375, %v8543
        %8545 = vmatmul.bf16.gmra.mxu0 %v3657
        %v8546 = vpop.f32.mrf.mxu0
        %v8547 = vadd.f32 %v8378, %v8546
        %v8548 = vpop.f32.mrf.mxu0
        %v8549 = vadd.f32 %v8380, %v8548
        %8550 = vmatmul.bf16.gmra.mxu0 %v3663
        %v8551 = vpop.f32.mrf.mxu0
        %v8552 = vadd.f32 %v8383, %v8551
        %v8553 = vpop.f32.mrf.mxu0
        %v8554 = vadd.f32 %v8385, %v8553
        %8555 = vmatmul.bf16.gmra.mxu0 %v3669
        %v8556 = vpop.f32.mrf.mxu0
        %v8557 = vadd.f32 %v8388, %v8556
        %v8558 = vpop.f32.mrf.mxu0
        %v8559 = vadd.f32 %v8390, %v8558
        %8560 = vmatmul.bf16.gmra.mxu0 %v3675
        %v8561 = vpop.f32.mrf.mxu0
        %v8562 = vadd.f32 %v8393, %v8561
        %v8563 = vpop.f32.mrf.mxu0
        %v8564 = vadd.f32 %v8395, %v8563
        %8565 = vmatmul.bf16.gmra.mxu0 %v3681
        %v8566 = vpop.f32.mrf.mxu0
        %v8567 = vadd.f32 %v8398, %v8566
        %v8568 = vpop.f32.mrf.mxu0
        %v8569 = vadd.f32 %v8400, %v8568
        %8570 = vmatmul.bf16.gmra.mxu0 %v3687
        %v8571 = vpop.f32.mrf.mxu0
        %v8572 = vadd.f32 %v8403, %v8571
        %v8573 = vpop.f32.mrf.mxu0
        %v8574 = vadd.f32 %v8405, %v8573
        %8575 = vmatmul.bf16.gmra.mxu0 %v3693
        %v8576 = vpop.f32.mrf.mxu0
        %v8577 = vadd.f32 %v8408, %v8576
        %v8578 = vpop.f32.mrf.mxu0
        %v8579 = vadd.f32 %v8410, %v8578
        %8580 = vmatmul.bf16.gmra.mxu0 %v3699
        %v8581 = vpop.f32.mrf.mxu0
        %v8582 = vadd.f32 %v8413, %v8581
        %v8583 = vpop.f32.mrf.mxu0
        %v8584 = vadd.f32 %v8415, %v8583
        %8585 = vmatmul.bf16.gmra.mxu0 %v3705
        %v8586 = vpop.f32.mrf.mxu0
        %v8587 = vadd.f32 %v8418, %v8586
        %v8588 = vpop.f32.mrf.mxu0
        %v8589 = vadd.f32 %v8420, %v8588
        %8590 = vmatmul.bf16.gmra.mxu0 %v3711
        %v8591 = vpop.f32.mrf.mxu0
        %v8592 = vadd.f32 %v8423, %v8591
        %v8593 = vpop.f32.mrf.mxu0
        %v8594 = vadd.f32 %v8425, %v8593
        %8595 = vmatmul.bf16.gmra.mxu0 %v3717
        %v8596 = vpop.f32.mrf.mxu0
        %v8597 = vadd.f32 %v8428, %v8596
        %v8598 = vpop.f32.mrf.mxu0
        %v8599 = vadd.f32 %v8430, %v8598
        %8600 = vmatmul.bf16.gmra.mxu0 %v3723
        %v8601 = vpop.f32.mrf.mxu0
        %v8602 = vadd.f32 %v8433, %v8601
        %v8603 = vpop.f32.mrf.mxu0
        %v8604 = vadd.f32 %v8435, %v8603
        %8605 = vdwg.mxu0
        %8606 = vmatpush.bf16.msra.mxu0 %v4663
        %8607 = vmatpush.bf16.msra.mxu0 %v4659
        %8608 = vmatpush.bf16.msra.mxu0 %v4655
        %8609 = vmatpush.bf16.msra.mxu0 %v4651
        %8610 = vmatpush.bf16.msra.mxu0 %v4647
        %8611 = vmatpush.bf16.msra.mxu0 %v4643
        %8612 = vmatpush.bf16.msra.mxu0 %v4639
        %8613 = vmatpush.bf16.msra.mxu0 %v4635
        %8614 = vmatmul.bf16.gmra.mxu0 %v3538
        %v8615 = vpop.f32.mrf.mxu0
        %v8616 = vadd.f32 %v8447, %v8615
        %v8617 = vpop.f32.mrf.mxu0
        %v8618 = vadd.f32 %v8449, %v8617
        %8619 = vmatmul.bf16.gmra.mxu0 %v3544
        %v8620 = vpop.f32.mrf.mxu0
        %v8621 = vadd.f32 %v8452, %v8620
        %v8622 = vpop.f32.mrf.mxu0
        %v8623 = vadd.f32 %v8454, %v8622
        %8624 = vmatmul.bf16.gmra.mxu0 %v3550
        %v8625 = vpop.f32.mrf.mxu0
        %v8626 = vadd.f32 %v8457, %v8625
        %v8627 = vpop.f32.mrf.mxu0
        %v8628 = vadd.f32 %v8459, %v8627
        %8629 = vmatmul.bf16.gmra.mxu0 %v3556
        %v8630 = vpop.f32.mrf.mxu0
        %v8631 = vadd.f32 %v8462, %v8630
        %v8632 = vpop.f32.mrf.mxu0
        %v8633 = vadd.f32 %v8464, %v8632
        %8634 = vmatmul.bf16.gmra.mxu0 %v3562
        %v8635 = vpop.f32.mrf.mxu0
        %v8636 = vadd.f32 %v8467, %v8635
        %v8637 = vpop.f32.mrf.mxu0
        %v8638 = vadd.f32 %v8469, %v8637
        %8639 = vmatmul.bf16.gmra.mxu0 %v3568
        %v8640 = vpop.f32.mrf.mxu0
        %v8641 = vadd.f32 %v8472, %v8640
        %v8642 = vpop.f32.mrf.mxu0
        %v8643 = vadd.f32 %v8474, %v8642
        %8644 = vmatmul.bf16.gmra.mxu0 %v3574
        %v8645 = vpop.f32.mrf.mxu0
        %v8646 = vadd.f32 %v8477, %v8645
        %v8647 = vpop.f32.mrf.mxu0
        %v8648 = vadd.f32 %v8479, %v8647
        %8649 = vmatmul.bf16.gmra.mxu0 %v3580
        %v8650 = vpop.f32.mrf.mxu0
        %v8651 = vadd.f32 %v8482, %v8650
        %v8652 = vpop.f32.mrf.mxu0
        %v8653 = vadd.f32 %v8484, %v8652
        %8654 = vmatmul.bf16.gmra.mxu0 %v3586
        %v8655 = vpop.f32.mrf.mxu0
        %v8656 = vadd.f32 %v8487, %v8655
        %v8657 = vpop.f32.mrf.mxu0
        %v8658 = vadd.f32 %v8489, %v8657
        %8659 = vmatmul.bf16.gmra.mxu0 %v3592
        %v8660 = vpop.f32.mrf.mxu0
        %v8661 = vadd.f32 %v8492, %v8660
        %v8662 = vpop.f32.mrf.mxu0
        %v8663 = vadd.f32 %v8494, %v8662
        %8664 = vmatmul.bf16.gmra.mxu0 %v3598
        %v8665 = vpop.f32.mrf.mxu0
        %v8666 = vadd.f32 %v8497, %v8665
        %v8667 = vpop.f32.mrf.mxu0
        %v8668 = vadd.f32 %v8499, %v8667
        %8669 = vmatmul.bf16.gmra.mxu0 %v3604
        %v8670 = vpop.f32.mrf.mxu0
        %v8671 = vadd.f32 %v8502, %v8670
        %v8672 = vpop.f32.mrf.mxu0
        %v8673 = vadd.f32 %v8504, %v8672
        %8674 = vmatmul.bf16.gmra.mxu0 %v3610
        %v8675 = vpop.f32.mrf.mxu0
        %v8676 = vadd.f32 %v8507, %v8675
        %v8677 = vpop.f32.mrf.mxu0
        %v8678 = vadd.f32 %v8509, %v8677
        %8679 = vmatmul.bf16.gmra.mxu0 %v3616
        %v8680 = vpop.f32.mrf.mxu0
        %v8681 = vadd.f32 %v8512, %v8680
        %v8682 = vpop.f32.mrf.mxu0
        %v8683 = vadd.f32 %v8514, %v8682
        %8684 = vmatmul.bf16.gmra.mxu0 %v3622
        %v8685 = vpop.f32.mrf.mxu0
        %v8686 = vadd.f32 %v8517, %v8685
        %v8687 = vpop.f32.mrf.mxu0
        %v8688 = vadd.f32 %v8519, %v8687
        %8689 = vmatmul.bf16.gmra.mxu0 %v3628
        %v8690 = vpop.f32.mrf.mxu0
        %v8691 = vadd.f32 %v8522, %v8690
        %v8692 = vpop.f32.mrf.mxu0
        %v8693 = vadd.f32 %v8524, %v8692
        %8694 = vmatmul.bf16.gmra.mxu0 %v3634
        %v8695 = vpop.f32.mrf.mxu0
        %v8696 = vadd.f32 %v8527, %v8695
        %v8697 = vpop.f32.mrf.mxu0
        %v8698 = vadd.f32 %v8529, %v8697
        %8699 = vmatmul.bf16.gmra.mxu0 %v3640
        %v8700 = vpop.f32.mrf.mxu0
        %v8701 = vadd.f32 %v8532, %v8700
        %v8702 = vpop.f32.mrf.mxu0
        %v8703 = vadd.f32 %v8534, %v8702
        %8704 = vmatmul.bf16.gmra.mxu0 %v3646
        %v8705 = vpop.f32.mrf.mxu0
        %v8706 = vadd.f32 %v8537, %v8705
        %v8707 = vpop.f32.mrf.mxu0
        %v8708 = vadd.f32 %v8539, %v8707
        %8709 = vmatmul.bf16.gmra.mxu0 %v3652
        %v8710 = vpop.f32.mrf.mxu0
        %v8711 = vadd.f32 %v8542, %v8710
        %v8712 = vpop.f32.mrf.mxu0
        %v8713 = vadd.f32 %v8544, %v8712
        %8714 = vmatmul.bf16.gmra.mxu0 %v3658
        %v8715 = vpop.f32.mrf.mxu0
        %v8716 = vadd.f32 %v8547, %v8715
        %v8717 = vpop.f32.mrf.mxu0
        %v8718 = vadd.f32 %v8549, %v8717
        %8719 = vmatmul.bf16.gmra.mxu0 %v3664
        %v8720 = vpop.f32.mrf.mxu0
        %v8721 = vadd.f32 %v8552, %v8720
        %v8722 = vpop.f32.mrf.mxu0
        %v8723 = vadd.f32 %v8554, %v8722
        %8724 = vmatmul.bf16.gmra.mxu0 %v3670
        %v8725 = vpop.f32.mrf.mxu0
        %v8726 = vadd.f32 %v8557, %v8725
        %v8727 = vpop.f32.mrf.mxu0
        %v8728 = vadd.f32 %v8559, %v8727
        %8729 = vmatmul.bf16.gmra.mxu0 %v3676
        %v8730 = vpop.f32.mrf.mxu0
        %v8731 = vadd.f32 %v8562, %v8730
        %v8732 = vpop.f32.mrf.mxu0
        %v8733 = vadd.f32 %v8564, %v8732
        %8734 = vmatmul.bf16.gmra.mxu0 %v3682
        %v8735 = vpop.f32.mrf.mxu0
        %v8736 = vadd.f32 %v8567, %v8735
        %v8737 = vpop.f32.mrf.mxu0
        %v8738 = vadd.f32 %v8569, %v8737
        %8739 = vmatmul.bf16.gmra.mxu0 %v3688
        %v8740 = vpop.f32.mrf.mxu0
        %v8741 = vadd.f32 %v8572, %v8740
        %v8742 = vpop.f32.mrf.mxu0
        %v8743 = vadd.f32 %v8574, %v8742
        %8744 = vmatmul.bf16.gmra.mxu0 %v3694
        %v8745 = vpop.f32.mrf.mxu0
        %v8746 = vadd.f32 %v8577, %v8745
        %v8747 = vpop.f32.mrf.mxu0
        %v8748 = vadd.f32 %v8579, %v8747
        %8749 = vmatmul.bf16.gmra.mxu0 %v3700
        %v8750 = vpop.f32.mrf.mxu0
        %v8751 = vadd.f32 %v8582, %v8750
        %v8752 = vpop.f32.mrf.mxu0
        %v8753 = vadd.f32 %v8584, %v8752
        %8754 = vmatmul.bf16.gmra.mxu0 %v3706
        %v8755 = vpop.f32.mrf.mxu0
        %v8756 = vadd.f32 %v8587, %v8755
        %v8757 = vpop.f32.mrf.mxu0
        %v8758 = vadd.f32 %v8589, %v8757
        %8759 = vmatmul.bf16.gmra.mxu0 %v3712
        %v8760 = vpop.f32.mrf.mxu0
        %v8761 = vadd.f32 %v8592, %v8760
        %v8762 = vpop.f32.mrf.mxu0
        %v8763 = vadd.f32 %v8594, %v8762
        %8764 = vmatmul.bf16.gmra.mxu0 %v3718
        %v8765 = vpop.f32.mrf.mxu0
        %v8766 = vadd.f32 %v8597, %v8765
        %v8767 = vpop.f32.mrf.mxu0
        %v8768 = vadd.f32 %v8599, %v8767
        %8769 = vmatmul.bf16.gmra.mxu0 %v3724
        %v8770 = vpop.f32.mrf.mxu0
        %v8771 = vadd.f32 %v8602, %v8770
        %v8772 = vpop.f32.mrf.mxu0
        %v8773 = vadd.f32 %v8604, %v8772
        %8774 = vdwg.mxu0
        %8775 = vmatpush.bf16.msra.mxu0 %v4695
        %8776 = vmatpush.bf16.msra.mxu0 %v4691
        %8777 = vmatpush.bf16.msra.mxu0 %v4687
        %8778 = vmatpush.bf16.msra.mxu0 %v4683
        %8779 = vmatpush.bf16.msra.mxu0 %v4679
        %8780 = vmatpush.bf16.msra.mxu0 %v4675
        %8781 = vmatpush.bf16.msra.mxu0 %v4671
        %8782 = vmatpush.bf16.msra.mxu0 %v4667
        %8783 = vmatmul.bf16.gmra.mxu0 %v3539
        %v8784 = vpop.f32.mrf.mxu0
        %v8785 = vadd.f32 %v8616, %v8784
        %v8786 = vpop.f32.mrf.mxu0
        %v8787 = vadd.f32 %v8618, %v8786
        %8788 = vmatmul.bf16.gmra.mxu0 %v3545
        %v8789 = vpop.f32.mrf.mxu0
        %v8790 = vadd.f32 %v8621, %v8789
        %v8791 = vpop.f32.mrf.mxu0
        %v8792 = vadd.f32 %v8623, %v8791
        %8793 = vmatmul.bf16.gmra.mxu0 %v3551
        %v8794 = vpop.f32.mrf.mxu0
        %v8795 = vadd.f32 %v8626, %v8794
        %v8796 = vpop.f32.mrf.mxu0
        %v8797 = vadd.f32 %v8628, %v8796
        %8798 = vmatmul.bf16.gmra.mxu0 %v3557
        %v8799 = vpop.f32.mrf.mxu0
        %v8800 = vadd.f32 %v8631, %v8799
        %v8801 = vpop.f32.mrf.mxu0
        %v8802 = vadd.f32 %v8633, %v8801
        %8803 = vmatmul.bf16.gmra.mxu0 %v3563
        %v8804 = vpop.f32.mrf.mxu0
        %v8805 = vadd.f32 %v8636, %v8804
        %v8806 = vpop.f32.mrf.mxu0
        %v8807 = vadd.f32 %v8638, %v8806
        %8808 = vmatmul.bf16.gmra.mxu0 %v3569
        %v8809 = vpop.f32.mrf.mxu0
        %v8810 = vadd.f32 %v8641, %v8809
        %v8811 = vpop.f32.mrf.mxu0
        %v8812 = vadd.f32 %v8643, %v8811
        %8813 = vmatmul.bf16.gmra.mxu0 %v3575
        %v8814 = vpop.f32.mrf.mxu0
        %v8815 = vadd.f32 %v8646, %v8814
        %v8816 = vpop.f32.mrf.mxu0
        %v8817 = vadd.f32 %v8648, %v8816
        %8818 = vmatmul.bf16.gmra.mxu0 %v3581
        %v8819 = vpop.f32.mrf.mxu0
        %v8820 = vadd.f32 %v8651, %v8819
        %v8821 = vpop.f32.mrf.mxu0
        %v8822 = vadd.f32 %v8653, %v8821
        %8823 = vmatmul.bf16.gmra.mxu0 %v3587
        %v8824 = vpop.f32.mrf.mxu0
        %v8825 = vadd.f32 %v8656, %v8824
        %v8826 = vpop.f32.mrf.mxu0
        %v8827 = vadd.f32 %v8658, %v8826
        %8828 = vmatmul.bf16.gmra.mxu0 %v3593
        %v8829 = vpop.f32.mrf.mxu0
        %v8830 = vadd.f32 %v8661, %v8829
        %v8831 = vpop.f32.mrf.mxu0
        %v8832 = vadd.f32 %v8663, %v8831
        %8833 = vmatmul.bf16.gmra.mxu0 %v3599
        %v8834 = vpop.f32.mrf.mxu0
        %v8835 = vadd.f32 %v8666, %v8834
        %v8836 = vpop.f32.mrf.mxu0
        %v8837 = vadd.f32 %v8668, %v8836
        %8838 = vmatmul.bf16.gmra.mxu0 %v3605
        %v8839 = vpop.f32.mrf.mxu0
        %v8840 = vadd.f32 %v8671, %v8839
        %v8841 = vpop.f32.mrf.mxu0
        %v8842 = vadd.f32 %v8673, %v8841
        %8843 = vmatmul.bf16.gmra.mxu0 %v3611
        %v8844 = vpop.f32.mrf.mxu0
        %v8845 = vadd.f32 %v8676, %v8844
        %v8846 = vpop.f32.mrf.mxu0
        %v8847 = vadd.f32 %v8678, %v8846
        %8848 = vmatmul.bf16.gmra.mxu0 %v3617
        %v8849 = vpop.f32.mrf.mxu0
        %v8850 = vadd.f32 %v8681, %v8849
        %v8851 = vpop.f32.mrf.mxu0
        %v8852 = vadd.f32 %v8683, %v8851
        %8853 = vmatmul.bf16.gmra.mxu0 %v3623
        %v8854 = vpop.f32.mrf.mxu0
        %v8855 = vadd.f32 %v8686, %v8854
        %v8856 = vpop.f32.mrf.mxu0
        %v8857 = vadd.f32 %v8688, %v8856
        %8858 = vmatmul.bf16.gmra.mxu0 %v3629
        %v8859 = vpop.f32.mrf.mxu0
        %v8860 = vadd.f32 %v8691, %v8859
        %v8861 = vpop.f32.mrf.mxu0
        %v8862 = vadd.f32 %v8693, %v8861
        %8863 = vmatmul.bf16.gmra.mxu0 %v3635
        %v8864 = vpop.f32.mrf.mxu0
        %v8865 = vadd.f32 %v8696, %v8864
        %v8866 = vpop.f32.mrf.mxu0
        %v8867 = vadd.f32 %v8698, %v8866
        %8868 = vmatmul.bf16.gmra.mxu0 %v3641
        %v8869 = vpop.f32.mrf.mxu0
        %v8870 = vadd.f32 %v8701, %v8869
        %v8871 = vpop.f32.mrf.mxu0
        %v8872 = vadd.f32 %v8703, %v8871
        %8873 = vmatmul.bf16.gmra.mxu0 %v3647
        %v8874 = vpop.f32.mrf.mxu0
        %v8875 = vadd.f32 %v8706, %v8874
        %v8876 = vpop.f32.mrf.mxu0
        %v8877 = vadd.f32 %v8708, %v8876
        %8878 = vmatmul.bf16.gmra.mxu0 %v3653
        %v8879 = vpop.f32.mrf.mxu0
        %v8880 = vadd.f32 %v8711, %v8879
        %v8881 = vpop.f32.mrf.mxu0
        %v8882 = vadd.f32 %v8713, %v8881
        %8883 = vmatmul.bf16.gmra.mxu0 %v3659
        %v8884 = vpop.f32.mrf.mxu0
        %v8885 = vadd.f32 %v8716, %v8884
        %v8886 = vpop.f32.mrf.mxu0
        %v8887 = vadd.f32 %v8718, %v8886
        %8888 = vmatmul.bf16.gmra.mxu0 %v3665
        %v8889 = vpop.f32.mrf.mxu0
        %v8890 = vadd.f32 %v8721, %v8889
        %v8891 = vpop.f32.mrf.mxu0
        %v8892 = vadd.f32 %v8723, %v8891
        %8893 = vmatmul.bf16.gmra.mxu0 %v3671
        %v8894 = vpop.f32.mrf.mxu0
        %v8895 = vadd.f32 %v8726, %v8894
        %v8896 = vpop.f32.mrf.mxu0
        %v8897 = vadd.f32 %v8728, %v8896
        %8898 = vmatmul.bf16.gmra.mxu0 %v3677
        %v8899 = vpop.f32.mrf.mxu0
        %v8900 = vadd.f32 %v8731, %v8899
        %v8901 = vpop.f32.mrf.mxu0
        %v8902 = vadd.f32 %v8733, %v8901
        %8903 = vmatmul.bf16.gmra.mxu0 %v3683
        %v8904 = vpop.f32.mrf.mxu0
        %v8905 = vadd.f32 %v8736, %v8904
        %v8906 = vpop.f32.mrf.mxu0
        %v8907 = vadd.f32 %v8738, %v8906
        %8908 = vmatmul.bf16.gmra.mxu0 %v3689
        %v8909 = vpop.f32.mrf.mxu0
        %v8910 = vadd.f32 %v8741, %v8909
        %v8911 = vpop.f32.mrf.mxu0
        %v8912 = vadd.f32 %v8743, %v8911
        %8913 = vmatmul.bf16.gmra.mxu0 %v3695
        %v8914 = vpop.f32.mrf.mxu0
        %v8915 = vadd.f32 %v8746, %v8914
        %v8916 = vpop.f32.mrf.mxu0
        %v8917 = vadd.f32 %v8748, %v8916
        %8918 = vmatmul.bf16.gmra.mxu0 %v3701
        %v8919 = vpop.f32.mrf.mxu0
        %v8920 = vadd.f32 %v8751, %v8919
        %v8921 = vpop.f32.mrf.mxu0
        %v8922 = vadd.f32 %v8753, %v8921
        %8923 = vmatmul.bf16.gmra.mxu0 %v3707
        %v8924 = vpop.f32.mrf.mxu0
        %v8925 = vadd.f32 %v8756, %v8924
        %v8926 = vpop.f32.mrf.mxu0
        %v8927 = vadd.f32 %v8758, %v8926
        %8928 = vmatmul.bf16.gmra.mxu0 %v3713
        %v8929 = vpop.f32.mrf.mxu0
        %v8930 = vadd.f32 %v8761, %v8929
        %v8931 = vpop.f32.mrf.mxu0
        %v8932 = vadd.f32 %v8763, %v8931
        %8933 = vmatmul.bf16.gmra.mxu0 %v3719
        %v8934 = vpop.f32.mrf.mxu0
        %v8935 = vadd.f32 %v8766, %v8934
        %v8936 = vpop.f32.mrf.mxu0
        %v8937 = vadd.f32 %v8768, %v8936
        %8938 = vmatmul.bf16.gmra.mxu0 %v3725
        %v8939 = vpop.f32.mrf.mxu0
        %v8940 = vadd.f32 %v8771, %v8939
        %v8941 = vpop.f32.mrf.mxu0
        %v8942 = vadd.f32 %v8773, %v8941
        %8943 = vdwg.mxu0
        %v8944 = vmax.f32 %v5743, 0.0
        %v8945 = vmax.f32 %v6757, 0.0
        %v8946 = vmax.f32 %v7771, 0.0
        %v8947 = vmax.f32 %v8785, 0.0
        %v8948 = vmax.f32 %v5745, 0.0
        %v8949 = vmax.f32 %v6759, 0.0
        %v8950 = vmax.f32 %v7773, 0.0
        %v8951 = vmax.f32 %v8787, 0.0
        %v8952 = vmax.f32 %v5748, 0.0
        %v8953 = vmax.f32 %v6762, 0.0
        %v8954 = vmax.f32 %v7776, 0.0
        %v8955 = vmax.f32 %v8790, 0.0
        %v8956 = vmax.f32 %v5750, 0.0
        %v8957 = vmax.f32 %v6764, 0.0
        %v8958 = vmax.f32 %v7778, 0.0
        %v8959 = vmax.f32 %v8792, 0.0
        %v8960 = vmax.f32 %v5753, 0.0
        %v8961 = vmax.f32 %v6767, 0.0
        %v8962 = vmax.f32 %v7781, 0.0
        %v8963 = vmax.f32 %v8795, 0.0
        %v8964 = vmax.f32 %v5755, 0.0
        %v8965 = vmax.f32 %v6769, 0.0
        %v8966 = vmax.f32 %v7783, 0.0
        %v8967 = vmax.f32 %v8797, 0.0
        %v8968 = vmax.f32 %v5758, 0.0
        %v8969 = vmax.f32 %v6772, 0.0
        %v8970 = vmax.f32 %v7786, 0.0
        %v8971 = vmax.f32 %v8800, 0.0
        %v8972 = vmax.f32 %v5760, 0.0
        %v8973 = vmax.f32 %v6774, 0.0
        %v8974 = vmax.f32 %v7788, 0.0
        %v8975 = vmax.f32 %v8802, 0.0
        %v8976 = vmax.f32 %v5763, 0.0
        %v8977 = vmax.f32 %v6777, 0.0
        %v8978 = vmax.f32 %v7791, 0.0
        %v8979 = vmax.f32 %v8805, 0.0
        %v8980 = vmax.f32 %v5765, 0.0
        %v8981 = vmax.f32 %v6779, 0.0
        %v8982 = vmax.f32 %v7793, 0.0
        %v8983 = vmax.f32 %v8807, 0.0
        %v8984 = vmax.f32 %v5768, 0.0
        %v8985 = vmax.f32 %v6782, 0.0
        %v8986 = vmax.f32 %v7796, 0.0
        %v8987 = vmax.f32 %v8810, 0.0
        %v8988 = vmax.f32 %v5770, 0.0
        %v8989 = vmax.f32 %v6784, 0.0
        %v8990 = vmax.f32 %v7798, 0.0
        %v8991 = vmax.f32 %v8812, 0.0
        %v8992 = vmax.f32 %v5773, 0.0
        %v8993 = vmax.f32 %v6787, 0.0
        %v8994 = vmax.f32 %v7801, 0.0
        %v8995 = vmax.f32 %v8815, 0.0
        %v8996 = vmax.f32 %v5775, 0.0
        %v8997 = vmax.f32 %v6789, 0.0
        %v8998 = vmax.f32 %v7803, 0.0
        %v8999 = vmax.f32 %v8817, 0.0
        %v9000 = vmax.f32 %v5778, 0.0
        %v9001 = vmax.f32 %v6792, 0.0
        %v9002 = vmax.f32 %v7806, 0.0
        %v9003 = vmax.f32 %v8820, 0.0
        %v9004 = vmax.f32 %v5780, 0.0
        %v9005 = vmax.f32 %v6794, 0.0
        %v9006 = vmax.f32 %v7808, 0.0
        %v9007 = vmax.f32 %v8822, 0.0
        %v9008 = vmax.f32 %v5783, 0.0
        %v9009 = vmax.f32 %v6797, 0.0
        %v9010 = vmax.f32 %v7811, 0.0
        %v9011 = vmax.f32 %v8825, 0.0
        %v9012 = vmax.f32 %v5785, 0.0
        %v9013 = vmax.f32 %v6799, 0.0
        %v9014 = vmax.f32 %v7813, 0.0
        %v9015 = vmax.f32 %v8827, 0.0
        %v9016 = vmax.f32 %v5788, 0.0
        %v9017 = vmax.f32 %v6802, 0.0
        %v9018 = vmax.f32 %v7816, 0.0
        %v9019 = vmax.f32 %v8830, 0.0
        %v9020 = vmax.f32 %v5790, 0.0
        %v9021 = vmax.f32 %v6804, 0.0
        %v9022 = vmax.f32 %v7818, 0.0
        %v9023 = vmax.f32 %v8832, 0.0
        %v9024 = vmax.f32 %v5793, 0.0
        %v9025 = vmax.f32 %v6807, 0.0
        %v9026 = vmax.f32 %v7821, 0.0
        %v9027 = vmax.f32 %v8835, 0.0
        %v9028 = vmax.f32 %v5795, 0.0
        %v9029 = vmax.f32 %v6809, 0.0
        %v9030 = vmax.f32 %v7823, 0.0
        %v9031 = vmax.f32 %v8837, 0.0
        %v9032 = vmax.f32 %v5798, 0.0
        %v9033 = vmax.f32 %v6812, 0.0
        %v9034 = vmax.f32 %v7826, 0.0
        %v9035 = vmax.f32 %v8840, 0.0
        %v9036 = vmax.f32 %v5800, 0.0
        %v9037 = vmax.f32 %v6814, 0.0
        %v9038 = vmax.f32 %v7828, 0.0
        %v9039 = vmax.f32 %v8842, 0.0
        %v9040 = vmax.f32 %v5803, 0.0
        %v9041 = vmax.f32 %v6817, 0.0
        %v9042 = vmax.f32 %v7831, 0.0
        %v9043 = vmax.f32 %v8845, 0.0
        %v9044 = vmax.f32 %v5805, 0.0
        %v9045 = vmax.f32 %v6819, 0.0
        %v9046 = vmax.f32 %v7833, 0.0
        %v9047 = vmax.f32 %v8847, 0.0
        %v9048 = vmax.f32 %v5808, 0.0
        %v9049 = vmax.f32 %v6822, 0.0
        %v9050 = vmax.f32 %v7836, 0.0
        %v9051 = vmax.f32 %v8850, 0.0
        %v9052 = vmax.f32 %v5810, 0.0
        %v9053 = vmax.f32 %v6824, 0.0
        %v9054 = vmax.f32 %v7838, 0.0
        %v9055 = vmax.f32 %v8852, 0.0
        %v9056 = vmax.f32 %v5813, 0.0
        %v9057 = vmax.f32 %v6827, 0.0
        %v9058 = vmax.f32 %v7841, 0.0
        %v9059 = vmax.f32 %v8855, 0.0
        %v9060 = vmax.f32 %v5815, 0.0
        %v9061 = vmax.f32 %v6829, 0.0
        %v9062 = vmax.f32 %v7843, 0.0
        %v9063 = vmax.f32 %v8857, 0.0
        %v9064 = vmax.f32 %v5818, 0.0
        %v9065 = vmax.f32 %v6832, 0.0
        %v9066 = vmax.f32 %v7846, 0.0
        %v9067 = vmax.f32 %v8860, 0.0
        %v9068 = vmax.f32 %v5820, 0.0
        %v9069 = vmax.f32 %v6834, 0.0
        %v9070 = vmax.f32 %v7848, 0.0
        %v9071 = vmax.f32 %v8862, 0.0
        %v9072 = vmax.f32 %v5823, 0.0
        %v9073 = vmax.f32 %v6837, 0.0
        %v9074 = vmax.f32 %v7851, 0.0
        %v9075 = vmax.f32 %v8865, 0.0
        %v9076 = vmax.f32 %v5825, 0.0
        %v9077 = vmax.f32 %v6839, 0.0
        %v9078 = vmax.f32 %v7853, 0.0
        %v9079 = vmax.f32 %v8867, 0.0
        %v9080 = vmax.f32 %v5828, 0.0
        %v9081 = vmax.f32 %v6842, 0.0
        %v9082 = vmax.f32 %v7856, 0.0
        %v9083 = vmax.f32 %v8870, 0.0
        %v9084 = vmax.f32 %v5830, 0.0
        %v9085 = vmax.f32 %v6844, 0.0
        %v9086 = vmax.f32 %v7858, 0.0
        %v9087 = vmax.f32 %v8872, 0.0
        %v9088 = vmax.f32 %v5833, 0.0
        %v9089 = vmax.f32 %v6847, 0.0
        %v9090 = vmax.f32 %v7861, 0.0
        %v9091 = vmax.f32 %v8875, 0.0
        %v9092 = vmax.f32 %v5835, 0.0
        %v9093 = vmax.f32 %v6849, 0.0
        %v9094 = vmax.f32 %v7863, 0.0
        %v9095 = vmax.f32 %v8877, 0.0
        %v9096 = vmax.f32 %v5838, 0.0
        %v9097 = vmax.f32 %v6852, 0.0
        %v9098 = vmax.f32 %v7866, 0.0
        %v9099 = vmax.f32 %v8880, 0.0
        %v9100 = vmax.f32 %v5840, 0.0
        %v9101 = vmax.f32 %v6854, 0.0
        %v9102 = vmax.f32 %v7868, 0.0
        %v9103 = vmax.f32 %v8882, 0.0
        %v9104 = vmax.f32 %v5843, 0.0
        %v9105 = vmax.f32 %v6857, 0.0
        %v9106 = vmax.f32 %v7871, 0.0
        %v9107 = vmax.f32 %v8885, 0.0
        %v9108 = vmax.f32 %v5845, 0.0
        %v9109 = vmax.f32 %v6859, 0.0
        %v9110 = vmax.f32 %v7873, 0.0
        %v9111 = vmax.f32 %v8887, 0.0
        %v9112 = vmax.f32 %v5848, 0.0
        %v9113 = vmax.f32 %v6862, 0.0
        %v9114 = vmax.f32 %v7876, 0.0
        %v9115 = vmax.f32 %v8890, 0.0
        %v9116 = vmax.f32 %v5850, 0.0
        %v9117 = vmax.f32 %v6864, 0.0
        %v9118 = vmax.f32 %v7878, 0.0
        %v9119 = vmax.f32 %v8892, 0.0
        %v9120 = vmax.f32 %v5853, 0.0
        %v9121 = vmax.f32 %v6867, 0.0
        %v9122 = vmax.f32 %v7881, 0.0
        %v9123 = vmax.f32 %v8895, 0.0
        %v9124 = vmax.f32 %v5855, 0.0
        %v9125 = vmax.f32 %v6869, 0.0
        %v9126 = vmax.f32 %v7883, 0.0
        %v9127 = vmax.f32 %v8897, 0.0
        %v9128 = vmax.f32 %v5858, 0.0
        %v9129 = vmax.f32 %v6872, 0.0
        %v9130 = vmax.f32 %v7886, 0.0
        %v9131 = vmax.f32 %v8900, 0.0
        %v9132 = vmax.f32 %v5860, 0.0
        %v9133 = vmax.f32 %v6874, 0.0
        %v9134 = vmax.f32 %v7888, 0.0
        %v9135 = vmax.f32 %v8902, 0.0
        %v9136 = vmax.f32 %v5863, 0.0
        %v9137 = vmax.f32 %v6877, 0.0
        %v9138 = vmax.f32 %v7891, 0.0
        %v9139 = vmax.f32 %v8905, 0.0
        %v9140 = vmax.f32 %v5865, 0.0
        %v9141 = vmax.f32 %v6879, 0.0
        %v9142 = vmax.f32 %v7893, 0.0
        %v9143 = vmax.f32 %v8907, 0.0
        %v9144 = vmax.f32 %v5868, 0.0
        %v9145 = vmax.f32 %v6882, 0.0
        %v9146 = vmax.f32 %v7896, 0.0
        %v9147 = vmax.f32 %v8910, 0.0
        %v9148 = vmax.f32 %v5870, 0.0
        %v9149 = vmax.f32 %v6884, 0.0
        %v9150 = vmax.f32 %v7898, 0.0
        %v9151 = vmax.f32 %v8912, 0.0
        %v9152 = vmax.f32 %v5873, 0.0
        %v9153 = vmax.f32 %v6887, 0.0
        %v9154 = vmax.f32 %v7901, 0.0
        %v9155 = vmax.f32 %v8915, 0.0
        %v9156 = vmax.f32 %v5875, 0.0
        %v9157 = vmax.f32 %v6889, 0.0
        %v9158 = vmax.f32 %v7903, 0.0
        %v9159 = vmax.f32 %v8917, 0.0
        %v9160 = vmax.f32 %v5878, 0.0
        %v9161 = vmax.f32 %v6892, 0.0
        %v9162 = vmax.f32 %v7906, 0.0
        %v9163 = vmax.f32 %v8920, 0.0
        %v9164 = vmax.f32 %v5880, 0.0
        %v9165 = vmax.f32 %v6894, 0.0
        %v9166 = vmax.f32 %v7908, 0.0
        %v9167 = vmax.f32 %v8922, 0.0
        %v9168 = vmax.f32 %v5883, 0.0
        %v9169 = vmax.f32 %v6897, 0.0
        %v9170 = vmax.f32 %v7911, 0.0
        %v9171 = vmax.f32 %v8925, 0.0
        %v9172 = vmax.f32 %v5885, 0.0
        %v9173 = vmax.f32 %v6899, 0.0
        %v9174 = vmax.f32 %v7913, 0.0
        %v9175 = vmax.f32 %v8927, 0.0
        %v9176 = vmax.f32 %v5888, 0.0
        %v9177 = vmax.f32 %v6902, 0.0
        %v9178 = vmax.f32 %v7916, 0.0
        %v9179 = vmax.f32 %v8930, 0.0
        %v9180 = vmax.f32 %v5890, 0.0
        %v9181 = vmax.f32 %v6904, 0.0
        %v9182 = vmax.f32 %v7918, 0.0
        %v9183 = vmax.f32 %v8932, 0.0
        %v9184 = vmax.f32 %v5893, 0.0
        %v9185 = vmax.f32 %v6907, 0.0
        %v9186 = vmax.f32 %v7921, 0.0
        %v9187 = vmax.f32 %v8935, 0.0
        %v9188 = vmax.f32 %v5895, 0.0
        %v9189 = vmax.f32 %v6909, 0.0
        %v9190 = vmax.f32 %v7923, 0.0
        %v9191 = vmax.f32 %v8937, 0.0
        %v9192 = vmax.f32 %v5898, 0.0
        %v9193 = vmax.f32 %v6912, 0.0
        %v9194 = vmax.f32 %v7926, 0.0
        %v9195 = vmax.f32 %v8940, 0.0
        %v9196 = vmax.f32 %v5900, 0.0
        %v9197 = vmax.f32 %v6914, 0.0
        %v9198 = vmax.f32 %v7928, 0.0
        %v9199 = vmax.f32 %v8942, 0.0
        %v9200 = vpack.c.bf16 %v8948, %v8944
        %v9201 = vpack.c.bf16 %v8949, %v8945
        %v9202 = vpack.c.bf16 %v8950, %v8946
        %v9203 = vpack.c.bf16 %v8951, %v8947
        %v9204 = vpack.c.bf16 %v8956, %v8952
        %v9205 = vpack.c.bf16 %v8957, %v8953
        %v9206 = vpack.c.bf16 %v8958, %v8954
        %v9207 = vpack.c.bf16 %v8959, %v8955
        %v9208 = vpack.c.bf16 %v8964, %v8960
        %v9209 = vpack.c.bf16 %v8965, %v8961
        %v9210 = vpack.c.bf16 %v8966, %v8962
        %v9211 = vpack.c.bf16 %v8967, %v8963
        %v9212 = vpack.c.bf16 %v8972, %v8968
        %v9213 = vpack.c.bf16 %v8973, %v8969
        %v9214 = vpack.c.bf16 %v8974, %v8970
        %v9215 = vpack.c.bf16 %v8975, %v8971
        %v9216 = vpack.c.bf16 %v8980, %v8976
        %v9217 = vpack.c.bf16 %v8981, %v8977
        %v9218 = vpack.c.bf16 %v8982, %v8978
        %v9219 = vpack.c.bf16 %v8983, %v8979
        %v9220 = vpack.c.bf16 %v8988, %v8984
        %v9221 = vpack.c.bf16 %v8989, %v8985
        %v9222 = vpack.c.bf16 %v8990, %v8986
        %v9223 = vpack.c.bf16 %v8991, %v8987
        %v9224 = vpack.c.bf16 %v8996, %v8992
        %v9225 = vpack.c.bf16 %v8997, %v8993
        %v9226 = vpack.c.bf16 %v8998, %v8994
        %v9227 = vpack.c.bf16 %v8999, %v8995
        %v9228 = vpack.c.bf16 %v9004, %v9000
        %v9229 = vpack.c.bf16 %v9005, %v9001
        %v9230 = vpack.c.bf16 %v9006, %v9002
        %v9231 = vpack.c.bf16 %v9007, %v9003
        %v9232 = vpack.c.bf16 %v9012, %v9008
        %v9233 = vpack.c.bf16 %v9013, %v9009
        %v9234 = vpack.c.bf16 %v9014, %v9010
        %v9235 = vpack.c.bf16 %v9015, %v9011
        %v9236 = vpack.c.bf16 %v9020, %v9016
        %v9237 = vpack.c.bf16 %v9021, %v9017
        %v9238 = vpack.c.bf16 %v9022, %v9018
        %v9239 = vpack.c.bf16 %v9023, %v9019
        %v9240 = vpack.c.bf16 %v9028, %v9024
        %v9241 = vpack.c.bf16 %v9029, %v9025
        %v9242 = vpack.c.bf16 %v9030, %v9026
        %v9243 = vpack.c.bf16 %v9031, %v9027
        %v9244 = vpack.c.bf16 %v9036, %v9032
        %v9245 = vpack.c.bf16 %v9037, %v9033
        %v9246 = vpack.c.bf16 %v9038, %v9034
        %v9247 = vpack.c.bf16 %v9039, %v9035
        %v9248 = vpack.c.bf16 %v9044, %v9040
        %v9249 = vpack.c.bf16 %v9045, %v9041
        %v9250 = vpack.c.bf16 %v9046, %v9042
        %v9251 = vpack.c.bf16 %v9047, %v9043
        %v9252 = vpack.c.bf16 %v9052, %v9048
        %v9253 = vpack.c.bf16 %v9053, %v9049
        %v9254 = vpack.c.bf16 %v9054, %v9050
        %v9255 = vpack.c.bf16 %v9055, %v9051
        %v9256 = vpack.c.bf16 %v9060, %v9056
        %v9257 = vpack.c.bf16 %v9061, %v9057
        %v9258 = vpack.c.bf16 %v9062, %v9058
        %v9259 = vpack.c.bf16 %v9063, %v9059
        %v9260 = vpack.c.bf16 %v9068, %v9064
        %v9261 = vpack.c.bf16 %v9069, %v9065
        %v9262 = vpack.c.bf16 %v9070, %v9066
        %v9263 = vpack.c.bf16 %v9071, %v9067
        %v9264 = vpack.c.bf16 %v9076, %v9072
        %v9265 = vpack.c.bf16 %v9077, %v9073
        %v9266 = vpack.c.bf16 %v9078, %v9074
        %v9267 = vpack.c.bf16 %v9079, %v9075
        %v9268 = vpack.c.bf16 %v9084, %v9080
        %v9269 = vpack.c.bf16 %v9085, %v9081
        %v9270 = vpack.c.bf16 %v9086, %v9082
        %v9271 = vpack.c.bf16 %v9087, %v9083
        %v9272 = vpack.c.bf16 %v9092, %v9088
        %v9273 = vpack.c.bf16 %v9093, %v9089
        %v9274 = vpack.c.bf16 %v9094, %v9090
        %v9275 = vpack.c.bf16 %v9095, %v9091
        %v9276 = vpack.c.bf16 %v9100, %v9096
        %v9277 = vpack.c.bf16 %v9101, %v9097
        %v9278 = vpack.c.bf16 %v9102, %v9098
        %v9279 = vpack.c.bf16 %v9103, %v9099
        %v9280 = vpack.c.bf16 %v9108, %v9104
        %v9281 = vpack.c.bf16 %v9109, %v9105
        %v9282 = vpack.c.bf16 %v9110, %v9106
        %v9283 = vpack.c.bf16 %v9111, %v9107
        %v9284 = vpack.c.bf16 %v9116, %v9112
        %v9285 = vpack.c.bf16 %v9117, %v9113
        %v9286 = vpack.c.bf16 %v9118, %v9114
        %v9287 = vpack.c.bf16 %v9119, %v9115
        %v9288 = vpack.c.bf16 %v9124, %v9120
        %v9289 = vpack.c.bf16 %v9125, %v9121
        %v9290 = vpack.c.bf16 %v9126, %v9122
        %v9291 = vpack.c.bf16 %v9127, %v9123
        %v9292 = vpack.c.bf16 %v9132, %v9128
        %v9293 = vpack.c.bf16 %v9133, %v9129
        %v9294 = vpack.c.bf16 %v9134, %v9130
        %v9295 = vpack.c.bf16 %v9135, %v9131
        %v9296 = vpack.c.bf16 %v9140, %v9136
        %v9297 = vpack.c.bf16 %v9141, %v9137
        %v9298 = vpack.c.bf16 %v9142, %v9138
        %v9299 = vpack.c.bf16 %v9143, %v9139
        %v9300 = vpack.c.bf16 %v9148, %v9144
        %v9301 = vpack.c.bf16 %v9149, %v9145
        %v9302 = vpack.c.bf16 %v9150, %v9146
        %v9303 = vpack.c.bf16 %v9151, %v9147
        %v9304 = vpack.c.bf16 %v9156, %v9152
        %v9305 = vpack.c.bf16 %v9157, %v9153
        %v9306 = vpack.c.bf16 %v9158, %v9154
        %v9307 = vpack.c.bf16 %v9159, %v9155
        %v9308 = vpack.c.bf16 %v9164, %v9160
        %v9309 = vpack.c.bf16 %v9165, %v9161
        %v9310 = vpack.c.bf16 %v9166, %v9162
        %v9311 = vpack.c.bf16 %v9167, %v9163
        %v9312 = vpack.c.bf16 %v9172, %v9168
        %v9313 = vpack.c.bf16 %v9173, %v9169
        %v9314 = vpack.c.bf16 %v9174, %v9170
        %v9315 = vpack.c.bf16 %v9175, %v9171
        %v9316 = vpack.c.bf16 %v9180, %v9176
        %v9317 = vpack.c.bf16 %v9181, %v9177
        %v9318 = vpack.c.bf16 %v9182, %v9178
        %v9319 = vpack.c.bf16 %v9183, %v9179
        %v9320 = vpack.c.bf16 %v9188, %v9184
        %v9321 = vpack.c.bf16 %v9189, %v9185
        %v9322 = vpack.c.bf16 %v9190, %v9186
        %v9323 = vpack.c.bf16 %v9191, %v9187
        %v9324 = vpack.c.bf16 %v9196, %v9192
        %v9325 = vpack.c.bf16 %v9197, %v9193
        %v9326 = vpack.c.bf16 %v9198, %v9194
        %v9327 = vpack.c.bf16 %v9199, %v9195
        %v9328 = vld [vmem:[#allocation10] sm:$0xff]
        %v9329 = vld [vmem:[#allocation10 + $0x8] sm:$0xff]
        %v9330 = vld [vmem:[#allocation10 + $0x10] sm:$0xff]
        %v9331 = vld [vmem:[#allocation10 + $0x18] sm:$0xff]
        %v9332 = vld [vmem:[#allocation10 + $0x20] sm:$0xff]
        %v9333 = vld [vmem:[#allocation10 + $0x28] sm:$0xff]
        %v9334 = vld [vmem:[#allocation10 + $0x30] sm:$0xff]
        %v9335 = vld [vmem:[#allocation10 + $0x38] sm:$0xff]
        %v9336 = vld [vmem:[#allocation10 + $0x40] sm:$0xff]
        %v9337 = vld [vmem:[#allocation10 + $0x48] sm:$0xff]
        %v9338 = vld [vmem:[#allocation10 + $0x50] sm:$0xff]
        %v9339 = vld [vmem:[#allocation10 + $0x58] sm:$0xff]
        %v9340 = vld [vmem:[#allocation10 + $0x60] sm:$0xff]
        %v9341 = vld [vmem:[#allocation10 + $0x68] sm:$0xff]
        %v9342 = vld [vmem:[#allocation10 + $0x70] sm:$0xff]
        %v9343 = vld [vmem:[#allocation10 + $0x78] sm:$0xff]
        %v9344 = vld [vmem:[#allocation10 + $0x80] sm:$0xff]
        %v9345 = vld [vmem:[#allocation10 + $0x88] sm:$0xff]
        %v9346 = vld [vmem:[#allocation10 + $0x90] sm:$0xff]
        %v9347 = vld [vmem:[#allocation10 + $0x98] sm:$0xff]
        %v9348 = vld [vmem:[#allocation10 + $0xa0] sm:$0xff]
        %v9349 = vld [vmem:[#allocation10 + $0xa8] sm:$0xff]
        %v9350 = vld [vmem:[#allocation10 + $0xb0] sm:$0xff]
        %v9351 = vld [vmem:[#allocation10 + $0xb8] sm:$0xff]
        %v9352 = vld [vmem:[#allocation10 + $0xc0] sm:$0xff]
        %v9353 = vld [vmem:[#allocation10 + $0xc8] sm:$0xff]
        %v9354 = vld [vmem:[#allocation10 + $0xd0] sm:$0xff]
        %v9355 = vld [vmem:[#allocation10 + $0xd8] sm:$0xff]
        %v9356 = vld [vmem:[#allocation10 + $0xe0] sm:$0xff]
        %v9357 = vld [vmem:[#allocation10 + $0xe8] sm:$0xff]
        %v9358 = vld [vmem:[#allocation10 + $0xf0] sm:$0xff]
        %v9359 = vld [vmem:[#allocation10 + $0xf8] sm:$0xff]
        %v9360 = vld [vmem:[#allocation10 + $0x100] sm:$0xff]
        %v9361 = vld [vmem:[#allocation10 + $0x108] sm:$0xff]
        %v9362 = vld [vmem:[#allocation10 + $0x110] sm:$0xff]
        %v9363 = vld [vmem:[#allocation10 + $0x118] sm:$0xff]
        %v9364 = vld [vmem:[#allocation10 + $0x120] sm:$0xff]
        %v9365 = vld [vmem:[#allocation10 + $0x128] sm:$0xff]
        %v9366 = vld [vmem:[#allocation10 + $0x130] sm:$0xff]
        %v9367 = vld [vmem:[#allocation10 + $0x138] sm:$0xff]
        %v9368 = vld [vmem:[#allocation10 + $0x140] sm:$0xff]
        %v9369 = vld [vmem:[#allocation10 + $0x148] sm:$0xff]
        %v9370 = vld [vmem:[#allocation10 + $0x150] sm:$0xff]
        %v9371 = vld [vmem:[#allocation10 + $0x158] sm:$0xff]
        %v9372 = vld [vmem:[#allocation10 + $0x160] sm:$0xff]
        %v9373 = vld [vmem:[#allocation10 + $0x168] sm:$0xff]
        %v9374 = vld [vmem:[#allocation10 + $0x170] sm:$0xff]
        %v9375 = vld [vmem:[#allocation10 + $0x178] sm:$0xff]
        %v9376 = vld [vmem:[#allocation10 + $0x180] sm:$0xff]
        %v9377 = vld [vmem:[#allocation10 + $0x188] sm:$0xff]
        %v9378 = vld [vmem:[#allocation10 + $0x190] sm:$0xff]
        %v9379 = vld [vmem:[#allocation10 + $0x198] sm:$0xff]
        %v9380 = vld [vmem:[#allocation10 + $0x1a0] sm:$0xff]
        %v9381 = vld [vmem:[#allocation10 + $0x1a8] sm:$0xff]
        %v9382 = vld [vmem:[#allocation10 + $0x1b0] sm:$0xff]
        %v9383 = vld [vmem:[#allocation10 + $0x1b8] sm:$0xff]
        %v9384 = vld [vmem:[#allocation10 + $0x1c0] sm:$0xff]
        %v9385 = vld [vmem:[#allocation10 + $0x1c8] sm:$0xff]
        %v9386 = vld [vmem:[#allocation10 + $0x1d0] sm:$0xff]
        %v9387 = vld [vmem:[#allocation10 + $0x1d8] sm:$0xff]
        %v9388 = vld [vmem:[#allocation10 + $0x1e0] sm:$0xff]
        %v9389 = vld [vmem:[#allocation10 + $0x1e8] sm:$0xff]
        %v9390 = vld [vmem:[#allocation10 + $0x1f0] sm:$0xff]
        %v9391 = vld [vmem:[#allocation10 + $0x1f8] sm:$0xff]
        %v9392 = vld [vmem:[#allocation11] sm:$0x3]
        %v9394 = vperm.slane %v9392, 0
        %v9395 = vperm.slane %v9392, 1
        %v9462 = vunpack.c.l.b16 %v9328
        %v9463 = vunpack.c.h.b16 %v9328
        %v9464 = vunpack.c.l.b16 %v9329
        %v9465 = vunpack.c.h.b16 %v9329
        %v9466 = vunpack.c.l.b16 %v9330
        %v9467 = vunpack.c.h.b16 %v9330
        %v9468 = vunpack.c.l.b16 %v9331
        %v9469 = vunpack.c.h.b16 %v9331
        %v9470 = vunpack.c.l.b16 %v9332
        %v9471 = vunpack.c.h.b16 %v9332
        %v9472 = vunpack.c.l.b16 %v9333
        %v9473 = vunpack.c.h.b16 %v9333
        %v9474 = vunpack.c.l.b16 %v9334
        %v9475 = vunpack.c.h.b16 %v9334
        %v9476 = vunpack.c.l.b16 %v9335
        %v9477 = vunpack.c.h.b16 %v9335
        %v9478 = vunpack.c.l.b16 %v9336
        %v9479 = vunpack.c.h.b16 %v9336
        %v9480 = vunpack.c.l.b16 %v9337
        %v9481 = vunpack.c.h.b16 %v9337
        %v9482 = vunpack.c.l.b16 %v9338
        %v9483 = vunpack.c.h.b16 %v9338
        %v9484 = vunpack.c.l.b16 %v9339
        %v9485 = vunpack.c.h.b16 %v9339
        %v9486 = vunpack.c.l.b16 %v9340
        %v9487 = vunpack.c.h.b16 %v9340
        %v9488 = vunpack.c.l.b16 %v9341
        %v9489 = vunpack.c.h.b16 %v9341
        %v9490 = vunpack.c.l.b16 %v9342
        %v9491 = vunpack.c.h.b16 %v9342
        %v9492 = vunpack.c.l.b16 %v9343
        %v9493 = vunpack.c.h.b16 %v9343
        %v9494 = vunpack.c.l.b16 %v9344
        %v9495 = vunpack.c.h.b16 %v9344
        %v9496 = vunpack.c.l.b16 %v9345
        %v9497 = vunpack.c.h.b16 %v9345
        %v9498 = vunpack.c.l.b16 %v9346
        %v9499 = vunpack.c.h.b16 %v9346
        %v9500 = vunpack.c.l.b16 %v9347
        %v9501 = vunpack.c.h.b16 %v9347
        %v9502 = vunpack.c.l.b16 %v9348
        %v9503 = vunpack.c.h.b16 %v9348
        %v9504 = vunpack.c.l.b16 %v9349
        %v9505 = vunpack.c.h.b16 %v9349
        %v9506 = vunpack.c.l.b16 %v9350
        %v9507 = vunpack.c.h.b16 %v9350
        %v9508 = vunpack.c.l.b16 %v9351
        %v9509 = vunpack.c.h.b16 %v9351
        %v9510 = vunpack.c.l.b16 %v9352
        %v9511 = vunpack.c.h.b16 %v9352
        %v9512 = vunpack.c.l.b16 %v9353
        %v9513 = vunpack.c.h.b16 %v9353
        %v9514 = vunpack.c.l.b16 %v9354
        %v9515 = vunpack.c.h.b16 %v9354
        %v9516 = vunpack.c.l.b16 %v9355
        %v9517 = vunpack.c.h.b16 %v9355
        %v9518 = vunpack.c.l.b16 %v9356
        %v9519 = vunpack.c.h.b16 %v9356
        %v9520 = vunpack.c.l.b16 %v9357
        %v9521 = vunpack.c.h.b16 %v9357
        %v9522 = vunpack.c.l.b16 %v9358
        %v9523 = vunpack.c.h.b16 %v9358
        %v9524 = vunpack.c.l.b16 %v9359
        %v9525 = vunpack.c.h.b16 %v9359
        %v9526 = vunpack.c.l.b16 %v9360
        %v9527 = vunpack.c.h.b16 %v9360
        %v9528 = vunpack.c.l.b16 %v9361
        %v9529 = vunpack.c.h.b16 %v9361
        %v9530 = vunpack.c.l.b16 %v9362
        %v9531 = vunpack.c.h.b16 %v9362
        %v9532 = vunpack.c.l.b16 %v9363
        %v9533 = vunpack.c.h.b16 %v9363
        %v9534 = vunpack.c.l.b16 %v9364
        %v9535 = vunpack.c.h.b16 %v9364
        %v9536 = vunpack.c.l.b16 %v9365
        %v9537 = vunpack.c.h.b16 %v9365
        %v9538 = vunpack.c.l.b16 %v9366
        %v9539 = vunpack.c.h.b16 %v9366
        %v9540 = vunpack.c.l.b16 %v9367
        %v9541 = vunpack.c.h.b16 %v9367
        %v9542 = vunpack.c.l.b16 %v9368
        %v9543 = vunpack.c.h.b16 %v9368
        %v9544 = vunpack.c.l.b16 %v9369
        %v9545 = vunpack.c.h.b16 %v9369
        %v9546 = vunpack.c.l.b16 %v9370
        %v9547 = vunpack.c.h.b16 %v9370
        %v9548 = vunpack.c.l.b16 %v9371
        %v9549 = vunpack.c.h.b16 %v9371
        %v9550 = vunpack.c.l.b16 %v9372
        %v9551 = vunpack.c.h.b16 %v9372
        %v9552 = vunpack.c.l.b16 %v9373
        %v9553 = vunpack.c.h.b16 %v9373
        %v9554 = vunpack.c.l.b16 %v9374
        %v9555 = vunpack.c.h.b16 %v9374
        %v9556 = vunpack.c.l.b16 %v9375
        %v9557 = vunpack.c.h.b16 %v9375
        %v9558 = vunpack.c.l.b16 %v9376
        %v9559 = vunpack.c.h.b16 %v9376
        %v9560 = vunpack.c.l.b16 %v9377
        %v9561 = vunpack.c.h.b16 %v9377
        %v9562 = vunpack.c.l.b16 %v9378
        %v9563 = vunpack.c.h.b16 %v9378
        %v9564 = vunpack.c.l.b16 %v9379
        %v9565 = vunpack.c.h.b16 %v9379
        %v9566 = vunpack.c.l.b16 %v9380
        %v9567 = vunpack.c.h.b16 %v9380
        %v9568 = vunpack.c.l.b16 %v9381
        %v9569 = vunpack.c.h.b16 %v9381
        %v9570 = vunpack.c.l.b16 %v9382
        %v9571 = vunpack.c.h.b16 %v9382
        %v9572 = vunpack.c.l.b16 %v9383
        %v9573 = vunpack.c.h.b16 %v9383
        %v9574 = vunpack.c.l.b16 %v9384
        %v9575 = vunpack.c.h.b16 %v9384
        %v9576 = vunpack.c.l.b16 %v9385
        %v9577 = vunpack.c.h.b16 %v9385
        %v9578 = vunpack.c.l.b16 %v9386
        %v9579 = vunpack.c.h.b16 %v9386
        %v9580 = vunpack.c.l.b16 %v9387
        %v9581 = vunpack.c.h.b16 %v9387
        %v9582 = vunpack.c.l.b16 %v9388
        %v9583 = vunpack.c.h.b16 %v9388
        %v9584 = vunpack.c.l.b16 %v9389
        %v9585 = vunpack.c.h.b16 %v9389
        %v9586 = vunpack.c.l.b16 %v9390
        %v9587 = vunpack.c.h.b16 %v9390
        %v9588 = vunpack.c.l.b16 %v9391
        %v9589 = vunpack.c.h.b16 %v9391
        %v9590 = vpack.c.b16 %v9464, %v9462
        %v9591 = vpack.c.b16 %v9465, %v9463
        %v9592 = vpack.c.b16 %v9468, %v9466
        %v9593 = vpack.c.b16 %v9469, %v9467
        %v9594 = vpack.c.b16 %v9472, %v9470
        %v9595 = vpack.c.b16 %v9473, %v9471
        %v9596 = vpack.c.b16 %v9476, %v9474
        %v9597 = vpack.c.b16 %v9477, %v9475
        %v9598 = vpack.c.b16 %v9480, %v9478
        %v9599 = vpack.c.b16 %v9481, %v9479
        %v9600 = vpack.c.b16 %v9484, %v9482
        %v9601 = vpack.c.b16 %v9485, %v9483
        %v9602 = vpack.c.b16 %v9488, %v9486
        %v9603 = vpack.c.b16 %v9489, %v9487
        %v9604 = vpack.c.b16 %v9492, %v9490
        %v9605 = vpack.c.b16 %v9493, %v9491
        %v9606 = vpack.c.b16 %v9496, %v9494
        %v9607 = vpack.c.b16 %v9497, %v9495
        %v9608 = vpack.c.b16 %v9500, %v9498
        %v9609 = vpack.c.b16 %v9501, %v9499
        %v9610 = vpack.c.b16 %v9504, %v9502
        %v9611 = vpack.c.b16 %v9505, %v9503
        %v9612 = vpack.c.b16 %v9508, %v9506
        %v9613 = vpack.c.b16 %v9509, %v9507
        %v9614 = vpack.c.b16 %v9512, %v9510
        %v9615 = vpack.c.b16 %v9513, %v9511
        %v9616 = vpack.c.b16 %v9516, %v9514
        %v9617 = vpack.c.b16 %v9517, %v9515
        %v9618 = vpack.c.b16 %v9520, %v9518
        %v9619 = vpack.c.b16 %v9521, %v9519
        %v9620 = vpack.c.b16 %v9524, %v9522
        %v9621 = vpack.c.b16 %v9525, %v9523
        %v9622 = vpack.c.b16 %v9528, %v9526
        %v9623 = vpack.c.b16 %v9529, %v9527
        %v9624 = vpack.c.b16 %v9532, %v9530
        %v9625 = vpack.c.b16 %v9533, %v9531
        %v9626 = vpack.c.b16 %v9536, %v9534
        %v9627 = vpack.c.b16 %v9537, %v9535
        %v9628 = vpack.c.b16 %v9540, %v9538
        %v9629 = vpack.c.b16 %v9541, %v9539
        %v9630 = vpack.c.b16 %v9544, %v9542
        %v9631 = vpack.c.b16 %v9545, %v9543
        %v9632 = vpack.c.b16 %v9548, %v9546
        %v9633 = vpack.c.b16 %v9549, %v9547
        %v9634 = vpack.c.b16 %v9552, %v9550
        %v9635 = vpack.c.b16 %v9553, %v9551
        %v9636 = vpack.c.b16 %v9556, %v9554
        %v9637 = vpack.c.b16 %v9557, %v9555
        %v9638 = vpack.c.b16 %v9560, %v9558
        %v9639 = vpack.c.b16 %v9561, %v9559
        %v9640 = vpack.c.b16 %v9564, %v9562
        %v9641 = vpack.c.b16 %v9565, %v9563
        %v9642 = vpack.c.b16 %v9568, %v9566
        %v9643 = vpack.c.b16 %v9569, %v9567
        %v9644 = vpack.c.b16 %v9572, %v9570
        %v9645 = vpack.c.b16 %v9573, %v9571
        %v9646 = vpack.c.b16 %v9576, %v9574
        %v9647 = vpack.c.b16 %v9577, %v9575
        %v9648 = vpack.c.b16 %v9580, %v9578
        %v9649 = vpack.c.b16 %v9581, %v9579
        %v9650 = vpack.c.b16 %v9584, %v9582
        %v9651 = vpack.c.b16 %v9585, %v9583
        %v9652 = vpack.c.b16 %v9588, %v9586
        %v9653 = vpack.c.b16 %v9589, %v9587
        %9718 = vmatpush.bf16.msra.mxu0 %v9604
        %9719 = vmatpush.bf16.msra.mxu0 %v9602
        %9720 = vmatpush.bf16.msra.mxu0 %v9600
        %9721 = vmatpush.bf16.msra.mxu0 %v9598
        %9722 = vmatpush.bf16.msra.mxu0 %v9596
        %9723 = vmatpush.bf16.msra.mxu0 %v9594
        %9724 = vmatpush.bf16.msra.mxu0 %v9592
        %9725 = vmatpush.bf16.msra.mxu0 %v9590
        %9726 = vmatmul.bf16.gmra.mxu0 %v9200
        %v9727 = vpop.f32.mrf.mxu0
        %v9728 = vadd.f32 %v9394, %v9727
        %v9729 = vpop.f32.mrf.mxu0
        %v9730 = vadd.f32 %v9394, %v9729
        %9731 = vmatmul.bf16.gmra.mxu0 %v9204
        %v9732 = vpop.f32.mrf.mxu0
        %v9733 = vadd.f32 %v9394, %v9732
        %v9734 = vpop.f32.mrf.mxu0
        %v9735 = vadd.f32 %v9394, %v9734
        %9736 = vmatmul.bf16.gmra.mxu0 %v9208
        %v9737 = vpop.f32.mrf.mxu0
        %v9738 = vadd.f32 %v9394, %v9737
        %v9739 = vpop.f32.mrf.mxu0
        %v9740 = vadd.f32 %v9394, %v9739
        %9741 = vmatmul.bf16.gmra.mxu0 %v9212
        %v9742 = vpop.f32.mrf.mxu0
        %v9743 = vadd.f32 %v9394, %v9742
        %v9744 = vpop.f32.mrf.mxu0
        %v9745 = vadd.f32 %v9394, %v9744
        %9746 = vmatmul.bf16.gmra.mxu0 %v9216
        %v9747 = vpop.f32.mrf.mxu0
        %v9748 = vadd.f32 %v9394, %v9747
        %v9749 = vpop.f32.mrf.mxu0
        %v9750 = vadd.f32 %v9394, %v9749
        %9751 = vmatmul.bf16.gmra.mxu0 %v9220
        %v9752 = vpop.f32.mrf.mxu0
        %v9753 = vadd.f32 %v9394, %v9752
        %v9754 = vpop.f32.mrf.mxu0
        %v9755 = vadd.f32 %v9394, %v9754
        %9756 = vmatmul.bf16.gmra.mxu0 %v9224
        %v9757 = vpop.f32.mrf.mxu0
        %v9758 = vadd.f32 %v9394, %v9757
        %v9759 = vpop.f32.mrf.mxu0
        %v9760 = vadd.f32 %v9394, %v9759
        %9761 = vmatmul.bf16.gmra.mxu0 %v9228
        %v9762 = vpop.f32.mrf.mxu0
        %v9763 = vadd.f32 %v9394, %v9762
        %v9764 = vpop.f32.mrf.mxu0
        %v9765 = vadd.f32 %v9394, %v9764
        %9766 = vmatmul.bf16.gmra.mxu0 %v9232
        %v9767 = vpop.f32.mrf.mxu0
        %v9768 = vadd.f32 %v9394, %v9767
        %v9769 = vpop.f32.mrf.mxu0
        %v9770 = vadd.f32 %v9394, %v9769
        %9771 = vmatmul.bf16.gmra.mxu0 %v9236
        %v9772 = vpop.f32.mrf.mxu0
        %v9773 = vadd.f32 %v9394, %v9772
        %v9774 = vpop.f32.mrf.mxu0
        %v9775 = vadd.f32 %v9394, %v9774
        %9776 = vmatmul.bf16.gmra.mxu0 %v9240
        %v9777 = vpop.f32.mrf.mxu0
        %v9778 = vadd.f32 %v9394, %v9777
        %v9779 = vpop.f32.mrf.mxu0
        %v9780 = vadd.f32 %v9394, %v9779
        %9781 = vmatmul.bf16.gmra.mxu0 %v9244
        %v9782 = vpop.f32.mrf.mxu0
        %v9783 = vadd.f32 %v9394, %v9782
        %v9784 = vpop.f32.mrf.mxu0
        %v9785 = vadd.f32 %v9394, %v9784
        %9786 = vmatmul.bf16.gmra.mxu0 %v9248
        %v9787 = vpop.f32.mrf.mxu0
        %v9788 = vadd.f32 %v9394, %v9787
        %v9789 = vpop.f32.mrf.mxu0
        %v9790 = vadd.f32 %v9394, %v9789
        %9791 = vmatmul.bf16.gmra.mxu0 %v9252
        %v9792 = vpop.f32.mrf.mxu0
        %v9793 = vadd.f32 %v9394, %v9792
        %v9794 = vpop.f32.mrf.mxu0
        %v9795 = vadd.f32 %v9394, %v9794
        %9796 = vmatmul.bf16.gmra.mxu0 %v9256
        %v9797 = vpop.f32.mrf.mxu0
        %v9798 = vadd.f32 %v9394, %v9797
        %v9799 = vpop.f32.mrf.mxu0
        %v9800 = vadd.f32 %v9394, %v9799
        %9801 = vmatmul.bf16.gmra.mxu0 %v9260
        %v9802 = vpop.f32.mrf.mxu0
        %v9803 = vadd.f32 %v9394, %v9802
        %v9804 = vpop.f32.mrf.mxu0
        %v9805 = vadd.f32 %v9394, %v9804
        %9806 = vmatmul.bf16.gmra.mxu0 %v9264
        %v9807 = vpop.f32.mrf.mxu0
        %v9808 = vadd.f32 %v9394, %v9807
        %v9809 = vpop.f32.mrf.mxu0
        %v9810 = vadd.f32 %v9394, %v9809
        %9811 = vmatmul.bf16.gmra.mxu0 %v9268
        %v9812 = vpop.f32.mrf.mxu0
        %v9813 = vadd.f32 %v9394, %v9812
        %v9814 = vpop.f32.mrf.mxu0
        %v9815 = vadd.f32 %v9394, %v9814
        %9816 = vmatmul.bf16.gmra.mxu0 %v9272
        %v9817 = vpop.f32.mrf.mxu0
        %v9818 = vadd.f32 %v9394, %v9817
        %v9819 = vpop.f32.mrf.mxu0
        %v9820 = vadd.f32 %v9394, %v9819
        %9821 = vmatmul.bf16.gmra.mxu0 %v9276
        %v9822 = vpop.f32.mrf.mxu0
        %v9823 = vadd.f32 %v9394, %v9822
        %v9824 = vpop.f32.mrf.mxu0
        %v9825 = vadd.f32 %v9394, %v9824
        %9826 = vmatmul.bf16.gmra.mxu0 %v9280
        %v9827 = vpop.f32.mrf.mxu0
        %v9828 = vadd.f32 %v9394, %v9827
        %v9829 = vpop.f32.mrf.mxu0
        %v9830 = vadd.f32 %v9394, %v9829
        %9831 = vmatmul.bf16.gmra.mxu0 %v9284
        %v9832 = vpop.f32.mrf.mxu0
        %v9833 = vadd.f32 %v9394, %v9832
        %v9834 = vpop.f32.mrf.mxu0
        %v9835 = vadd.f32 %v9394, %v9834
        %9836 = vmatmul.bf16.gmra.mxu0 %v9288
        %v9837 = vpop.f32.mrf.mxu0
        %v9838 = vadd.f32 %v9394, %v9837
        %v9839 = vpop.f32.mrf.mxu0
        %v9840 = vadd.f32 %v9394, %v9839
        %9841 = vmatmul.bf16.gmra.mxu0 %v9292
        %v9842 = vpop.f32.mrf.mxu0
        %v9843 = vadd.f32 %v9394, %v9842
        %v9844 = vpop.f32.mrf.mxu0
        %v9845 = vadd.f32 %v9394, %v9844
        %9846 = vmatmul.bf16.gmra.mxu0 %v9296
        %v9847 = vpop.f32.mrf.mxu0
        %v9848 = vadd.f32 %v9394, %v9847
        %v9849 = vpop.f32.mrf.mxu0
        %v9850 = vadd.f32 %v9394, %v9849
        %9851 = vmatmul.bf16.gmra.mxu0 %v9300
        %v9852 = vpop.f32.mrf.mxu0
        %v9853 = vadd.f32 %v9394, %v9852
        %v9854 = vpop.f32.mrf.mxu0
        %v9855 = vadd.f32 %v9394, %v9854
        %9856 = vmatmul.bf16.gmra.mxu0 %v9304
        %v9857 = vpop.f32.mrf.mxu0
        %v9858 = vadd.f32 %v9394, %v9857
        %v9859 = vpop.f32.mrf.mxu0
        %v9860 = vadd.f32 %v9394, %v9859
        %9861 = vmatmul.bf16.gmra.mxu0 %v9308
        %v9862 = vpop.f32.mrf.mxu0
        %v9863 = vadd.f32 %v9394, %v9862
        %v9864 = vpop.f32.mrf.mxu0
        %v9865 = vadd.f32 %v9394, %v9864
        %9866 = vmatmul.bf16.gmra.mxu0 %v9312
        %v9867 = vpop.f32.mrf.mxu0
        %v9868 = vadd.f32 %v9394, %v9867
        %v9869 = vpop.f32.mrf.mxu0
        %v9870 = vadd.f32 %v9394, %v9869
        %9871 = vmatmul.bf16.gmra.mxu0 %v9316
        %v9872 = vpop.f32.mrf.mxu0
        %v9873 = vadd.f32 %v9394, %v9872
        %v9874 = vpop.f32.mrf.mxu0
        %v9875 = vadd.f32 %v9394, %v9874
        %9876 = vmatmul.bf16.gmra.mxu0 %v9320
        %v9877 = vpop.f32.mrf.mxu0
        %v9878 = vadd.f32 %v9394, %v9877
        %v9879 = vpop.f32.mrf.mxu0
        %v9880 = vadd.f32 %v9394, %v9879
        %9881 = vmatmul.bf16.gmra.mxu0 %v9324
        %v9882 = vpop.f32.mrf.mxu0
        %v9883 = vadd.f32 %v9394, %v9882
        %v9884 = vpop.f32.mrf.mxu0
        %v9885 = vadd.f32 %v9394, %v9884
        %9886 = vdwg.mxu0
        %9887 = vmatpush.bf16.msra.mxu0 %v9620
        %9888 = vmatpush.bf16.msra.mxu0 %v9618
        %9889 = vmatpush.bf16.msra.mxu0 %v9616
        %9890 = vmatpush.bf16.msra.mxu0 %v9614
        %9891 = vmatpush.bf16.msra.mxu0 %v9612
        %9892 = vmatpush.bf16.msra.mxu0 %v9610
        %9893 = vmatpush.bf16.msra.mxu0 %v9608
        %9894 = vmatpush.bf16.msra.mxu0 %v9606
        %9895 = vmatmul.bf16.gmra.mxu0 %v9201
        %v9896 = vpop.f32.mrf.mxu0
        %v9897 = vadd.f32 %v9728, %v9896
        %v9898 = vpop.f32.mrf.mxu0
        %v9899 = vadd.f32 %v9730, %v9898
        %9900 = vmatmul.bf16.gmra.mxu0 %v9205
        %v9901 = vpop.f32.mrf.mxu0
        %v9902 = vadd.f32 %v9733, %v9901
        %v9903 = vpop.f32.mrf.mxu0
        %v9904 = vadd.f32 %v9735, %v9903
        %9905 = vmatmul.bf16.gmra.mxu0 %v9209
        %v9906 = vpop.f32.mrf.mxu0
        %v9907 = vadd.f32 %v9738, %v9906
        %v9908 = vpop.f32.mrf.mxu0
        %v9909 = vadd.f32 %v9740, %v9908
        %9910 = vmatmul.bf16.gmra.mxu0 %v9213
        %v9911 = vpop.f32.mrf.mxu0
        %v9912 = vadd.f32 %v9743, %v9911
        %v9913 = vpop.f32.mrf.mxu0
        %v9914 = vadd.f32 %v9745, %v9913
        %9915 = vmatmul.bf16.gmra.mxu0 %v9217
        %v9916 = vpop.f32.mrf.mxu0
        %v9917 = vadd.f32 %v9748, %v9916
        %v9918 = vpop.f32.mrf.mxu0
        %v9919 = vadd.f32 %v9750, %v9918
        %9920 = vmatmul.bf16.gmra.mxu0 %v9221
        %v9921 = vpop.f32.mrf.mxu0
        %v9922 = vadd.f32 %v9753, %v9921
        %v9923 = vpop.f32.mrf.mxu0
        %v9924 = vadd.f32 %v9755, %v9923
        %9925 = vmatmul.bf16.gmra.mxu0 %v9225
        %v9926 = vpop.f32.mrf.mxu0
        %v9927 = vadd.f32 %v9758, %v9926
        %v9928 = vpop.f32.mrf.mxu0
        %v9929 = vadd.f32 %v9760, %v9928
        %9930 = vmatmul.bf16.gmra.mxu0 %v9229
        %v9931 = vpop.f32.mrf.mxu0
        %v9932 = vadd.f32 %v9763, %v9931
        %v9933 = vpop.f32.mrf.mxu0
        %v9934 = vadd.f32 %v9765, %v9933
        %9935 = vmatmul.bf16.gmra.mxu0 %v9233
        %v9936 = vpop.f32.mrf.mxu0
        %v9937 = vadd.f32 %v9768, %v9936
        %v9938 = vpop.f32.mrf.mxu0
        %v9939 = vadd.f32 %v9770, %v9938
        %9940 = vmatmul.bf16.gmra.mxu0 %v9237
        %v9941 = vpop.f32.mrf.mxu0
        %v9942 = vadd.f32 %v9773, %v9941
        %v9943 = vpop.f32.mrf.mxu0
        %v9944 = vadd.f32 %v9775, %v9943
        %9945 = vmatmul.bf16.gmra.mxu0 %v9241
        %v9946 = vpop.f32.mrf.mxu0
        %v9947 = vadd.f32 %v9778, %v9946
        %v9948 = vpop.f32.mrf.mxu0
        %v9949 = vadd.f32 %v9780, %v9948
        %9950 = vmatmul.bf16.gmra.mxu0 %v9245
        %v9951 = vpop.f32.mrf.mxu0
        %v9952 = vadd.f32 %v9783, %v9951
        %v9953 = vpop.f32.mrf.mxu0
        %v9954 = vadd.f32 %v9785, %v9953
        %9955 = vmatmul.bf16.gmra.mxu0 %v9249
        %v9956 = vpop.f32.mrf.mxu0
        %v9957 = vadd.f32 %v9788, %v9956
        %v9958 = vpop.f32.mrf.mxu0
        %v9959 = vadd.f32 %v9790, %v9958
        %9960 = vmatmul.bf16.gmra.mxu0 %v9253
        %v9961 = vpop.f32.mrf.mxu0
        %v9962 = vadd.f32 %v9793, %v9961
        %v9963 = vpop.f32.mrf.mxu0
        %v9964 = vadd.f32 %v9795, %v9963
        %9965 = vmatmul.bf16.gmra.mxu0 %v9257
        %v9966 = vpop.f32.mrf.mxu0
        %v9967 = vadd.f32 %v9798, %v9966
        %v9968 = vpop.f32.mrf.mxu0
        %v9969 = vadd.f32 %v9800, %v9968
        %9970 = vmatmul.bf16.gmra.mxu0 %v9261
        %v9971 = vpop.f32.mrf.mxu0
        %v9972 = vadd.f32 %v9803, %v9971
        %v9973 = vpop.f32.mrf.mxu0
        %v9974 = vadd.f32 %v9805, %v9973
        %9975 = vmatmul.bf16.gmra.mxu0 %v9265
        %v9976 = vpop.f32.mrf.mxu0
        %v9977 = vadd.f32 %v9808, %v9976
        %v9978 = vpop.f32.mrf.mxu0
        %v9979 = vadd.f32 %v9810, %v9978
        %9980 = vmatmul.bf16.gmra.mxu0 %v9269
        %v9981 = vpop.f32.mrf.mxu0
        %v9982 = vadd.f32 %v9813, %v9981
        %v9983 = vpop.f32.mrf.mxu0
        %v9984 = vadd.f32 %v9815, %v9983
        %9985 = vmatmul.bf16.gmra.mxu0 %v9273
        %v9986 = vpop.f32.mrf.mxu0
        %v9987 = vadd.f32 %v9818, %v9986
        %v9988 = vpop.f32.mrf.mxu0
        %v9989 = vadd.f32 %v9820, %v9988
        %9990 = vmatmul.bf16.gmra.mxu0 %v9277
        %v9991 = vpop.f32.mrf.mxu0
        %v9992 = vadd.f32 %v9823, %v9991
        %v9993 = vpop.f32.mrf.mxu0
        %v9994 = vadd.f32 %v9825, %v9993
        %9995 = vmatmul.bf16.gmra.mxu0 %v9281
        %v9996 = vpop.f32.mrf.mxu0
        %v9997 = vadd.f32 %v9828, %v9996
        %v9998 = vpop.f32.mrf.mxu0
        %v9999 = vadd.f32 %v9830, %v9998
        %10000 = vmatmul.bf16.gmra.mxu0 %v9285
        %v10001 = vpop.f32.mrf.mxu0
        %v10002 = vadd.f32 %v9833, %v10001
        %v10003 = vpop.f32.mrf.mxu0
        %v10004 = vadd.f32 %v9835, %v10003
        %10005 = vmatmul.bf16.gmra.mxu0 %v9289
        %v10006 = vpop.f32.mrf.mxu0
        %v10007 = vadd.f32 %v9838, %v10006
        %v10008 = vpop.f32.mrf.mxu0
        %v10009 = vadd.f32 %v9840, %v10008
        %10010 = vmatmul.bf16.gmra.mxu0 %v9293
        %v10011 = vpop.f32.mrf.mxu0
        %v10012 = vadd.f32 %v9843, %v10011
        %v10013 = vpop.f32.mrf.mxu0
        %v10014 = vadd.f32 %v9845, %v10013
        %10015 = vmatmul.bf16.gmra.mxu0 %v9297
        %v10016 = vpop.f32.mrf.mxu0
        %v10017 = vadd.f32 %v9848, %v10016
        %v10018 = vpop.f32.mrf.mxu0
        %v10019 = vadd.f32 %v9850, %v10018
        %10020 = vmatmul.bf16.gmra.mxu0 %v9301
        %v10021 = vpop.f32.mrf.mxu0
        %v10022 = vadd.f32 %v9853, %v10021
        %v10023 = vpop.f32.mrf.mxu0
        %v10024 = vadd.f32 %v9855, %v10023
        %10025 = vmatmul.bf16.gmra.mxu0 %v9305
        %v10026 = vpop.f32.mrf.mxu0
        %v10027 = vadd.f32 %v9858, %v10026
        %v10028 = vpop.f32.mrf.mxu0
        %v10029 = vadd.f32 %v9860, %v10028
        %10030 = vmatmul.bf16.gmra.mxu0 %v9309
        %v10031 = vpop.f32.mrf.mxu0
        %v10032 = vadd.f32 %v9863, %v10031
        %v10033 = vpop.f32.mrf.mxu0
        %v10034 = vadd.f32 %v9865, %v10033
        %10035 = vmatmul.bf16.gmra.mxu0 %v9313
        %v10036 = vpop.f32.mrf.mxu0
        %v10037 = vadd.f32 %v9868, %v10036
        %v10038 = vpop.f32.mrf.mxu0
        %v10039 = vadd.f32 %v9870, %v10038
        %10040 = vmatmul.bf16.gmra.mxu0 %v9317
        %v10041 = vpop.f32.mrf.mxu0
        %v10042 = vadd.f32 %v9873, %v10041
        %v10043 = vpop.f32.mrf.mxu0
        %v10044 = vadd.f32 %v9875, %v10043
        %10045 = vmatmul.bf16.gmra.mxu0 %v9321
        %v10046 = vpop.f32.mrf.mxu0
        %v10047 = vadd.f32 %v9878, %v10046
        %v10048 = vpop.f32.mrf.mxu0
        %v10049 = vadd.f32 %v9880, %v10048
        %10050 = vmatmul.bf16.gmra.mxu0 %v9325
        %v10051 = vpop.f32.mrf.mxu0
        %v10052 = vadd.f32 %v9883, %v10051
        %v10053 = vpop.f32.mrf.mxu0
        %v10054 = vadd.f32 %v9885, %v10053
        %10055 = vdwg.mxu0
        %10056 = vmatpush.bf16.msra.mxu0 %v9636
        %10057 = vmatpush.bf16.msra.mxu0 %v9634
        %10058 = vmatpush.bf16.msra.mxu0 %v9632
        %10059 = vmatpush.bf16.msra.mxu0 %v9630
        %10060 = vmatpush.bf16.msra.mxu0 %v9628
        %10061 = vmatpush.bf16.msra.mxu0 %v9626
        %10062 = vmatpush.bf16.msra.mxu0 %v9624
        %10063 = vmatpush.bf16.msra.mxu0 %v9622
        %10064 = vmatmul.bf16.gmra.mxu0 %v9202
        %v10065 = vpop.f32.mrf.mxu0
        %v10066 = vadd.f32 %v9897, %v10065
        %v10067 = vpop.f32.mrf.mxu0
        %v10068 = vadd.f32 %v9899, %v10067
        %10069 = vmatmul.bf16.gmra.mxu0 %v9206
        %v10070 = vpop.f32.mrf.mxu0
        %v10071 = vadd.f32 %v9902, %v10070
        %v10072 = vpop.f32.mrf.mxu0
        %v10073 = vadd.f32 %v9904, %v10072
        %10074 = vmatmul.bf16.gmra.mxu0 %v9210
        %v10075 = vpop.f32.mrf.mxu0
        %v10076 = vadd.f32 %v9907, %v10075
        %v10077 = vpop.f32.mrf.mxu0
        %v10078 = vadd.f32 %v9909, %v10077
        %10079 = vmatmul.bf16.gmra.mxu0 %v9214
        %v10080 = vpop.f32.mrf.mxu0
        %v10081 = vadd.f32 %v9912, %v10080
        %v10082 = vpop.f32.mrf.mxu0
        %v10083 = vadd.f32 %v9914, %v10082
        %10084 = vmatmul.bf16.gmra.mxu0 %v9218
        %v10085 = vpop.f32.mrf.mxu0
        %v10086 = vadd.f32 %v9917, %v10085
        %v10087 = vpop.f32.mrf.mxu0
        %v10088 = vadd.f32 %v9919, %v10087
        %10089 = vmatmul.bf16.gmra.mxu0 %v9222
        %v10090 = vpop.f32.mrf.mxu0
        %v10091 = vadd.f32 %v9922, %v10090
        %v10092 = vpop.f32.mrf.mxu0
        %v10093 = vadd.f32 %v9924, %v10092
        %10094 = vmatmul.bf16.gmra.mxu0 %v9226
        %v10095 = vpop.f32.mrf.mxu0
        %v10096 = vadd.f32 %v9927, %v10095
        %v10097 = vpop.f32.mrf.mxu0
        %v10098 = vadd.f32 %v9929, %v10097
        %10099 = vmatmul.bf16.gmra.mxu0 %v9230
        %v10100 = vpop.f32.mrf.mxu0
        %v10101 = vadd.f32 %v9932, %v10100
        %v10102 = vpop.f32.mrf.mxu0
        %v10103 = vadd.f32 %v9934, %v10102
        %10104 = vmatmul.bf16.gmra.mxu0 %v9234
        %v10105 = vpop.f32.mrf.mxu0
        %v10106 = vadd.f32 %v9937, %v10105
        %v10107 = vpop.f32.mrf.mxu0
        %v10108 = vadd.f32 %v9939, %v10107
        %10109 = vmatmul.bf16.gmra.mxu0 %v9238
        %v10110 = vpop.f32.mrf.mxu0
        %v10111 = vadd.f32 %v9942, %v10110
        %v10112 = vpop.f32.mrf.mxu0
        %v10113 = vadd.f32 %v9944, %v10112
        %10114 = vmatmul.bf16.gmra.mxu0 %v9242
        %v10115 = vpop.f32.mrf.mxu0
        %v10116 = vadd.f32 %v9947, %v10115
        %v10117 = vpop.f32.mrf.mxu0
        %v10118 = vadd.f32 %v9949, %v10117
        %10119 = vmatmul.bf16.gmra.mxu0 %v9246
        %v10120 = vpop.f32.mrf.mxu0
        %v10121 = vadd.f32 %v9952, %v10120
        %v10122 = vpop.f32.mrf.mxu0
        %v10123 = vadd.f32 %v9954, %v10122
        %10124 = vmatmul.bf16.gmra.mxu0 %v9250
        %v10125 = vpop.f32.mrf.mxu0
        %v10126 = vadd.f32 %v9957, %v10125
        %v10127 = vpop.f32.mrf.mxu0
        %v10128 = vadd.f32 %v9959, %v10127
        %10129 = vmatmul.bf16.gmra.mxu0 %v9254
        %v10130 = vpop.f32.mrf.mxu0
        %v10131 = vadd.f32 %v9962, %v10130
        %v10132 = vpop.f32.mrf.mxu0
        %v10133 = vadd.f32 %v9964, %v10132
        %10134 = vmatmul.bf16.gmra.mxu0 %v9258
        %v10135 = vpop.f32.mrf.mxu0
        %v10136 = vadd.f32 %v9967, %v10135
        %v10137 = vpop.f32.mrf.mxu0
        %v10138 = vadd.f32 %v9969, %v10137
        %10139 = vmatmul.bf16.gmra.mxu0 %v9262
        %v10140 = vpop.f32.mrf.mxu0
        %v10141 = vadd.f32 %v9972, %v10140
        %v10142 = vpop.f32.mrf.mxu0
        %v10143 = vadd.f32 %v9974, %v10142
        %10144 = vmatmul.bf16.gmra.mxu0 %v9266
        %v10145 = vpop.f32.mrf.mxu0
        %v10146 = vadd.f32 %v9977, %v10145
        %v10147 = vpop.f32.mrf.mxu0
        %v10148 = vadd.f32 %v9979, %v10147
        %10149 = vmatmul.bf16.gmra.mxu0 %v9270
        %v10150 = vpop.f32.mrf.mxu0
        %v10151 = vadd.f32 %v9982, %v10150
        %v10152 = vpop.f32.mrf.mxu0
        %v10153 = vadd.f32 %v9984, %v10152
        %10154 = vmatmul.bf16.gmra.mxu0 %v9274
        %v10155 = vpop.f32.mrf.mxu0
        %v10156 = vadd.f32 %v9987, %v10155
        %v10157 = vpop.f32.mrf.mxu0
        %v10158 = vadd.f32 %v9989, %v10157
        %10159 = vmatmul.bf16.gmra.mxu0 %v9278
        %v10160 = vpop.f32.mrf.mxu0
        %v10161 = vadd.f32 %v9992, %v10160
        %v10162 = vpop.f32.mrf.mxu0
        %v10163 = vadd.f32 %v9994, %v10162
        %10164 = vmatmul.bf16.gmra.mxu0 %v9282
        %v10165 = vpop.f32.mrf.mxu0
        %v10166 = vadd.f32 %v9997, %v10165
        %v10167 = vpop.f32.mrf.mxu0
        %v10168 = vadd.f32 %v9999, %v10167
        %10169 = vmatmul.bf16.gmra.mxu0 %v9286
        %v10170 = vpop.f32.mrf.mxu0
        %v10171 = vadd.f32 %v10002, %v10170
        %v10172 = vpop.f32.mrf.mxu0
        %v10173 = vadd.f32 %v10004, %v10172
        %10174 = vmatmul.bf16.gmra.mxu0 %v9290
        %v10175 = vpop.f32.mrf.mxu0
        %v10176 = vadd.f32 %v10007, %v10175
        %v10177 = vpop.f32.mrf.mxu0
        %v10178 = vadd.f32 %v10009, %v10177
        %10179 = vmatmul.bf16.gmra.mxu0 %v9294
        %v10180 = vpop.f32.mrf.mxu0
        %v10181 = vadd.f32 %v10012, %v10180
        %v10182 = vpop.f32.mrf.mxu0
        %v10183 = vadd.f32 %v10014, %v10182
        %10184 = vmatmul.bf16.gmra.mxu0 %v9298
        %v10185 = vpop.f32.mrf.mxu0
        %v10186 = vadd.f32 %v10017, %v10185
        %v10187 = vpop.f32.mrf.mxu0
        %v10188 = vadd.f32 %v10019, %v10187
        %10189 = vmatmul.bf16.gmra.mxu0 %v9302
        %v10190 = vpop.f32.mrf.mxu0
        %v10191 = vadd.f32 %v10022, %v10190
        %v10192 = vpop.f32.mrf.mxu0
        %v10193 = vadd.f32 %v10024, %v10192
        %10194 = vmatmul.bf16.gmra.mxu0 %v9306
        %v10195 = vpop.f32.mrf.mxu0
        %v10196 = vadd.f32 %v10027, %v10195
        %v10197 = vpop.f32.mrf.mxu0
        %v10198 = vadd.f32 %v10029, %v10197
        %10199 = vmatmul.bf16.gmra.mxu0 %v9310
        %v10200 = vpop.f32.mrf.mxu0
        %v10201 = vadd.f32 %v10032, %v10200
        %v10202 = vpop.f32.mrf.mxu0
        %v10203 = vadd.f32 %v10034, %v10202
        %10204 = vmatmul.bf16.gmra.mxu0 %v9314
        %v10205 = vpop.f32.mrf.mxu0
        %v10206 = vadd.f32 %v10037, %v10205
        %v10207 = vpop.f32.mrf.mxu0
        %v10208 = vadd.f32 %v10039, %v10207
        %10209 = vmatmul.bf16.gmra.mxu0 %v9318
        %v10210 = vpop.f32.mrf.mxu0
        %v10211 = vadd.f32 %v10042, %v10210
        %v10212 = vpop.f32.mrf.mxu0
        %v10213 = vadd.f32 %v10044, %v10212
        %10214 = vmatmul.bf16.gmra.mxu0 %v9322
        %v10215 = vpop.f32.mrf.mxu0
        %v10216 = vadd.f32 %v10047, %v10215
        %v10217 = vpop.f32.mrf.mxu0
        %v10218 = vadd.f32 %v10049, %v10217
        %10219 = vmatmul.bf16.gmra.mxu0 %v9326
        %v10220 = vpop.f32.mrf.mxu0
        %v10221 = vadd.f32 %v10052, %v10220
        %v10222 = vpop.f32.mrf.mxu0
        %v10223 = vadd.f32 %v10054, %v10222
        %10224 = vdwg.mxu0
        %10225 = vmatpush.bf16.msra.mxu0 %v9652
        %10226 = vmatpush.bf16.msra.mxu0 %v9650
        %10227 = vmatpush.bf16.msra.mxu0 %v9648
        %10228 = vmatpush.bf16.msra.mxu0 %v9646
        %10229 = vmatpush.bf16.msra.mxu0 %v9644
        %10230 = vmatpush.bf16.msra.mxu0 %v9642
        %10231 = vmatpush.bf16.msra.mxu0 %v9640
        %10232 = vmatpush.bf16.msra.mxu0 %v9638
        %10233 = vmatmul.bf16.gmra.mxu0 %v9203
        %v10234 = vpop.f32.mrf.mxu0
        %v10235 = vadd.f32 %v10066, %v10234
        %v10236 = vpop.f32.mrf.mxu0
        %v10237 = vadd.f32 %v10068, %v10236
        %10238 = vmatmul.bf16.gmra.mxu0 %v9207
        %v10239 = vpop.f32.mrf.mxu0
        %v10240 = vadd.f32 %v10071, %v10239
        %v10241 = vpop.f32.mrf.mxu0
        %v10242 = vadd.f32 %v10073, %v10241
        %10243 = vmatmul.bf16.gmra.mxu0 %v9211
        %v10244 = vpop.f32.mrf.mxu0
        %v10245 = vadd.f32 %v10076, %v10244
        %v10246 = vpop.f32.mrf.mxu0
        %v10247 = vadd.f32 %v10078, %v10246
        %10248 = vmatmul.bf16.gmra.mxu0 %v9215
        %v10249 = vpop.f32.mrf.mxu0
        %v10250 = vadd.f32 %v10081, %v10249
        %v10251 = vpop.f32.mrf.mxu0
        %v10252 = vadd.f32 %v10083, %v10251
        %10253 = vmatmul.bf16.gmra.mxu0 %v9219
        %v10254 = vpop.f32.mrf.mxu0
        %v10255 = vadd.f32 %v10086, %v10254
        %v10256 = vpop.f32.mrf.mxu0
        %v10257 = vadd.f32 %v10088, %v10256
        %10258 = vmatmul.bf16.gmra.mxu0 %v9223
        %v10259 = vpop.f32.mrf.mxu0
        %v10260 = vadd.f32 %v10091, %v10259
        %v10261 = vpop.f32.mrf.mxu0
        %v10262 = vadd.f32 %v10093, %v10261
        %10263 = vmatmul.bf16.gmra.mxu0 %v9227
        %v10264 = vpop.f32.mrf.mxu0
        %v10265 = vadd.f32 %v10096, %v10264
        %v10266 = vpop.f32.mrf.mxu0
        %v10267 = vadd.f32 %v10098, %v10266
        %10268 = vmatmul.bf16.gmra.mxu0 %v9231
        %v10269 = vpop.f32.mrf.mxu0
        %v10270 = vadd.f32 %v10101, %v10269
        %v10271 = vpop.f32.mrf.mxu0
        %v10272 = vadd.f32 %v10103, %v10271
        %10273 = vmatmul.bf16.gmra.mxu0 %v9235
        %v10274 = vpop.f32.mrf.mxu0
        %v10275 = vadd.f32 %v10106, %v10274
        %v10276 = vpop.f32.mrf.mxu0
        %v10277 = vadd.f32 %v10108, %v10276
        %10278 = vmatmul.bf16.gmra.mxu0 %v9239
        %v10279 = vpop.f32.mrf.mxu0
        %v10280 = vadd.f32 %v10111, %v10279
        %v10281 = vpop.f32.mrf.mxu0
        %v10282 = vadd.f32 %v10113, %v10281
        %10283 = vmatmul.bf16.gmra.mxu0 %v9243
        %v10284 = vpop.f32.mrf.mxu0
        %v10285 = vadd.f32 %v10116, %v10284
        %v10286 = vpop.f32.mrf.mxu0
        %v10287 = vadd.f32 %v10118, %v10286
        %10288 = vmatmul.bf16.gmra.mxu0 %v9247
        %v10289 = vpop.f32.mrf.mxu0
        %v10290 = vadd.f32 %v10121, %v10289
        %v10291 = vpop.f32.mrf.mxu0
        %v10292 = vadd.f32 %v10123, %v10291
        %10293 = vmatmul.bf16.gmra.mxu0 %v9251
        %v10294 = vpop.f32.mrf.mxu0
        %v10295 = vadd.f32 %v10126, %v10294
        %v10296 = vpop.f32.mrf.mxu0
        %v10297 = vadd.f32 %v10128, %v10296
        %10298 = vmatmul.bf16.gmra.mxu0 %v9255
        %v10299 = vpop.f32.mrf.mxu0
        %v10300 = vadd.f32 %v10131, %v10299
        %v10301 = vpop.f32.mrf.mxu0
        %v10302 = vadd.f32 %v10133, %v10301
        %10303 = vmatmul.bf16.gmra.mxu0 %v9259
        %v10304 = vpop.f32.mrf.mxu0
        %v10305 = vadd.f32 %v10136, %v10304
        %v10306 = vpop.f32.mrf.mxu0
        %v10307 = vadd.f32 %v10138, %v10306
        %10308 = vmatmul.bf16.gmra.mxu0 %v9263
        %v10309 = vpop.f32.mrf.mxu0
        %v10310 = vadd.f32 %v10141, %v10309
        %v10311 = vpop.f32.mrf.mxu0
        %v10312 = vadd.f32 %v10143, %v10311
        %10313 = vmatmul.bf16.gmra.mxu0 %v9267
        %v10314 = vpop.f32.mrf.mxu0
        %v10315 = vadd.f32 %v10146, %v10314
        %v10316 = vpop.f32.mrf.mxu0
        %v10317 = vadd.f32 %v10148, %v10316
        %10318 = vmatmul.bf16.gmra.mxu0 %v9271
        %v10319 = vpop.f32.mrf.mxu0
        %v10320 = vadd.f32 %v10151, %v10319
        %v10321 = vpop.f32.mrf.mxu0
        %v10322 = vadd.f32 %v10153, %v10321
        %10323 = vmatmul.bf16.gmra.mxu0 %v9275
        %v10324 = vpop.f32.mrf.mxu0
        %v10325 = vadd.f32 %v10156, %v10324
        %v10326 = vpop.f32.mrf.mxu0
        %v10327 = vadd.f32 %v10158, %v10326
        %10328 = vmatmul.bf16.gmra.mxu0 %v9279
        %v10329 = vpop.f32.mrf.mxu0
        %v10330 = vadd.f32 %v10161, %v10329
        %v10331 = vpop.f32.mrf.mxu0
        %v10332 = vadd.f32 %v10163, %v10331
        %10333 = vmatmul.bf16.gmra.mxu0 %v9283
        %v10334 = vpop.f32.mrf.mxu0
        %v10335 = vadd.f32 %v10166, %v10334
        %v10336 = vpop.f32.mrf.mxu0
        %v10337 = vadd.f32 %v10168, %v10336
        %10338 = vmatmul.bf16.gmra.mxu0 %v9287
        %v10339 = vpop.f32.mrf.mxu0
        %v10340 = vadd.f32 %v10171, %v10339
        %v10341 = vpop.f32.mrf.mxu0
        %v10342 = vadd.f32 %v10173, %v10341
        %10343 = vmatmul.bf16.gmra.mxu0 %v9291
        %v10344 = vpop.f32.mrf.mxu0
        %v10345 = vadd.f32 %v10176, %v10344
        %v10346 = vpop.f32.mrf.mxu0
        %v10347 = vadd.f32 %v10178, %v10346
        %10348 = vmatmul.bf16.gmra.mxu0 %v9295
        %v10349 = vpop.f32.mrf.mxu0
        %v10350 = vadd.f32 %v10181, %v10349
        %v10351 = vpop.f32.mrf.mxu0
        %v10352 = vadd.f32 %v10183, %v10351
        %10353 = vmatmul.bf16.gmra.mxu0 %v9299
        %v10354 = vpop.f32.mrf.mxu0
        %v10355 = vadd.f32 %v10186, %v10354
        %v10356 = vpop.f32.mrf.mxu0
        %v10357 = vadd.f32 %v10188, %v10356
        %10358 = vmatmul.bf16.gmra.mxu0 %v9303
        %v10359 = vpop.f32.mrf.mxu0
        %v10360 = vadd.f32 %v10191, %v10359
        %v10361 = vpop.f32.mrf.mxu0
        %v10362 = vadd.f32 %v10193, %v10361
        %10363 = vmatmul.bf16.gmra.mxu0 %v9307
        %v10364 = vpop.f32.mrf.mxu0
        %v10365 = vadd.f32 %v10196, %v10364
        %v10366 = vpop.f32.mrf.mxu0
        %v10367 = vadd.f32 %v10198, %v10366
        %10368 = vmatmul.bf16.gmra.mxu0 %v9311
        %v10369 = vpop.f32.mrf.mxu0
        %v10370 = vadd.f32 %v10201, %v10369
        %v10371 = vpop.f32.mrf.mxu0
        %v10372 = vadd.f32 %v10203, %v10371
        %10373 = vmatmul.bf16.gmra.mxu0 %v9315
        %v10374 = vpop.f32.mrf.mxu0
        %v10375 = vadd.f32 %v10206, %v10374
        %v10376 = vpop.f32.mrf.mxu0
        %v10377 = vadd.f32 %v10208, %v10376
        %10378 = vmatmul.bf16.gmra.mxu0 %v9319
        %v10379 = vpop.f32.mrf.mxu0
        %v10380 = vadd.f32 %v10211, %v10379
        %v10381 = vpop.f32.mrf.mxu0
        %v10382 = vadd.f32 %v10213, %v10381
        %10383 = vmatmul.bf16.gmra.mxu0 %v9323
        %v10384 = vpop.f32.mrf.mxu0
        %v10385 = vadd.f32 %v10216, %v10384
        %v10386 = vpop.f32.mrf.mxu0
        %v10387 = vadd.f32 %v10218, %v10386
        %10388 = vmatmul.bf16.gmra.mxu0 %v9327
        %v10389 = vpop.f32.mrf.mxu0
        %v10390 = vadd.f32 %v10221, %v10389
        %v10391 = vpop.f32.mrf.mxu0
        %v10392 = vadd.f32 %v10223, %v10391
        %10393 = vdwg.mxu0
        %10394 = vmatpush.bf16.msra.mxu0 %v9605
        %10395 = vmatpush.bf16.msra.mxu0 %v9603
        %10396 = vmatpush.bf16.msra.mxu0 %v9601
        %10397 = vmatpush.bf16.msra.mxu0 %v9599
        %10398 = vmatpush.bf16.msra.mxu0 %v9597
        %10399 = vmatpush.bf16.msra.mxu0 %v9595
        %10400 = vmatpush.bf16.msra.mxu0 %v9593
        %10401 = vmatpush.bf16.msra.mxu0 %v9591
        %10402 = vmatmul.bf16.gmra.mxu0 %v9200
        %v10403 = vpop.f32.mrf.mxu0
        %v10404 = vadd.f32 %v9395, %v10403
        %v10405 = vpop.f32.mrf.mxu0
        %v10406 = vadd.f32 %v9395, %v10405
        %10407 = vmatmul.bf16.gmra.mxu0 %v9204
        %v10408 = vpop.f32.mrf.mxu0
        %v10409 = vadd.f32 %v9395, %v10408
        %v10410 = vpop.f32.mrf.mxu0
        %v10411 = vadd.f32 %v9395, %v10410
        %10412 = vmatmul.bf16.gmra.mxu0 %v9208
        %v10413 = vpop.f32.mrf.mxu0
        %v10414 = vadd.f32 %v9395, %v10413
        %v10415 = vpop.f32.mrf.mxu0
        %v10416 = vadd.f32 %v9395, %v10415
        %10417 = vmatmul.bf16.gmra.mxu0 %v9212
        %v10418 = vpop.f32.mrf.mxu0
        %v10419 = vadd.f32 %v9395, %v10418
        %v10420 = vpop.f32.mrf.mxu0
        %v10421 = vadd.f32 %v9395, %v10420
        %10422 = vmatmul.bf16.gmra.mxu0 %v9216
        %v10423 = vpop.f32.mrf.mxu0
        %v10424 = vadd.f32 %v9395, %v10423
        %v10425 = vpop.f32.mrf.mxu0
        %v10426 = vadd.f32 %v9395, %v10425
        %10427 = vmatmul.bf16.gmra.mxu0 %v9220
        %v10428 = vpop.f32.mrf.mxu0
        %v10429 = vadd.f32 %v9395, %v10428
        %v10430 = vpop.f32.mrf.mxu0
        %v10431 = vadd.f32 %v9395, %v10430
        %10432 = vmatmul.bf16.gmra.mxu0 %v9224
        %v10433 = vpop.f32.mrf.mxu0
        %v10434 = vadd.f32 %v9395, %v10433
        %v10435 = vpop.f32.mrf.mxu0
        %v10436 = vadd.f32 %v9395, %v10435
        %10437 = vmatmul.bf16.gmra.mxu0 %v9228
        %v10438 = vpop.f32.mrf.mxu0
        %v10439 = vadd.f32 %v9395, %v10438
        %v10440 = vpop.f32.mrf.mxu0
        %v10441 = vadd.f32 %v9395, %v10440
        %10442 = vmatmul.bf16.gmra.mxu0 %v9232
        %v10443 = vpop.f32.mrf.mxu0
        %v10444 = vadd.f32 %v9395, %v10443
        %v10445 = vpop.f32.mrf.mxu0
        %v10446 = vadd.f32 %v9395, %v10445
        %10447 = vmatmul.bf16.gmra.mxu0 %v9236
        %v10448 = vpop.f32.mrf.mxu0
        %v10449 = vadd.f32 %v9395, %v10448
        %v10450 = vpop.f32.mrf.mxu0
        %v10451 = vadd.f32 %v9395, %v10450
        %10452 = vmatmul.bf16.gmra.mxu0 %v9240
        %v10453 = vpop.f32.mrf.mxu0
        %v10454 = vadd.f32 %v9395, %v10453
        %v10455 = vpop.f32.mrf.mxu0
        %v10456 = vadd.f32 %v9395, %v10455
        %10457 = vmatmul.bf16.gmra.mxu0 %v9244
        %v10458 = vpop.f32.mrf.mxu0
        %v10459 = vadd.f32 %v9395, %v10458
        %v10460 = vpop.f32.mrf.mxu0
        %v10461 = vadd.f32 %v9395, %v10460
        %10462 = vmatmul.bf16.gmra.mxu0 %v9248
        %v10463 = vpop.f32.mrf.mxu0
        %v10464 = vadd.f32 %v9395, %v10463
        %v10465 = vpop.f32.mrf.mxu0
        %v10466 = vadd.f32 %v9395, %v10465
        %10467 = vmatmul.bf16.gmra.mxu0 %v9252
        %v10468 = vpop.f32.mrf.mxu0
        %v10469 = vadd.f32 %v9395, %v10468
        %v10470 = vpop.f32.mrf.mxu0
        %v10471 = vadd.f32 %v9395, %v10470
        %10472 = vmatmul.bf16.gmra.mxu0 %v9256
        %v10473 = vpop.f32.mrf.mxu0
        %v10474 = vadd.f32 %v9395, %v10473
        %v10475 = vpop.f32.mrf.mxu0
        %v10476 = vadd.f32 %v9395, %v10475
        %10477 = vmatmul.bf16.gmra.mxu0 %v9260
        %v10478 = vpop.f32.mrf.mxu0
        %v10479 = vadd.f32 %v9395, %v10478
        %v10480 = vpop.f32.mrf.mxu0
        %v10481 = vadd.f32 %v9395, %v10480
        %10482 = vmatmul.bf16.gmra.mxu0 %v9264
        %v10483 = vpop.f32.mrf.mxu0
        %v10484 = vadd.f32 %v9395, %v10483
        %v10485 = vpop.f32.mrf.mxu0
        %v10486 = vadd.f32 %v9395, %v10485
        %10487 = vmatmul.bf16.gmra.mxu0 %v9268
        %v10488 = vpop.f32.mrf.mxu0
        %v10489 = vadd.f32 %v9395, %v10488
        %v10490 = vpop.f32.mrf.mxu0
        %v10491 = vadd.f32 %v9395, %v10490
        %10492 = vmatmul.bf16.gmra.mxu0 %v9272
        %v10493 = vpop.f32.mrf.mxu0
        %v10494 = vadd.f32 %v9395, %v10493
        %v10495 = vpop.f32.mrf.mxu0
        %v10496 = vadd.f32 %v9395, %v10495
        %10497 = vmatmul.bf16.gmra.mxu0 %v9276
        %v10498 = vpop.f32.mrf.mxu0
        %v10499 = vadd.f32 %v9395, %v10498
        %v10500 = vpop.f32.mrf.mxu0
        %v10501 = vadd.f32 %v9395, %v10500
        %10502 = vmatmul.bf16.gmra.mxu0 %v9280
        %v10503 = vpop.f32.mrf.mxu0
        %v10504 = vadd.f32 %v9395, %v10503
        %v10505 = vpop.f32.mrf.mxu0
        %v10506 = vadd.f32 %v9395, %v10505
        %10507 = vmatmul.bf16.gmra.mxu0 %v9284
        %v10508 = vpop.f32.mrf.mxu0
        %v10509 = vadd.f32 %v9395, %v10508
        %v10510 = vpop.f32.mrf.mxu0
        %v10511 = vadd.f32 %v9395, %v10510
        %10512 = vmatmul.bf16.gmra.mxu0 %v9288
        %v10513 = vpop.f32.mrf.mxu0
        %v10514 = vadd.f32 %v9395, %v10513
        %v10515 = vpop.f32.mrf.mxu0
        %v10516 = vadd.f32 %v9395, %v10515
        %10517 = vmatmul.bf16.gmra.mxu0 %v9292
        %v10518 = vpop.f32.mrf.mxu0
        %v10519 = vadd.f32 %v9395, %v10518
        %v10520 = vpop.f32.mrf.mxu0
        %v10521 = vadd.f32 %v9395, %v10520
        %10522 = vmatmul.bf16.gmra.mxu0 %v9296
        %v10523 = vpop.f32.mrf.mxu0
        %v10524 = vadd.f32 %v9395, %v10523
        %v10525 = vpop.f32.mrf.mxu0
        %v10526 = vadd.f32 %v9395, %v10525
        %10527 = vmatmul.bf16.gmra.mxu0 %v9300
        %v10528 = vpop.f32.mrf.mxu0
        %v10529 = vadd.f32 %v9395, %v10528
        %v10530 = vpop.f32.mrf.mxu0
        %v10531 = vadd.f32 %v9395, %v10530
        %10532 = vmatmul.bf16.gmra.mxu0 %v9304
        %v10533 = vpop.f32.mrf.mxu0
        %v10534 = vadd.f32 %v9395, %v10533
        %v10535 = vpop.f32.mrf.mxu0
        %v10536 = vadd.f32 %v9395, %v10535
        %10537 = vmatmul.bf16.gmra.mxu0 %v9308
        %v10538 = vpop.f32.mrf.mxu0
        %v10539 = vadd.f32 %v9395, %v10538
        %v10540 = vpop.f32.mrf.mxu0
        %v10541 = vadd.f32 %v9395, %v10540
        %10542 = vmatmul.bf16.gmra.mxu0 %v9312
        %v10543 = vpop.f32.mrf.mxu0
        %v10544 = vadd.f32 %v9395, %v10543
        %v10545 = vpop.f32.mrf.mxu0
        %v10546 = vadd.f32 %v9395, %v10545
        %10547 = vmatmul.bf16.gmra.mxu0 %v9316
        %v10548 = vpop.f32.mrf.mxu0
        %v10549 = vadd.f32 %v9395, %v10548
        %v10550 = vpop.f32.mrf.mxu0
        %v10551 = vadd.f32 %v9395, %v10550
        %10552 = vmatmul.bf16.gmra.mxu0 %v9320
        %v10553 = vpop.f32.mrf.mxu0
        %v10554 = vadd.f32 %v9395, %v10553
        %v10555 = vpop.f32.mrf.mxu0
        %v10556 = vadd.f32 %v9395, %v10555
        %10557 = vmatmul.bf16.gmra.mxu0 %v9324
        %v10558 = vpop.f32.mrf.mxu0
        %v10559 = vadd.f32 %v9395, %v10558
        %v10560 = vpop.f32.mrf.mxu0
        %v10561 = vadd.f32 %v9395, %v10560
        %10562 = vdwg.mxu0
        %10563 = vmatpush.bf16.msra.mxu0 %v9621
        %10564 = vmatpush.bf16.msra.mxu0 %v9619
        %10565 = vmatpush.bf16.msra.mxu0 %v9617
        %10566 = vmatpush.bf16.msra.mxu0 %v9615
        %10567 = vmatpush.bf16.msra.mxu0 %v9613
        %10568 = vmatpush.bf16.msra.mxu0 %v9611
        %10569 = vmatpush.bf16.msra.mxu0 %v9609
        %10570 = vmatpush.bf16.msra.mxu0 %v9607
        %10571 = vmatmul.bf16.gmra.mxu0 %v9201
        %v10572 = vpop.f32.mrf.mxu0
        %v10573 = vadd.f32 %v10404, %v10572
        %v10574 = vpop.f32.mrf.mxu0
        %v10575 = vadd.f32 %v10406, %v10574
        %10576 = vmatmul.bf16.gmra.mxu0 %v9205
        %v10577 = vpop.f32.mrf.mxu0
        %v10578 = vadd.f32 %v10409, %v10577
        %v10579 = vpop.f32.mrf.mxu0
        %v10580 = vadd.f32 %v10411, %v10579
        %10581 = vmatmul.bf16.gmra.mxu0 %v9209
        %v10582 = vpop.f32.mrf.mxu0
        %v10583 = vadd.f32 %v10414, %v10582
        %v10584 = vpop.f32.mrf.mxu0
        %v10585 = vadd.f32 %v10416, %v10584
        %10586 = vmatmul.bf16.gmra.mxu0 %v9213
        %v10587 = vpop.f32.mrf.mxu0
        %v10588 = vadd.f32 %v10419, %v10587
        %v10589 = vpop.f32.mrf.mxu0
        %v10590 = vadd.f32 %v10421, %v10589
        %10591 = vmatmul.bf16.gmra.mxu0 %v9217
        %v10592 = vpop.f32.mrf.mxu0
        %v10593 = vadd.f32 %v10424, %v10592
        %v10594 = vpop.f32.mrf.mxu0
        %v10595 = vadd.f32 %v10426, %v10594
        %10596 = vmatmul.bf16.gmra.mxu0 %v9221
        %v10597 = vpop.f32.mrf.mxu0
        %v10598 = vadd.f32 %v10429, %v10597
        %v10599 = vpop.f32.mrf.mxu0
        %v10600 = vadd.f32 %v10431, %v10599
        %10601 = vmatmul.bf16.gmra.mxu0 %v9225
        %v10602 = vpop.f32.mrf.mxu0
        %v10603 = vadd.f32 %v10434, %v10602
        %v10604 = vpop.f32.mrf.mxu0
        %v10605 = vadd.f32 %v10436, %v10604
        %10606 = vmatmul.bf16.gmra.mxu0 %v9229
        %v10607 = vpop.f32.mrf.mxu0
        %v10608 = vadd.f32 %v10439, %v10607
        %v10609 = vpop.f32.mrf.mxu0
        %v10610 = vadd.f32 %v10441, %v10609
        %10611 = vmatmul.bf16.gmra.mxu0 %v9233
        %v10612 = vpop.f32.mrf.mxu0
        %v10613 = vadd.f32 %v10444, %v10612
        %v10614 = vpop.f32.mrf.mxu0
        %v10615 = vadd.f32 %v10446, %v10614
        %10616 = vmatmul.bf16.gmra.mxu0 %v9237
        %v10617 = vpop.f32.mrf.mxu0
        %v10618 = vadd.f32 %v10449, %v10617
        %v10619 = vpop.f32.mrf.mxu0
        %v10620 = vadd.f32 %v10451, %v10619
        %10621 = vmatmul.bf16.gmra.mxu0 %v9241
        %v10622 = vpop.f32.mrf.mxu0
        %v10623 = vadd.f32 %v10454, %v10622
        %v10624 = vpop.f32.mrf.mxu0
        %v10625 = vadd.f32 %v10456, %v10624
        %10626 = vmatmul.bf16.gmra.mxu0 %v9245
        %v10627 = vpop.f32.mrf.mxu0
        %v10628 = vadd.f32 %v10459, %v10627
        %v10629 = vpop.f32.mrf.mxu0
        %v10630 = vadd.f32 %v10461, %v10629
        %10631 = vmatmul.bf16.gmra.mxu0 %v9249
        %v10632 = vpop.f32.mrf.mxu0
        %v10633 = vadd.f32 %v10464, %v10632
        %v10634 = vpop.f32.mrf.mxu0
        %v10635 = vadd.f32 %v10466, %v10634
        %10636 = vmatmul.bf16.gmra.mxu0 %v9253
        %v10637 = vpop.f32.mrf.mxu0
        %v10638 = vadd.f32 %v10469, %v10637
        %v10639 = vpop.f32.mrf.mxu0
        %v10640 = vadd.f32 %v10471, %v10639
        %10641 = vmatmul.bf16.gmra.mxu0 %v9257
        %v10642 = vpop.f32.mrf.mxu0
        %v10643 = vadd.f32 %v10474, %v10642
        %v10644 = vpop.f32.mrf.mxu0
        %v10645 = vadd.f32 %v10476, %v10644
        %10646 = vmatmul.bf16.gmra.mxu0 %v9261
        %v10647 = vpop.f32.mrf.mxu0
        %v10648 = vadd.f32 %v10479, %v10647
        %v10649 = vpop.f32.mrf.mxu0
        %v10650 = vadd.f32 %v10481, %v10649
        %10651 = vmatmul.bf16.gmra.mxu0 %v9265
        %v10652 = vpop.f32.mrf.mxu0
        %v10653 = vadd.f32 %v10484, %v10652
        %v10654 = vpop.f32.mrf.mxu0
        %v10655 = vadd.f32 %v10486, %v10654
        %10656 = vmatmul.bf16.gmra.mxu0 %v9269
        %v10657 = vpop.f32.mrf.mxu0
        %v10658 = vadd.f32 %v10489, %v10657
        %v10659 = vpop.f32.mrf.mxu0
        %v10660 = vadd.f32 %v10491, %v10659
        %10661 = vmatmul.bf16.gmra.mxu0 %v9273
        %v10662 = vpop.f32.mrf.mxu0
        %v10663 = vadd.f32 %v10494, %v10662
        %v10664 = vpop.f32.mrf.mxu0
        %v10665 = vadd.f32 %v10496, %v10664
        %10666 = vmatmul.bf16.gmra.mxu0 %v9277
        %v10667 = vpop.f32.mrf.mxu0
        %v10668 = vadd.f32 %v10499, %v10667
        %v10669 = vpop.f32.mrf.mxu0
        %v10670 = vadd.f32 %v10501, %v10669
        %10671 = vmatmul.bf16.gmra.mxu0 %v9281
        %v10672 = vpop.f32.mrf.mxu0
        %v10673 = vadd.f32 %v10504, %v10672
        %v10674 = vpop.f32.mrf.mxu0
        %v10675 = vadd.f32 %v10506, %v10674
        %10676 = vmatmul.bf16.gmra.mxu0 %v9285
        %v10677 = vpop.f32.mrf.mxu0
        %v10678 = vadd.f32 %v10509, %v10677
        %v10679 = vpop.f32.mrf.mxu0
        %v10680 = vadd.f32 %v10511, %v10679
        %10681 = vmatmul.bf16.gmra.mxu0 %v9289
        %v10682 = vpop.f32.mrf.mxu0
        %v10683 = vadd.f32 %v10514, %v10682
        %v10684 = vpop.f32.mrf.mxu0
        %v10685 = vadd.f32 %v10516, %v10684
        %10686 = vmatmul.bf16.gmra.mxu0 %v9293
        %v10687 = vpop.f32.mrf.mxu0
        %v10688 = vadd.f32 %v10519, %v10687
        %v10689 = vpop.f32.mrf.mxu0
        %v10690 = vadd.f32 %v10521, %v10689
        %10691 = vmatmul.bf16.gmra.mxu0 %v9297
        %v10692 = vpop.f32.mrf.mxu0
        %v10693 = vadd.f32 %v10524, %v10692
        %v10694 = vpop.f32.mrf.mxu0
        %v10695 = vadd.f32 %v10526, %v10694
        %10696 = vmatmul.bf16.gmra.mxu0 %v9301
        %v10697 = vpop.f32.mrf.mxu0
        %v10698 = vadd.f32 %v10529, %v10697
        %v10699 = vpop.f32.mrf.mxu0
        %v10700 = vadd.f32 %v10531, %v10699
        %10701 = vmatmul.bf16.gmra.mxu0 %v9305
        %v10702 = vpop.f32.mrf.mxu0
        %v10703 = vadd.f32 %v10534, %v10702
        %v10704 = vpop.f32.mrf.mxu0
        %v10705 = vadd.f32 %v10536, %v10704
        %10706 = vmatmul.bf16.gmra.mxu0 %v9309
        %v10707 = vpop.f32.mrf.mxu0
        %v10708 = vadd.f32 %v10539, %v10707
        %v10709 = vpop.f32.mrf.mxu0
        %v10710 = vadd.f32 %v10541, %v10709
        %10711 = vmatmul.bf16.gmra.mxu0 %v9313
        %v10712 = vpop.f32.mrf.mxu0
        %v10713 = vadd.f32 %v10544, %v10712
        %v10714 = vpop.f32.mrf.mxu0
        %v10715 = vadd.f32 %v10546, %v10714
        %10716 = vmatmul.bf16.gmra.mxu0 %v9317
        %v10717 = vpop.f32.mrf.mxu0
        %v10718 = vadd.f32 %v10549, %v10717
        %v10719 = vpop.f32.mrf.mxu0
        %v10720 = vadd.f32 %v10551, %v10719
        %10721 = vmatmul.bf16.gmra.mxu0 %v9321
        %v10722 = vpop.f32.mrf.mxu0
        %v10723 = vadd.f32 %v10554, %v10722
        %v10724 = vpop.f32.mrf.mxu0
        %v10725 = vadd.f32 %v10556, %v10724
        %10726 = vmatmul.bf16.gmra.mxu0 %v9325
        %v10727 = vpop.f32.mrf.mxu0
        %v10728 = vadd.f32 %v10559, %v10727
        %v10729 = vpop.f32.mrf.mxu0
        %v10730 = vadd.f32 %v10561, %v10729
        %10731 = vdwg.mxu0
        %10732 = vmatpush.bf16.msra.mxu0 %v9637
        %10733 = vmatpush.bf16.msra.mxu0 %v9635
        %10734 = vmatpush.bf16.msra.mxu0 %v9633
        %10735 = vmatpush.bf16.msra.mxu0 %v9631
        %10736 = vmatpush.bf16.msra.mxu0 %v9629
        %10737 = vmatpush.bf16.msra.mxu0 %v9627
        %10738 = vmatpush.bf16.msra.mxu0 %v9625
        %10739 = vmatpush.bf16.msra.mxu0 %v9623
        %10740 = vmatmul.bf16.gmra.mxu0 %v9202
        %v10741 = vpop.f32.mrf.mxu0
        %v10742 = vadd.f32 %v10573, %v10741
        %v10743 = vpop.f32.mrf.mxu0
        %v10744 = vadd.f32 %v10575, %v10743
        %10745 = vmatmul.bf16.gmra.mxu0 %v9206
        %v10746 = vpop.f32.mrf.mxu0
        %v10747 = vadd.f32 %v10578, %v10746
        %v10748 = vpop.f32.mrf.mxu0
        %v10749 = vadd.f32 %v10580, %v10748
        %10750 = vmatmul.bf16.gmra.mxu0 %v9210
        %v10751 = vpop.f32.mrf.mxu0
        %v10752 = vadd.f32 %v10583, %v10751
        %v10753 = vpop.f32.mrf.mxu0
        %v10754 = vadd.f32 %v10585, %v10753
        %10755 = vmatmul.bf16.gmra.mxu0 %v9214
        %v10756 = vpop.f32.mrf.mxu0
        %v10757 = vadd.f32 %v10588, %v10756
        %v10758 = vpop.f32.mrf.mxu0
        %v10759 = vadd.f32 %v10590, %v10758
        %10760 = vmatmul.bf16.gmra.mxu0 %v9218
        %v10761 = vpop.f32.mrf.mxu0
        %v10762 = vadd.f32 %v10593, %v10761
        %v10763 = vpop.f32.mrf.mxu0
        %v10764 = vadd.f32 %v10595, %v10763
        %10765 = vmatmul.bf16.gmra.mxu0 %v9222
        %v10766 = vpop.f32.mrf.mxu0
        %v10767 = vadd.f32 %v10598, %v10766
        %v10768 = vpop.f32.mrf.mxu0
        %v10769 = vadd.f32 %v10600, %v10768
        %10770 = vmatmul.bf16.gmra.mxu0 %v9226
        %v10771 = vpop.f32.mrf.mxu0
        %v10772 = vadd.f32 %v10603, %v10771
        %v10773 = vpop.f32.mrf.mxu0
        %v10774 = vadd.f32 %v10605, %v10773
        %10775 = vmatmul.bf16.gmra.mxu0 %v9230
        %v10776 = vpop.f32.mrf.mxu0
        %v10777 = vadd.f32 %v10608, %v10776
        %v10778 = vpop.f32.mrf.mxu0
        %v10779 = vadd.f32 %v10610, %v10778
        %10780 = vmatmul.bf16.gmra.mxu0 %v9234
        %v10781 = vpop.f32.mrf.mxu0
        %v10782 = vadd.f32 %v10613, %v10781
        %v10783 = vpop.f32.mrf.mxu0
        %v10784 = vadd.f32 %v10615, %v10783
        %10785 = vmatmul.bf16.gmra.mxu0 %v9238
        %v10786 = vpop.f32.mrf.mxu0
        %v10787 = vadd.f32 %v10618, %v10786
        %v10788 = vpop.f32.mrf.mxu0
        %v10789 = vadd.f32 %v10620, %v10788
        %10790 = vmatmul.bf16.gmra.mxu0 %v9242
        %v10791 = vpop.f32.mrf.mxu0
        %v10792 = vadd.f32 %v10623, %v10791
        %v10793 = vpop.f32.mrf.mxu0
        %v10794 = vadd.f32 %v10625, %v10793
        %10795 = vmatmul.bf16.gmra.mxu0 %v9246
        %v10796 = vpop.f32.mrf.mxu0
        %v10797 = vadd.f32 %v10628, %v10796
        %v10798 = vpop.f32.mrf.mxu0
        %v10799 = vadd.f32 %v10630, %v10798
        %10800 = vmatmul.bf16.gmra.mxu0 %v9250
        %v10801 = vpop.f32.mrf.mxu0
        %v10802 = vadd.f32 %v10633, %v10801
        %v10803 = vpop.f32.mrf.mxu0
        %v10804 = vadd.f32 %v10635, %v10803
        %10805 = vmatmul.bf16.gmra.mxu0 %v9254
        %v10806 = vpop.f32.mrf.mxu0
        %v10807 = vadd.f32 %v10638, %v10806
        %v10808 = vpop.f32.mrf.mxu0
        %v10809 = vadd.f32 %v10640, %v10808
        %10810 = vmatmul.bf16.gmra.mxu0 %v9258
        %v10811 = vpop.f32.mrf.mxu0
        %v10812 = vadd.f32 %v10643, %v10811
        %v10813 = vpop.f32.mrf.mxu0
        %v10814 = vadd.f32 %v10645, %v10813
        %10815 = vmatmul.bf16.gmra.mxu0 %v9262
        %v10816 = vpop.f32.mrf.mxu0
        %v10817 = vadd.f32 %v10648, %v10816
        %v10818 = vpop.f32.mrf.mxu0
        %v10819 = vadd.f32 %v10650, %v10818
        %10820 = vmatmul.bf16.gmra.mxu0 %v9266
        %v10821 = vpop.f32.mrf.mxu0
        %v10822 = vadd.f32 %v10653, %v10821
        %v10823 = vpop.f32.mrf.mxu0
        %v10824 = vadd.f32 %v10655, %v10823
        %10825 = vmatmul.bf16.gmra.mxu0 %v9270
        %v10826 = vpop.f32.mrf.mxu0
        %v10827 = vadd.f32 %v10658, %v10826
        %v10828 = vpop.f32.mrf.mxu0
        %v10829 = vadd.f32 %v10660, %v10828
        %10830 = vmatmul.bf16.gmra.mxu0 %v9274
        %v10831 = vpop.f32.mrf.mxu0
        %v10832 = vadd.f32 %v10663, %v10831
        %v10833 = vpop.f32.mrf.mxu0
        %v10834 = vadd.f32 %v10665, %v10833
        %10835 = vmatmul.bf16.gmra.mxu0 %v9278
        %v10836 = vpop.f32.mrf.mxu0
        %v10837 = vadd.f32 %v10668, %v10836
        %v10838 = vpop.f32.mrf.mxu0
        %v10839 = vadd.f32 %v10670, %v10838
        %10840 = vmatmul.bf16.gmra.mxu0 %v9282
        %v10841 = vpop.f32.mrf.mxu0
        %v10842 = vadd.f32 %v10673, %v10841
        %v10843 = vpop.f32.mrf.mxu0
        %v10844 = vadd.f32 %v10675, %v10843
        %10845 = vmatmul.bf16.gmra.mxu0 %v9286
        %v10846 = vpop.f32.mrf.mxu0
        %v10847 = vadd.f32 %v10678, %v10846
        %v10848 = vpop.f32.mrf.mxu0
        %v10849 = vadd.f32 %v10680, %v10848
        %10850 = vmatmul.bf16.gmra.mxu0 %v9290
        %v10851 = vpop.f32.mrf.mxu0
        %v10852 = vadd.f32 %v10683, %v10851
        %v10853 = vpop.f32.mrf.mxu0
        %v10854 = vadd.f32 %v10685, %v10853
        %10855 = vmatmul.bf16.gmra.mxu0 %v9294
        %v10856 = vpop.f32.mrf.mxu0
        %v10857 = vadd.f32 %v10688, %v10856
        %v10858 = vpop.f32.mrf.mxu0
        %v10859 = vadd.f32 %v10690, %v10858
        %10860 = vmatmul.bf16.gmra.mxu0 %v9298
        %v10861 = vpop.f32.mrf.mxu0
        %v10862 = vadd.f32 %v10693, %v10861
        %v10863 = vpop.f32.mrf.mxu0
        %v10864 = vadd.f32 %v10695, %v10863
        %10865 = vmatmul.bf16.gmra.mxu0 %v9302
        %v10866 = vpop.f32.mrf.mxu0
        %v10867 = vadd.f32 %v10698, %v10866
        %v10868 = vpop.f32.mrf.mxu0
        %v10869 = vadd.f32 %v10700, %v10868
        %10870 = vmatmul.bf16.gmra.mxu0 %v9306
        %v10871 = vpop.f32.mrf.mxu0
        %v10872 = vadd.f32 %v10703, %v10871
        %v10873 = vpop.f32.mrf.mxu0
        %v10874 = vadd.f32 %v10705, %v10873
        %10875 = vmatmul.bf16.gmra.mxu0 %v9310
        %v10876 = vpop.f32.mrf.mxu0
        %v10877 = vadd.f32 %v10708, %v10876
        %v10878 = vpop.f32.mrf.mxu0
        %v10879 = vadd.f32 %v10710, %v10878
        %10880 = vmatmul.bf16.gmra.mxu0 %v9314
        %v10881 = vpop.f32.mrf.mxu0
        %v10882 = vadd.f32 %v10713, %v10881
        %v10883 = vpop.f32.mrf.mxu0
        %v10884 = vadd.f32 %v10715, %v10883
        %10885 = vmatmul.bf16.gmra.mxu0 %v9318
        %v10886 = vpop.f32.mrf.mxu0
        %v10887 = vadd.f32 %v10718, %v10886
        %v10888 = vpop.f32.mrf.mxu0
        %v10889 = vadd.f32 %v10720, %v10888
        %10890 = vmatmul.bf16.gmra.mxu0 %v9322
        %v10891 = vpop.f32.mrf.mxu0
        %v10892 = vadd.f32 %v10723, %v10891
        %v10893 = vpop.f32.mrf.mxu0
        %v10894 = vadd.f32 %v10725, %v10893
        %10895 = vmatmul.bf16.gmra.mxu0 %v9326
        %v10896 = vpop.f32.mrf.mxu0
        %v10897 = vadd.f32 %v10728, %v10896
        %v10898 = vpop.f32.mrf.mxu0
        %v10899 = vadd.f32 %v10730, %v10898
        %10900 = vdwg.mxu0
        %10901 = vmatpush.bf16.msra.mxu0 %v9653
        %10902 = vmatpush.bf16.msra.mxu0 %v9651
        %10903 = vmatpush.bf16.msra.mxu0 %v9649
        %10904 = vmatpush.bf16.msra.mxu0 %v9647
        %10905 = vmatpush.bf16.msra.mxu0 %v9645
        %10906 = vmatpush.bf16.msra.mxu0 %v9643
        %10907 = vmatpush.bf16.msra.mxu0 %v9641
        %10908 = vmatpush.bf16.msra.mxu0 %v9639
        %10909 = vmatmul.bf16.gmra.mxu0 %v9203
        %v10910 = vpop.f32.mrf.mxu0
        %v10911 = vadd.f32 %v10742, %v10910
        %v10912 = vpop.f32.mrf.mxu0
        %v10913 = vadd.f32 %v10744, %v10912
        %10914 = vmatmul.bf16.gmra.mxu0 %v9207
        %v10915 = vpop.f32.mrf.mxu0
        %v10916 = vadd.f32 %v10747, %v10915
        %v10917 = vpop.f32.mrf.mxu0
        %v10918 = vadd.f32 %v10749, %v10917
        %10919 = vmatmul.bf16.gmra.mxu0 %v9211
        %v10920 = vpop.f32.mrf.mxu0
        %v10921 = vadd.f32 %v10752, %v10920
        %v10922 = vpop.f32.mrf.mxu0
        %v10923 = vadd.f32 %v10754, %v10922
        %10924 = vmatmul.bf16.gmra.mxu0 %v9215
        %v10925 = vpop.f32.mrf.mxu0
        %v10926 = vadd.f32 %v10757, %v10925
        %v10927 = vpop.f32.mrf.mxu0
        %v10928 = vadd.f32 %v10759, %v10927
        %10929 = vmatmul.bf16.gmra.mxu0 %v9219
        %v10930 = vpop.f32.mrf.mxu0
        %v10931 = vadd.f32 %v10762, %v10930
        %v10932 = vpop.f32.mrf.mxu0
        %v10933 = vadd.f32 %v10764, %v10932
        %10934 = vmatmul.bf16.gmra.mxu0 %v9223
        %v10935 = vpop.f32.mrf.mxu0
        %v10936 = vadd.f32 %v10767, %v10935
        %v10937 = vpop.f32.mrf.mxu0
        %v10938 = vadd.f32 %v10769, %v10937
        %10939 = vmatmul.bf16.gmra.mxu0 %v9227
        %v10940 = vpop.f32.mrf.mxu0
        %v10941 = vadd.f32 %v10772, %v10940
        %v10942 = vpop.f32.mrf.mxu0
        %v10943 = vadd.f32 %v10774, %v10942
        %10944 = vmatmul.bf16.gmra.mxu0 %v9231
        %v10945 = vpop.f32.mrf.mxu0
        %v10946 = vadd.f32 %v10777, %v10945
        %v10947 = vpop.f32.mrf.mxu0
        %v10948 = vadd.f32 %v10779, %v10947
        %10949 = vmatmul.bf16.gmra.mxu0 %v9235
        %v10950 = vpop.f32.mrf.mxu0
        %v10951 = vadd.f32 %v10782, %v10950
        %v10952 = vpop.f32.mrf.mxu0
        %v10953 = vadd.f32 %v10784, %v10952
        %10954 = vmatmul.bf16.gmra.mxu0 %v9239
        %v10955 = vpop.f32.mrf.mxu0
        %v10956 = vadd.f32 %v10787, %v10955
        %v10957 = vpop.f32.mrf.mxu0
        %v10958 = vadd.f32 %v10789, %v10957
        %10959 = vmatmul.bf16.gmra.mxu0 %v9243
        %v10960 = vpop.f32.mrf.mxu0
        %v10961 = vadd.f32 %v10792, %v10960
        %v10962 = vpop.f32.mrf.mxu0
        %v10963 = vadd.f32 %v10794, %v10962
        %10964 = vmatmul.bf16.gmra.mxu0 %v9247
        %v10965 = vpop.f32.mrf.mxu0
        %v10966 = vadd.f32 %v10797, %v10965
        %v10967 = vpop.f32.mrf.mxu0
        %v10968 = vadd.f32 %v10799, %v10967
        %10969 = vmatmul.bf16.gmra.mxu0 %v9251
        %v10970 = vpop.f32.mrf.mxu0
        %v10971 = vadd.f32 %v10802, %v10970
        %v10972 = vpop.f32.mrf.mxu0
        %v10973 = vadd.f32 %v10804, %v10972
        %10974 = vmatmul.bf16.gmra.mxu0 %v9255
        %v10975 = vpop.f32.mrf.mxu0
        %v10976 = vadd.f32 %v10807, %v10975
        %v10977 = vpop.f32.mrf.mxu0
        %v10978 = vadd.f32 %v10809, %v10977
        %10979 = vmatmul.bf16.gmra.mxu0 %v9259
        %v10980 = vpop.f32.mrf.mxu0
        %v10981 = vadd.f32 %v10812, %v10980
        %v10982 = vpop.f32.mrf.mxu0
        %v10983 = vadd.f32 %v10814, %v10982
        %10984 = vmatmul.bf16.gmra.mxu0 %v9263
        %v10985 = vpop.f32.mrf.mxu0
        %v10986 = vadd.f32 %v10817, %v10985
        %v10987 = vpop.f32.mrf.mxu0
        %v10988 = vadd.f32 %v10819, %v10987
        %10989 = vmatmul.bf16.gmra.mxu0 %v9267
        %v10990 = vpop.f32.mrf.mxu0
        %v10991 = vadd.f32 %v10822, %v10990
        %v10992 = vpop.f32.mrf.mxu0
        %v10993 = vadd.f32 %v10824, %v10992
        %10994 = vmatmul.bf16.gmra.mxu0 %v9271
        %v10995 = vpop.f32.mrf.mxu0
        %v10996 = vadd.f32 %v10827, %v10995
        %v10997 = vpop.f32.mrf.mxu0
        %v10998 = vadd.f32 %v10829, %v10997
        %10999 = vmatmul.bf16.gmra.mxu0 %v9275
        %v11000 = vpop.f32.mrf.mxu0
        %v11001 = vadd.f32 %v10832, %v11000
        %v11002 = vpop.f32.mrf.mxu0
        %v11003 = vadd.f32 %v10834, %v11002
        %11004 = vmatmul.bf16.gmra.mxu0 %v9279
        %v11005 = vpop.f32.mrf.mxu0
        %v11006 = vadd.f32 %v10837, %v11005
        %v11007 = vpop.f32.mrf.mxu0
        %v11008 = vadd.f32 %v10839, %v11007
        %11009 = vmatmul.bf16.gmra.mxu0 %v9283
        %v11010 = vpop.f32.mrf.mxu0
        %v11011 = vadd.f32 %v10842, %v11010
        %v11012 = vpop.f32.mrf.mxu0
        %v11013 = vadd.f32 %v10844, %v11012
        %11014 = vmatmul.bf16.gmra.mxu0 %v9287
        %v11015 = vpop.f32.mrf.mxu0
        %v11016 = vadd.f32 %v10847, %v11015
        %v11017 = vpop.f32.mrf.mxu0
        %v11018 = vadd.f32 %v10849, %v11017
        %11019 = vmatmul.bf16.gmra.mxu0 %v9291
        %v11020 = vpop.f32.mrf.mxu0
        %v11021 = vadd.f32 %v10852, %v11020
        %v11022 = vpop.f32.mrf.mxu0
        %v11023 = vadd.f32 %v10854, %v11022
        %11024 = vmatmul.bf16.gmra.mxu0 %v9295
        %v11025 = vpop.f32.mrf.mxu0
        %v11026 = vadd.f32 %v10857, %v11025
        %v11027 = vpop.f32.mrf.mxu0
        %v11028 = vadd.f32 %v10859, %v11027
        %11029 = vmatmul.bf16.gmra.mxu0 %v9299
        %v11030 = vpop.f32.mrf.mxu0
        %v11031 = vadd.f32 %v10862, %v11030
        %v11032 = vpop.f32.mrf.mxu0
        %v11033 = vadd.f32 %v10864, %v11032
        %11034 = vmatmul.bf16.gmra.mxu0 %v9303
        %v11035 = vpop.f32.mrf.mxu0
        %v11036 = vadd.f32 %v10867, %v11035
        %v11037 = vpop.f32.mrf.mxu0
        %v11038 = vadd.f32 %v10869, %v11037
        %11039 = vmatmul.bf16.gmra.mxu0 %v9307
        %v11040 = vpop.f32.mrf.mxu0
        %v11041 = vadd.f32 %v10872, %v11040
        %v11042 = vpop.f32.mrf.mxu0
        %v11043 = vadd.f32 %v10874, %v11042
        %11044 = vmatmul.bf16.gmra.mxu0 %v9311
        %v11045 = vpop.f32.mrf.mxu0
        %v11046 = vadd.f32 %v10877, %v11045
        %v11047 = vpop.f32.mrf.mxu0
        %v11048 = vadd.f32 %v10879, %v11047
        %11049 = vmatmul.bf16.gmra.mxu0 %v9315
        %v11050 = vpop.f32.mrf.mxu0
        %v11051 = vadd.f32 %v10882, %v11050
        %v11052 = vpop.f32.mrf.mxu0
        %v11053 = vadd.f32 %v10884, %v11052
        %11054 = vmatmul.bf16.gmra.mxu0 %v9319
        %v11055 = vpop.f32.mrf.mxu0
        %v11056 = vadd.f32 %v10887, %v11055
        %v11057 = vpop.f32.mrf.mxu0
        %v11058 = vadd.f32 %v10889, %v11057
        %11059 = vmatmul.bf16.gmra.mxu0 %v9323
        %v11060 = vpop.f32.mrf.mxu0
        %v11061 = vadd.f32 %v10892, %v11060
        %v11062 = vpop.f32.mrf.mxu0
        %v11063 = vadd.f32 %v10894, %v11062
        %11064 = vmatmul.bf16.gmra.mxu0 %v9327
        %v11065 = vpop.f32.mrf.mxu0
        %v11066 = vadd.f32 %v10897, %v11065
        %v11067 = vpop.f32.mrf.mxu0
        %v11068 = vadd.f32 %v10899, %v11067
        %11069 = vdwg.mxu0
        %11070 = vst [vmem:[%s351] sm:$0xff] %v10235
        %11071 = vst [vmem:[%s351 + $0x8] sm:$0xff] %v10911
        %11072 = vst [vmem:[%s351 + $0x10] sm:$0xff] %v10237
        %11073 = vst [vmem:[%s351 + $0x18] sm:$0xff] %v10913
        %11074 = vst [vmem:[%s351 + $0x20] sm:$0xff] %v10240
        %11075 = vst [vmem:[%s351 + $0x28] sm:$0xff] %v10916
        %11076 = vst [vmem:[%s351 + $0x30] sm:$0xff] %v10242
        %11077 = vst [vmem:[%s351 + $0x38] sm:$0xff] %v10918
        %11078 = vst [vmem:[%s351 + $0x40] sm:$0xff] %v10245
        %11079 = vst [vmem:[%s351 + $0x48] sm:$0xff] %v10921
        %11080 = vst [vmem:[%s351 + $0x50] sm:$0xff] %v10247
        %11081 = vst [vmem:[%s351 + $0x58] sm:$0xff] %v10923
        %11082 = vst [vmem:[%s351 + $0x60] sm:$0xff] %v10250
        %11083 = vst [vmem:[%s351 + $0x68] sm:$0xff] %v10926
        %11084 = vst [vmem:[%s351 + $0x70] sm:$0xff] %v10252
        %11085 = vst [vmem:[%s351 + $0x78] sm:$0xff] %v10928
        %11086 = vst [vmem:[%s351 + $0x80] sm:$0xff] %v10255
        %11087 = vst [vmem:[%s351 + $0x88] sm:$0xff] %v10931
        %11088 = vst [vmem:[%s351 + $0x90] sm:$0xff] %v10257
        %11089 = vst [vmem:[%s351 + $0x98] sm:$0xff] %v10933
        %11090 = vst [vmem:[%s351 + $0xa0] sm:$0xff] %v10260
        %11091 = vst [vmem:[%s351 + $0xa8] sm:$0xff] %v10936
        %11092 = vst [vmem:[%s351 + $0xb0] sm:$0xff] %v10262
        %11093 = vst [vmem:[%s351 + $0xb8] sm:$0xff] %v10938
        %11094 = vst [vmem:[%s351 + $0xc0] sm:$0xff] %v10265
        %11095 = vst [vmem:[%s351 + $0xc8] sm:$0xff] %v10941
        %11096 = vst [vmem:[%s351 + $0xd0] sm:$0xff] %v10267
        %11097 = vst [vmem:[%s351 + $0xd8] sm:$0xff] %v10943
        %11098 = vst [vmem:[%s351 + $0xe0] sm:$0xff] %v10270
        %11099 = vst [vmem:[%s351 + $0xe8] sm:$0xff] %v10946
        %11100 = vst [vmem:[%s351 + $0xf0] sm:$0xff] %v10272
        %11101 = vst [vmem:[%s351 + $0xf8] sm:$0xff] %v10948
        %11102 = vst [vmem:[%s351 + $0x100] sm:$0xff] %v10275
        %11103 = vst [vmem:[%s351 + $0x108] sm:$0xff] %v10951
        %11104 = vst [vmem:[%s351 + $0x110] sm:$0xff] %v10277
        %11105 = vst [vmem:[%s351 + $0x118] sm:$0xff] %v10953
        %11106 = vst [vmem:[%s351 + $0x120] sm:$0xff] %v10280
        %11107 = vst [vmem:[%s351 + $0x128] sm:$0xff] %v10956
        %11108 = vst [vmem:[%s351 + $0x130] sm:$0xff] %v10282
        %11109 = vst [vmem:[%s351 + $0x138] sm:$0xff] %v10958
        %11110 = vst [vmem:[%s351 + $0x140] sm:$0xff] %v10285
        %11111 = vst [vmem:[%s351 + $0x148] sm:$0xff] %v10961
        %11112 = vst [vmem:[%s351 + $0x150] sm:$0xff] %v10287
        %11113 = vst [vmem:[%s351 + $0x158] sm:$0xff] %v10963
        %11114 = vst [vmem:[%s351 + $0x160] sm:$0xff] %v10290
        %11115 = vst [vmem:[%s351 + $0x168] sm:$0xff] %v10966
        %11116 = vst [vmem:[%s351 + $0x170] sm:$0xff] %v10292
        %11117 = vst [vmem:[%s351 + $0x178] sm:$0xff] %v10968
        %11118 = vst [vmem:[%s351 + $0x180] sm:$0xff] %v10295
        %11119 = vst [vmem:[%s351 + $0x188] sm:$0xff] %v10971
        %11120 = vst [vmem:[%s351 + $0x190] sm:$0xff] %v10297
        %11121 = vst [vmem:[%s351 + $0x198] sm:$0xff] %v10973
        %11122 = vst [vmem:[%s351 + $0x1a0] sm:$0xff] %v10300
        %11123 = vst [vmem:[%s351 + $0x1a8] sm:$0xff] %v10976
        %11124 = vst [vmem:[%s351 + $0x1b0] sm:$0xff] %v10302
        %11125 = vst [vmem:[%s351 + $0x1b8] sm:$0xff] %v10978
        %11126 = vst [vmem:[%s351 + $0x1c0] sm:$0xff] %v10305
        %11127 = vst [vmem:[%s351 + $0x1c8] sm:$0xff] %v10981
        %11128 = vst [vmem:[%s351 + $0x1d0] sm:$0xff] %v10307
        %11129 = vst [vmem:[%s351 + $0x1d8] sm:$0xff] %v10983
        %11130 = vst [vmem:[%s351 + $0x1e0] sm:$0xff] %v10310
        %11131 = vst [vmem:[%s351 + $0x1e8] sm:$0xff] %v10986
        %11132 = vst [vmem:[%s351 + $0x1f0] sm:$0xff] %v10312
        %11133 = vst [vmem:[%s351 + $0x1f8] sm:$0xff] %v10988
        %11134 = vst [vmem:[%s351 + $0x200] sm:$0xff] %v10315
        %11135 = vst [vmem:[%s351 + $0x208] sm:$0xff] %v10991
        %11136 = vst [vmem:[%s351 + $0x210] sm:$0xff] %v10317
        %11137 = vst [vmem:[%s351 + $0x218] sm:$0xff] %v10993
        %11138 = vst [vmem:[%s351 + $0x220] sm:$0xff] %v10320
        %11139 = vst [vmem:[%s351 + $0x228] sm:$0xff] %v10996
        %11140 = vst [vmem:[%s351 + $0x230] sm:$0xff] %v10322
        %11141 = vst [vmem:[%s351 + $0x238] sm:$0xff] %v10998
        %11142 = vst [vmem:[%s351 + $0x240] sm:$0xff] %v10325
        %11143 = vst [vmem:[%s351 + $0x248] sm:$0xff] %v11001
        %11144 = vst [vmem:[%s351 + $0x250] sm:$0xff] %v10327
        %11145 = vst [vmem:[%s351 + $0x258] sm:$0xff] %v11003
        %11146 = vst [vmem:[%s351 + $0x260] sm:$0xff] %v10330
        %11147 = vst [vmem:[%s351 + $0x268] sm:$0xff] %v11006
        %11148 = vst [vmem:[%s351 + $0x270] sm:$0xff] %v10332
        %11149 = vst [vmem:[%s351 + $0x278] sm:$0xff] %v11008
        %11150 = vst [vmem:[%s351 + $0x280] sm:$0xff] %v10335
        %11151 = vst [vmem:[%s351 + $0x288] sm:$0xff] %v11011
        %11152 = vst [vmem:[%s351 + $0x290] sm:$0xff] %v10337
        %11153 = vst [vmem:[%s351 + $0x298] sm:$0xff] %v11013
        %11154 = vst [vmem:[%s351 + $0x2a0] sm:$0xff] %v10340
        %11155 = vst [vmem:[%s351 + $0x2a8] sm:$0xff] %v11016
        %11156 = vst [vmem:[%s351 + $0x2b0] sm:$0xff] %v10342
        %11157 = vst [vmem:[%s351 + $0x2b8] sm:$0xff] %v11018
        %11158 = vst [vmem:[%s351 + $0x2c0] sm:$0xff] %v10345
        %11159 = vst [vmem:[%s351 + $0x2c8] sm:$0xff] %v11021
        %11160 = vst [vmem:[%s351 + $0x2d0] sm:$0xff] %v10347
        %11161 = vst [vmem:[%s351 + $0x2d8] sm:$0xff] %v11023
        %11162 = vst [vmem:[%s351 + $0x2e0] sm:$0xff] %v10350
        %11163 = vst [vmem:[%s351 + $0x2e8] sm:$0xff] %v11026
        %11164 = vst [vmem:[%s351 + $0x2f0] sm:$0xff] %v10352
        %11165 = vst [vmem:[%s351 + $0x2f8] sm:$0xff] %v11028
        %11166 = vst [vmem:[%s351 + $0x300] sm:$0xff] %v10355
        %11167 = vst [vmem:[%s351 + $0x308] sm:$0xff] %v11031
        %11168 = vst [vmem:[%s351 + $0x310] sm:$0xff] %v10357
        %11169 = vst [vmem:[%s351 + $0x318] sm:$0xff] %v11033
        %11170 = vst [vmem:[%s351 + $0x320] sm:$0xff] %v10360
        %11171 = vst [vmem:[%s351 + $0x328] sm:$0xff] %v11036
        %11172 = vst [vmem:[%s351 + $0x330] sm:$0xff] %v10362
        %11173 = vst [vmem:[%s351 + $0x338] sm:$0xff] %v11038
        %11174 = vst [vmem:[%s351 + $0x340] sm:$0xff] %v10365
        %11175 = vst [vmem:[%s351 + $0x348] sm:$0xff] %v11041
        %11176 = vst [vmem:[%s351 + $0x350] sm:$0xff] %v10367
        %11177 = vst [vmem:[%s351 + $0x358] sm:$0xff] %v11043
        %11178 = vst [vmem:[%s351 + $0x360] sm:$0xff] %v10370
        %11179 = vst [vmem:[%s351 + $0x368] sm:$0xff] %v11046
        %11180 = vst [vmem:[%s351 + $0x370] sm:$0xff] %v10372
        %11181 = vst [vmem:[%s351 + $0x378] sm:$0xff] %v11048
        %11182 = vst [vmem:[%s351 + $0x380] sm:$0xff] %v10375
        %11183 = vst [vmem:[%s351 + $0x388] sm:$0xff] %v11051
        %11184 = vst [vmem:[%s351 + $0x390] sm:$0xff] %v10377
        %11185 = vst [vmem:[%s351 + $0x398] sm:$0xff] %v11053
        %11186 = vst [vmem:[%s351 + $0x3a0] sm:$0xff] %v10380
        %11187 = vst [vmem:[%s351 + $0x3a8] sm:$0xff] %v11056
        %11188 = vst [vmem:[%s351 + $0x3b0] sm:$0xff] %v10382
        %11189 = vst [vmem:[%s351 + $0x3b8] sm:$0xff] %v11058
        %11190 = vst [vmem:[%s351 + $0x3c0] sm:$0xff] %v10385
        %11191 = vst [vmem:[%s351 + $0x3c8] sm:$0xff] %v11061
        %11192 = vst [vmem:[%s351 + $0x3d0] sm:$0xff] %v10387
        %11193 = vst [vmem:[%s351 + $0x3d8] sm:$0xff] %v11063
        %11194 = vst [vmem:[%s351 + $0x3e0] sm:$0xff] %v10390
        %11195 = vst [vmem:[%s351 + $0x3e8] sm:$0xff] %v11066
        %11196 = vst [vmem:[%s351 + $0x3f0] sm:$0xff] %v10392
        %11197 = vst [vmem:[%s351 + $0x3f8] sm:$0xff] %v11068
        %s11198 = sand.u32 %s165, 1
        %s11199 = scalar_lea.sflag [#allocation4], %s11198
        %s11200 = sand.u32 %s165, 1
        %s11201 = smul.addr %s11200, 1024
        %s11202 = scalar_lea.vmem [#allocation13], %s11201
        // Predicated region
        $region69: #{tpu_custom_call.1} parent=43 // pred_check
          %p11203 = pneg %p175
        $region70: #{tpu_custom_call.1} parent=43 // pred_check_branch
          %11205 = sbr.rel (%p11203) target = $region72
        $region71: #{tpu_custom_call.1} parent=43 // pred_region
          %s11206 = smul.u32 64, %s26
          %11208 = vsyncadd %s11199, 0
          %s11209 = smul.addr %s11206, 2
          %s11210 = smul.addr %s11209, 8
          %s11211 = scalar_lea.hbm %s6, %s11210
          %s11212 = sshll.u32 %s11202, 4
          %s11213 = int_to_ptr.vmem [resolvable:$true] %s11212
          %s11214 = sshll.u32 %s11211, 4
          %s11215 = int_to_ptr.hbm [resolvable:$true] %s11214
          %11220 = dma.vmem_to_hbm [thread:$0]  %s11213, 16384, %s11215, %s11199, 256, 256, 16
        $region72: #{tpu_custom_call.1} parent=43 // pred_fallthru
          _
      $region44: #{tpu_custom_call.1} parent=5 // pred_fallthru
        _
      %p11221 = scmp.le.s32.totalorder 2, %s21
      // Predicated region
      $region73: #{tpu_custom_call.1} parent=5 // pred_check
        %p11222 = pneg %p11221
      $region74: #{tpu_custom_call.1} parent=5 // pred_check_branch
        %11224 = sbr.rel (%p11222) target = $region76
      $region75: #{tpu_custom_call.1} parent=5 // pred_region
        %s11225 = ssub.s32 %s21, 2
        // Predicated region
        $region77: #{tpu_custom_call.1} parent=75 // pred_check
          %p11226 = pneg %p181
        $region78: #{tpu_custom_call.1} parent=75 // pred_check_branch
          %11228 = sbr.rel (%p11226) target = $region80
        $region79: #{tpu_custom_call.1} parent=75 // pred_region
          %s11229 = sand.u32 %s166, 1
          %s11230 = scalar_lea.sflag [#allocation4], %s11229
          %s11231 = sand.u32 %s166, 1
          %s11232 = smul.addr %s11231, 1024
          %s11233 = scalar_lea.vmem [#allocation13], %s11232
          %11235 = dma.done %s11230, 16384
        $region80: #{tpu_custom_call.1} parent=75 // pred_fallthru
          _
      $region76: #{tpu_custom_call.1} parent=5 // pred_fallthru
        _
    $region6: #{tpu_custom_call.1} parent=1 // loop_footer
      %s25 = sadd.s32 1, %s21
    $region7: #{tpu_custom_call.1} parent=1 // loop_footer_branch
      %20 = sbr.rel target = $region3
    $region8: #{tpu_custom_call.1} parent=1 // loop_exit
      _
    %11236 = vsyncpa [#allocation3], 1
    %s11237 = scalar_lea.sflag [#allocation3], 1
    %11238 = vsyncpa %s11237, 1
    %11239 = vsyncpa [#allocation6], 1
    %11240 = vsyncpa [#allocation9], 1
    %11241 = vsyncpa [#allocation12], 1
    %11242 = vsyncpa [#allocation4], 1
    %s11243 = scalar_lea.sflag [#allocation4], 1
    %11244 = vsyncpa %s11243, 1

</llo_original>
